<compile_context>
chip_gen: v5e
topology: v5e:2x2
jax: 0.10.0
libtpu: 0.0.40
codegen_flags: <defaults>
</compile_context>

<pallas_src>
import jax
import jax.numpy as jnp
from jax.experimental import pallas as pl
from jax.experimental.pallas import tpu as pltpu


# ----------------------------------------------------------------------------
# Parameter init (torch-like layouts) + repacking into kernel layouts.
# ----------------------------------------------------------------------------
def init_params(key):
    """Torch-layout params (Conv2d OIHW, Linear (out, in)), uniform(-1/sqrt(fan_in))."""
    def u(k, shape, fan_in):
        bound = 1.0 / jnp.sqrt(jnp.float32(fan_in))
        return jax.random.uniform(k, shape, jnp.float32, -bound, bound)

    ks = jax.random.split(key, 12)
    return {
        "conv1_w": u(ks[0], (32, 3, 3, 3), 3 * 9),
        "conv1_b": u(ks[1], (32,), 3 * 9),
        "conv2_w": u(ks[2], (64, 32, 3, 3), 32 * 9),
        "conv2_b": u(ks[3], (64,), 32 * 9),
        "conv3_w": u(ks[4], (128, 64, 3, 3), 64 * 9),
        "conv3_b": u(ks[5], (128,), 64 * 9),
        "fc1_w": u(ks[6], (512, 128 * 4 * 4), 128 * 4 * 4),
        "fc1_b": u(ks[7], (512,), 128 * 4 * 4),
        "fc2_w": u(ks[8], (256, 512), 512),
        "fc2_b": u(ks[9], (256,), 512),
        "fc3_w": u(ks[10], (10, 256), 256),
        "fc3_b": u(ks[11], (10,), 256),
    }


def pack_params(p):
    """Repack torch-layout params into the layouts the Pallas kernels consume."""
    def conv_cols(w_oihw):
        # OIHW -> HWIO -> (3, 3*Cin, Cout): dx taps folded into the K dim.
        w = jnp.transpose(w_oihw, (2, 3, 1, 0))          # (kh, kw, Cin, Cout)
        kh, kw, cin, cout = w.shape
        return w.reshape(kh, kw * cin, cout)

    # conv1: full im2col columns, order (dy, dx, c) to match the wrapper packing.
    w1 = jnp.transpose(p["conv1_w"], (2, 3, 1, 0)).reshape(27, 32)

    # fc1: torch flattens NCHW C-major (c, h, w); the conv kernel emits NHWC
    # (h, w, c).  Permute fc1's input rows once here so no runtime transpose
    # is needed between the conv stack and the MLP.
    fw1 = p["fc1_w"].reshape(512, 128, 4, 4)             # (out, c, h, w)
    fw1 = jnp.transpose(fw1, (2, 3, 1, 0)).reshape(2048, 512)   # rows = (h, w, c)

    return {
        "w1": w1, "b1": p["conv1_b"].reshape(1, 32),
        "w2": conv_cols(p["conv2_w"]), "b2": p["conv2_b"].reshape(1, 64),
        "w3": conv_cols(p["conv3_w"]), "b3": p["conv3_b"].reshape(1, 128),
        "fw1": fw1, "fb1": p["fc1_b"].reshape(1, 512),
        "fw2": p["fc2_w"].T, "fb2": p["fc2_b"].reshape(1, 256),
        "fw3": p["fc3_w"].T, "fb3": p["fc3_b"].reshape(1, 10),
    }


# ----------------------------------------------------------------------------
# Fused conv stack: conv1/2/3, each + bias + ReLU + 2x2 maxpool, one image per
# grid step ("parallel" grid -> both v7x TensorCores get work for N >= 2).
# ----------------------------------------------------------------------------
def _bias_relu_pool(acc, b, h, w, c):
    # acc: (h*w, c) conv rows (row-major over (h, w)); bias + ReLU + 2x2 maxpool.
    a = jnp.maximum(acc + b, 0.0).reshape(h // 2, 2, w // 2, 2, c)
    return jnp.max(a, axis=(1, 3))                       # (h//2, w//2, c)


def conv_stack_kernel(xcol_ref, w1_ref, b1_ref, w2_ref, b2_ref, w3_ref, b3_ref,
                      o_ref, x1p_ref, x2p_ref):
    # xcol_ref: (1, 1024, 27)  im2col(3x3, pad=1) of one 32x32x3 image
    # w1_ref:   (27, 32)       b1_ref: (1, 32)
    # w2_ref:   (3, 96, 64)    b2_ref: (1, 64)    (dx taps folded into K)
    # w3_ref:   (3, 192, 128)  b3_ref: (1, 128)
    # o_ref:    (1, 4, 4, 128) pooled conv3 output (NHWC)
    # x1p_ref:  VMEM (18, 18, 32) scratch: conv1 pooled output + 1px halo
    # x2p_ref:  VMEM (10, 10, 64) scratch: conv2 pooled output + 1px halo

    # ---- conv1: one K=27 matmul per 8-row block (accumulator stays in-vreg) --
    x1p_ref[...] = jnp.zeros_like(x1p_ref)               # halo = zero padding
    for rb in range(4):                                  # 4 blocks x 8 output rows
        rows = xcol_ref[0, rb * 256:(rb + 1) * 256, :]   # (256, 27)
        acc = jnp.dot(rows, w1_ref[...], preferred_element_type=jnp.float32)
        pooled = _bias_relu_pool(acc, b1_ref[...], 8, 32, 32)     # (4, 16, 32)
        x1p_ref[1 + rb * 4:5 + rb * 4, 1:17, :] = pooled

    # ---- conv2: 3 matmuls, K = 3*32 = 96 ------------------------------------
    x2p_ref[...] = jnp.zeros_like(x2p_ref)
    x1p = x1p_ref[...]
    acc = jnp.zeros((256, 64), jnp.float32)
    for dy in range(3):
        row = x1p[dy:dy + 16]                            # (16, 18, 32)
        patch = jnp.concatenate(
            [row[:, 0:16, :], row[:, 1:17, :], row[:, 2:18, :]], axis=-1)
        acc = acc + jnp.dot(patch.reshape(256, 96), w2_ref[dy],
                            preferred_element_type=jnp.float32)
    x2p_ref[1:9, 1:9, :] = _bias_relu_pool(acc, b2_ref[...], 16, 16, 64)

    # ---- conv3: 3 matmuls, K = 3*64 = 192 -----------------------------------
    x2p = x2p_ref[...]
    acc = jnp.zeros((64, 128), jnp.float32)
    for dy in range(3):
        row = x2p[dy:dy + 8]                             # (8, 10, 64)
        patch = jnp.concatenate(
            [row[:, 0:8, :], row[:, 1:9, :], row[:, 2:10, :]], axis=-1)
        acc = acc + jnp.dot(patch.reshape(64, 192), w3_ref[dy],
                            preferred_element_type=jnp.float32)
    o_ref[0] = _bias_relu_pool(acc, b3_ref[...], 8, 8, 128).astype(o_ref.dtype)


def conv_stack(x_nhwc, kp):
    N = x_nhwc.shape[0]
    # im2col of the 3-channel input (done once in XLA: pure layout plumbing so
    # the kernel's conv1 is a single lane-filled K=27 matmul per row block).
    xp = jnp.pad(x_nhwc, ((0, 0), (1, 1), (1, 1), (0, 0)))
    cols = [xp[:, dy:dy + 32, dx:dx + 32, :] for dy in range(3) for dx in range(3)]
    xcol = jnp.concatenate(cols, axis=-1).reshape(N, 32 * 32, 27)

    feats = pl.pallas_call(
        conv_stack_kernel,
        out_shape=jax.ShapeDtypeStruct((N, 4, 4, 128), jnp.float32),
        grid=(N,),
        in_specs=[
            pl.BlockSpec((1, 1024, 27), lambda n: (n, 0, 0)),
            pl.BlockSpec((27, 32), lambda n: (0, 0)),
            pl.BlockSpec((1, 32), lambda n: (0, 0)),
            pl.BlockSpec((3, 96, 64), lambda n: (0, 0, 0)),
            pl.BlockSpec((1, 64), lambda n: (0, 0)),
            pl.BlockSpec((3, 192, 128), lambda n: (0, 0, 0)),
            pl.BlockSpec((1, 128), lambda n: (0, 0)),
        ],
        out_specs=pl.BlockSpec((1, 4, 4, 128), lambda n: (n, 0, 0, 0)),
        scratch_shapes=[
            pltpu.VMEM((18, 18, 32), jnp.float32),
            pltpu.VMEM((10, 10, 64), jnp.float32),
        ],
        compiler_params=pltpu.CompilerParams(
            dimension_semantics=("parallel",)),
    )(xcol, kp["w1"], kp["b1"], kp["w2"], kp["b2"], kp["w3"], kp["b3"])
    # NHWC flatten (h, w, c); fc1 rows were permuted at pack time to match.
    return feats.reshape(N, 4 * 4 * 128)


# ----------------------------------------------------------------------------
# Batched MLP head: fc1 -> ReLU -> fc2 -> ReLU -> fc3 (dropout = identity).
# Batch-row-tiled "parallel" grid; weights resident via constant index_map.
# ----------------------------------------------------------------------------
def mlp_kernel(x_ref, w1_ref, b1_ref, w2_ref, b2_ref, w3_ref, b3_ref, o_ref):
    h = jnp.dot(x_ref[...], w1_ref[...], preferred_element_type=jnp.float32)
    h = jnp.maximum(h + b1_ref[...], 0.0)
    # dropout(p=0.5) = identity in eval mode
    h = jnp.dot(h, w2_ref[...], preferred_element_type=jnp.float32)
    h = jnp.maximum(h + b2_ref[...], 0.0)
    h = jnp.dot(h, w3_ref[...], preferred_element_type=jnp.float32)
    o_ref[...] = (h + b3_ref[...]).astype(o_ref.dtype)


def mlp_head(x, kp):
    N, K = x.shape
    out_d = kp["fw3"].shape[1]
    tb = N                                   # batch-row tile (bounded VMEM, and
    for cand in (128, 64, 32, 16, 8):        # >1 grid point for megacore when N allows)
        if N % cand == 0:
            tb = cand
            break
    full2 = lambda a: pl.BlockSpec(a.shape, lambda i: (0, 0))
    return pl.pallas_call(
        mlp_kernel,
        out_shape=jax.ShapeDtypeStruct((N, out_d), x.dtype),
        grid=(N // tb,),
        in_specs=[
            pl.BlockSpec((tb, K), lambda i: (i, 0)),
            full2(kp["fw1"]), full2(kp["fb1"]),
            full2(kp["fw2"]), full2(kp["fb2"]),
            full2(kp["fw3"]), full2(kp["fb3"]),
        ],
        out_specs=pl.BlockSpec((tb, out_d), lambda i: (i, 0)),
        compiler_params=pltpu.CompilerParams(
            dimension_semantics=("parallel",),
            vmem_limit_bytes=32 * 1024 * 1024),
    )(x, kp["fw1"], kp["fb1"], kp["fw2"], kp["fb2"], kp["fw3"], kp["fb3"])


# ----------------------------------------------------------------------------
# Full forward pass (matches CNN.forward of the PyTorch reference, eval mode).
# ----------------------------------------------------------------------------
@jax.jit
def cnn_forward(x_nchw, kernel_params):
    x = jnp.transpose(x_nchw, (0, 2, 3, 1)).astype(jnp.float32)   # NCHW -> NHWC
    feats = conv_stack(x, kernel_params)     # (N, 2048), NHWC-flatten order
    return mlp_head(feats, kernel_params)    # (N, 10)


if __name__ == "__main__":
    key = jax.random.PRNGKey(0)
    k_x, k_p = jax.random.split(key)
    # fc1 = Linear(128*4*4, ...) after three /2 pools implies 32x32 spatial input.
    x = jax.random.normal(k_x, (2, 3, 32, 32), jnp.float32)
    params = pack_params(init_params(k_p))

    out = jax.block_until_ready(cnn_forward(x, params))
    assert out.shape == (2, 10), out.shape
    print("KERNEL_OK")
</pallas_src>

<mosaic_0001>
module attributes {stable_mosaic.version = 11 : i64} {
  func.func @conv_stack_kernel(%arg0: i32, %arg1: memref<1x1024x27xf32, #tpu.memory_space<vmem>>, %arg2: memref<27x32xf32, #tpu.memory_space<vmem>>, %arg3: memref<1x32xf32, #tpu.memory_space<vmem>>, %arg4: memref<3x96x64xf32, #tpu.memory_space<vmem>>, %arg5: memref<1x64xf32, #tpu.memory_space<vmem>>, %arg6: memref<3x192x128xf32, #tpu.memory_space<vmem>>, %arg7: memref<1x128xf32, #tpu.memory_space<vmem>>, %arg8: memref<1x4x4x128xf32, #tpu.memory_space<vmem>>, %arg9: memref<18x18x32xf32, #tpu.memory_space<vmem>>, %arg10: memref<10x10x64xf32, #tpu.memory_space<vmem>>) attributes {dimension_semantics = [#tpu.dimension_semantics<parallel>], iteration_bounds = array<i64: 2>, scalar_prefetch = 0 : i64, scratch_operands = 2 : i64, tpu.core_type = #tpu.core_type<tc>, window_params = [{transform_indices = @transform_0, window_bounds = array<i64: 1, 1024, 27>}, {pipeline_mode = #tpu.pipeline_mode<synchronous>, transform_indices = @transform_1, window_bounds = array<i64: 27, 32>}, {pipeline_mode = #tpu.pipeline_mode<synchronous>, transform_indices = @transform_2, window_bounds = array<i64: 1, 32>}, {pipeline_mode = #tpu.pipeline_mode<synchronous>, transform_indices = @transform_3, window_bounds = array<i64: 3, 96, 64>}, {pipeline_mode = #tpu.pipeline_mode<synchronous>, transform_indices = @transform_4, window_bounds = array<i64: 1, 64>}, {pipeline_mode = #tpu.pipeline_mode<synchronous>, transform_indices = @transform_5, window_bounds = array<i64: 3, 192, 128>}, {pipeline_mode = #tpu.pipeline_mode<synchronous>, transform_indices = @transform_6, window_bounds = array<i64: 1, 128>}, {transform_indices = @transform_7, window_bounds = array<i64: 1, 4, 4, 128>}]} {
    %cst = arith.constant 0.000000e+00 : f32
    %0 = vector.broadcast %cst : f32 to vector<18x18x32xf32>
    %c0 = arith.constant 0 : index
    %c0_0 = arith.constant 0 : index
    %c0_1 = arith.constant 0 : index
    %1 = vector.load %arg9[%c0, %c0_0, %c0_1] : memref<18x18x32xf32, #tpu.memory_space<vmem>>, vector<18x18x32xf32>
    tpu.vector_store %arg9[%c0, %c0_0, %c0_1], %0 {strides = array<i32>} : memref<18x18x32xf32, #tpu.memory_space<vmem>>, vector<18x18x32xf32>,
    %c0_2 = arith.constant 0 : index
    %c0_3 = arith.constant 0 : index
    %c0_4 = arith.constant 0 : index
    %2 = vector.load %arg1[%c0_2, %c0_3, %c0_4] : memref<1x1024x27xf32, #tpu.memory_space<vmem>>, vector<1x256x27xf32>
    %3 = vector.shape_cast %2 : vector<1x256x27xf32> to vector<256x27xf32>
    %c0_5 = arith.constant 0 : index
    %c0_6 = arith.constant 0 : index
    %4 = vector.load %arg2[%c0_5, %c0_6] : memref<27x32xf32, #tpu.memory_space<vmem>>, vector<27x32xf32>
    %cst_7 = arith.constant dense<0.000000e+00> : vector<256x32xf32>
    %5 = tpu.matmul %3, %4, %cst_7 {dimension_numbers = #tpu.dot_dimension_numbers<[1], [0], [0], [1], [0, 0, 1, 1], [], []>} : vector<256x27xf32>, vector<27x32xf32>, vector<256x32xf32> -> vector<256x32xf32>
    %c0_8 = arith.constant 0 : index
    %c0_9 = arith.constant 0 : index
    %6 = vector.load %arg3[%c0_8, %c0_9] : memref<1x32xf32, #tpu.memory_space<vmem>>, vector<1x32xf32>
    %7 = vector.broadcast %6 : vector<1x32xf32> to vector<256x32xf32>
    %8 = arith.addf %5, %7 : vector<256x32xf32>
    %cst_10 = arith.constant 0.000000e+00 : f32
    %9 = vector.broadcast %cst_10 : f32 to vector<256x32xf32>
    %10 = arith.maximumf %8, %9 : vector<256x32xf32>
    %11 = vector.shape_cast %10 : vector<256x32xf32> to vector<4x2x16x2x32xf32>
    %cst_11 = arith.constant dense<0xFF800000> : vector<4x16x32xf32>
    %12 = vector.multi_reduction <maximumf>, %11, %cst_11 [1, 3] : vector<4x2x16x2x32xf32> to vector<4x16x32xf32>
    %c1 = arith.constant 1 : index
    %c1_12 = arith.constant 1 : index
    %c0_13 = arith.constant 0 : index
    %13 = vector.load %arg9[%c1, %c1_12, %c0_13] : memref<18x18x32xf32, #tpu.memory_space<vmem>>, vector<4x16x32xf32>
    tpu.vector_store %arg9[%c1, %c1_12, %c0_13], %12 {strides = array<i32>} : memref<18x18x32xf32, #tpu.memory_space<vmem>>, vector<4x16x32xf32>,
    %c0_14 = arith.constant 0 : index
    %c256 = arith.constant 256 : index
    %c0_15 = arith.constant 0 : index
    %14 = vector.load %arg1[%c0_14, %c256, %c0_15] : memref<1x1024x27xf32, #tpu.memory_space<vmem>>, vector<1x256x27xf32>
    %15 = vector.shape_cast %14 : vector<1x256x27xf32> to vector<256x27xf32>
    %c0_16 = arith.constant 0 : index
    %c0_17 = arith.constant 0 : index
    %16 = vector.load %arg2[%c0_16, %c0_17] : memref<27x32xf32, #tpu.memory_space<vmem>>, vector<27x32xf32>
    %cst_18 = arith.constant dense<0.000000e+00> : vector<256x32xf32>
    %17 = tpu.matmul %15, %16, %cst_18 {dimension_numbers = #tpu.dot_dimension_numbers<[1], [0], [0], [1], [0, 0, 1, 1], [], []>} : vector<256x27xf32>, vector<27x32xf32>, vector<256x32xf32> -> vector<256x32xf32>
    %c0_19 = arith.constant 0 : index
    %c0_20 = arith.constant 0 : index
    %18 = vector.load %arg3[%c0_19, %c0_20] : memref<1x32xf32, #tpu.memory_space<vmem>>, vector<1x32xf32>
    %19 = vector.broadcast %18 : vector<1x32xf32> to vector<256x32xf32>
    %20 = arith.addf %17, %19 : vector<256x32xf32>
    %cst_21 = arith.constant 0.000000e+00 : f32
    %21 = vector.broadcast %cst_21 : f32 to vector<256x32xf32>
    %22 = arith.maximumf %20, %21 : vector<256x32xf32>
    %23 = vector.shape_cast %22 : vector<256x32xf32> to vector<4x2x16x2x32xf32>
    %cst_22 = arith.constant dense<0xFF800000> : vector<4x16x32xf32>
    %24 = vector.multi_reduction <maximumf>, %23, %cst_22 [1, 3] : vector<4x2x16x2x32xf32> to vector<4x16x32xf32>
    %c5 = arith.constant 5 : index
    %c1_23 = arith.constant 1 : index
    %c0_24 = arith.constant 0 : index
    %25 = vector.load %arg9[%c5, %c1_23, %c0_24] : memref<18x18x32xf32, #tpu.memory_space<vmem>>, vector<4x16x32xf32>
    tpu.vector_store %arg9[%c5, %c1_23, %c0_24], %24 {strides = array<i32>} : memref<18x18x32xf32, #tpu.memory_space<vmem>>, vector<4x16x32xf32>,
    %c0_25 = arith.constant 0 : index
    %c512 = arith.constant 512 : index
    %c0_26 = arith.constant 0 : index
    %26 = vector.load %arg1[%c0_25, %c512, %c0_26] : memref<1x1024x27xf32, #tpu.memory_space<vmem>>, vector<1x256x27xf32>
    %27 = vector.shape_cast %26 : vector<1x256x27xf32> to vector<256x27xf32>
    %c0_27 = arith.constant 0 : index
    %c0_28 = arith.constant 0 : index
    %28 = vector.load %arg2[%c0_27, %c0_28] : memref<27x32xf32, #tpu.memory_space<vmem>>, vector<27x32xf32>
    %cst_29 = arith.constant dense<0.000000e+00> : vector<256x32xf32>
    %29 = tpu.matmul %27, %28, %cst_29 {dimension_numbers = #tpu.dot_dimension_numbers<[1], [0], [0], [1], [0, 0, 1, 1], [], []>} : vector<256x27xf32>, vector<27x32xf32>, vector<256x32xf32> -> vector<256x32xf32>
    %c0_30 = arith.constant 0 : index
    %c0_31 = arith.constant 0 : index
    %30 = vector.load %arg3[%c0_30, %c0_31] : memref<1x32xf32, #tpu.memory_space<vmem>>, vector<1x32xf32>
    %31 = vector.broadcast %30 : vector<1x32xf32> to vector<256x32xf32>
    %32 = arith.addf %29, %31 : vector<256x32xf32>
    %cst_32 = arith.constant 0.000000e+00 : f32
    %33 = vector.broadcast %cst_32 : f32 to vector<256x32xf32>
    %34 = arith.maximumf %32, %33 : vector<256x32xf32>
    %35 = vector.shape_cast %34 : vector<256x32xf32> to vector<4x2x16x2x32xf32>
    %cst_33 = arith.constant dense<0xFF800000> : vector<4x16x32xf32>
    %36 = vector.multi_reduction <maximumf>, %35, %cst_33 [1, 3] : vector<4x2x16x2x32xf32> to vector<4x16x32xf32>
    %c9 = arith.constant 9 : index
    %c1_34 = arith.constant 1 : index
    %c0_35 = arith.constant 0 : index
    %37 = vector.load %arg9[%c9, %c1_34, %c0_35] : memref<18x18x32xf32, #tpu.memory_space<vmem>>, vector<4x16x32xf32>
    tpu.vector_store %arg9[%c9, %c1_34, %c0_35], %36 {strides = array<i32>} : memref<18x18x32xf32, #tpu.memory_space<vmem>>, vector<4x16x32xf32>,
    %c0_36 = arith.constant 0 : index
    %c768 = arith.constant 768 : index
    %c0_37 = arith.constant 0 : index
    %38 = vector.load %arg1[%c0_36, %c768, %c0_37] : memref<1x1024x27xf32, #tpu.memory_space<vmem>>, vector<1x256x27xf32>
    %39 = vector.shape_cast %38 : vector<1x256x27xf32> to vector<256x27xf32>
    %c0_38 = arith.constant 0 : index
    %c0_39 = arith.constant 0 : index
    %40 = vector.load %arg2[%c0_38, %c0_39] : memref<27x32xf32, #tpu.memory_space<vmem>>, vector<27x32xf32>
    %cst_40 = arith.constant dense<0.000000e+00> : vector<256x32xf32>
    %41 = tpu.matmul %39, %40, %cst_40 {dimension_numbers = #tpu.dot_dimension_numbers<[1], [0], [0], [1], [0, 0, 1, 1], [], []>} : vector<256x27xf32>, vector<27x32xf32>, vector<256x32xf32> -> vector<256x32xf32>
    %c0_41 = arith.constant 0 : index
    %c0_42 = arith.constant 0 : index
    %42 = vector.load %arg3[%c0_41, %c0_42] : memref<1x32xf32, #tpu.memory_space<vmem>>, vector<1x32xf32>
    %43 = vector.broadcast %42 : vector<1x32xf32> to vector<256x32xf32>
    %44 = arith.addf %41, %43 : vector<256x32xf32>
    %cst_43 = arith.constant 0.000000e+00 : f32
    %45 = vector.broadcast %cst_43 : f32 to vector<256x32xf32>
    %46 = arith.maximumf %44, %45 : vector<256x32xf32>
    %47 = vector.shape_cast %46 : vector<256x32xf32> to vector<4x2x16x2x32xf32>
    %cst_44 = arith.constant dense<0xFF800000> : vector<4x16x32xf32>
    %48 = vector.multi_reduction <maximumf>, %47, %cst_44 [1, 3] : vector<4x2x16x2x32xf32> to vector<4x16x32xf32>
    %c13 = arith.constant 13 : index
    %c1_45 = arith.constant 1 : index
    %c0_46 = arith.constant 0 : index
    %49 = vector.load %arg9[%c13, %c1_45, %c0_46] : memref<18x18x32xf32, #tpu.memory_space<vmem>>, vector<4x16x32xf32>
    tpu.vector_store %arg9[%c13, %c1_45, %c0_46], %48 {strides = array<i32>} : memref<18x18x32xf32, #tpu.memory_space<vmem>>, vector<4x16x32xf32>,
    %cst_47 = arith.constant 0.000000e+00 : f32
    %50 = vector.broadcast %cst_47 : f32 to vector<10x10x64xf32>
    %c0_48 = arith.constant 0 : index
    %c0_49 = arith.constant 0 : index
    %c0_50 = arith.constant 0 : index
    %51 = vector.load %arg10[%c0_48, %c0_49, %c0_50] : memref<10x10x64xf32, #tpu.memory_space<vmem>>, vector<10x10x64xf32>
    tpu.vector_store %arg10[%c0_48, %c0_49, %c0_50], %50 {strides = array<i32>} : memref<10x10x64xf32, #tpu.memory_space<vmem>>, vector<10x10x64xf32>,
    %c0_51 = arith.constant 0 : index
    %c0_52 = arith.constant 0 : index
    %c0_53 = arith.constant 0 : index
    %52 = vector.load %arg9[%c0_51, %c0_52, %c0_53] : memref<18x18x32xf32, #tpu.memory_space<vmem>>, vector<18x18x32xf32>
    %cst_54 = arith.constant 0.000000e+00 : f32
    %53 = vector.broadcast %cst_54 : f32 to vector<256x64xf32>
    %54 = vector.extract_strided_slice %52 {offsets = [0, 0, 0], sizes = [16, 18, 32], strides = [1, 1, 1]} : vector<18x18x32xf32> to vector<16x18x32xf32>
    %55 = vector.extract_strided_slice %54 {offsets = [0, 0, 0], sizes = [16, 16, 32], strides = [1, 1, 1]} : vector<16x18x32xf32> to vector<16x16x32xf32>
    %56 = vector.extract_strided_slice %54 {offsets = [0, 1, 0], sizes = [16, 16, 32], strides = [1, 1, 1]} : vector<16x18x32xf32> to vector<16x16x32xf32>
    %57 = vector.extract_strided_slice %54 {offsets = [0, 2, 0], sizes = [16, 16, 32], strides = [1, 1, 1]} : vector<16x18x32xf32> to vector<16x16x32xf32>
    %58 = tpu.concatenate %55, %56, %57 in 2 : vector<16x16x32xf32>, vector<16x16x32xf32>, vector<16x16x32xf32> -> vector<16x16x96xf32>
    %59 = vector.shape_cast %58 : vector<16x16x96xf32> to vector<256x96xf32>
    %c0_55 = arith.constant 0 : index
    %c0_56 = arith.constant 0 : index
    %c0_57 = arith.constant 0 : index
    %60 = vector.load %arg4[%c0_55, %c0_56, %c0_57] : memref<3x96x64xf32, #tpu.memory_space<vmem>>, vector<1x96x64xf32>
    %61 = vector.shape_cast %60 : vector<1x96x64xf32> to vector<96x64xf32>
    %cst_58 = arith.constant dense<0.000000e+00> : vector<256x64xf32>
    %62 = tpu.matmul %59, %61, %cst_58 {dimension_numbers = #tpu.dot_dimension_numbers<[1], [0], [0], [1], [0, 0, 1, 1], [], []>} : vector<256x96xf32>, vector<96x64xf32>, vector<256x64xf32> -> vector<256x64xf32>
    %63 = arith.addf %53, %62 : vector<256x64xf32>
    %64 = vector.extract_strided_slice %52 {offsets = [1, 0, 0], sizes = [16, 18, 32], strides = [1, 1, 1]} : vector<18x18x32xf32> to vector<16x18x32xf32>
    %65 = vector.extract_strided_slice %64 {offsets = [0, 0, 0], sizes = [16, 16, 32], strides = [1, 1, 1]} : vector<16x18x32xf32> to vector<16x16x32xf32>
    %66 = vector.extract_strided_slice %64 {offsets = [0, 1, 0], sizes = [16, 16, 32], strides = [1, 1, 1]} : vector<16x18x32xf32> to vector<16x16x32xf32>
    %67 = vector.extract_strided_slice %64 {offsets = [0, 2, 0], sizes = [16, 16, 32], strides = [1, 1, 1]} : vector<16x18x32xf32> to vector<16x16x32xf32>
    %68 = tpu.concatenate %65, %66, %67 in 2 : vector<16x16x32xf32>, vector<16x16x32xf32>, vector<16x16x32xf32> -> vector<16x16x96xf32>
    %69 = vector.shape_cast %68 : vector<16x16x96xf32> to vector<256x96xf32>
    %c1_59 = arith.constant 1 : index
    %c0_60 = arith.constant 0 : index
    %c0_61 = arith.constant 0 : index
    %70 = vector.load %arg4[%c1_59, %c0_60, %c0_61] : memref<3x96x64xf32, #tpu.memory_space<vmem>>, vector<1x96x64xf32>
    %71 = vector.shape_cast %70 : vector<1x96x64xf32> to vector<96x64xf32>
    %cst_62 = arith.constant dense<0.000000e+00> : vector<256x64xf32>
    %72 = tpu.matmul %69, %71, %cst_62 {dimension_numbers = #tpu.dot_dimension_numbers<[1], [0], [0], [1], [0, 0, 1, 1], [], []>} : vector<256x96xf32>, vector<96x64xf32>, vector<256x64xf32> -> vector<256x64xf32>
    %73 = arith.addf %63, %72 : vector<256x64xf32>
    %74 = vector.extract_strided_slice %52 {offsets = [2, 0, 0], sizes = [16, 18, 32], strides = [1, 1, 1]} : vector<18x18x32xf32> to vector<16x18x32xf32>
    %75 = vector.extract_strided_slice %74 {offsets = [0, 0, 0], sizes = [16, 16, 32], strides = [1, 1, 1]} : vector<16x18x32xf32> to vector<16x16x32xf32>
    %76 = vector.extract_strided_slice %74 {offsets = [0, 1, 0], sizes = [16, 16, 32], strides = [1, 1, 1]} : vector<16x18x32xf32> to vector<16x16x32xf32>
    %77 = vector.extract_strided_slice %74 {offsets = [0, 2, 0], sizes = [16, 16, 32], strides = [1, 1, 1]} : vector<16x18x32xf32> to vector<16x16x32xf32>
    %78 = tpu.concatenate %75, %76, %77 in 2 : vector<16x16x32xf32>, vector<16x16x32xf32>, vector<16x16x32xf32> -> vector<16x16x96xf32>
    %79 = vector.shape_cast %78 : vector<16x16x96xf32> to vector<256x96xf32>
    %c2 = arith.constant 2 : index
    %c0_63 = arith.constant 0 : index
    %c0_64 = arith.constant 0 : index
    %80 = vector.load %arg4[%c2, %c0_63, %c0_64] : memref<3x96x64xf32, #tpu.memory_space<vmem>>, vector<1x96x64xf32>
    %81 = vector.shape_cast %80 : vector<1x96x64xf32> to vector<96x64xf32>
    %cst_65 = arith.constant dense<0.000000e+00> : vector<256x64xf32>
    %82 = tpu.matmul %79, %81, %cst_65 {dimension_numbers = #tpu.dot_dimension_numbers<[1], [0], [0], [1], [0, 0, 1, 1], [], []>} : vector<256x96xf32>, vector<96x64xf32>, vector<256x64xf32> -> vector<256x64xf32>
    %83 = arith.addf %73, %82 : vector<256x64xf32>
    %c0_66 = arith.constant 0 : index
    %c0_67 = arith.constant 0 : index
    %84 = vector.load %arg5[%c0_66, %c0_67] : memref<1x64xf32, #tpu.memory_space<vmem>>, vector<1x64xf32>
    %85 = vector.broadcast %84 : vector<1x64xf32> to vector<256x64xf32>
    %86 = arith.addf %83, %85 : vector<256x64xf32>
    %cst_68 = arith.constant 0.000000e+00 : f32
    %87 = vector.broadcast %cst_68 : f32 to vector<256x64xf32>
    %88 = arith.maximumf %86, %87 : vector<256x64xf32>
    %89 = vector.shape_cast %88 : vector<256x64xf32> to vector<8x2x8x2x64xf32>
    %cst_69 = arith.constant dense<0xFF800000> : vector<8x8x64xf32>
    %90 = vector.multi_reduction <maximumf>, %89, %cst_69 [1, 3] : vector<8x2x8x2x64xf32> to vector<8x8x64xf32>
    %c1_70 = arith.constant 1 : index
    %c1_71 = arith.constant 1 : index
    %c0_72 = arith.constant 0 : index
    %91 = vector.load %arg10[%c1_70, %c1_71, %c0_72] : memref<10x10x64xf32, #tpu.memory_space<vmem>>, vector<8x8x64xf32>
    tpu.vector_store %arg10[%c1_70, %c1_71, %c0_72], %90 {strides = array<i32>} : memref<10x10x64xf32, #tpu.memory_space<vmem>>, vector<8x8x64xf32>,
    %c0_73 = arith.constant 0 : index
    %c0_74 = arith.constant 0 : index
    %c0_75 = arith.constant 0 : index
    %92 = vector.load %arg10[%c0_73, %c0_74, %c0_75] : memref<10x10x64xf32, #tpu.memory_space<vmem>>, vector<10x10x64xf32>
    %cst_76 = arith.constant 0.000000e+00 : f32
    %93 = vector.broadcast %cst_76 : f32 to vector<64x128xf32>
    %94 = vector.extract_strided_slice %92 {offsets = [0, 0, 0], sizes = [8, 10, 64], strides = [1, 1, 1]} : vector<10x10x64xf32> to vector<8x10x64xf32>
    %95 = vector.extract_strided_slice %94 {offsets = [0, 0, 0], sizes = [8, 8, 64], strides = [1, 1, 1]} : vector<8x10x64xf32> to vector<8x8x64xf32>
    %96 = vector.extract_strided_slice %94 {offsets = [0, 1, 0], sizes = [8, 8, 64], strides = [1, 1, 1]} : vector<8x10x64xf32> to vector<8x8x64xf32>
    %97 = vector.extract_strided_slice %94 {offsets = [0, 2, 0], sizes = [8, 8, 64], strides = [1, 1, 1]} : vector<8x10x64xf32> to vector<8x8x64xf32>
    %98 = tpu.concatenate %95, %96, %97 in 2 : vector<8x8x64xf32>, vector<8x8x64xf32>, vector<8x8x64xf32> -> vector<8x8x192xf32>
    %99 = vector.shape_cast %98 : vector<8x8x192xf32> to vector<64x192xf32>
    %c0_77 = arith.constant 0 : index
    %c0_78 = arith.constant 0 : index
    %c0_79 = arith.constant 0 : index
    %100 = vector.load %arg6[%c0_77, %c0_78, %c0_79] : memref<3x192x128xf32, #tpu.memory_space<vmem>>, vector<1x192x128xf32>
    %101 = vector.shape_cast %100 : vector<1x192x128xf32> to vector<192x128xf32>
    %cst_80 = arith.constant dense<0.000000e+00> : vector<64x128xf32>
    %102 = tpu.matmul %99, %101, %cst_80 {dimension_numbers = #tpu.dot_dimension_numbers<[1], [0], [0], [1], [0, 0, 1, 1], [], []>} : vector<64x192xf32>, vector<192x128xf32>, vector<64x128xf32> -> vector<64x128xf32>
    %103 = arith.addf %93, %102 : vector<64x128xf32>
    %104 = vector.extract_strided_slice %92 {offsets = [1, 0, 0], sizes = [8, 10, 64], strides = [1, 1, 1]} : vector<10x10x64xf32> to vector<8x10x64xf32>
    %105 = vector.extract_strided_slice %104 {offsets = [0, 0, 0], sizes = [8, 8, 64], strides = [1, 1, 1]} : vector<8x10x64xf32> to vector<8x8x64xf32>
    %106 = vector.extract_strided_slice %104 {offsets = [0, 1, 0], sizes = [8, 8, 64], strides = [1, 1, 1]} : vector<8x10x64xf32> to vector<8x8x64xf32>
    %107 = vector.extract_strided_slice %104 {offsets = [0, 2, 0], sizes = [8, 8, 64], strides = [1, 1, 1]} : vector<8x10x64xf32> to vector<8x8x64xf32>
    %108 = tpu.concatenate %105, %106, %107 in 2 : vector<8x8x64xf32>, vector<8x8x64xf32>, vector<8x8x64xf32> -> vector<8x8x192xf32>
    %109 = vector.shape_cast %108 : vector<8x8x192xf32> to vector<64x192xf32>
    %c1_81 = arith.constant 1 : index
    %c0_82 = arith.constant 0 : index
    %c0_83 = arith.constant 0 : index
    %110 = vector.load %arg6[%c1_81, %c0_82, %c0_83] : memref<3x192x128xf32, #tpu.memory_space<vmem>>, vector<1x192x128xf32>
    %111 = vector.shape_cast %110 : vector<1x192x128xf32> to vector<192x128xf32>
    %cst_84 = arith.constant dense<0.000000e+00> : vector<64x128xf32>
    %112 = tpu.matmul %109, %111, %cst_84 {dimension_numbers = #tpu.dot_dimension_numbers<[1], [0], [0], [1], [0, 0, 1, 1], [], []>} : vector<64x192xf32>, vector<192x128xf32>, vector<64x128xf32> -> vector<64x128xf32>
    %113 = arith.addf %103, %112 : vector<64x128xf32>
    %114 = vector.extract_strided_slice %92 {offsets = [2, 0, 0], sizes = [8, 10, 64], strides = [1, 1, 1]} : vector<10x10x64xf32> to vector<8x10x64xf32>
    %115 = vector.extract_strided_slice %114 {offsets = [0, 0, 0], sizes = [8, 8, 64], strides = [1, 1, 1]} : vector<8x10x64xf32> to vector<8x8x64xf32>
    %116 = vector.extract_strided_slice %114 {offsets = [0, 1, 0], sizes = [8, 8, 64], strides = [1, 1, 1]} : vector<8x10x64xf32> to vector<8x8x64xf32>
    %117 = vector.extract_strided_slice %114 {offsets = [0, 2, 0], sizes = [8, 8, 64], strides = [1, 1, 1]} : vector<8x10x64xf32> to vector<8x8x64xf32>
    %118 = tpu.concatenate %115, %116, %117 in 2 : vector<8x8x64xf32>, vector<8x8x64xf32>, vector<8x8x64xf32> -> vector<8x8x192xf32>
    %119 = vector.shape_cast %118 : vector<8x8x192xf32> to vector<64x192xf32>
    %c2_85 = arith.constant 2 : index
    %c0_86 = arith.constant 0 : index
    %c0_87 = arith.constant 0 : index
    %120 = vector.load %arg6[%c2_85, %c0_86, %c0_87] : memref<3x192x128xf32, #tpu.memory_space<vmem>>, vector<1x192x128xf32>
    %121 = vector.shape_cast %120 : vector<1x192x128xf32> to vector<192x128xf32>
    %cst_88 = arith.constant dense<0.000000e+00> : vector<64x128xf32>
    %122 = tpu.matmul %119, %121, %cst_88 {dimension_numbers = #tpu.dot_dimension_numbers<[1], [0], [0], [1], [0, 0, 1, 1], [], []>} : vector<64x192xf32>, vector<192x128xf32>, vector<64x128xf32> -> vector<64x128xf32>
    %123 = arith.addf %113, %122 : vector<64x128xf32>
    %c0_89 = arith.constant 0 : index
    %c0_90 = arith.constant 0 : index
    %124 = vector.load %arg7[%c0_89, %c0_90] : memref<1x128xf32, #tpu.memory_space<vmem>>, vector<1x128xf32>
    %125 = vector.broadcast %124 : vector<1x128xf32> to vector<64x128xf32>
    %126 = arith.addf %123, %125 : vector<64x128xf32>
    %cst_91 = arith.constant 0.000000e+00 : f32
    %127 = vector.broadcast %cst_91 : f32 to vector<64x128xf32>
    %128 = arith.maximumf %126, %127 : vector<64x128xf32>
    %129 = vector.shape_cast %128 : vector<64x128xf32> to vector<4x2x4x2x128xf32>
    %cst_92 = arith.constant dense<0xFF800000> : vector<4x4x128xf32>
    %130 = vector.multi_reduction <maximumf>, %129, %cst_92 [1, 3] : vector<4x2x4x2x128xf32> to vector<4x4x128xf32>
    %c0_93 = arith.constant 0 : index
    %c0_94 = arith.constant 0 : index
    %c0_95 = arith.constant 0 : index
    %c0_96 = arith.constant 0 : index
    %131 = vector.load %arg8[%c0_93, %c0_94, %c0_95, %c0_96] : memref<1x4x4x128xf32, #tpu.memory_space<vmem>>, vector<1x4x4x128xf32>
    %132 = vector.shape_cast %131 : vector<1x4x4x128xf32> to vector<4x4x128xf32>
    %133 = vector.shape_cast %130 : vector<4x4x128xf32> to vector<1x4x4x128xf32>
    tpu.vector_store %arg8[%c0_93, %c0_94, %c0_95, %c0_96], %133 {strides = array<i32>} : memref<1x4x4x128xf32, #tpu.memory_space<vmem>>, vector<1x4x4x128xf32>,
    return
  }
  func.func @transform_0(%arg0: i32) -> (i32, i32, i32) {
    %c0_i32 = arith.constant 0 : i32
    %c0_i32_0 = arith.constant 0 : i32
    %c0_i32_1 = arith.constant 0 : i32
    return %arg0, %c0_i32, %c0_i32_0 : i32, i32, i32
  }
  func.func @transform_1(%arg0: i32) -> (i32, i32) {
    %c0_i32 = arith.constant 0 : i32
    %c0_i32_0 = arith.constant 0 : i32
    %c0_i32_1 = arith.constant 0 : i32
    return %c0_i32, %c0_i32_0 : i32, i32
  }
  func.func @transform_2(%arg0: i32) -> (i32, i32) {
    %c0_i32 = arith.constant 0 : i32
    %c0_i32_0 = arith.constant 0 : i32
    %c0_i32_1 = arith.constant 0 : i32
    return %c0_i32, %c0_i32_0 : i32, i32
  }
  func.func @transform_3(%arg0: i32) -> (i32, i32, i32) {
    %c0_i32 = arith.constant 0 : i32
    %c0_i32_0 = arith.constant 0 : i32
    %c0_i32_1 = arith.constant 0 : i32
    %c0_i32_2 = arith.constant 0 : i32
    return %c0_i32, %c0_i32_0, %c0_i32_1 : i32, i32, i32
  }
  func.func @transform_4(%arg0: i32) -> (i32, i32) {
    %c0_i32 = arith.constant 0 : i32
    %c0_i32_0 = arith.constant 0 : i32
    %c0_i32_1 = arith.constant 0 : i32
    return %c0_i32, %c0_i32_0 : i32, i32
  }
  func.func @transform_5(%arg0: i32) -> (i32, i32, i32) {
    %c0_i32 = arith.constant 0 : i32
    %c0_i32_0 = arith.constant 0 : i32
    %c0_i32_1 = arith.constant 0 : i32
    %c0_i32_2 = arith.constant 0 : i32
    return %c0_i32, %c0_i32_0, %c0_i32_1 : i32, i32, i32
  }
  func.func @transform_6(%arg0: i32) -> (i32, i32) {
    %c0_i32 = arith.constant 0 : i32
    %c0_i32_0 = arith.constant 0 : i32
    %c0_i32_1 = arith.constant 0 : i32
    return %c0_i32, %c0_i32_0 : i32, i32
  }
  func.func @transform_7(%arg0: i32) -> (i32, i32, i32, i32) {
    %c0_i32 = arith.constant 0 : i32
    %c0_i32_0 = arith.constant 0 : i32
    %c0_i32_1 = arith.constant 0 : i32
    %c0_i32_2 = arith.constant 0 : i32
    return %arg0, %c0_i32, %c0_i32_0, %c0_i32_1 : i32, i32, i32, i32
  }
}

module attributes {stable_mosaic.version = 11 : i64} {
  func.func @mlp_kernel(%arg0: i32, %arg1: memref<2x2048xf32, #tpu.memory_space<vmem>>, %arg2: memref<2048x512xf32, #tpu.memory_space<vmem>>, %arg3: memref<1x512xf32, #tpu.memory_space<vmem>>, %arg4: memref<512x256xf32, #tpu.memory_space<vmem>>, %arg5: memref<1x256xf32, #tpu.memory_space<vmem>>, %arg6: memref<256x10xf32, #tpu.memory_space<vmem>>, %arg7: memref<1x10xf32, #tpu.memory_space<vmem>>, %arg8: memref<2x10xf32, #tpu.memory_space<vmem>>) attributes {dimension_semantics = [#tpu.dimension_semantics<parallel>], iteration_bounds = array<i64: 1>, scalar_prefetch = 0 : i64, scratch_operands = 0 : i64, tpu.core_type = #tpu.core_type<tc>, window_params = [{transform_indices = @transform_0, window_bounds = array<i64: 2, 2048>}, {pipeline_mode = #tpu.pipeline_mode<synchronous>, transform_indices = @transform_1, window_bounds = array<i64: 2048, 512>}, {pipeline_mode = #tpu.pipeline_mode<synchronous>, transform_indices = @transform_2, window_bounds = array<i64: 1, 512>}, {pipeline_mode = #tpu.pipeline_mode<synchronous>, transform_indices = @transform_3, window_bounds = array<i64: 512, 256>}, {pipeline_mode = #tpu.pipeline_mode<synchronous>, transform_indices = @transform_4, window_bounds = array<i64: 1, 256>}, {pipeline_mode = #tpu.pipeline_mode<synchronous>, transform_indices = @transform_5, window_bounds = array<i64: 256, 10>}, {pipeline_mode = #tpu.pipeline_mode<synchronous>, transform_indices = @transform_6, window_bounds = array<i64: 1, 10>}, {transform_indices = @transform_7, window_bounds = array<i64: 2, 10>}]} {
    %c0 = arith.constant 0 : index
    %c0_0 = arith.constant 0 : index
    %0 = vector.load %arg1[%c0, %c0_0] : memref<2x2048xf32, #tpu.memory_space<vmem>>, vector<2x2048xf32>
    %c0_1 = arith.constant 0 : index
    %c0_2 = arith.constant 0 : index
    %1 = vector.load %arg2[%c0_1, %c0_2] : memref<2048x512xf32, #tpu.memory_space<vmem>>, vector<2048x512xf32>
    %cst = arith.constant dense<0.000000e+00> : vector<2x512xf32>
    %2 = tpu.matmul %0, %1, %cst {dimension_numbers = #tpu.dot_dimension_numbers<[1], [0], [0], [1], [0, 0, 1, 1], [], []>} : vector<2x2048xf32>, vector<2048x512xf32>, vector<2x512xf32> -> vector<2x512xf32>
    %c0_3 = arith.constant 0 : index
    %c0_4 = arith.constant 0 : index
    %3 = vector.load %arg3[%c0_3, %c0_4] : memref<1x512xf32, #tpu.memory_space<vmem>>, vector<1x512xf32>
    %4 = vector.broadcast %3 : vector<1x512xf32> to vector<2x512xf32>
    %5 = arith.addf %2, %4 : vector<2x512xf32>
    %cst_5 = arith.constant 0.000000e+00 : f32
    %6 = vector.broadcast %cst_5 : f32 to vector<2x512xf32>
    %7 = arith.maximumf %5, %6 : vector<2x512xf32>
    %c0_6 = arith.constant 0 : index
    %c0_7 = arith.constant 0 : index
    %8 = vector.load %arg4[%c0_6, %c0_7] : memref<512x256xf32, #tpu.memory_space<vmem>>, vector<512x256xf32>
    %cst_8 = arith.constant dense<0.000000e+00> : vector<2x256xf32>
    %9 = tpu.matmul %7, %8, %cst_8 {dimension_numbers = #tpu.dot_dimension_numbers<[1], [0], [0], [1], [0, 0, 1, 1], [], []>} : vector<2x512xf32>, vector<512x256xf32>, vector<2x256xf32> -> vector<2x256xf32>
    %c0_9 = arith.constant 0 : index
    %c0_10 = arith.constant 0 : index
    %10 = vector.load %arg5[%c0_9, %c0_10] : memref<1x256xf32, #tpu.memory_space<vmem>>, vector<1x256xf32>
    %11 = vector.broadcast %10 : vector<1x256xf32> to vector<2x256xf32>
    %12 = arith.addf %9, %11 : vector<2x256xf32>
    %cst_11 = arith.constant 0.000000e+00 : f32
    %13 = vector.broadcast %cst_11 : f32 to vector<2x256xf32>
    %14 = arith.maximumf %12, %13 : vector<2x256xf32>
    %c0_12 = arith.constant 0 : index
    %c0_13 = arith.constant 0 : index
    %15 = vector.load %arg6[%c0_12, %c0_13] : memref<256x10xf32, #tpu.memory_space<vmem>>, vector<256x10xf32>
    %cst_14 = arith.constant dense<0.000000e+00> : vector<2x10xf32>
    %16 = tpu.matmul %14, %15, %cst_14 {dimension_numbers = #tpu.dot_dimension_numbers<[1], [0], [0], [1], [0, 0, 1, 1], [], []>} : vector<2x256xf32>, vector<256x10xf32>, vector<2x10xf32> -> vector<2x10xf32>
    %c0_15 = arith.constant 0 : index
    %c0_16 = arith.constant 0 : index
    %17 = vector.load %arg7[%c0_15, %c0_16] : memref<1x10xf32, #tpu.memory_space<vmem>>, vector<1x10xf32>
    %18 = vector.broadcast %17 : vector<1x10xf32> to vector<2x10xf32>
    %19 = arith.addf %16, %18 : vector<2x10xf32>
    %c0_17 = arith.constant 0 : index
    %c0_18 = arith.constant 0 : index
    %20 = vector.load %arg8[%c0_17, %c0_18] : memref<2x10xf32, #tpu.memory_space<vmem>>, vector<2x10xf32>
    tpu.vector_store %arg8[%c0_17, %c0_18], %19 {strides = array<i32>} : memref<2x10xf32, #tpu.memory_space<vmem>>, vector<2x10xf32>,
    return
  }
  func.func @transform_0(%arg0: i32) -> (i32, i32) {
    %c0_i32 = arith.constant 0 : i32
    %c0_i32_0 = arith.constant 0 : i32
    return %arg0, %c0_i32 : i32, i32
  }
  func.func @transform_1(%arg0: i32) -> (i32, i32) {
    %c0_i32 = arith.constant 0 : i32
    %c0_i32_0 = arith.constant 0 : i32
    %c0_i32_1 = arith.constant 0 : i32
    return %c0_i32, %c0_i32_0 : i32, i32
  }
  func.func @transform_2(%arg0: i32) -> (i32, i32) {
    %c0_i32 = arith.constant 0 : i32
    %c0_i32_0 = arith.constant 0 : i32
    %c0_i32_1 = arith.constant 0 : i32
    return %c0_i32, %c0_i32_0 : i32, i32
  }
  func.func @transform_3(%arg0: i32) -> (i32, i32) {
    %c0_i32 = arith.constant 0 : i32
    %c0_i32_0 = arith.constant 0 : i32
    %c0_i32_1 = arith.constant 0 : i32
    return %c0_i32, %c0_i32_0 : i32, i32
  }
  func.func @transform_4(%arg0: i32) -> (i32, i32) {
    %c0_i32 = arith.constant 0 : i32
    %c0_i32_0 = arith.constant 0 : i32
    %c0_i32_1 = arith.constant 0 : i32
    return %c0_i32, %c0_i32_0 : i32, i32
  }
  func.func @transform_5(%arg0: i32) -> (i32, i32) {
    %c0_i32 = arith.constant 0 : i32
    %c0_i32_0 = arith.constant 0 : i32
    %c0_i32_1 = arith.constant 0 : i32
    return %c0_i32, %c0_i32_0 : i32, i32
  }
  func.func @transform_6(%arg0: i32) -> (i32, i32) {
    %c0_i32 = arith.constant 0 : i32
    %c0_i32_0 = arith.constant 0 : i32
    %c0_i32_1 = arith.constant 0 : i32
    return %c0_i32, %c0_i32_0 : i32, i32
  }
  func.func @transform_7(%arg0: i32) -> (i32, i32) {
    %c0_i32 = arith.constant 0 : i32
    %c0_i32_0 = arith.constant 0 : i32
    return %arg0, %c0_i32 : i32, i32
  }
}

</mosaic_0001>

<llo_original>
// kernel: cnn_forward.3
$region0: #{cnn_forward.3}
  #allocation0 [shape = 'u32[]', space=smem, size = 0x4, offset = 0x4, fixed_abs, tag = 'smem constant byte address 0x4 - core index']
  #allocation1 [shape = 'u32[72,128]{1,0:T(1,128)}', space=vmem, size = 0x9000, scoped, tag = 'internal scratch']
  %s0 = inlined_call_operand.vmem [shape: f32[2,2048], index: 0, kind: input, shape index: {}]
  %s1 = inlined_call_operand.hbm [shape: f32[2048,512], index: 1, kind: input, shape index: {}]
  %s2 = inlined_call_operand.hbm [shape: f32[1,512], index: 2, kind: input, shape index: {}]
  %s3 = inlined_call_operand.hbm [shape: f32[512,256], index: 3, kind: input, shape index: {}]
  %s4 = inlined_call_operand.hbm [shape: f32[1,256], index: 4, kind: input, shape index: {}]
  %s5 = inlined_call_operand.vmem [shape: f32[256,10], index: 5, kind: input, shape index: {}]
  %s6 = inlined_call_operand.hbm [shape: f32[1,10], index: 6, kind: input, shape index: {}]
  %s7 = inlined_call_operand.hbm [shape: f32[2,10], index: 7, kind: output, shape index: {}]
  %s8 = sld [smem:[#allocation0]]
  $region58: #{cnn_forward.3} parent=0
    _
  %s10 = ssub.s32 1, %s8
  %s11 = scalar_select 0, %s10, %s8
  $region1: #{cnn_forward.3} parent=0
    #allocation2 [shape = 'u8[4194304]{0}', space=vmem, size = 0x400000, scoped, tag = 'input window, operand 1, single buffered']
    #allocation3 [shape = 's32[1]{0}', space=sflag, size = 0x4, scoped, tag = 'scoped memory for cnn_forward.3']
    #allocation4 [shape = 's32[1]{0}', space=sflag, size = 0x4, scoped, tag = 'scoped memory for cnn_forward.3']
    #allocation5 [shape = 'u8[2048]{0}', space=vmem, size = 0x800, scoped, tag = 'input window, operand 2, single buffered']
    #allocation6 [shape = 's32[1]{0}', space=sflag, size = 0x4, scoped, tag = 'scoped memory for cnn_forward.3']
    #allocation7 [shape = 'u8[524288]{0}', space=vmem, size = 0x80000, scoped, tag = 'input window, operand 3, single buffered']
    #allocation8 [shape = 'u8[1024]{0}', space=vmem, size = 0x400, scoped, tag = 'input window, operand 4, single buffered']
    #allocation9 [shape = 's32[1]{0}', space=sflag, size = 0x4, scoped, tag = 'scoped memory for cnn_forward.3']
    #allocation10 [shape = 'u8[512]{0}', space=vmem, size = 0x400, scoped, tag = 'input window, operand 6, single buffered']
    #allocation11 [shape = 'u8[1024]{0}', space=vmem, size = 0x400, scoped, tag = 'output window, operand 0, single buffered']
    %12 = vsyncpa [#allocation3], 0
    %13 = vsyncpa [#allocation6], 0
    %14 = vsyncpa [#allocation9], 0
    %15 = vsyncpa [#allocation4], 0
    // Predicated region
    $region2: #{cnn_forward.3} parent=1 // pred_check
      _
    $region3: #{cnn_forward.3} parent=1 // pred_check_branch
      %17 = sbr.rel (0) target = $region5
    $region4: #{cnn_forward.3} parent=1 // pred_region
      _
    $region5: #{cnn_forward.3} parent=1 // pred_fallthru
      _
    // Predicated region
    $region6: #{cnn_forward.3} parent=1 // pred_check
      _
    $region7: #{cnn_forward.3} parent=1 // pred_check_branch
      %19 = sbr.rel (0) target = $region9
    $region8: #{cnn_forward.3} parent=1 // pred_region
      %21 = vsyncadd [#allocation3], 0
      %s22 = sshll.u32 %s1, 4
      %s23 = int_to_ptr.hbm [resolvable:$true] %s22
      %s24 = sshll.u32 [#allocation2], 4
      %s25 = int_to_ptr.vmem [resolvable:$true] %s24
      %30 = dma.hbm_to_vmem [thread:$0]  %s23, 131072, %s25, [#allocation3], 512, 512, 32
    $region9: #{cnn_forward.3} parent=1 // pred_fallthru
      _
    // Predicated region
    $region10: #{cnn_forward.3} parent=1 // pred_check
      _
    $region11: #{cnn_forward.3} parent=1 // pred_check_branch
      %32 = sbr.rel (0) target = $region13
    $region12: #{cnn_forward.3} parent=1 // pred_region
      %34 = vsyncadd [#allocation6], 0
      %s36 = sshll.u32 %s2, 4
      %s37 = int_to_ptr.hbm [resolvable:$true] %s36
      %s38 = sshll.u32 [#allocation5], 4
      %s39 = int_to_ptr.vmem [resolvable:$true] %s38
      %41 = dma.hbm_to_vmem [thread:$0]  %s37, 64, %s39, [#allocation6]
    $region13: #{cnn_forward.3} parent=1 // pred_fallthru
      _
    // Predicated region
    $region14: #{cnn_forward.3} parent=1 // pred_check
      _
    $region15: #{cnn_forward.3} parent=1 // pred_check_branch
      %43 = sbr.rel (0) target = $region17
    $region16: #{cnn_forward.3} parent=1 // pred_region
      %45 = vsyncadd [#allocation6], 0
      %s46 = sshll.u32 %s3, 4
      %s47 = int_to_ptr.hbm [resolvable:$true] %s46
      %s48 = sshll.u32 [#allocation7], 4
      %s49 = int_to_ptr.vmem [resolvable:$true] %s48
      %54 = dma.hbm_to_vmem [thread:$0]  %s47, 16384, %s49, [#allocation6], 256, 256, 16
    $region17: #{cnn_forward.3} parent=1 // pred_fallthru
      _
    // Predicated region
    $region18: #{cnn_forward.3} parent=1 // pred_check
      _
    $region19: #{cnn_forward.3} parent=1 // pred_check_branch
      %56 = sbr.rel (0) target = $region21
    $region20: #{cnn_forward.3} parent=1 // pred_region
      %58 = vsyncadd [#allocation9], 0
      %s60 = sshll.u32 %s4, 4
      %s61 = int_to_ptr.hbm [resolvable:$true] %s60
      %s62 = sshll.u32 [#allocation8], 4
      %s63 = int_to_ptr.vmem [resolvable:$true] %s62
      %65 = dma.hbm_to_vmem [thread:$0]  %s61, 32, %s63, [#allocation9]
    $region21: #{cnn_forward.3} parent=1 // pred_fallthru
      _
    // Predicated region
    $region22: #{cnn_forward.3} parent=1 // pred_check
      _
    $region23: #{cnn_forward.3} parent=1 // pred_check_branch
      %67 = sbr.rel (0) target = $region25
    $region24: #{cnn_forward.3} parent=1 // pred_region
      _
    $region25: #{cnn_forward.3} parent=1 // pred_fallthru
      _
    // Predicated region
    $region26: #{cnn_forward.3} parent=1 // pred_check
      _
    $region27: #{cnn_forward.3} parent=1 // pred_check_branch
      %69 = sbr.rel (0) target = $region29
    $region28: #{cnn_forward.3} parent=1 // pred_region
      %71 = vsyncadd [#allocation9], 0
      %s73 = sshll.u32 %s6, 4
      %s74 = int_to_ptr.hbm [resolvable:$true] %s73
      %s75 = sshll.u32 [#allocation10], 4
      %s76 = int_to_ptr.vmem [resolvable:$true] %s75
      %78 = dma.hbm_to_vmem [thread:$0]  %s74, 16, %s76, [#allocation9]
    $region29: #{cnn_forward.3} parent=1 // pred_fallthru
      _
    // Predicated region
    $region30: #{cnn_forward.3} parent=1 // pred_check
      _
    $region31: #{cnn_forward.3} parent=1 // pred_check_branch
      %80 = sbr.rel (0) target = $region33
    $region32: #{cnn_forward.3} parent=1 // pred_region
      %82 = dma.done [#allocation3], 131072
    $region33: #{cnn_forward.3} parent=1 // pred_fallthru
      _
    // Predicated region
    $region34: #{cnn_forward.3} parent=1 // pred_check
      _
    $region35: #{cnn_forward.3} parent=1 // pred_check_branch
      %84 = sbr.rel (0) target = $region37
    $region36: #{cnn_forward.3} parent=1 // pred_region
      %86 = dma.done [#allocation6], 64
    $region37: #{cnn_forward.3} parent=1 // pred_fallthru
      _
    // Predicated region
    $region38: #{cnn_forward.3} parent=1 // pred_check
      _
    $region39: #{cnn_forward.3} parent=1 // pred_check_branch
      %88 = sbr.rel (0) target = $region41
    $region40: #{cnn_forward.3} parent=1 // pred_region
      %90 = dma.done [#allocation6], 16384
    $region41: #{cnn_forward.3} parent=1 // pred_fallthru
      _
    // Predicated region
    $region42: #{cnn_forward.3} parent=1 // pred_check
      _
    $region43: #{cnn_forward.3} parent=1 // pred_check_branch
      %92 = sbr.rel (0) target = $region45
    $region44: #{cnn_forward.3} parent=1 // pred_region
      %94 = dma.done [#allocation9], 32
    $region45: #{cnn_forward.3} parent=1 // pred_fallthru
      _
    // Predicated region
    $region46: #{cnn_forward.3} parent=1 // pred_check
      _
    $region47: #{cnn_forward.3} parent=1 // pred_check_branch
      %96 = sbr.rel (0) target = $region49
    $region48: #{cnn_forward.3} parent=1 // pred_region
      %98 = dma.done [#allocation9], 16
    $region49: #{cnn_forward.3} parent=1 // pred_fallthru
      _
    %v99 = vld [vmem:[%s0] sm:$0xff]
    %v100 = vld [vmem:[%s0 + $0x8] sm:$0xff]
    %v101 = vld [vmem:[%s0 + $0x10] sm:$0xff]
    %v102 = vld [vmem:[%s0 + $0x18] sm:$0xff]
    %v103 = vld [vmem:[#allocation2] sm:$0xff]
    %v104 = vld [vmem:[#allocation2 + $0x8] sm:$0xff]
    %v105 = vld [vmem:[#allocation2 + $0x10] sm:$0xff]
    %v106 = vld [vmem:[#allocation2 + $0x18] sm:$0xff]
    %v107 = vld [vmem:[#allocation2 + $0x20] sm:$0xff]
    %v108 = vld [vmem:[#allocation2 + $0x28] sm:$0xff]
    %v109 = vld [vmem:[#allocation2 + $0x30] sm:$0xff]
    %v110 = vld [vmem:[#allocation2 + $0x38] sm:$0xff]
    %v111 = vld [vmem:[#allocation2 + $0x40] sm:$0xff]
    %v112 = vld [vmem:[#allocation2 + $0x48] sm:$0xff]
    %v113 = vld [vmem:[#allocation2 + $0x50] sm:$0xff]
    %v114 = vld [vmem:[#allocation2 + $0x58] sm:$0xff]
    %v115 = vld [vmem:[#allocation2 + $0x60] sm:$0xff]
    %v116 = vld [vmem:[#allocation2 + $0x68] sm:$0xff]
    %v117 = vld [vmem:[#allocation2 + $0x70] sm:$0xff]
    %v118 = vld [vmem:[#allocation2 + $0x78] sm:$0xff]
    %v119 = vld [vmem:[#allocation2 + $0x80] sm:$0xff]
    %v120 = vld [vmem:[#allocation2 + $0x88] sm:$0xff]
    %v121 = vld [vmem:[#allocation2 + $0x90] sm:$0xff]
    %v122 = vld [vmem:[#allocation2 + $0x98] sm:$0xff]
    %v123 = vld [vmem:[#allocation2 + $0xa0] sm:$0xff]
    %v124 = vld [vmem:[#allocation2 + $0xa8] sm:$0xff]
    %v125 = vld [vmem:[#allocation2 + $0xb0] sm:$0xff]
    %v126 = vld [vmem:[#allocation2 + $0xb8] sm:$0xff]
    %v127 = vld [vmem:[#allocation2 + $0xc0] sm:$0xff]
    %v128 = vld [vmem:[#allocation2 + $0xc8] sm:$0xff]
    %v129 = vld [vmem:[#allocation2 + $0xd0] sm:$0xff]
    %v130 = vld [vmem:[#allocation2 + $0xd8] sm:$0xff]
    %v131 = vld [vmem:[#allocation2 + $0xe0] sm:$0xff]
    %v132 = vld [vmem:[#allocation2 + $0xe8] sm:$0xff]
    %v133 = vld [vmem:[#allocation2 + $0xf0] sm:$0xff]
    %v134 = vld [vmem:[#allocation2 + $0xf8] sm:$0xff]
    %v135 = vld [vmem:[#allocation2 + $0x100] sm:$0xff]
    %v136 = vld [vmem:[#allocation2 + $0x108] sm:$0xff]
    %v137 = vld [vmem:[#allocation2 + $0x110] sm:$0xff]
    %v138 = vld [vmem:[#allocation2 + $0x118] sm:$0xff]
    %v139 = vld [vmem:[#allocation2 + $0x120] sm:$0xff]
    %v140 = vld [vmem:[#allocation2 + $0x128] sm:$0xff]
    %v141 = vld [vmem:[#allocation2 + $0x130] sm:$0xff]
    %v142 = vld [vmem:[#allocation2 + $0x138] sm:$0xff]
    %v143 = vld [vmem:[#allocation2 + $0x140] sm:$0xff]
    %v144 = vld [vmem:[#allocation2 + $0x148] sm:$0xff]
    %v145 = vld [vmem:[#allocation2 + $0x150] sm:$0xff]
    %v146 = vld [vmem:[#allocation2 + $0x158] sm:$0xff]
    %v147 = vld [vmem:[#allocation2 + $0x160] sm:$0xff]
    %v148 = vld [vmem:[#allocation2 + $0x168] sm:$0xff]
    %v149 = vld [vmem:[#allocation2 + $0x170] sm:$0xff]
    %v150 = vld [vmem:[#allocation2 + $0x178] sm:$0xff]
    %v151 = vld [vmem:[#allocation2 + $0x180] sm:$0xff]
    %v152 = vld [vmem:[#allocation2 + $0x188] sm:$0xff]
    %v153 = vld [vmem:[#allocation2 + $0x190] sm:$0xff]
    %v154 = vld [vmem:[#allocation2 + $0x198] sm:$0xff]
    %v155 = vld [vmem:[#allocation2 + $0x1a0] sm:$0xff]
    %v156 = vld [vmem:[#allocation2 + $0x1a8] sm:$0xff]
    %v157 = vld [vmem:[#allocation2 + $0x1b0] sm:$0xff]
    %v158 = vld [vmem:[#allocation2 + $0x1b8] sm:$0xff]
    %v159 = vld [vmem:[#allocation2 + $0x1c0] sm:$0xff]
    %v160 = vld [vmem:[#allocation2 + $0x1c8] sm:$0xff]
    %v161 = vld [vmem:[#allocation2 + $0x1d0] sm:$0xff]
    %v162 = vld [vmem:[#allocation2 + $0x1d8] sm:$0xff]
    %v163 = vld [vmem:[#allocation2 + $0x1e0] sm:$0xff]
    %v164 = vld [vmem:[#allocation2 + $0x1e8] sm:$0xff]
    %v165 = vld [vmem:[#allocation2 + $0x1f0] sm:$0xff]
    %v166 = vld [vmem:[#allocation2 + $0x1f8] sm:$0xff]
    %v167 = vld [vmem:[#allocation2 + $0x200] sm:$0xff]
    %v168 = vld [vmem:[#allocation2 + $0x208] sm:$0xff]
    %v169 = vld [vmem:[#allocation2 + $0x210] sm:$0xff]
    %v170 = vld [vmem:[#allocation2 + $0x218] sm:$0xff]
    %v171 = vld [vmem:[#allocation2 + $0x220] sm:$0xff]
    %v172 = vld [vmem:[#allocation2 + $0x228] sm:$0xff]
    %v173 = vld [vmem:[#allocation2 + $0x230] sm:$0xff]
    %v174 = vld [vmem:[#allocation2 + $0x238] sm:$0xff]
    %v175 = vld [vmem:[#allocation2 + $0x240] sm:$0xff]
    %v176 = vld [vmem:[#allocation2 + $0x248] sm:$0xff]
    %v177 = vld [vmem:[#allocation2 + $0x250] sm:$0xff]
    %v178 = vld [vmem:[#allocation2 + $0x258] sm:$0xff]
    %v179 = vld [vmem:[#allocation2 + $0x260] sm:$0xff]
    %v180 = vld [vmem:[#allocation2 + $0x268] sm:$0xff]
    %v181 = vld [vmem:[#allocation2 + $0x270] sm:$0xff]
    %v182 = vld [vmem:[#allocation2 + $0x278] sm:$0xff]
    %v183 = vld [vmem:[#allocation2 + $0x280] sm:$0xff]
    %v184 = vld [vmem:[#allocation2 + $0x288] sm:$0xff]
    %v185 = vld [vmem:[#allocation2 + $0x290] sm:$0xff]
    %v186 = vld [vmem:[#allocation2 + $0x298] sm:$0xff]
    %v187 = vld [vmem:[#allocation2 + $0x2a0] sm:$0xff]
    %v188 = vld [vmem:[#allocation2 + $0x2a8] sm:$0xff]
    %v189 = vld [vmem:[#allocation2 + $0x2b0] sm:$0xff]
    %v190 = vld [vmem:[#allocation2 + $0x2b8] sm:$0xff]
    %v191 = vld [vmem:[#allocation2 + $0x2c0] sm:$0xff]
    %v192 = vld [vmem:[#allocation2 + $0x2c8] sm:$0xff]
    %v193 = vld [vmem:[#allocation2 + $0x2d0] sm:$0xff]
    %v194 = vld [vmem:[#allocation2 + $0x2d8] sm:$0xff]
    %v195 = vld [vmem:[#allocation2 + $0x2e0] sm:$0xff]
    %v196 = vld [vmem:[#allocation2 + $0x2e8] sm:$0xff]
    %v197 = vld [vmem:[#allocation2 + $0x2f0] sm:$0xff]
    %v198 = vld [vmem:[#allocation2 + $0x2f8] sm:$0xff]
    %v199 = vld [vmem:[#allocation2 + $0x300] sm:$0xff]
    %v200 = vld [vmem:[#allocation2 + $0x308] sm:$0xff]
    %v201 = vld [vmem:[#allocation2 + $0x310] sm:$0xff]
    %v202 = vld [vmem:[#allocation2 + $0x318] sm:$0xff]
    %v203 = vld [vmem:[#allocation2 + $0x320] sm:$0xff]
    %v204 = vld [vmem:[#allocation2 + $0x328] sm:$0xff]
    %v205 = vld [vmem:[#allocation2 + $0x330] sm:$0xff]
    %v206 = vld [vmem:[#allocation2 + $0x338] sm:$0xff]
    %v207 = vld [vmem:[#allocation2 + $0x340] sm:$0xff]
    %v208 = vld [vmem:[#allocation2 + $0x348] sm:$0xff]
    %v209 = vld [vmem:[#allocation2 + $0x350] sm:$0xff]
    %v210 = vld [vmem:[#allocation2 + $0x358] sm:$0xff]
    %v211 = vld [vmem:[#allocation2 + $0x360] sm:$0xff]
    %v212 = vld [vmem:[#allocation2 + $0x368] sm:$0xff]
    %v213 = vld [vmem:[#allocation2 + $0x370] sm:$0xff]
    %v214 = vld [vmem:[#allocation2 + $0x378] sm:$0xff]
    %v215 = vld [vmem:[#allocation2 + $0x380] sm:$0xff]
    %v216 = vld [vmem:[#allocation2 + $0x388] sm:$0xff]
    %v217 = vld [vmem:[#allocation2 + $0x390] sm:$0xff]
    %v218 = vld [vmem:[#allocation2 + $0x398] sm:$0xff]
    %v219 = vld [vmem:[#allocation2 + $0x3a0] sm:$0xff]
    %v220 = vld [vmem:[#allocation2 + $0x3a8] sm:$0xff]
    %v221 = vld [vmem:[#allocation2 + $0x3b0] sm:$0xff]
    %v222 = vld [vmem:[#allocation2 + $0x3b8] sm:$0xff]
    %v223 = vld [vmem:[#allocation2 + $0x3c0] sm:$0xff]
    %v224 = vld [vmem:[#allocation2 + $0x3c8] sm:$0xff]
    %v225 = vld [vmem:[#allocation2 + $0x3d0] sm:$0xff]
    %v226 = vld [vmem:[#allocation2 + $0x3d8] sm:$0xff]
    %v227 = vld [vmem:[#allocation2 + $0x3e0] sm:$0xff]
    %v228 = vld [vmem:[#allocation2 + $0x3e8] sm:$0xff]
    %v229 = vld [vmem:[#allocation2 + $0x3f0] sm:$0xff]
    %v230 = vld [vmem:[#allocation2 + $0x3f8] sm:$0xff]
    %v231 = vld [vmem:[#allocation2 + $0x400] sm:$0xff]
    %v232 = vld [vmem:[#allocation2 + $0x408] sm:$0xff]
    %v233 = vld [vmem:[#allocation2 + $0x410] sm:$0xff]
    %v234 = vld [vmem:[#allocation2 + $0x418] sm:$0xff]
    %v235 = vld [vmem:[#allocation2 + $0x420] sm:$0xff]
    %v236 = vld [vmem:[#allocation2 + $0x428] sm:$0xff]
    %v237 = vld [vmem:[#allocation2 + $0x430] sm:$0xff]
    %v238 = vld [vmem:[#allocation2 + $0x438] sm:$0xff]
    %v239 = vld [vmem:[#allocation2 + $0x440] sm:$0xff]
    %v240 = vld [vmem:[#allocation2 + $0x448] sm:$0xff]
    %v241 = vld [vmem:[#allocation2 + $0x450] sm:$0xff]
    %v242 = vld [vmem:[#allocation2 + $0x458] sm:$0xff]
    %v243 = vld [vmem:[#allocation2 + $0x460] sm:$0xff]
    %v244 = vld [vmem:[#allocation2 + $0x468] sm:$0xff]
    %v245 = vld [vmem:[#allocation2 + $0x470] sm:$0xff]
    %v246 = vld [vmem:[#allocation2 + $0x478] sm:$0xff]
    %v247 = vld [vmem:[#allocation2 + $0x480] sm:$0xff]
    %v248 = vld [vmem:[#allocation2 + $0x488] sm:$0xff]
    %v249 = vld [vmem:[#allocation2 + $0x490] sm:$0xff]
    %v250 = vld [vmem:[#allocation2 + $0x498] sm:$0xff]
    %v251 = vld [vmem:[#allocation2 + $0x4a0] sm:$0xff]
    %v252 = vld [vmem:[#allocation2 + $0x4a8] sm:$0xff]
    %v253 = vld [vmem:[#allocation2 + $0x4b0] sm:$0xff]
    %v254 = vld [vmem:[#allocation2 + $0x4b8] sm:$0xff]
    %v255 = vld [vmem:[#allocation2 + $0x4c0] sm:$0xff]
    %v256 = vld [vmem:[#allocation2 + $0x4c8] sm:$0xff]
    %v257 = vld [vmem:[#allocation2 + $0x4d0] sm:$0xff]
    %v258 = vld [vmem:[#allocation2 + $0x4d8] sm:$0xff]
    %v259 = vld [vmem:[#allocation2 + $0x4e0] sm:$0xff]
    %v260 = vld [vmem:[#allocation2 + $0x4e8] sm:$0xff]
    %v261 = vld [vmem:[#allocation2 + $0x4f0] sm:$0xff]
    %v262 = vld [vmem:[#allocation2 + $0x4f8] sm:$0xff]
    %v263 = vld [vmem:[#allocation2 + $0x500] sm:$0xff]
    %v264 = vld [vmem:[#allocation2 + $0x508] sm:$0xff]
    %v265 = vld [vmem:[#allocation2 + $0x510] sm:$0xff]
    %v266 = vld [vmem:[#allocation2 + $0x518] sm:$0xff]
    %v267 = vld [vmem:[#allocation2 + $0x520] sm:$0xff]
    %v268 = vld [vmem:[#allocation2 + $0x528] sm:$0xff]
    %v269 = vld [vmem:[#allocation2 + $0x530] sm:$0xff]
    %v270 = vld [vmem:[#allocation2 + $0x538] sm:$0xff]
    %v271 = vld [vmem:[#allocation2 + $0x540] sm:$0xff]
    %v272 = vld [vmem:[#allocation2 + $0x548] sm:$0xff]
    %v273 = vld [vmem:[#allocation2 + $0x550] sm:$0xff]
    %v274 = vld [vmem:[#allocation2 + $0x558] sm:$0xff]
    %v275 = vld [vmem:[#allocation2 + $0x560] sm:$0xff]
    %v276 = vld [vmem:[#allocation2 + $0x568] sm:$0xff]
    %v277 = vld [vmem:[#allocation2 + $0x570] sm:$0xff]
    %v278 = vld [vmem:[#allocation2 + $0x578] sm:$0xff]
    %v279 = vld [vmem:[#allocation2 + $0x580] sm:$0xff]
    %v280 = vld [vmem:[#allocation2 + $0x588] sm:$0xff]
    %v281 = vld [vmem:[#allocation2 + $0x590] sm:$0xff]
    %v282 = vld [vmem:[#allocation2 + $0x598] sm:$0xff]
    %v283 = vld [vmem:[#allocation2 + $0x5a0] sm:$0xff]
    %v284 = vld [vmem:[#allocation2 + $0x5a8] sm:$0xff]
    %v285 = vld [vmem:[#allocation2 + $0x5b0] sm:$0xff]
    %v286 = vld [vmem:[#allocation2 + $0x5b8] sm:$0xff]
    %v287 = vld [vmem:[#allocation2 + $0x5c0] sm:$0xff]
    %v288 = vld [vmem:[#allocation2 + $0x5c8] sm:$0xff]
    %v289 = vld [vmem:[#allocation2 + $0x5d0] sm:$0xff]
    %v290 = vld [vmem:[#allocation2 + $0x5d8] sm:$0xff]
    %v291 = vld [vmem:[#allocation2 + $0x5e0] sm:$0xff]
    %v292 = vld [vmem:[#allocation2 + $0x5e8] sm:$0xff]
    %v293 = vld [vmem:[#allocation2 + $0x5f0] sm:$0xff]
    %v294 = vld [vmem:[#allocation2 + $0x5f8] sm:$0xff]
    %v295 = vld [vmem:[#allocation2 + $0x600] sm:$0xff]
    %v296 = vld [vmem:[#allocation2 + $0x608] sm:$0xff]
    %v297 = vld [vmem:[#allocation2 + $0x610] sm:$0xff]
    %v298 = vld [vmem:[#allocation2 + $0x618] sm:$0xff]
    %v299 = vld [vmem:[#allocation2 + $0x620] sm:$0xff]
    %v300 = vld [vmem:[#allocation2 + $0x628] sm:$0xff]
    %v301 = vld [vmem:[#allocation2 + $0x630] sm:$0xff]
    %v302 = vld [vmem:[#allocation2 + $0x638] sm:$0xff]
    %v303 = vld [vmem:[#allocation2 + $0x640] sm:$0xff]
    %v304 = vld [vmem:[#allocation2 + $0x648] sm:$0xff]
    %v305 = vld [vmem:[#allocation2 + $0x650] sm:$0xff]
    %v306 = vld [vmem:[#allocation2 + $0x658] sm:$0xff]
    %v307 = vld [vmem:[#allocation2 + $0x660] sm:$0xff]
    %v308 = vld [vmem:[#allocation2 + $0x668] sm:$0xff]
    %v309 = vld [vmem:[#allocation2 + $0x670] sm:$0xff]
    %v310 = vld [vmem:[#allocation2 + $0x678] sm:$0xff]
    %v311 = vld [vmem:[#allocation2 + $0x680] sm:$0xff]
    %v312 = vld [vmem:[#allocation2 + $0x688] sm:$0xff]
    %v313 = vld [vmem:[#allocation2 + $0x690] sm:$0xff]
    %v314 = vld [vmem:[#allocation2 + $0x698] sm:$0xff]
    %v315 = vld [vmem:[#allocation2 + $0x6a0] sm:$0xff]
    %v316 = vld [vmem:[#allocation2 + $0x6a8] sm:$0xff]
    %v317 = vld [vmem:[#allocation2 + $0x6b0] sm:$0xff]
    %v318 = vld [vmem:[#allocation2 + $0x6b8] sm:$0xff]
    %v319 = vld [vmem:[#allocation2 + $0x6c0] sm:$0xff]
    %v320 = vld [vmem:[#allocation2 + $0x6c8] sm:$0xff]
    %v321 = vld [vmem:[#allocation2 + $0x6d0] sm:$0xff]
    %v322 = vld [vmem:[#allocation2 + $0x6d8] sm:$0xff]
    %v323 = vld [vmem:[#allocation2 + $0x6e0] sm:$0xff]
    %v324 = vld [vmem:[#allocation2 + $0x6e8] sm:$0xff]
    %v325 = vld [vmem:[#allocation2 + $0x6f0] sm:$0xff]
    %v326 = vld [vmem:[#allocation2 + $0x6f8] sm:$0xff]
    %v327 = vld [vmem:[#allocation2 + $0x700] sm:$0xff]
    %v328 = vld [vmem:[#allocation2 + $0x708] sm:$0xff]
    %v329 = vld [vmem:[#allocation2 + $0x710] sm:$0xff]
    %v330 = vld [vmem:[#allocation2 + $0x718] sm:$0xff]
    %v331 = vld [vmem:[#allocation2 + $0x720] sm:$0xff]
    %v332 = vld [vmem:[#allocation2 + $0x728] sm:$0xff]
    %v333 = vld [vmem:[#allocation2 + $0x730] sm:$0xff]
    %v334 = vld [vmem:[#allocation2 + $0x738] sm:$0xff]
    %v335 = vld [vmem:[#allocation2 + $0x740] sm:$0xff]
    %v336 = vld [vmem:[#allocation2 + $0x748] sm:$0xff]
    %v337 = vld [vmem:[#allocation2 + $0x750] sm:$0xff]
    %v338 = vld [vmem:[#allocation2 + $0x758] sm:$0xff]
    %v339 = vld [vmem:[#allocation2 + $0x760] sm:$0xff]
    %v340 = vld [vmem:[#allocation2 + $0x768] sm:$0xff]
    %v341 = vld [vmem:[#allocation2 + $0x770] sm:$0xff]
    %v342 = vld [vmem:[#allocation2 + $0x778] sm:$0xff]
    %v343 = vld [vmem:[#allocation2 + $0x780] sm:$0xff]
    %v344 = vld [vmem:[#allocation2 + $0x788] sm:$0xff]
    %v345 = vld [vmem:[#allocation2 + $0x790] sm:$0xff]
    %v346 = vld [vmem:[#allocation2 + $0x798] sm:$0xff]
    %v347 = vld [vmem:[#allocation2 + $0x7a0] sm:$0xff]
    %v348 = vld [vmem:[#allocation2 + $0x7a8] sm:$0xff]
    %v349 = vld [vmem:[#allocation2 + $0x7b0] sm:$0xff]
    %v350 = vld [vmem:[#allocation2 + $0x7b8] sm:$0xff]
    %v351 = vld [vmem:[#allocation2 + $0x7c0] sm:$0xff]
    %v352 = vld [vmem:[#allocation2 + $0x7c8] sm:$0xff]
    %v353 = vld [vmem:[#allocation2 + $0x7d0] sm:$0xff]
    %v354 = vld [vmem:[#allocation2 + $0x7d8] sm:$0xff]
    %v355 = vld [vmem:[#allocation2 + $0x7e0] sm:$0xff]
    %v356 = vld [vmem:[#allocation2 + $0x7e8] sm:$0xff]
    %v357 = vld [vmem:[#allocation2 + $0x7f0] sm:$0xff]
    %v358 = vld [vmem:[#allocation2 + $0x7f8] sm:$0xff]
    %v359 = vld [vmem:[#allocation2 + $0x800] sm:$0xff]
    %v360 = vld [vmem:[#allocation2 + $0x808] sm:$0xff]
    %v361 = vld [vmem:[#allocation2 + $0x810] sm:$0xff]
    %v362 = vld [vmem:[#allocation2 + $0x818] sm:$0xff]
    %v363 = vld [vmem:[#allocation2 + $0x820] sm:$0xff]
    %v364 = vld [vmem:[#allocation2 + $0x828] sm:$0xff]
    %v365 = vld [vmem:[#allocation2 + $0x830] sm:$0xff]
    %v366 = vld [vmem:[#allocation2 + $0x838] sm:$0xff]
    %v367 = vld [vmem:[#allocation2 + $0x840] sm:$0xff]
    %v368 = vld [vmem:[#allocation2 + $0x848] sm:$0xff]
    %v369 = vld [vmem:[#allocation2 + $0x850] sm:$0xff]
    %v370 = vld [vmem:[#allocation2 + $0x858] sm:$0xff]
    %v371 = vld [vmem:[#allocation2 + $0x860] sm:$0xff]
    %v372 = vld [vmem:[#allocation2 + $0x868] sm:$0xff]
    %v373 = vld [vmem:[#allocation2 + $0x870] sm:$0xff]
    %v374 = vld [vmem:[#allocation2 + $0x878] sm:$0xff]
    %v375 = vld [vmem:[#allocation2 + $0x880] sm:$0xff]
    %v376 = vld [vmem:[#allocation2 + $0x888] sm:$0xff]
    %v377 = vld [vmem:[#allocation2 + $0x890] sm:$0xff]
    %v378 = vld [vmem:[#allocation2 + $0x898] sm:$0xff]
    %v379 = vld [vmem:[#allocation2 + $0x8a0] sm:$0xff]
    %v380 = vld [vmem:[#allocation2 + $0x8a8] sm:$0xff]
    %v381 = vld [vmem:[#allocation2 + $0x8b0] sm:$0xff]
    %v382 = vld [vmem:[#allocation2 + $0x8b8] sm:$0xff]
    %v383 = vld [vmem:[#allocation2 + $0x8c0] sm:$0xff]
    %v384 = vld [vmem:[#allocation2 + $0x8c8] sm:$0xff]
    %v385 = vld [vmem:[#allocation2 + $0x8d0] sm:$0xff]
    %v386 = vld [vmem:[#allocation2 + $0x8d8] sm:$0xff]
    %v387 = vld [vmem:[#allocation2 + $0x8e0] sm:$0xff]
    %v388 = vld [vmem:[#allocation2 + $0x8e8] sm:$0xff]
    %v389 = vld [vmem:[#allocation2 + $0x8f0] sm:$0xff]
    %v390 = vld [vmem:[#allocation2 + $0x8f8] sm:$0xff]
    %v391 = vld [vmem:[#allocation2 + $0x900] sm:$0xff]
    %v392 = vld [vmem:[#allocation2 + $0x908] sm:$0xff]
    %v393 = vld [vmem:[#allocation2 + $0x910] sm:$0xff]
    %v394 = vld [vmem:[#allocation2 + $0x918] sm:$0xff]
    %v395 = vld [vmem:[#allocation2 + $0x920] sm:$0xff]
    %v396 = vld [vmem:[#allocation2 + $0x928] sm:$0xff]
    %v397 = vld [vmem:[#allocation2 + $0x930] sm:$0xff]
    %v398 = vld [vmem:[#allocation2 + $0x938] sm:$0xff]
    %v399 = vld [vmem:[#allocation2 + $0x940] sm:$0xff]
    %v400 = vld [vmem:[#allocation2 + $0x948] sm:$0xff]
    %v401 = vld [vmem:[#allocation2 + $0x950] sm:$0xff]
    %v402 = vld [vmem:[#allocation2 + $0x958] sm:$0xff]
    %v403 = vld [vmem:[#allocation2 + $0x960] sm:$0xff]
    %v404 = vld [vmem:[#allocation2 + $0x968] sm:$0xff]
    %v405 = vld [vmem:[#allocation2 + $0x970] sm:$0xff]
    %v406 = vld [vmem:[#allocation2 + $0x978] sm:$0xff]
    %v407 = vld [vmem:[#allocation2 + $0x980] sm:$0xff]
    %v408 = vld [vmem:[#allocation2 + $0x988] sm:$0xff]
    %v409 = vld [vmem:[#allocation2 + $0x990] sm:$0xff]
    %v410 = vld [vmem:[#allocation2 + $0x998] sm:$0xff]
    %v411 = vld [vmem:[#allocation2 + $0x9a0] sm:$0xff]
    %v412 = vld [vmem:[#allocation2 + $0x9a8] sm:$0xff]
    %v413 = vld [vmem:[#allocation2 + $0x9b0] sm:$0xff]
    %v414 = vld [vmem:[#allocation2 + $0x9b8] sm:$0xff]
    %v415 = vld [vmem:[#allocation2 + $0x9c0] sm:$0xff]
    %v416 = vld [vmem:[#allocation2 + $0x9c8] sm:$0xff]
    %v417 = vld [vmem:[#allocation2 + $0x9d0] sm:$0xff]
    %v418 = vld [vmem:[#allocation2 + $0x9d8] sm:$0xff]
    %v419 = vld [vmem:[#allocation2 + $0x9e0] sm:$0xff]
    %v420 = vld [vmem:[#allocation2 + $0x9e8] sm:$0xff]
    %v421 = vld [vmem:[#allocation2 + $0x9f0] sm:$0xff]
    %v422 = vld [vmem:[#allocation2 + $0x9f8] sm:$0xff]
    %v423 = vld [vmem:[#allocation2 + $0xa00] sm:$0xff]
    %v424 = vld [vmem:[#allocation2 + $0xa08] sm:$0xff]
    %v425 = vld [vmem:[#allocation2 + $0xa10] sm:$0xff]
    %v426 = vld [vmem:[#allocation2 + $0xa18] sm:$0xff]
    %v427 = vld [vmem:[#allocation2 + $0xa20] sm:$0xff]
    %v428 = vld [vmem:[#allocation2 + $0xa28] sm:$0xff]
    %v429 = vld [vmem:[#allocation2 + $0xa30] sm:$0xff]
    %v430 = vld [vmem:[#allocation2 + $0xa38] sm:$0xff]
    %v431 = vld [vmem:[#allocation2 + $0xa40] sm:$0xff]
    %v432 = vld [vmem:[#allocation2 + $0xa48] sm:$0xff]
    %v433 = vld [vmem:[#allocation2 + $0xa50] sm:$0xff]
    %v434 = vld [vmem:[#allocation2 + $0xa58] sm:$0xff]
    %v435 = vld [vmem:[#allocation2 + $0xa60] sm:$0xff]
    %v436 = vld [vmem:[#allocation2 + $0xa68] sm:$0xff]
    %v437 = vld [vmem:[#allocation2 + $0xa70] sm:$0xff]
    %v438 = vld [vmem:[#allocation2 + $0xa78] sm:$0xff]
    %v439 = vld [vmem:[#allocation2 + $0xa80] sm:$0xff]
    %v440 = vld [vmem:[#allocation2 + $0xa88] sm:$0xff]
    %v441 = vld [vmem:[#allocation2 + $0xa90] sm:$0xff]
    %v442 = vld [vmem:[#allocation2 + $0xa98] sm:$0xff]
    %v443 = vld [vmem:[#allocation2 + $0xaa0] sm:$0xff]
    %v444 = vld [vmem:[#allocation2 + $0xaa8] sm:$0xff]
    %v445 = vld [vmem:[#allocation2 + $0xab0] sm:$0xff]
    %v446 = vld [vmem:[#allocation2 + $0xab8] sm:$0xff]
    %v447 = vld [vmem:[#allocation2 + $0xac0] sm:$0xff]
    %v448 = vld [vmem:[#allocation2 + $0xac8] sm:$0xff]
    %v449 = vld [vmem:[#allocation2 + $0xad0] sm:$0xff]
    %v450 = vld [vmem:[#allocation2 + $0xad8] sm:$0xff]
    %v451 = vld [vmem:[#allocation2 + $0xae0] sm:$0xff]
    %v452 = vld [vmem:[#allocation2 + $0xae8] sm:$0xff]
    %v453 = vld [vmem:[#allocation2 + $0xaf0] sm:$0xff]
    %v454 = vld [vmem:[#allocation2 + $0xaf8] sm:$0xff]
    %v455 = vld [vmem:[#allocation2 + $0xb00] sm:$0xff]
    %v456 = vld [vmem:[#allocation2 + $0xb08] sm:$0xff]
    %v457 = vld [vmem:[#allocation2 + $0xb10] sm:$0xff]
    %v458 = vld [vmem:[#allocation2 + $0xb18] sm:$0xff]
    %v459 = vld [vmem:[#allocation2 + $0xb20] sm:$0xff]
    %v460 = vld [vmem:[#allocation2 + $0xb28] sm:$0xff]
    %v461 = vld [vmem:[#allocation2 + $0xb30] sm:$0xff]
    %v462 = vld [vmem:[#allocation2 + $0xb38] sm:$0xff]
    %v463 = vld [vmem:[#allocation2 + $0xb40] sm:$0xff]
    %v464 = vld [vmem:[#allocation2 + $0xb48] sm:$0xff]
    %v465 = vld [vmem:[#allocation2 + $0xb50] sm:$0xff]
    %v466 = vld [vmem:[#allocation2 + $0xb58] sm:$0xff]
    %v467 = vld [vmem:[#allocation2 + $0xb60] sm:$0xff]
    %v468 = vld [vmem:[#allocation2 + $0xb68] sm:$0xff]
    %v469 = vld [vmem:[#allocation2 + $0xb70] sm:$0xff]
    %v470 = vld [vmem:[#allocation2 + $0xb78] sm:$0xff]
    %v471 = vld [vmem:[#allocation2 + $0xb80] sm:$0xff]
    %v472 = vld [vmem:[#allocation2 + $0xb88] sm:$0xff]
    %v473 = vld [vmem:[#allocation2 + $0xb90] sm:$0xff]
    %v474 = vld [vmem:[#allocation2 + $0xb98] sm:$0xff]
    %v475 = vld [vmem:[#allocation2 + $0xba0] sm:$0xff]
    %v476 = vld [vmem:[#allocation2 + $0xba8] sm:$0xff]
    %v477 = vld [vmem:[#allocation2 + $0xbb0] sm:$0xff]
    %v478 = vld [vmem:[#allocation2 + $0xbb8] sm:$0xff]
    %v479 = vld [vmem:[#allocation2 + $0xbc0] sm:$0xff]
    %v480 = vld [vmem:[#allocation2 + $0xbc8] sm:$0xff]
    %v481 = vld [vmem:[#allocation2 + $0xbd0] sm:$0xff]
    %v482 = vld [vmem:[#allocation2 + $0xbd8] sm:$0xff]
    %v483 = vld [vmem:[#allocation2 + $0xbe0] sm:$0xff]
    %v484 = vld [vmem:[#allocation2 + $0xbe8] sm:$0xff]
    %v485 = vld [vmem:[#allocation2 + $0xbf0] sm:$0xff]
    %v486 = vld [vmem:[#allocation2 + $0xbf8] sm:$0xff]
    %v487 = vld [vmem:[#allocation2 + $0xc00] sm:$0xff]
    %v488 = vld [vmem:[#allocation2 + $0xc08] sm:$0xff]
    %v489 = vld [vmem:[#allocation2 + $0xc10] sm:$0xff]
    %v490 = vld [vmem:[#allocation2 + $0xc18] sm:$0xff]
    %v491 = vld [vmem:[#allocation2 + $0xc20] sm:$0xff]
    %v492 = vld [vmem:[#allocation2 + $0xc28] sm:$0xff]
    %v493 = vld [vmem:[#allocation2 + $0xc30] sm:$0xff]
    %v494 = vld [vmem:[#allocation2 + $0xc38] sm:$0xff]
    %v495 = vld [vmem:[#allocation2 + $0xc40] sm:$0xff]
    %v496 = vld [vmem:[#allocation2 + $0xc48] sm:$0xff]
    %v497 = vld [vmem:[#allocation2 + $0xc50] sm:$0xff]
    %v498 = vld [vmem:[#allocation2 + $0xc58] sm:$0xff]
    %v499 = vld [vmem:[#allocation2 + $0xc60] sm:$0xff]
    %v500 = vld [vmem:[#allocation2 + $0xc68] sm:$0xff]
    %v501 = vld [vmem:[#allocation2 + $0xc70] sm:$0xff]
    %v502 = vld [vmem:[#allocation2 + $0xc78] sm:$0xff]
    %v503 = vld [vmem:[#allocation2 + $0xc80] sm:$0xff]
    %v504 = vld [vmem:[#allocation2 + $0xc88] sm:$0xff]
    %v505 = vld [vmem:[#allocation2 + $0xc90] sm:$0xff]
    %v506 = vld [vmem:[#allocation2 + $0xc98] sm:$0xff]
    %v507 = vld [vmem:[#allocation2 + $0xca0] sm:$0xff]
    %v508 = vld [vmem:[#allocation2 + $0xca8] sm:$0xff]
    %v509 = vld [vmem:[#allocation2 + $0xcb0] sm:$0xff]
    %v510 = vld [vmem:[#allocation2 + $0xcb8] sm:$0xff]
    %v511 = vld [vmem:[#allocation2 + $0xcc0] sm:$0xff]
    %v512 = vld [vmem:[#allocation2 + $0xcc8] sm:$0xff]
    %v513 = vld [vmem:[#allocation2 + $0xcd0] sm:$0xff]
    %v514 = vld [vmem:[#allocation2 + $0xcd8] sm:$0xff]
    %v515 = vld [vmem:[#allocation2 + $0xce0] sm:$0xff]
    %v516 = vld [vmem:[#allocation2 + $0xce8] sm:$0xff]
    %v517 = vld [vmem:[#allocation2 + $0xcf0] sm:$0xff]
    %v518 = vld [vmem:[#allocation2 + $0xcf8] sm:$0xff]
    %v519 = vld [vmem:[#allocation2 + $0xd00] sm:$0xff]
    %v520 = vld [vmem:[#allocation2 + $0xd08] sm:$0xff]
    %v521 = vld [vmem:[#allocation2 + $0xd10] sm:$0xff]
    %v522 = vld [vmem:[#allocation2 + $0xd18] sm:$0xff]
    %v523 = vld [vmem:[#allocation2 + $0xd20] sm:$0xff]
    %v524 = vld [vmem:[#allocation2 + $0xd28] sm:$0xff]
    %v525 = vld [vmem:[#allocation2 + $0xd30] sm:$0xff]
    %v526 = vld [vmem:[#allocation2 + $0xd38] sm:$0xff]
    %v527 = vld [vmem:[#allocation2 + $0xd40] sm:$0xff]
    %v528 = vld [vmem:[#allocation2 + $0xd48] sm:$0xff]
    %v529 = vld [vmem:[#allocation2 + $0xd50] sm:$0xff]
    %v530 = vld [vmem:[#allocation2 + $0xd58] sm:$0xff]
    %v531 = vld [vmem:[#allocation2 + $0xd60] sm:$0xff]
    %v532 = vld [vmem:[#allocation2 + $0xd68] sm:$0xff]
    %v533 = vld [vmem:[#allocation2 + $0xd70] sm:$0xff]
    %v534 = vld [vmem:[#allocation2 + $0xd78] sm:$0xff]
    %v535 = vld [vmem:[#allocation2 + $0xd80] sm:$0xff]
    %v536 = vld [vmem:[#allocation2 + $0xd88] sm:$0xff]
    %v537 = vld [vmem:[#allocation2 + $0xd90] sm:$0xff]
    %v538 = vld [vmem:[#allocation2 + $0xd98] sm:$0xff]
    %v539 = vld [vmem:[#allocation2 + $0xda0] sm:$0xff]
    %v540 = vld [vmem:[#allocation2 + $0xda8] sm:$0xff]
    %v541 = vld [vmem:[#allocation2 + $0xdb0] sm:$0xff]
    %v542 = vld [vmem:[#allocation2 + $0xdb8] sm:$0xff]
    %v543 = vld [vmem:[#allocation2 + $0xdc0] sm:$0xff]
    %v544 = vld [vmem:[#allocation2 + $0xdc8] sm:$0xff]
    %v545 = vld [vmem:[#allocation2 + $0xdd0] sm:$0xff]
    %v546 = vld [vmem:[#allocation2 + $0xdd8] sm:$0xff]
    %v547 = vld [vmem:[#allocation2 + $0xde0] sm:$0xff]
    %v548 = vld [vmem:[#allocation2 + $0xde8] sm:$0xff]
    %v549 = vld [vmem:[#allocation2 + $0xdf0] sm:$0xff]
    %v550 = vld [vmem:[#allocation2 + $0xdf8] sm:$0xff]
    %v551 = vld [vmem:[#allocation2 + $0xe00] sm:$0xff]
    %v552 = vld [vmem:[#allocation2 + $0xe08] sm:$0xff]
    %v553 = vld [vmem:[#allocation2 + $0xe10] sm:$0xff]
    %v554 = vld [vmem:[#allocation2 + $0xe18] sm:$0xff]
    %v555 = vld [vmem:[#allocation2 + $0xe20] sm:$0xff]
    %v556 = vld [vmem:[#allocation2 + $0xe28] sm:$0xff]
    %v557 = vld [vmem:[#allocation2 + $0xe30] sm:$0xff]
    %v558 = vld [vmem:[#allocation2 + $0xe38] sm:$0xff]
    %v559 = vld [vmem:[#allocation2 + $0xe40] sm:$0xff]
    %v560 = vld [vmem:[#allocation2 + $0xe48] sm:$0xff]
    %v561 = vld [vmem:[#allocation2 + $0xe50] sm:$0xff]
    %v562 = vld [vmem:[#allocation2 + $0xe58] sm:$0xff]
    %v563 = vld [vmem:[#allocation2 + $0xe60] sm:$0xff]
    %v564 = vld [vmem:[#allocation2 + $0xe68] sm:$0xff]
    %v565 = vld [vmem:[#allocation2 + $0xe70] sm:$0xff]
    %v566 = vld [vmem:[#allocation2 + $0xe78] sm:$0xff]
    %v567 = vld [vmem:[#allocation2 + $0xe80] sm:$0xff]
    %v568 = vld [vmem:[#allocation2 + $0xe88] sm:$0xff]
    %v569 = vld [vmem:[#allocation2 + $0xe90] sm:$0xff]
    %v570 = vld [vmem:[#allocation2 + $0xe98] sm:$0xff]
    %v571 = vld [vmem:[#allocation2 + $0xea0] sm:$0xff]
    %v572 = vld [vmem:[#allocation2 + $0xea8] sm:$0xff]
    %v573 = vld [vmem:[#allocation2 + $0xeb0] sm:$0xff]
    %v574 = vld [vmem:[#allocation2 + $0xeb8] sm:$0xff]
    %v575 = vld [vmem:[#allocation2 + $0xec0] sm:$0xff]
    %v576 = vld [vmem:[#allocation2 + $0xec8] sm:$0xff]
    %v577 = vld [vmem:[#allocation2 + $0xed0] sm:$0xff]
    %v578 = vld [vmem:[#allocation2 + $0xed8] sm:$0xff]
    %v579 = vld [vmem:[#allocation2 + $0xee0] sm:$0xff]
    %v580 = vld [vmem:[#allocation2 + $0xee8] sm:$0xff]
    %v581 = vld [vmem:[#allocation2 + $0xef0] sm:$0xff]
    %v582 = vld [vmem:[#allocation2 + $0xef8] sm:$0xff]
    %v583 = vld [vmem:[#allocation2 + $0xf00] sm:$0xff]
    %v584 = vld [vmem:[#allocation2 + $0xf08] sm:$0xff]
    %v585 = vld [vmem:[#allocation2 + $0xf10] sm:$0xff]
    %v586 = vld [vmem:[#allocation2 + $0xf18] sm:$0xff]
    %v587 = vld [vmem:[#allocation2 + $0xf20] sm:$0xff]
    %v588 = vld [vmem:[#allocation2 + $0xf28] sm:$0xff]
    %v589 = vld [vmem:[#allocation2 + $0xf30] sm:$0xff]
    %v590 = vld [vmem:[#allocation2 + $0xf38] sm:$0xff]
    %v591 = vld [vmem:[#allocation2 + $0xf40] sm:$0xff]
    %v592 = vld [vmem:[#allocation2 + $0xf48] sm:$0xff]
    %v593 = vld [vmem:[#allocation2 + $0xf50] sm:$0xff]
    %v594 = vld [vmem:[#allocation2 + $0xf58] sm:$0xff]
    %v595 = vld [vmem:[#allocation2 + $0xf60] sm:$0xff]
    %v596 = vld [vmem:[#allocation2 + $0xf68] sm:$0xff]
    %v597 = vld [vmem:[#allocation2 + $0xf70] sm:$0xff]
    %v598 = vld [vmem:[#allocation2 + $0xf78] sm:$0xff]
    %v599 = vld [vmem:[#allocation2 + $0xf80] sm:$0xff]
    %v600 = vld [vmem:[#allocation2 + $0xf88] sm:$0xff]
    %v601 = vld [vmem:[#allocation2 + $0xf90] sm:$0xff]
    %v602 = vld [vmem:[#allocation2 + $0xf98] sm:$0xff]
    %v603 = vld [vmem:[#allocation2 + $0xfa0] sm:$0xff]
    %v604 = vld [vmem:[#allocation2 + $0xfa8] sm:$0xff]
    %v605 = vld [vmem:[#allocation2 + $0xfb0] sm:$0xff]
    %v606 = vld [vmem:[#allocation2 + $0xfb8] sm:$0xff]
    %v607 = vld [vmem:[#allocation2 + $0xfc0] sm:$0xff]
    %v608 = vld [vmem:[#allocation2 + $0xfc8] sm:$0xff]
    %v609 = vld [vmem:[#allocation2 + $0xfd0] sm:$0xff]
    %v610 = vld [vmem:[#allocation2 + $0xfd8] sm:$0xff]
    %v611 = vld [vmem:[#allocation2 + $0xfe0] sm:$0xff]
    %v612 = vld [vmem:[#allocation2 + $0xfe8] sm:$0xff]
    %v613 = vld [vmem:[#allocation2 + $0xff0] sm:$0xff]
    %v614 = vld [vmem:[#allocation2 + $0xff8] sm:$0xff]
    %v615 = vld [vmem:[#allocation2 + $0x1000] sm:$0xff]
    %v616 = vld [vmem:[#allocation2 + $0x1008] sm:$0xff]
    %v617 = vld [vmem:[#allocation2 + $0x1010] sm:$0xff]
    %v618 = vld [vmem:[#allocation2 + $0x1018] sm:$0xff]
    %v619 = vld [vmem:[#allocation2 + $0x1020] sm:$0xff]
    %v620 = vld [vmem:[#allocation2 + $0x1028] sm:$0xff]
    %v621 = vld [vmem:[#allocation2 + $0x1030] sm:$0xff]
    %v622 = vld [vmem:[#allocation2 + $0x1038] sm:$0xff]
    %v623 = vld [vmem:[#allocation2 + $0x1040] sm:$0xff]
    %v624 = vld [vmem:[#allocation2 + $0x1048] sm:$0xff]
    %v625 = vld [vmem:[#allocation2 + $0x1050] sm:$0xff]
    %v626 = vld [vmem:[#allocation2 + $0x1058] sm:$0xff]
    %v627 = vld [vmem:[#allocation2 + $0x1060] sm:$0xff]
    %v628 = vld [vmem:[#allocation2 + $0x1068] sm:$0xff]
    %v629 = vld [vmem:[#allocation2 + $0x1070] sm:$0xff]
    %v630 = vld [vmem:[#allocation2 + $0x1078] sm:$0xff]
    %v631 = vld [vmem:[#allocation2 + $0x1080] sm:$0xff]
    %v632 = vld [vmem:[#allocation2 + $0x1088] sm:$0xff]
    %v633 = vld [vmem:[#allocation2 + $0x1090] sm:$0xff]
    %v634 = vld [vmem:[#allocation2 + $0x1098] sm:$0xff]
    %v635 = vld [vmem:[#allocation2 + $0x10a0] sm:$0xff]
    %v636 = vld [vmem:[#allocation2 + $0x10a8] sm:$0xff]
    %v637 = vld [vmem:[#allocation2 + $0x10b0] sm:$0xff]
    %v638 = vld [vmem:[#allocation2 + $0x10b8] sm:$0xff]
    %v639 = vld [vmem:[#allocation2 + $0x10c0] sm:$0xff]
    %v640 = vld [vmem:[#allocation2 + $0x10c8] sm:$0xff]
    %v641 = vld [vmem:[#allocation2 + $0x10d0] sm:$0xff]
    %v642 = vld [vmem:[#allocation2 + $0x10d8] sm:$0xff]
    %v643 = vld [vmem:[#allocation2 + $0x10e0] sm:$0xff]
    %v644 = vld [vmem:[#allocation2 + $0x10e8] sm:$0xff]
    %v645 = vld [vmem:[#allocation2 + $0x10f0] sm:$0xff]
    %v646 = vld [vmem:[#allocation2 + $0x10f8] sm:$0xff]
    %v647 = vld [vmem:[#allocation2 + $0x1100] sm:$0xff]
    %v648 = vld [vmem:[#allocation2 + $0x1108] sm:$0xff]
    %v649 = vld [vmem:[#allocation2 + $0x1110] sm:$0xff]
    %v650 = vld [vmem:[#allocation2 + $0x1118] sm:$0xff]
    %v651 = vld [vmem:[#allocation2 + $0x1120] sm:$0xff]
    %v652 = vld [vmem:[#allocation2 + $0x1128] sm:$0xff]
    %v653 = vld [vmem:[#allocation2 + $0x1130] sm:$0xff]
    %v654 = vld [vmem:[#allocation2 + $0x1138] sm:$0xff]
    %v655 = vld [vmem:[#allocation2 + $0x1140] sm:$0xff]
    %v656 = vld [vmem:[#allocation2 + $0x1148] sm:$0xff]
    %v657 = vld [vmem:[#allocation2 + $0x1150] sm:$0xff]
    %v658 = vld [vmem:[#allocation2 + $0x1158] sm:$0xff]
    %v659 = vld [vmem:[#allocation2 + $0x1160] sm:$0xff]
    %v660 = vld [vmem:[#allocation2 + $0x1168] sm:$0xff]
    %v661 = vld [vmem:[#allocation2 + $0x1170] sm:$0xff]
    %v662 = vld [vmem:[#allocation2 + $0x1178] sm:$0xff]
    %v663 = vld [vmem:[#allocation2 + $0x1180] sm:$0xff]
    %v664 = vld [vmem:[#allocation2 + $0x1188] sm:$0xff]
    %v665 = vld [vmem:[#allocation2 + $0x1190] sm:$0xff]
    %v666 = vld [vmem:[#allocation2 + $0x1198] sm:$0xff]
    %v667 = vld [vmem:[#allocation2 + $0x11a0] sm:$0xff]
    %v668 = vld [vmem:[#allocation2 + $0x11a8] sm:$0xff]
    %v669 = vld [vmem:[#allocation2 + $0x11b0] sm:$0xff]
    %v670 = vld [vmem:[#allocation2 + $0x11b8] sm:$0xff]
    %v671 = vld [vmem:[#allocation2 + $0x11c0] sm:$0xff]
    %v672 = vld [vmem:[#allocation2 + $0x11c8] sm:$0xff]
    %v673 = vld [vmem:[#allocation2 + $0x11d0] sm:$0xff]
    %v674 = vld [vmem:[#allocation2 + $0x11d8] sm:$0xff]
    %v675 = vld [vmem:[#allocation2 + $0x11e0] sm:$0xff]
    %v676 = vld [vmem:[#allocation2 + $0x11e8] sm:$0xff]
    %v677 = vld [vmem:[#allocation2 + $0x11f0] sm:$0xff]
    %v678 = vld [vmem:[#allocation2 + $0x11f8] sm:$0xff]
    %v679 = vld [vmem:[#allocation2 + $0x1200] sm:$0xff]
    %v680 = vld [vmem:[#allocation2 + $0x1208] sm:$0xff]
    %v681 = vld [vmem:[#allocation2 + $0x1210] sm:$0xff]
    %v682 = vld [vmem:[#allocation2 + $0x1218] sm:$0xff]
    %v683 = vld [vmem:[#allocation2 + $0x1220] sm:$0xff]
    %v684 = vld [vmem:[#allocation2 + $0x1228] sm:$0xff]
    %v685 = vld [vmem:[#allocation2 + $0x1230] sm:$0xff]
    %v686 = vld [vmem:[#allocation2 + $0x1238] sm:$0xff]
    %v687 = vld [vmem:[#allocation2 + $0x1240] sm:$0xff]
    %v688 = vld [vmem:[#allocation2 + $0x1248] sm:$0xff]
    %v689 = vld [vmem:[#allocation2 + $0x1250] sm:$0xff]
    %v690 = vld [vmem:[#allocation2 + $0x1258] sm:$0xff]
    %v691 = vld [vmem:[#allocation2 + $0x1260] sm:$0xff]
    %v692 = vld [vmem:[#allocation2 + $0x1268] sm:$0xff]
    %v693 = vld [vmem:[#allocation2 + $0x1270] sm:$0xff]
    %v694 = vld [vmem:[#allocation2 + $0x1278] sm:$0xff]
    %v695 = vld [vmem:[#allocation2 + $0x1280] sm:$0xff]
    %v696 = vld [vmem:[#allocation2 + $0x1288] sm:$0xff]
    %v697 = vld [vmem:[#allocation2 + $0x1290] sm:$0xff]
    %v698 = vld [vmem:[#allocation2 + $0x1298] sm:$0xff]
    %v699 = vld [vmem:[#allocation2 + $0x12a0] sm:$0xff]
    %v700 = vld [vmem:[#allocation2 + $0x12a8] sm:$0xff]
    %v701 = vld [vmem:[#allocation2 + $0x12b0] sm:$0xff]
    %v702 = vld [vmem:[#allocation2 + $0x12b8] sm:$0xff]
    %v703 = vld [vmem:[#allocation2 + $0x12c0] sm:$0xff]
    %v704 = vld [vmem:[#allocation2 + $0x12c8] sm:$0xff]
    %v705 = vld [vmem:[#allocation2 + $0x12d0] sm:$0xff]
    %v706 = vld [vmem:[#allocation2 + $0x12d8] sm:$0xff]
    %v707 = vld [vmem:[#allocation2 + $0x12e0] sm:$0xff]
    %v708 = vld [vmem:[#allocation2 + $0x12e8] sm:$0xff]
    %v709 = vld [vmem:[#allocation2 + $0x12f0] sm:$0xff]
    %v710 = vld [vmem:[#allocation2 + $0x12f8] sm:$0xff]
    %v711 = vld [vmem:[#allocation2 + $0x1300] sm:$0xff]
    %v712 = vld [vmem:[#allocation2 + $0x1308] sm:$0xff]
    %v713 = vld [vmem:[#allocation2 + $0x1310] sm:$0xff]
    %v714 = vld [vmem:[#allocation2 + $0x1318] sm:$0xff]
    %v715 = vld [vmem:[#allocation2 + $0x1320] sm:$0xff]
    %v716 = vld [vmem:[#allocation2 + $0x1328] sm:$0xff]
    %v717 = vld [vmem:[#allocation2 + $0x1330] sm:$0xff]
    %v718 = vld [vmem:[#allocation2 + $0x1338] sm:$0xff]
    %v719 = vld [vmem:[#allocation2 + $0x1340] sm:$0xff]
    %v720 = vld [vmem:[#allocation2 + $0x1348] sm:$0xff]
    %v721 = vld [vmem:[#allocation2 + $0x1350] sm:$0xff]
    %v722 = vld [vmem:[#allocation2 + $0x1358] sm:$0xff]
    %v723 = vld [vmem:[#allocation2 + $0x1360] sm:$0xff]
    %v724 = vld [vmem:[#allocation2 + $0x1368] sm:$0xff]
    %v725 = vld [vmem:[#allocation2 + $0x1370] sm:$0xff]
    %v726 = vld [vmem:[#allocation2 + $0x1378] sm:$0xff]
    %v727 = vld [vmem:[#allocation2 + $0x1380] sm:$0xff]
    %v728 = vld [vmem:[#allocation2 + $0x1388] sm:$0xff]
    %v729 = vld [vmem:[#allocation2 + $0x1390] sm:$0xff]
    %v730 = vld [vmem:[#allocation2 + $0x1398] sm:$0xff]
    %v731 = vld [vmem:[#allocation2 + $0x13a0] sm:$0xff]
    %v732 = vld [vmem:[#allocation2 + $0x13a8] sm:$0xff]
    %v733 = vld [vmem:[#allocation2 + $0x13b0] sm:$0xff]
    %v734 = vld [vmem:[#allocation2 + $0x13b8] sm:$0xff]
    %v735 = vld [vmem:[#allocation2 + $0x13c0] sm:$0xff]
    %v736 = vld [vmem:[#allocation2 + $0x13c8] sm:$0xff]
    %v737 = vld [vmem:[#allocation2 + $0x13d0] sm:$0xff]
    %v738 = vld [vmem:[#allocation2 + $0x13d8] sm:$0xff]
    %v739 = vld [vmem:[#allocation2 + $0x13e0] sm:$0xff]
    %v740 = vld [vmem:[#allocation2 + $0x13e8] sm:$0xff]
    %v741 = vld [vmem:[#allocation2 + $0x13f0] sm:$0xff]
    %v742 = vld [vmem:[#allocation2 + $0x13f8] sm:$0xff]
    %v743 = vld [vmem:[#allocation2 + $0x1400] sm:$0xff]
    %v744 = vld [vmem:[#allocation2 + $0x1408] sm:$0xff]
    %v745 = vld [vmem:[#allocation2 + $0x1410] sm:$0xff]
    %v746 = vld [vmem:[#allocation2 + $0x1418] sm:$0xff]
    %v747 = vld [vmem:[#allocation2 + $0x1420] sm:$0xff]
    %v748 = vld [vmem:[#allocation2 + $0x1428] sm:$0xff]
    %v749 = vld [vmem:[#allocation2 + $0x1430] sm:$0xff]
    %v750 = vld [vmem:[#allocation2 + $0x1438] sm:$0xff]
    %v751 = vld [vmem:[#allocation2 + $0x1440] sm:$0xff]
    %v752 = vld [vmem:[#allocation2 + $0x1448] sm:$0xff]
    %v753 = vld [vmem:[#allocation2 + $0x1450] sm:$0xff]
    %v754 = vld [vmem:[#allocation2 + $0x1458] sm:$0xff]
    %v755 = vld [vmem:[#allocation2 + $0x1460] sm:$0xff]
    %v756 = vld [vmem:[#allocation2 + $0x1468] sm:$0xff]
    %v757 = vld [vmem:[#allocation2 + $0x1470] sm:$0xff]
    %v758 = vld [vmem:[#allocation2 + $0x1478] sm:$0xff]
    %v759 = vld [vmem:[#allocation2 + $0x1480] sm:$0xff]
    %v760 = vld [vmem:[#allocation2 + $0x1488] sm:$0xff]
    %v761 = vld [vmem:[#allocation2 + $0x1490] sm:$0xff]
    %v762 = vld [vmem:[#allocation2 + $0x1498] sm:$0xff]
    %v763 = vld [vmem:[#allocation2 + $0x14a0] sm:$0xff]
    %v764 = vld [vmem:[#allocation2 + $0x14a8] sm:$0xff]
    %v765 = vld [vmem:[#allocation2 + $0x14b0] sm:$0xff]
    %v766 = vld [vmem:[#allocation2 + $0x14b8] sm:$0xff]
    %v767 = vld [vmem:[#allocation2 + $0x14c0] sm:$0xff]
    %v768 = vld [vmem:[#allocation2 + $0x14c8] sm:$0xff]
    %v769 = vld [vmem:[#allocation2 + $0x14d0] sm:$0xff]
    %v770 = vld [vmem:[#allocation2 + $0x14d8] sm:$0xff]
    %v771 = vld [vmem:[#allocation2 + $0x14e0] sm:$0xff]
    %v772 = vld [vmem:[#allocation2 + $0x14e8] sm:$0xff]
    %v773 = vld [vmem:[#allocation2 + $0x14f0] sm:$0xff]
    %v774 = vld [vmem:[#allocation2 + $0x14f8] sm:$0xff]
    %v775 = vld [vmem:[#allocation2 + $0x1500] sm:$0xff]
    %v776 = vld [vmem:[#allocation2 + $0x1508] sm:$0xff]
    %v777 = vld [vmem:[#allocation2 + $0x1510] sm:$0xff]
    %v778 = vld [vmem:[#allocation2 + $0x1518] sm:$0xff]
    %v779 = vld [vmem:[#allocation2 + $0x1520] sm:$0xff]
    %v780 = vld [vmem:[#allocation2 + $0x1528] sm:$0xff]
    %v781 = vld [vmem:[#allocation2 + $0x1530] sm:$0xff]
    %v782 = vld [vmem:[#allocation2 + $0x1538] sm:$0xff]
    %v783 = vld [vmem:[#allocation2 + $0x1540] sm:$0xff]
    %v784 = vld [vmem:[#allocation2 + $0x1548] sm:$0xff]
    %v785 = vld [vmem:[#allocation2 + $0x1550] sm:$0xff]
    %v786 = vld [vmem:[#allocation2 + $0x1558] sm:$0xff]
    %v787 = vld [vmem:[#allocation2 + $0x1560] sm:$0xff]
    %v788 = vld [vmem:[#allocation2 + $0x1568] sm:$0xff]
    %v789 = vld [vmem:[#allocation2 + $0x1570] sm:$0xff]
    %v790 = vld [vmem:[#allocation2 + $0x1578] sm:$0xff]
    %v791 = vld [vmem:[#allocation2 + $0x1580] sm:$0xff]
    %v792 = vld [vmem:[#allocation2 + $0x1588] sm:$0xff]
    %v793 = vld [vmem:[#allocation2 + $0x1590] sm:$0xff]
    %v794 = vld [vmem:[#allocation2 + $0x1598] sm:$0xff]
    %v795 = vld [vmem:[#allocation2 + $0x15a0] sm:$0xff]
    %v796 = vld [vmem:[#allocation2 + $0x15a8] sm:$0xff]
    %v797 = vld [vmem:[#allocation2 + $0x15b0] sm:$0xff]
    %v798 = vld [vmem:[#allocation2 + $0x15b8] sm:$0xff]
    %v799 = vld [vmem:[#allocation2 + $0x15c0] sm:$0xff]
    %v800 = vld [vmem:[#allocation2 + $0x15c8] sm:$0xff]
    %v801 = vld [vmem:[#allocation2 + $0x15d0] sm:$0xff]
    %v802 = vld [vmem:[#allocation2 + $0x15d8] sm:$0xff]
    %v803 = vld [vmem:[#allocation2 + $0x15e0] sm:$0xff]
    %v804 = vld [vmem:[#allocation2 + $0x15e8] sm:$0xff]
    %v805 = vld [vmem:[#allocation2 + $0x15f0] sm:$0xff]
    %v806 = vld [vmem:[#allocation2 + $0x15f8] sm:$0xff]
    %v807 = vld [vmem:[#allocation2 + $0x1600] sm:$0xff]
    %v808 = vld [vmem:[#allocation2 + $0x1608] sm:$0xff]
    %v809 = vld [vmem:[#allocation2 + $0x1610] sm:$0xff]
    %v810 = vld [vmem:[#allocation2 + $0x1618] sm:$0xff]
    %v811 = vld [vmem:[#allocation2 + $0x1620] sm:$0xff]
    %v812 = vld [vmem:[#allocation2 + $0x1628] sm:$0xff]
    %v813 = vld [vmem:[#allocation2 + $0x1630] sm:$0xff]
    %v814 = vld [vmem:[#allocation2 + $0x1638] sm:$0xff]
    %v815 = vld [vmem:[#allocation2 + $0x1640] sm:$0xff]
    %v816 = vld [vmem:[#allocation2 + $0x1648] sm:$0xff]
    %v817 = vld [vmem:[#allocation2 + $0x1650] sm:$0xff]
    %v818 = vld [vmem:[#allocation2 + $0x1658] sm:$0xff]
    %v819 = vld [vmem:[#allocation2 + $0x1660] sm:$0xff]
    %v820 = vld [vmem:[#allocation2 + $0x1668] sm:$0xff]
    %v821 = vld [vmem:[#allocation2 + $0x1670] sm:$0xff]
    %v822 = vld [vmem:[#allocation2 + $0x1678] sm:$0xff]
    %v823 = vld [vmem:[#allocation2 + $0x1680] sm:$0xff]
    %v824 = vld [vmem:[#allocation2 + $0x1688] sm:$0xff]
    %v825 = vld [vmem:[#allocation2 + $0x1690] sm:$0xff]
    %v826 = vld [vmem:[#allocation2 + $0x1698] sm:$0xff]
    %v827 = vld [vmem:[#allocation2 + $0x16a0] sm:$0xff]
    %v828 = vld [vmem:[#allocation2 + $0x16a8] sm:$0xff]
    %v829 = vld [vmem:[#allocation2 + $0x16b0] sm:$0xff]
    %v830 = vld [vmem:[#allocation2 + $0x16b8] sm:$0xff]
    %v831 = vld [vmem:[#allocation2 + $0x16c0] sm:$0xff]
    %v832 = vld [vmem:[#allocation2 + $0x16c8] sm:$0xff]
    %v833 = vld [vmem:[#allocation2 + $0x16d0] sm:$0xff]
    %v834 = vld [vmem:[#allocation2 + $0x16d8] sm:$0xff]
    %v835 = vld [vmem:[#allocation2 + $0x16e0] sm:$0xff]
    %v836 = vld [vmem:[#allocation2 + $0x16e8] sm:$0xff]
    %v837 = vld [vmem:[#allocation2 + $0x16f0] sm:$0xff]
    %v838 = vld [vmem:[#allocation2 + $0x16f8] sm:$0xff]
    %v839 = vld [vmem:[#allocation2 + $0x1700] sm:$0xff]
    %v840 = vld [vmem:[#allocation2 + $0x1708] sm:$0xff]
    %v841 = vld [vmem:[#allocation2 + $0x1710] sm:$0xff]
    %v842 = vld [vmem:[#allocation2 + $0x1718] sm:$0xff]
    %v843 = vld [vmem:[#allocation2 + $0x1720] sm:$0xff]
    %v844 = vld [vmem:[#allocation2 + $0x1728] sm:$0xff]
    %v845 = vld [vmem:[#allocation2 + $0x1730] sm:$0xff]
    %v846 = vld [vmem:[#allocation2 + $0x1738] sm:$0xff]
    %v847 = vld [vmem:[#allocation2 + $0x1740] sm:$0xff]
    %v848 = vld [vmem:[#allocation2 + $0x1748] sm:$0xff]
    %v849 = vld [vmem:[#allocation2 + $0x1750] sm:$0xff]
    %v850 = vld [vmem:[#allocation2 + $0x1758] sm:$0xff]
    %v851 = vld [vmem:[#allocation2 + $0x1760] sm:$0xff]
    %v852 = vld [vmem:[#allocation2 + $0x1768] sm:$0xff]
    %v853 = vld [vmem:[#allocation2 + $0x1770] sm:$0xff]
    %v854 = vld [vmem:[#allocation2 + $0x1778] sm:$0xff]
    %v855 = vld [vmem:[#allocation2 + $0x1780] sm:$0xff]
    %v856 = vld [vmem:[#allocation2 + $0x1788] sm:$0xff]
    %v857 = vld [vmem:[#allocation2 + $0x1790] sm:$0xff]
    %v858 = vld [vmem:[#allocation2 + $0x1798] sm:$0xff]
    %v859 = vld [vmem:[#allocation2 + $0x17a0] sm:$0xff]
    %v860 = vld [vmem:[#allocation2 + $0x17a8] sm:$0xff]
    %v861 = vld [vmem:[#allocation2 + $0x17b0] sm:$0xff]
    %v862 = vld [vmem:[#allocation2 + $0x17b8] sm:$0xff]
    %v863 = vld [vmem:[#allocation2 + $0x17c0] sm:$0xff]
    %v864 = vld [vmem:[#allocation2 + $0x17c8] sm:$0xff]
    %v865 = vld [vmem:[#allocation2 + $0x17d0] sm:$0xff]
    %v866 = vld [vmem:[#allocation2 + $0x17d8] sm:$0xff]
    %v867 = vld [vmem:[#allocation2 + $0x17e0] sm:$0xff]
    %v868 = vld [vmem:[#allocation2 + $0x17e8] sm:$0xff]
    %v869 = vld [vmem:[#allocation2 + $0x17f0] sm:$0xff]
    %v870 = vld [vmem:[#allocation2 + $0x17f8] sm:$0xff]
    %v871 = vld [vmem:[#allocation2 + $0x1800] sm:$0xff]
    %v872 = vld [vmem:[#allocation2 + $0x1808] sm:$0xff]
    %v873 = vld [vmem:[#allocation2 + $0x1810] sm:$0xff]
    %v874 = vld [vmem:[#allocation2 + $0x1818] sm:$0xff]
    %v875 = vld [vmem:[#allocation2 + $0x1820] sm:$0xff]
    %v876 = vld [vmem:[#allocation2 + $0x1828] sm:$0xff]
    %v877 = vld [vmem:[#allocation2 + $0x1830] sm:$0xff]
    %v878 = vld [vmem:[#allocation2 + $0x1838] sm:$0xff]
    %v879 = vld [vmem:[#allocation2 + $0x1840] sm:$0xff]
    %v880 = vld [vmem:[#allocation2 + $0x1848] sm:$0xff]
    %v881 = vld [vmem:[#allocation2 + $0x1850] sm:$0xff]
    %v882 = vld [vmem:[#allocation2 + $0x1858] sm:$0xff]
    %v883 = vld [vmem:[#allocation2 + $0x1860] sm:$0xff]
    %v884 = vld [vmem:[#allocation2 + $0x1868] sm:$0xff]
    %v885 = vld [vmem:[#allocation2 + $0x1870] sm:$0xff]
    %v886 = vld [vmem:[#allocation2 + $0x1878] sm:$0xff]
    %v887 = vld [vmem:[#allocation2 + $0x1880] sm:$0xff]
    %v888 = vld [vmem:[#allocation2 + $0x1888] sm:$0xff]
    %v889 = vld [vmem:[#allocation2 + $0x1890] sm:$0xff]
    %v890 = vld [vmem:[#allocation2 + $0x1898] sm:$0xff]
    %v891 = vld [vmem:[#allocation2 + $0x18a0] sm:$0xff]
    %v892 = vld [vmem:[#allocation2 + $0x18a8] sm:$0xff]
    %v893 = vld [vmem:[#allocation2 + $0x18b0] sm:$0xff]
    %v894 = vld [vmem:[#allocation2 + $0x18b8] sm:$0xff]
    %v895 = vld [vmem:[#allocation2 + $0x18c0] sm:$0xff]
    %v896 = vld [vmem:[#allocation2 + $0x18c8] sm:$0xff]
    %v897 = vld [vmem:[#allocation2 + $0x18d0] sm:$0xff]
    %v898 = vld [vmem:[#allocation2 + $0x18d8] sm:$0xff]
    %v899 = vld [vmem:[#allocation2 + $0x18e0] sm:$0xff]
    %v900 = vld [vmem:[#allocation2 + $0x18e8] sm:$0xff]
    %v901 = vld [vmem:[#allocation2 + $0x18f0] sm:$0xff]
    %v902 = vld [vmem:[#allocation2 + $0x18f8] sm:$0xff]
    %v903 = vld [vmem:[#allocation2 + $0x1900] sm:$0xff]
    %v904 = vld [vmem:[#allocation2 + $0x1908] sm:$0xff]
    %v905 = vld [vmem:[#allocation2 + $0x1910] sm:$0xff]
    %v906 = vld [vmem:[#allocation2 + $0x1918] sm:$0xff]
    %v907 = vld [vmem:[#allocation2 + $0x1920] sm:$0xff]
    %v908 = vld [vmem:[#allocation2 + $0x1928] sm:$0xff]
    %v909 = vld [vmem:[#allocation2 + $0x1930] sm:$0xff]
    %v910 = vld [vmem:[#allocation2 + $0x1938] sm:$0xff]
    %v911 = vld [vmem:[#allocation2 + $0x1940] sm:$0xff]
    %v912 = vld [vmem:[#allocation2 + $0x1948] sm:$0xff]
    %v913 = vld [vmem:[#allocation2 + $0x1950] sm:$0xff]
    %v914 = vld [vmem:[#allocation2 + $0x1958] sm:$0xff]
    %v915 = vld [vmem:[#allocation2 + $0x1960] sm:$0xff]
    %v916 = vld [vmem:[#allocation2 + $0x1968] sm:$0xff]
    %v917 = vld [vmem:[#allocation2 + $0x1970] sm:$0xff]
    %v918 = vld [vmem:[#allocation2 + $0x1978] sm:$0xff]
    %v919 = vld [vmem:[#allocation2 + $0x1980] sm:$0xff]
    %v920 = vld [vmem:[#allocation2 + $0x1988] sm:$0xff]
    %v921 = vld [vmem:[#allocation2 + $0x1990] sm:$0xff]
    %v922 = vld [vmem:[#allocation2 + $0x1998] sm:$0xff]
    %v923 = vld [vmem:[#allocation2 + $0x19a0] sm:$0xff]
    %v924 = vld [vmem:[#allocation2 + $0x19a8] sm:$0xff]
    %v925 = vld [vmem:[#allocation2 + $0x19b0] sm:$0xff]
    %v926 = vld [vmem:[#allocation2 + $0x19b8] sm:$0xff]
    %v927 = vld [vmem:[#allocation2 + $0x19c0] sm:$0xff]
    %v928 = vld [vmem:[#allocation2 + $0x19c8] sm:$0xff]
    %v929 = vld [vmem:[#allocation2 + $0x19d0] sm:$0xff]
    %v930 = vld [vmem:[#allocation2 + $0x19d8] sm:$0xff]
    %v931 = vld [vmem:[#allocation2 + $0x19e0] sm:$0xff]
    %v932 = vld [vmem:[#allocation2 + $0x19e8] sm:$0xff]
    %v933 = vld [vmem:[#allocation2 + $0x19f0] sm:$0xff]
    %v934 = vld [vmem:[#allocation2 + $0x19f8] sm:$0xff]
    %v935 = vld [vmem:[#allocation2 + $0x1a00] sm:$0xff]
    %v936 = vld [vmem:[#allocation2 + $0x1a08] sm:$0xff]
    %v937 = vld [vmem:[#allocation2 + $0x1a10] sm:$0xff]
    %v938 = vld [vmem:[#allocation2 + $0x1a18] sm:$0xff]
    %v939 = vld [vmem:[#allocation2 + $0x1a20] sm:$0xff]
    %v940 = vld [vmem:[#allocation2 + $0x1a28] sm:$0xff]
    %v941 = vld [vmem:[#allocation2 + $0x1a30] sm:$0xff]
    %v942 = vld [vmem:[#allocation2 + $0x1a38] sm:$0xff]
    %v943 = vld [vmem:[#allocation2 + $0x1a40] sm:$0xff]
    %v944 = vld [vmem:[#allocation2 + $0x1a48] sm:$0xff]
    %v945 = vld [vmem:[#allocation2 + $0x1a50] sm:$0xff]
    %v946 = vld [vmem:[#allocation2 + $0x1a58] sm:$0xff]
    %v947 = vld [vmem:[#allocation2 + $0x1a60] sm:$0xff]
    %v948 = vld [vmem:[#allocation2 + $0x1a68] sm:$0xff]
    %v949 = vld [vmem:[#allocation2 + $0x1a70] sm:$0xff]
    %v950 = vld [vmem:[#allocation2 + $0x1a78] sm:$0xff]
    %v951 = vld [vmem:[#allocation2 + $0x1a80] sm:$0xff]
    %v952 = vld [vmem:[#allocation2 + $0x1a88] sm:$0xff]
    %v953 = vld [vmem:[#allocation2 + $0x1a90] sm:$0xff]
    %v954 = vld [vmem:[#allocation2 + $0x1a98] sm:$0xff]
    %v955 = vld [vmem:[#allocation2 + $0x1aa0] sm:$0xff]
    %v956 = vld [vmem:[#allocation2 + $0x1aa8] sm:$0xff]
    %v957 = vld [vmem:[#allocation2 + $0x1ab0] sm:$0xff]
    %v958 = vld [vmem:[#allocation2 + $0x1ab8] sm:$0xff]
    %v959 = vld [vmem:[#allocation2 + $0x1ac0] sm:$0xff]
    %v960 = vld [vmem:[#allocation2 + $0x1ac8] sm:$0xff]
    %v961 = vld [vmem:[#allocation2 + $0x1ad0] sm:$0xff]
    %v962 = vld [vmem:[#allocation2 + $0x1ad8] sm:$0xff]
    %v963 = vld [vmem:[#allocation2 + $0x1ae0] sm:$0xff]
    %v964 = vld [vmem:[#allocation2 + $0x1ae8] sm:$0xff]
    %v965 = vld [vmem:[#allocation2 + $0x1af0] sm:$0xff]
    %v966 = vld [vmem:[#allocation2 + $0x1af8] sm:$0xff]
    %v967 = vld [vmem:[#allocation2 + $0x1b00] sm:$0xff]
    %v968 = vld [vmem:[#allocation2 + $0x1b08] sm:$0xff]
    %v969 = vld [vmem:[#allocation2 + $0x1b10] sm:$0xff]
    %v970 = vld [vmem:[#allocation2 + $0x1b18] sm:$0xff]
    %v971 = vld [vmem:[#allocation2 + $0x1b20] sm:$0xff]
    %v972 = vld [vmem:[#allocation2 + $0x1b28] sm:$0xff]
    %v973 = vld [vmem:[#allocation2 + $0x1b30] sm:$0xff]
    %v974 = vld [vmem:[#allocation2 + $0x1b38] sm:$0xff]
    %v975 = vld [vmem:[#allocation2 + $0x1b40] sm:$0xff]
    %v976 = vld [vmem:[#allocation2 + $0x1b48] sm:$0xff]
    %v977 = vld [vmem:[#allocation2 + $0x1b50] sm:$0xff]
    %v978 = vld [vmem:[#allocation2 + $0x1b58] sm:$0xff]
    %v979 = vld [vmem:[#allocation2 + $0x1b60] sm:$0xff]
    %v980 = vld [vmem:[#allocation2 + $0x1b68] sm:$0xff]
    %v981 = vld [vmem:[#allocation2 + $0x1b70] sm:$0xff]
    %v982 = vld [vmem:[#allocation2 + $0x1b78] sm:$0xff]
    %v983 = vld [vmem:[#allocation2 + $0x1b80] sm:$0xff]
    %v984 = vld [vmem:[#allocation2 + $0x1b88] sm:$0xff]
    %v985 = vld [vmem:[#allocation2 + $0x1b90] sm:$0xff]
    %v986 = vld [vmem:[#allocation2 + $0x1b98] sm:$0xff]
    %v987 = vld [vmem:[#allocation2 + $0x1ba0] sm:$0xff]
    %v988 = vld [vmem:[#allocation2 + $0x1ba8] sm:$0xff]
    %v989 = vld [vmem:[#allocation2 + $0x1bb0] sm:$0xff]
    %v990 = vld [vmem:[#allocation2 + $0x1bb8] sm:$0xff]
    %v991 = vld [vmem:[#allocation2 + $0x1bc0] sm:$0xff]
    %v992 = vld [vmem:[#allocation2 + $0x1bc8] sm:$0xff]
    %v993 = vld [vmem:[#allocation2 + $0x1bd0] sm:$0xff]
    %v994 = vld [vmem:[#allocation2 + $0x1bd8] sm:$0xff]
    %v995 = vld [vmem:[#allocation2 + $0x1be0] sm:$0xff]
    %v996 = vld [vmem:[#allocation2 + $0x1be8] sm:$0xff]
    %v997 = vld [vmem:[#allocation2 + $0x1bf0] sm:$0xff]
    %v998 = vld [vmem:[#allocation2 + $0x1bf8] sm:$0xff]
    %v999 = vld [vmem:[#allocation2 + $0x1c00] sm:$0xff]
    %v1000 = vld [vmem:[#allocation2 + $0x1c08] sm:$0xff]
    %v1001 = vld [vmem:[#allocation2 + $0x1c10] sm:$0xff]
    %v1002 = vld [vmem:[#allocation2 + $0x1c18] sm:$0xff]
    %v1003 = vld [vmem:[#allocation2 + $0x1c20] sm:$0xff]
    %v1004 = vld [vmem:[#allocation2 + $0x1c28] sm:$0xff]
    %v1005 = vld [vmem:[#allocation2 + $0x1c30] sm:$0xff]
    %v1006 = vld [vmem:[#allocation2 + $0x1c38] sm:$0xff]
    %v1007 = vld [vmem:[#allocation2 + $0x1c40] sm:$0xff]
    %v1008 = vld [vmem:[#allocation2 + $0x1c48] sm:$0xff]
    %v1009 = vld [vmem:[#allocation2 + $0x1c50] sm:$0xff]
    %v1010 = vld [vmem:[#allocation2 + $0x1c58] sm:$0xff]
    %v1011 = vld [vmem:[#allocation2 + $0x1c60] sm:$0xff]
    %v1012 = vld [vmem:[#allocation2 + $0x1c68] sm:$0xff]
    %v1013 = vld [vmem:[#allocation2 + $0x1c70] sm:$0xff]
    %v1014 = vld [vmem:[#allocation2 + $0x1c78] sm:$0xff]
    %v1015 = vld [vmem:[#allocation2 + $0x1c80] sm:$0xff]
    %v1016 = vld [vmem:[#allocation2 + $0x1c88] sm:$0xff]
    %v1017 = vld [vmem:[#allocation2 + $0x1c90] sm:$0xff]
    %v1018 = vld [vmem:[#allocation2 + $0x1c98] sm:$0xff]
    %v1019 = vld [vmem:[#allocation2 + $0x1ca0] sm:$0xff]
    %v1020 = vld [vmem:[#allocation2 + $0x1ca8] sm:$0xff]
    %v1021 = vld [vmem:[#allocation2 + $0x1cb0] sm:$0xff]
    %v1022 = vld [vmem:[#allocation2 + $0x1cb8] sm:$0xff]
    %v1023 = vld [vmem:[#allocation2 + $0x1cc0] sm:$0xff]
    %v1024 = vld [vmem:[#allocation2 + $0x1cc8] sm:$0xff]
    %v1025 = vld [vmem:[#allocation2 + $0x1cd0] sm:$0xff]
    %v1026 = vld [vmem:[#allocation2 + $0x1cd8] sm:$0xff]
    %v1027 = vld [vmem:[#allocation2 + $0x1ce0] sm:$0xff]
    %v1028 = vld [vmem:[#allocation2 + $0x1ce8] sm:$0xff]
    %v1029 = vld [vmem:[#allocation2 + $0x1cf0] sm:$0xff]
    %v1030 = vld [vmem:[#allocation2 + $0x1cf8] sm:$0xff]
    %v1031 = vld [vmem:[#allocation2 + $0x1d00] sm:$0xff]
    %v1032 = vld [vmem:[#allocation2 + $0x1d08] sm:$0xff]
    %v1033 = vld [vmem:[#allocation2 + $0x1d10] sm:$0xff]
    %v1034 = vld [vmem:[#allocation2 + $0x1d18] sm:$0xff]
    %v1035 = vld [vmem:[#allocation2 + $0x1d20] sm:$0xff]
    %v1036 = vld [vmem:[#allocation2 + $0x1d28] sm:$0xff]
    %v1037 = vld [vmem:[#allocation2 + $0x1d30] sm:$0xff]
    %v1038 = vld [vmem:[#allocation2 + $0x1d38] sm:$0xff]
    %v1039 = vld [vmem:[#allocation2 + $0x1d40] sm:$0xff]
    %v1040 = vld [vmem:[#allocation2 + $0x1d48] sm:$0xff]
    %v1041 = vld [vmem:[#allocation2 + $0x1d50] sm:$0xff]
    %v1042 = vld [vmem:[#allocation2 + $0x1d58] sm:$0xff]
    %v1043 = vld [vmem:[#allocation2 + $0x1d60] sm:$0xff]
    %v1044 = vld [vmem:[#allocation2 + $0x1d68] sm:$0xff]
    %v1045 = vld [vmem:[#allocation2 + $0x1d70] sm:$0xff]
    %v1046 = vld [vmem:[#allocation2 + $0x1d78] sm:$0xff]
    %v1047 = vld [vmem:[#allocation2 + $0x1d80] sm:$0xff]
    %v1048 = vld [vmem:[#allocation2 + $0x1d88] sm:$0xff]
    %v1049 = vld [vmem:[#allocation2 + $0x1d90] sm:$0xff]
    %v1050 = vld [vmem:[#allocation2 + $0x1d98] sm:$0xff]
    %v1051 = vld [vmem:[#allocation2 + $0x1da0] sm:$0xff]
    %v1052 = vld [vmem:[#allocation2 + $0x1da8] sm:$0xff]
    %v1053 = vld [vmem:[#allocation2 + $0x1db0] sm:$0xff]
    %v1054 = vld [vmem:[#allocation2 + $0x1db8] sm:$0xff]
    %v1055 = vld [vmem:[#allocation2 + $0x1dc0] sm:$0xff]
    %v1056 = vld [vmem:[#allocation2 + $0x1dc8] sm:$0xff]
    %v1057 = vld [vmem:[#allocation2 + $0x1dd0] sm:$0xff]
    %v1058 = vld [vmem:[#allocation2 + $0x1dd8] sm:$0xff]
    %v1059 = vld [vmem:[#allocation2 + $0x1de0] sm:$0xff]
    %v1060 = vld [vmem:[#allocation2 + $0x1de8] sm:$0xff]
    %v1061 = vld [vmem:[#allocation2 + $0x1df0] sm:$0xff]
    %v1062 = vld [vmem:[#allocation2 + $0x1df8] sm:$0xff]
    %v1063 = vld [vmem:[#allocation2 + $0x1e00] sm:$0xff]
    %v1064 = vld [vmem:[#allocation2 + $0x1e08] sm:$0xff]
    %v1065 = vld [vmem:[#allocation2 + $0x1e10] sm:$0xff]
    %v1066 = vld [vmem:[#allocation2 + $0x1e18] sm:$0xff]
    %v1067 = vld [vmem:[#allocation2 + $0x1e20] sm:$0xff]
    %v1068 = vld [vmem:[#allocation2 + $0x1e28] sm:$0xff]
    %v1069 = vld [vmem:[#allocation2 + $0x1e30] sm:$0xff]
    %v1070 = vld [vmem:[#allocation2 + $0x1e38] sm:$0xff]
    %v1071 = vld [vmem:[#allocation2 + $0x1e40] sm:$0xff]
    %v1072 = vld [vmem:[#allocation2 + $0x1e48] sm:$0xff]
    %v1073 = vld [vmem:[#allocation2 + $0x1e50] sm:$0xff]
    %v1074 = vld [vmem:[#allocation2 + $0x1e58] sm:$0xff]
    %v1075 = vld [vmem:[#allocation2 + $0x1e60] sm:$0xff]
    %v1076 = vld [vmem:[#allocation2 + $0x1e68] sm:$0xff]
    %v1077 = vld [vmem:[#allocation2 + $0x1e70] sm:$0xff]
    %v1078 = vld [vmem:[#allocation2 + $0x1e78] sm:$0xff]
    %v1079 = vld [vmem:[#allocation2 + $0x1e80] sm:$0xff]
    %v1080 = vld [vmem:[#allocation2 + $0x1e88] sm:$0xff]
    %v1081 = vld [vmem:[#allocation2 + $0x1e90] sm:$0xff]
    %v1082 = vld [vmem:[#allocation2 + $0x1e98] sm:$0xff]
    %v1083 = vld [vmem:[#allocation2 + $0x1ea0] sm:$0xff]
    %v1084 = vld [vmem:[#allocation2 + $0x1ea8] sm:$0xff]
    %v1085 = vld [vmem:[#allocation2 + $0x1eb0] sm:$0xff]
    %v1086 = vld [vmem:[#allocation2 + $0x1eb8] sm:$0xff]
    %v1087 = vld [vmem:[#allocation2 + $0x1ec0] sm:$0xff]
    %v1088 = vld [vmem:[#allocation2 + $0x1ec8] sm:$0xff]
    %v1089 = vld [vmem:[#allocation2 + $0x1ed0] sm:$0xff]
    %v1090 = vld [vmem:[#allocation2 + $0x1ed8] sm:$0xff]
    %v1091 = vld [vmem:[#allocation2 + $0x1ee0] sm:$0xff]
    %v1092 = vld [vmem:[#allocation2 + $0x1ee8] sm:$0xff]
    %v1093 = vld [vmem:[#allocation2 + $0x1ef0] sm:$0xff]
    %v1094 = vld [vmem:[#allocation2 + $0x1ef8] sm:$0xff]
    %v1095 = vld [vmem:[#allocation2 + $0x1f00] sm:$0xff]
    %v1096 = vld [vmem:[#allocation2 + $0x1f08] sm:$0xff]
    %v1097 = vld [vmem:[#allocation2 + $0x1f10] sm:$0xff]
    %v1098 = vld [vmem:[#allocation2 + $0x1f18] sm:$0xff]
    %v1099 = vld [vmem:[#allocation2 + $0x1f20] sm:$0xff]
    %v1100 = vld [vmem:[#allocation2 + $0x1f28] sm:$0xff]
    %v1101 = vld [vmem:[#allocation2 + $0x1f30] sm:$0xff]
    %v1102 = vld [vmem:[#allocation2 + $0x1f38] sm:$0xff]
    %v1103 = vld [vmem:[#allocation2 + $0x1f40] sm:$0xff]
    %v1104 = vld [vmem:[#allocation2 + $0x1f48] sm:$0xff]
    %v1105 = vld [vmem:[#allocation2 + $0x1f50] sm:$0xff]
    %v1106 = vld [vmem:[#allocation2 + $0x1f58] sm:$0xff]
    %v1107 = vld [vmem:[#allocation2 + $0x1f60] sm:$0xff]
    %v1108 = vld [vmem:[#allocation2 + $0x1f68] sm:$0xff]
    %v1109 = vld [vmem:[#allocation2 + $0x1f70] sm:$0xff]
    %v1110 = vld [vmem:[#allocation2 + $0x1f78] sm:$0xff]
    %v1111 = vld [vmem:[#allocation2 + $0x1f80] sm:$0xff]
    %v1112 = vld [vmem:[#allocation2 + $0x1f88] sm:$0xff]
    %v1113 = vld [vmem:[#allocation2 + $0x1f90] sm:$0xff]
    %v1114 = vld [vmem:[#allocation2 + $0x1f98] sm:$0xff]
    %v1115 = vld [vmem:[#allocation2 + $0x1fa0] sm:$0xff]
    %v1116 = vld [vmem:[#allocation2 + $0x1fa8] sm:$0xff]
    %v1117 = vld [vmem:[#allocation2 + $0x1fb0] sm:$0xff]
    %v1118 = vld [vmem:[#allocation2 + $0x1fb8] sm:$0xff]
    %v1119 = vld [vmem:[#allocation2 + $0x1fc0] sm:$0xff]
    %v1120 = vld [vmem:[#allocation2 + $0x1fc8] sm:$0xff]
    %v1121 = vld [vmem:[#allocation2 + $0x1fd0] sm:$0xff]
    %v1122 = vld [vmem:[#allocation2 + $0x1fd8] sm:$0xff]
    %v1123 = vld [vmem:[#allocation2 + $0x1fe0] sm:$0xff]
    %v1124 = vld [vmem:[#allocation2 + $0x1fe8] sm:$0xff]
    %v1125 = vld [vmem:[#allocation2 + $0x1ff0] sm:$0xff]
    %v1126 = vld [vmem:[#allocation2 + $0x1ff8] sm:$0xff]
    %v1127 = vld [vmem:[#allocation5] sm:$0xf]
    %v1129 = vperm.slane %v1127, 0
    %v1130 = vperm.slane %v1127, 1
    %v1131 = vperm.slane %v1127, 2
    %v1132 = vperm.slane %v1127, 3
    %1141 = vst [vmem:[#allocation1] ss:$4 sm:$0xff] %v99
    %s1142 = scalar_lea.vmem [#allocation1], 32
    %1143 = vst [vmem:[%s1142] ss:$4 sm:$0xff] %v100
    %v1144 = vld.sshfl [vmem:[#allocation1] sm:$0xff pattern:$0x73625140]
    %v1145 = vld.sshfl [vmem:[#allocation1 + $0x8] sm:$0xff pattern:$0x73625140]
    %v1146 = vld.sshfl [vmem:[#allocation1 + $0x10] sm:$0xff pattern:$0x73625140]
    %v1147 = vld.sshfl [vmem:[#allocation1 + $0x18] sm:$0xff pattern:$0x73625140]
    %v1148 = vld.sshfl [vmem:[#allocation1 + $0x20] sm:$0xff pattern:$0x73625140]
    %v1149 = vld.sshfl [vmem:[#allocation1 + $0x28] sm:$0xff pattern:$0x73625140]
    %v1150 = vld.sshfl [vmem:[#allocation1 + $0x30] sm:$0xff pattern:$0x73625140]
    %v1151 = vld.sshfl [vmem:[#allocation1 + $0x38] sm:$0xff pattern:$0x73625140]
    %1152 = vst [vmem:[#allocation1] ss:$4 sm:$0xff] %v101
    %1153 = vst [vmem:[%s1142] ss:$4 sm:$0xff] %v102
    %v1154 = vld.sshfl [vmem:[#allocation1] sm:$0xff pattern:$0x73625140]
    %v1155 = vld.sshfl [vmem:[#allocation1 + $0x8] sm:$0xff pattern:$0x73625140]
    %v1156 = vld.sshfl [vmem:[#allocation1 + $0x10] sm:$0xff pattern:$0x73625140]
    %v1157 = vld.sshfl [vmem:[#allocation1 + $0x18] sm:$0xff pattern:$0x73625140]
    %v1158 = vld.sshfl [vmem:[#allocation1 + $0x20] sm:$0xff pattern:$0x73625140]
    %v1159 = vld.sshfl [vmem:[#allocation1 + $0x28] sm:$0xff pattern:$0x73625140]
    %v1160 = vld.sshfl [vmem:[#allocation1 + $0x30] sm:$0xff pattern:$0x73625140]
    %v1161 = vld.sshfl [vmem:[#allocation1 + $0x38] sm:$0xff pattern:$0x73625140]
    %1178 = vmatpush.msra.mxu0 %v163
    %1179 = vmatpush.msra.mxu0 %v159
    %1180 = vmatpush.msra.mxu0 %v155
    %1181 = vmatpush.msra.mxu0 %v151
    %1182 = vmatpush.msra.mxu0 %v147
    %1183 = vmatpush.msra.mxu0 %v143
    %1184 = vmatpush.msra.mxu0 %v139
    %1185 = vmatpush.msra.mxu0 %v135
    %1186 = vmatpush.msra.mxu0 %v131
    %1187 = vmatpush.msra.mxu0 %v127
    %1188 = vmatpush.msra.mxu0 %v123
    %1189 = vmatpush.msra.mxu0 %v119
    %1190 = vmatpush.msra.mxu0 %v115
    %1191 = vmatpush.msra.mxu0 %v111
    %1192 = vmatpush.msra.mxu0 %v107
    %1193 = vmatpush.msra.mxu0 %v103
    %1194 = vmatmul.f32.gmra.mxu0 %v1144
    %v1195 = vpop.f32.mrf.mxu0
    %v1196 = vadd.f32 %v1129, %v1195
    %1197 = vdwg.mxu0
    %1198 = vmatpush.msra.mxu0 %v227
    %1199 = vmatpush.msra.mxu0 %v223
    %1200 = vmatpush.msra.mxu0 %v219
    %1201 = vmatpush.msra.mxu0 %v215
    %1202 = vmatpush.msra.mxu0 %v211
    %1203 = vmatpush.msra.mxu0 %v207
    %1204 = vmatpush.msra.mxu0 %v203
    %1205 = vmatpush.msra.mxu0 %v199
    %1206 = vmatpush.msra.mxu0 %v195
    %1207 = vmatpush.msra.mxu0 %v191
    %1208 = vmatpush.msra.mxu0 %v187
    %1209 = vmatpush.msra.mxu0 %v183
    %1210 = vmatpush.msra.mxu0 %v179
    %1211 = vmatpush.msra.mxu0 %v175
    %1212 = vmatpush.msra.mxu0 %v171
    %1213 = vmatpush.msra.mxu0 %v167
    %1214 = vmatmul.f32.gmra.mxu0 %v1145
    %v1215 = vpop.f32.mrf.mxu0
    %v1216 = vadd.f32 %v1196, %v1215
    %1217 = vdwg.mxu0
    %1218 = vmatpush.msra.mxu0 %v291
    %1219 = vmatpush.msra.mxu0 %v287
    %1220 = vmatpush.msra.mxu0 %v283
    %1221 = vmatpush.msra.mxu0 %v279
    %1222 = vmatpush.msra.mxu0 %v275
    %1223 = vmatpush.msra.mxu0 %v271
    %1224 = vmatpush.msra.mxu0 %v267
    %1225 = vmatpush.msra.mxu0 %v263
    %1226 = vmatpush.msra.mxu0 %v259
    %1227 = vmatpush.msra.mxu0 %v255
    %1228 = vmatpush.msra.mxu0 %v251
    %1229 = vmatpush.msra.mxu0 %v247
    %1230 = vmatpush.msra.mxu0 %v243
    %1231 = vmatpush.msra.mxu0 %v239
    %1232 = vmatpush.msra.mxu0 %v235
    %1233 = vmatpush.msra.mxu0 %v231
    %1234 = vmatmul.f32.gmra.mxu0 %v1146
    %v1235 = vpop.f32.mrf.mxu0
    %v1236 = vadd.f32 %v1216, %v1235
    %1237 = vdwg.mxu0
    %1238 = vmatpush.msra.mxu0 %v355
    %1239 = vmatpush.msra.mxu0 %v351
    %1240 = vmatpush.msra.mxu0 %v347
    %1241 = vmatpush.msra.mxu0 %v343
    %1242 = vmatpush.msra.mxu0 %v339
    %1243 = vmatpush.msra.mxu0 %v335
    %1244 = vmatpush.msra.mxu0 %v331
    %1245 = vmatpush.msra.mxu0 %v327
    %1246 = vmatpush.msra.mxu0 %v323
    %1247 = vmatpush.msra.mxu0 %v319
    %1248 = vmatpush.msra.mxu0 %v315
    %1249 = vmatpush.msra.mxu0 %v311
    %1250 = vmatpush.msra.mxu0 %v307
    %1251 = vmatpush.msra.mxu0 %v303
    %1252 = vmatpush.msra.mxu0 %v299
    %1253 = vmatpush.msra.mxu0 %v295
    %1254 = vmatmul.f32.gmra.mxu0 %v1147
    %v1255 = vpop.f32.mrf.mxu0
    %v1256 = vadd.f32 %v1236, %v1255
    %1257 = vdwg.mxu0
    %1258 = vmatpush.msra.mxu0 %v419
    %1259 = vmatpush.msra.mxu0 %v415
    %1260 = vmatpush.msra.mxu0 %v411
    %1261 = vmatpush.msra.mxu0 %v407
    %1262 = vmatpush.msra.mxu0 %v403
    %1263 = vmatpush.msra.mxu0 %v399
    %1264 = vmatpush.msra.mxu0 %v395
    %1265 = vmatpush.msra.mxu0 %v391
    %1266 = vmatpush.msra.mxu0 %v387
    %1267 = vmatpush.msra.mxu0 %v383
    %1268 = vmatpush.msra.mxu0 %v379
    %1269 = vmatpush.msra.mxu0 %v375
    %1270 = vmatpush.msra.mxu0 %v371
    %1271 = vmatpush.msra.mxu0 %v367
    %1272 = vmatpush.msra.mxu0 %v363
    %1273 = vmatpush.msra.mxu0 %v359
    %1274 = vmatmul.f32.gmra.mxu0 %v1148
    %v1275 = vpop.f32.mrf.mxu0
    %v1276 = vadd.f32 %v1256, %v1275
    %1277 = vdwg.mxu0
    %1278 = vmatpush.msra.mxu0 %v483
    %1279 = vmatpush.msra.mxu0 %v479
    %1280 = vmatpush.msra.mxu0 %v475
    %1281 = vmatpush.msra.mxu0 %v471
    %1282 = vmatpush.msra.mxu0 %v467
    %1283 = vmatpush.msra.mxu0 %v463
    %1284 = vmatpush.msra.mxu0 %v459
    %1285 = vmatpush.msra.mxu0 %v455
    %1286 = vmatpush.msra.mxu0 %v451
    %1287 = vmatpush.msra.mxu0 %v447
    %1288 = vmatpush.msra.mxu0 %v443
    %1289 = vmatpush.msra.mxu0 %v439
    %1290 = vmatpush.msra.mxu0 %v435
    %1291 = vmatpush.msra.mxu0 %v431
    %1292 = vmatpush.msra.mxu0 %v427
    %1293 = vmatpush.msra.mxu0 %v423
    %1294 = vmatmul.f32.gmra.mxu0 %v1149
    %v1295 = vpop.f32.mrf.mxu0
    %v1296 = vadd.f32 %v1276, %v1295
    %1297 = vdwg.mxu0
    %1298 = vmatpush.msra.mxu0 %v547
    %1299 = vmatpush.msra.mxu0 %v543
    %1300 = vmatpush.msra.mxu0 %v539
    %1301 = vmatpush.msra.mxu0 %v535
    %1302 = vmatpush.msra.mxu0 %v531
    %1303 = vmatpush.msra.mxu0 %v527
    %1304 = vmatpush.msra.mxu0 %v523
    %1305 = vmatpush.msra.mxu0 %v519
    %1306 = vmatpush.msra.mxu0 %v515
    %1307 = vmatpush.msra.mxu0 %v511
    %1308 = vmatpush.msra.mxu0 %v507
    %1309 = vmatpush.msra.mxu0 %v503
    %1310 = vmatpush.msra.mxu0 %v499
    %1311 = vmatpush.msra.mxu0 %v495
    %1312 = vmatpush.msra.mxu0 %v491
    %1313 = vmatpush.msra.mxu0 %v487
    %1314 = vmatmul.f32.gmra.mxu0 %v1150
    %v1315 = vpop.f32.mrf.mxu0
    %v1316 = vadd.f32 %v1296, %v1315
    %1317 = vdwg.mxu0
    %1318 = vmatpush.msra.mxu0 %v611
    %1319 = vmatpush.msra.mxu0 %v607
    %1320 = vmatpush.msra.mxu0 %v603
    %1321 = vmatpush.msra.mxu0 %v599
    %1322 = vmatpush.msra.mxu0 %v595
    %1323 = vmatpush.msra.mxu0 %v591
    %1324 = vmatpush.msra.mxu0 %v587
    %1325 = vmatpush.msra.mxu0 %v583
    %1326 = vmatpush.msra.mxu0 %v579
    %1327 = vmatpush.msra.mxu0 %v575
    %1328 = vmatpush.msra.mxu0 %v571
    %1329 = vmatpush.msra.mxu0 %v567
    %1330 = vmatpush.msra.mxu0 %v563
    %1331 = vmatpush.msra.mxu0 %v559
    %1332 = vmatpush.msra.mxu0 %v555
    %1333 = vmatpush.msra.mxu0 %v551
    %1334 = vmatmul.f32.gmra.mxu0 %v1151
    %v1335 = vpop.f32.mrf.mxu0
    %v1336 = vadd.f32 %v1316, %v1335
    %1337 = vdwg.mxu0
    %1338 = vmatpush.msra.mxu0 %v675
    %1339 = vmatpush.msra.mxu0 %v671
    %1340 = vmatpush.msra.mxu0 %v667
    %1341 = vmatpush.msra.mxu0 %v663
    %1342 = vmatpush.msra.mxu0 %v659
    %1343 = vmatpush.msra.mxu0 %v655
    %1344 = vmatpush.msra.mxu0 %v651
    %1345 = vmatpush.msra.mxu0 %v647
    %1346 = vmatpush.msra.mxu0 %v643
    %1347 = vmatpush.msra.mxu0 %v639
    %1348 = vmatpush.msra.mxu0 %v635
    %1349 = vmatpush.msra.mxu0 %v631
    %1350 = vmatpush.msra.mxu0 %v627
    %1351 = vmatpush.msra.mxu0 %v623
    %1352 = vmatpush.msra.mxu0 %v619
    %1353 = vmatpush.msra.mxu0 %v615
    %1354 = vmatmul.f32.gmra.mxu0 %v1154
    %v1355 = vpop.f32.mrf.mxu0
    %v1356 = vadd.f32 %v1336, %v1355
    %1357 = vdwg.mxu0
    %1358 = vmatpush.msra.mxu0 %v739
    %1359 = vmatpush.msra.mxu0 %v735
    %1360 = vmatpush.msra.mxu0 %v731
    %1361 = vmatpush.msra.mxu0 %v727
    %1362 = vmatpush.msra.mxu0 %v723
    %1363 = vmatpush.msra.mxu0 %v719
    %1364 = vmatpush.msra.mxu0 %v715
    %1365 = vmatpush.msra.mxu0 %v711
    %1366 = vmatpush.msra.mxu0 %v707
    %1367 = vmatpush.msra.mxu0 %v703
    %1368 = vmatpush.msra.mxu0 %v699
    %1369 = vmatpush.msra.mxu0 %v695
    %1370 = vmatpush.msra.mxu0 %v691
    %1371 = vmatpush.msra.mxu0 %v687
    %1372 = vmatpush.msra.mxu0 %v683
    %1373 = vmatpush.msra.mxu0 %v679
    %1374 = vmatmul.f32.gmra.mxu0 %v1155
    %v1375 = vpop.f32.mrf.mxu0
    %v1376 = vadd.f32 %v1356, %v1375
    %1377 = vdwg.mxu0
    %1378 = vmatpush.msra.mxu0 %v803
    %1379 = vmatpush.msra.mxu0 %v799
    %1380 = vmatpush.msra.mxu0 %v795
    %1381 = vmatpush.msra.mxu0 %v791
    %1382 = vmatpush.msra.mxu0 %v787
    %1383 = vmatpush.msra.mxu0 %v783
    %1384 = vmatpush.msra.mxu0 %v779
    %1385 = vmatpush.msra.mxu0 %v775
    %1386 = vmatpush.msra.mxu0 %v771
    %1387 = vmatpush.msra.mxu0 %v767
    %1388 = vmatpush.msra.mxu0 %v763
    %1389 = vmatpush.msra.mxu0 %v759
    %1390 = vmatpush.msra.mxu0 %v755
    %1391 = vmatpush.msra.mxu0 %v751
    %1392 = vmatpush.msra.mxu0 %v747
    %1393 = vmatpush.msra.mxu0 %v743
    %1394 = vmatmul.f32.gmra.mxu0 %v1156
    %v1395 = vpop.f32.mrf.mxu0
    %v1396 = vadd.f32 %v1376, %v1395
    %1397 = vdwg.mxu0
    %1398 = vmatpush.msra.mxu0 %v867
    %1399 = vmatpush.msra.mxu0 %v863
    %1400 = vmatpush.msra.mxu0 %v859
    %1401 = vmatpush.msra.mxu0 %v855
    %1402 = vmatpush.msra.mxu0 %v851
    %1403 = vmatpush.msra.mxu0 %v847
    %1404 = vmatpush.msra.mxu0 %v843
    %1405 = vmatpush.msra.mxu0 %v839
    %1406 = vmatpush.msra.mxu0 %v835
    %1407 = vmatpush.msra.mxu0 %v831
    %1408 = vmatpush.msra.mxu0 %v827
    %1409 = vmatpush.msra.mxu0 %v823
    %1410 = vmatpush.msra.mxu0 %v819
    %1411 = vmatpush.msra.mxu0 %v815
    %1412 = vmatpush.msra.mxu0 %v811
    %1413 = vmatpush.msra.mxu0 %v807
    %1414 = vmatmul.f32.gmra.mxu0 %v1157
    %v1415 = vpop.f32.mrf.mxu0
    %v1416 = vadd.f32 %v1396, %v1415
    %1417 = vdwg.mxu0
    %1418 = vmatpush.msra.mxu0 %v931
    %1419 = vmatpush.msra.mxu0 %v927
    %1420 = vmatpush.msra.mxu0 %v923
    %1421 = vmatpush.msra.mxu0 %v919
    %1422 = vmatpush.msra.mxu0 %v915
    %1423 = vmatpush.msra.mxu0 %v911
    %1424 = vmatpush.msra.mxu0 %v907
    %1425 = vmatpush.msra.mxu0 %v903
    %1426 = vmatpush.msra.mxu0 %v899
    %1427 = vmatpush.msra.mxu0 %v895
    %1428 = vmatpush.msra.mxu0 %v891
    %1429 = vmatpush.msra.mxu0 %v887
    %1430 = vmatpush.msra.mxu0 %v883
    %1431 = vmatpush.msra.mxu0 %v879
    %1432 = vmatpush.msra.mxu0 %v875
    %1433 = vmatpush.msra.mxu0 %v871
    %1434 = vmatmul.f32.gmra.mxu0 %v1158
    %v1435 = vpop.f32.mrf.mxu0
    %v1436 = vadd.f32 %v1416, %v1435
    %1437 = vdwg.mxu0
    %1438 = vmatpush.msra.mxu0 %v995
    %1439 = vmatpush.msra.mxu0 %v991
    %1440 = vmatpush.msra.mxu0 %v987
    %1441 = vmatpush.msra.mxu0 %v983
    %1442 = vmatpush.msra.mxu0 %v979
    %1443 = vmatpush.msra.mxu0 %v975
    %1444 = vmatpush.msra.mxu0 %v971
    %1445 = vmatpush.msra.mxu0 %v967
    %1446 = vmatpush.msra.mxu0 %v963
    %1447 = vmatpush.msra.mxu0 %v959
    %1448 = vmatpush.msra.mxu0 %v955
    %1449 = vmatpush.msra.mxu0 %v951
    %1450 = vmatpush.msra.mxu0 %v947
    %1451 = vmatpush.msra.mxu0 %v943
    %1452 = vmatpush.msra.mxu0 %v939
    %1453 = vmatpush.msra.mxu0 %v935
    %1454 = vmatmul.f32.gmra.mxu0 %v1159
    %v1455 = vpop.f32.mrf.mxu0
    %v1456 = vadd.f32 %v1436, %v1455
    %1457 = vdwg.mxu0
    %1458 = vmatpush.msra.mxu0 %v1059
    %1459 = vmatpush.msra.mxu0 %v1055
    %1460 = vmatpush.msra.mxu0 %v1051
    %1461 = vmatpush.msra.mxu0 %v1047
    %1462 = vmatpush.msra.mxu0 %v1043
    %1463 = vmatpush.msra.mxu0 %v1039
    %1464 = vmatpush.msra.mxu0 %v1035
    %1465 = vmatpush.msra.mxu0 %v1031
    %1466 = vmatpush.msra.mxu0 %v1027
    %1467 = vmatpush.msra.mxu0 %v1023
    %1468 = vmatpush.msra.mxu0 %v1019
    %1469 = vmatpush.msra.mxu0 %v1015
    %1470 = vmatpush.msra.mxu0 %v1011
    %1471 = vmatpush.msra.mxu0 %v1007
    %1472 = vmatpush.msra.mxu0 %v1003
    %1473 = vmatpush.msra.mxu0 %v999
    %1474 = vmatmul.f32.gmra.mxu0 %v1160
    %v1475 = vpop.f32.mrf.mxu0
    %v1476 = vadd.f32 %v1456, %v1475
    %1477 = vdwg.mxu0
    %1478 = vmatpush.msra.mxu0 %v1123
    %1479 = vmatpush.msra.mxu0 %v1119
    %1480 = vmatpush.msra.mxu0 %v1115
    %1481 = vmatpush.msra.mxu0 %v1111
    %1482 = vmatpush.msra.mxu0 %v1107
    %1483 = vmatpush.msra.mxu0 %v1103
    %1484 = vmatpush.msra.mxu0 %v1099
    %1485 = vmatpush.msra.mxu0 %v1095
    %1486 = vmatpush.msra.mxu0 %v1091
    %1487 = vmatpush.msra.mxu0 %v1087
    %1488 = vmatpush.msra.mxu0 %v1083
    %1489 = vmatpush.msra.mxu0 %v1079
    %1490 = vmatpush.msra.mxu0 %v1075
    %1491 = vmatpush.msra.mxu0 %v1071
    %1492 = vmatpush.msra.mxu0 %v1067
    %1493 = vmatpush.msra.mxu0 %v1063
    %1494 = vmatmul.f32.gmra.mxu0 %v1161
    %v1495 = vpop.f32.mrf.mxu0
    %v1496 = vadd.f32 %v1476, %v1495
    %1497 = vdwg.mxu0
    %1498 = vmatpush.msra.mxu0 %v164
    %1499 = vmatpush.msra.mxu0 %v160
    %1500 = vmatpush.msra.mxu0 %v156
    %1501 = vmatpush.msra.mxu0 %v152
    %1502 = vmatpush.msra.mxu0 %v148
    %1503 = vmatpush.msra.mxu0 %v144
    %1504 = vmatpush.msra.mxu0 %v140
    %1505 = vmatpush.msra.mxu0 %v136
    %1506 = vmatpush.msra.mxu0 %v132
    %1507 = vmatpush.msra.mxu0 %v128
    %1508 = vmatpush.msra.mxu0 %v124
    %1509 = vmatpush.msra.mxu0 %v120
    %1510 = vmatpush.msra.mxu0 %v116
    %1511 = vmatpush.msra.mxu0 %v112
    %1512 = vmatpush.msra.mxu0 %v108
    %1513 = vmatpush.msra.mxu0 %v104
    %1514 = vmatmul.f32.gmra.mxu0 %v1144
    %v1515 = vpop.f32.mrf.mxu0
    %v1516 = vadd.f32 %v1130, %v1515
    %1517 = vdwg.mxu0
    %1518 = vmatpush.msra.mxu0 %v228
    %1519 = vmatpush.msra.mxu0 %v224
    %1520 = vmatpush.msra.mxu0 %v220
    %1521 = vmatpush.msra.mxu0 %v216
    %1522 = vmatpush.msra.mxu0 %v212
    %1523 = vmatpush.msra.mxu0 %v208
    %1524 = vmatpush.msra.mxu0 %v204
    %1525 = vmatpush.msra.mxu0 %v200
    %1526 = vmatpush.msra.mxu0 %v196
    %1527 = vmatpush.msra.mxu0 %v192
    %1528 = vmatpush.msra.mxu0 %v188
    %1529 = vmatpush.msra.mxu0 %v184
    %1530 = vmatpush.msra.mxu0 %v180
    %1531 = vmatpush.msra.mxu0 %v176
    %1532 = vmatpush.msra.mxu0 %v172
    %1533 = vmatpush.msra.mxu0 %v168
    %1534 = vmatmul.f32.gmra.mxu0 %v1145
    %v1535 = vpop.f32.mrf.mxu0
    %v1536 = vadd.f32 %v1516, %v1535
    %1537 = vdwg.mxu0
    %1538 = vmatpush.msra.mxu0 %v292
    %1539 = vmatpush.msra.mxu0 %v288
    %1540 = vmatpush.msra.mxu0 %v284
    %1541 = vmatpush.msra.mxu0 %v280
    %1542 = vmatpush.msra.mxu0 %v276
    %1543 = vmatpush.msra.mxu0 %v272
    %1544 = vmatpush.msra.mxu0 %v268
    %1545 = vmatpush.msra.mxu0 %v264
    %1546 = vmatpush.msra.mxu0 %v260
    %1547 = vmatpush.msra.mxu0 %v256
    %1548 = vmatpush.msra.mxu0 %v252
    %1549 = vmatpush.msra.mxu0 %v248
    %1550 = vmatpush.msra.mxu0 %v244
    %1551 = vmatpush.msra.mxu0 %v240
    %1552 = vmatpush.msra.mxu0 %v236
    %1553 = vmatpush.msra.mxu0 %v232
    %1554 = vmatmul.f32.gmra.mxu0 %v1146
    %v1555 = vpop.f32.mrf.mxu0
    %v1556 = vadd.f32 %v1536, %v1555
    %1557 = vdwg.mxu0
    %1558 = vmatpush.msra.mxu0 %v356
    %1559 = vmatpush.msra.mxu0 %v352
    %1560 = vmatpush.msra.mxu0 %v348
    %1561 = vmatpush.msra.mxu0 %v344
    %1562 = vmatpush.msra.mxu0 %v340
    %1563 = vmatpush.msra.mxu0 %v336
    %1564 = vmatpush.msra.mxu0 %v332
    %1565 = vmatpush.msra.mxu0 %v328
    %1566 = vmatpush.msra.mxu0 %v324
    %1567 = vmatpush.msra.mxu0 %v320
    %1568 = vmatpush.msra.mxu0 %v316
    %1569 = vmatpush.msra.mxu0 %v312
    %1570 = vmatpush.msra.mxu0 %v308
    %1571 = vmatpush.msra.mxu0 %v304
    %1572 = vmatpush.msra.mxu0 %v300
    %1573 = vmatpush.msra.mxu0 %v296
    %1574 = vmatmul.f32.gmra.mxu0 %v1147
    %v1575 = vpop.f32.mrf.mxu0
    %v1576 = vadd.f32 %v1556, %v1575
    %1577 = vdwg.mxu0
    %1578 = vmatpush.msra.mxu0 %v420
    %1579 = vmatpush.msra.mxu0 %v416
    %1580 = vmatpush.msra.mxu0 %v412
    %1581 = vmatpush.msra.mxu0 %v408
    %1582 = vmatpush.msra.mxu0 %v404
    %1583 = vmatpush.msra.mxu0 %v400
    %1584 = vmatpush.msra.mxu0 %v396
    %1585 = vmatpush.msra.mxu0 %v392
    %1586 = vmatpush.msra.mxu0 %v388
    %1587 = vmatpush.msra.mxu0 %v384
    %1588 = vmatpush.msra.mxu0 %v380
    %1589 = vmatpush.msra.mxu0 %v376
    %1590 = vmatpush.msra.mxu0 %v372
    %1591 = vmatpush.msra.mxu0 %v368
    %1592 = vmatpush.msra.mxu0 %v364
    %1593 = vmatpush.msra.mxu0 %v360
    %1594 = vmatmul.f32.gmra.mxu0 %v1148
    %v1595 = vpop.f32.mrf.mxu0
    %v1596 = vadd.f32 %v1576, %v1595
    %1597 = vdwg.mxu0
    %1598 = vmatpush.msra.mxu0 %v484
    %1599 = vmatpush.msra.mxu0 %v480
    %1600 = vmatpush.msra.mxu0 %v476
    %1601 = vmatpush.msra.mxu0 %v472
    %1602 = vmatpush.msra.mxu0 %v468
    %1603 = vmatpush.msra.mxu0 %v464
    %1604 = vmatpush.msra.mxu0 %v460
    %1605 = vmatpush.msra.mxu0 %v456
    %1606 = vmatpush.msra.mxu0 %v452
    %1607 = vmatpush.msra.mxu0 %v448
    %1608 = vmatpush.msra.mxu0 %v444
    %1609 = vmatpush.msra.mxu0 %v440
    %1610 = vmatpush.msra.mxu0 %v436
    %1611 = vmatpush.msra.mxu0 %v432
    %1612 = vmatpush.msra.mxu0 %v428
    %1613 = vmatpush.msra.mxu0 %v424
    %1614 = vmatmul.f32.gmra.mxu0 %v1149
    %v1615 = vpop.f32.mrf.mxu0
    %v1616 = vadd.f32 %v1596, %v1615
    %1617 = vdwg.mxu0
    %1618 = vmatpush.msra.mxu0 %v548
    %1619 = vmatpush.msra.mxu0 %v544
    %1620 = vmatpush.msra.mxu0 %v540
    %1621 = vmatpush.msra.mxu0 %v536
    %1622 = vmatpush.msra.mxu0 %v532
    %1623 = vmatpush.msra.mxu0 %v528
    %1624 = vmatpush.msra.mxu0 %v524
    %1625 = vmatpush.msra.mxu0 %v520
    %1626 = vmatpush.msra.mxu0 %v516
    %1627 = vmatpush.msra.mxu0 %v512
    %1628 = vmatpush.msra.mxu0 %v508
    %1629 = vmatpush.msra.mxu0 %v504
    %1630 = vmatpush.msra.mxu0 %v500
    %1631 = vmatpush.msra.mxu0 %v496
    %1632 = vmatpush.msra.mxu0 %v492
    %1633 = vmatpush.msra.mxu0 %v488
    %1634 = vmatmul.f32.gmra.mxu0 %v1150
    %v1635 = vpop.f32.mrf.mxu0
    %v1636 = vadd.f32 %v1616, %v1635
    %1637 = vdwg.mxu0
    %1638 = vmatpush.msra.mxu0 %v612
    %1639 = vmatpush.msra.mxu0 %v608
    %1640 = vmatpush.msra.mxu0 %v604
    %1641 = vmatpush.msra.mxu0 %v600
    %1642 = vmatpush.msra.mxu0 %v596
    %1643 = vmatpush.msra.mxu0 %v592
    %1644 = vmatpush.msra.mxu0 %v588
    %1645 = vmatpush.msra.mxu0 %v584
    %1646 = vmatpush.msra.mxu0 %v580
    %1647 = vmatpush.msra.mxu0 %v576
    %1648 = vmatpush.msra.mxu0 %v572
    %1649 = vmatpush.msra.mxu0 %v568
    %1650 = vmatpush.msra.mxu0 %v564
    %1651 = vmatpush.msra.mxu0 %v560
    %1652 = vmatpush.msra.mxu0 %v556
    %1653 = vmatpush.msra.mxu0 %v552
    %1654 = vmatmul.f32.gmra.mxu0 %v1151
    %v1655 = vpop.f32.mrf.mxu0
    %v1656 = vadd.f32 %v1636, %v1655
    %1657 = vdwg.mxu0
    %1658 = vmatpush.msra.mxu0 %v676
    %1659 = vmatpush.msra.mxu0 %v672
    %1660 = vmatpush.msra.mxu0 %v668
    %1661 = vmatpush.msra.mxu0 %v664
    %1662 = vmatpush.msra.mxu0 %v660
    %1663 = vmatpush.msra.mxu0 %v656
    %1664 = vmatpush.msra.mxu0 %v652
    %1665 = vmatpush.msra.mxu0 %v648
    %1666 = vmatpush.msra.mxu0 %v644
    %1667 = vmatpush.msra.mxu0 %v640
    %1668 = vmatpush.msra.mxu0 %v636
    %1669 = vmatpush.msra.mxu0 %v632
    %1670 = vmatpush.msra.mxu0 %v628
    %1671 = vmatpush.msra.mxu0 %v624
    %1672 = vmatpush.msra.mxu0 %v620
    %1673 = vmatpush.msra.mxu0 %v616
    %1674 = vmatmul.f32.gmra.mxu0 %v1154
    %v1675 = vpop.f32.mrf.mxu0
    %v1676 = vadd.f32 %v1656, %v1675
    %1677 = vdwg.mxu0
    %1678 = vmatpush.msra.mxu0 %v740
    %1679 = vmatpush.msra.mxu0 %v736
    %1680 = vmatpush.msra.mxu0 %v732
    %1681 = vmatpush.msra.mxu0 %v728
    %1682 = vmatpush.msra.mxu0 %v724
    %1683 = vmatpush.msra.mxu0 %v720
    %1684 = vmatpush.msra.mxu0 %v716
    %1685 = vmatpush.msra.mxu0 %v712
    %1686 = vmatpush.msra.mxu0 %v708
    %1687 = vmatpush.msra.mxu0 %v704
    %1688 = vmatpush.msra.mxu0 %v700
    %1689 = vmatpush.msra.mxu0 %v696
    %1690 = vmatpush.msra.mxu0 %v692
    %1691 = vmatpush.msra.mxu0 %v688
    %1692 = vmatpush.msra.mxu0 %v684
    %1693 = vmatpush.msra.mxu0 %v680
    %1694 = vmatmul.f32.gmra.mxu0 %v1155
    %v1695 = vpop.f32.mrf.mxu0
    %v1696 = vadd.f32 %v1676, %v1695
    %1697 = vdwg.mxu0
    %1698 = vmatpush.msra.mxu0 %v804
    %1699 = vmatpush.msra.mxu0 %v800
    %1700 = vmatpush.msra.mxu0 %v796
    %1701 = vmatpush.msra.mxu0 %v792
    %1702 = vmatpush.msra.mxu0 %v788
    %1703 = vmatpush.msra.mxu0 %v784
    %1704 = vmatpush.msra.mxu0 %v780
    %1705 = vmatpush.msra.mxu0 %v776
    %1706 = vmatpush.msra.mxu0 %v772
    %1707 = vmatpush.msra.mxu0 %v768
    %1708 = vmatpush.msra.mxu0 %v764
    %1709 = vmatpush.msra.mxu0 %v760
    %1710 = vmatpush.msra.mxu0 %v756
    %1711 = vmatpush.msra.mxu0 %v752
    %1712 = vmatpush.msra.mxu0 %v748
    %1713 = vmatpush.msra.mxu0 %v744
    %1714 = vmatmul.f32.gmra.mxu0 %v1156
    %v1715 = vpop.f32.mrf.mxu0
    %v1716 = vadd.f32 %v1696, %v1715
    %1717 = vdwg.mxu0
    %1718 = vmatpush.msra.mxu0 %v868
    %1719 = vmatpush.msra.mxu0 %v864
    %1720 = vmatpush.msra.mxu0 %v860
    %1721 = vmatpush.msra.mxu0 %v856
    %1722 = vmatpush.msra.mxu0 %v852
    %1723 = vmatpush.msra.mxu0 %v848
    %1724 = vmatpush.msra.mxu0 %v844
    %1725 = vmatpush.msra.mxu0 %v840
    %1726 = vmatpush.msra.mxu0 %v836
    %1727 = vmatpush.msra.mxu0 %v832
    %1728 = vmatpush.msra.mxu0 %v828
    %1729 = vmatpush.msra.mxu0 %v824
    %1730 = vmatpush.msra.mxu0 %v820
    %1731 = vmatpush.msra.mxu0 %v816
    %1732 = vmatpush.msra.mxu0 %v812
    %1733 = vmatpush.msra.mxu0 %v808
    %1734 = vmatmul.f32.gmra.mxu0 %v1157
    %v1735 = vpop.f32.mrf.mxu0
    %v1736 = vadd.f32 %v1716, %v1735
    %1737 = vdwg.mxu0
    %1738 = vmatpush.msra.mxu0 %v932
    %1739 = vmatpush.msra.mxu0 %v928
    %1740 = vmatpush.msra.mxu0 %v924
    %1741 = vmatpush.msra.mxu0 %v920
    %1742 = vmatpush.msra.mxu0 %v916
    %1743 = vmatpush.msra.mxu0 %v912
    %1744 = vmatpush.msra.mxu0 %v908
    %1745 = vmatpush.msra.mxu0 %v904
    %1746 = vmatpush.msra.mxu0 %v900
    %1747 = vmatpush.msra.mxu0 %v896
    %1748 = vmatpush.msra.mxu0 %v892
    %1749 = vmatpush.msra.mxu0 %v888
    %1750 = vmatpush.msra.mxu0 %v884
    %1751 = vmatpush.msra.mxu0 %v880
    %1752 = vmatpush.msra.mxu0 %v876
    %1753 = vmatpush.msra.mxu0 %v872
    %1754 = vmatmul.f32.gmra.mxu0 %v1158
    %v1755 = vpop.f32.mrf.mxu0
    %v1756 = vadd.f32 %v1736, %v1755
    %1757 = vdwg.mxu0
    %1758 = vmatpush.msra.mxu0 %v996
    %1759 = vmatpush.msra.mxu0 %v992
    %1760 = vmatpush.msra.mxu0 %v988
    %1761 = vmatpush.msra.mxu0 %v984
    %1762 = vmatpush.msra.mxu0 %v980
    %1763 = vmatpush.msra.mxu0 %v976
    %1764 = vmatpush.msra.mxu0 %v972
    %1765 = vmatpush.msra.mxu0 %v968
    %1766 = vmatpush.msra.mxu0 %v964
    %1767 = vmatpush.msra.mxu0 %v960
    %1768 = vmatpush.msra.mxu0 %v956
    %1769 = vmatpush.msra.mxu0 %v952
    %1770 = vmatpush.msra.mxu0 %v948
    %1771 = vmatpush.msra.mxu0 %v944
    %1772 = vmatpush.msra.mxu0 %v940
    %1773 = vmatpush.msra.mxu0 %v936
    %1774 = vmatmul.f32.gmra.mxu0 %v1159
    %v1775 = vpop.f32.mrf.mxu0
    %v1776 = vadd.f32 %v1756, %v1775
    %1777 = vdwg.mxu0
    %1778 = vmatpush.msra.mxu0 %v1060
    %1779 = vmatpush.msra.mxu0 %v1056
    %1780 = vmatpush.msra.mxu0 %v1052
    %1781 = vmatpush.msra.mxu0 %v1048
    %1782 = vmatpush.msra.mxu0 %v1044
    %1783 = vmatpush.msra.mxu0 %v1040
    %1784 = vmatpush.msra.mxu0 %v1036
    %1785 = vmatpush.msra.mxu0 %v1032
    %1786 = vmatpush.msra.mxu0 %v1028
    %1787 = vmatpush.msra.mxu0 %v1024
    %1788 = vmatpush.msra.mxu0 %v1020
    %1789 = vmatpush.msra.mxu0 %v1016
    %1790 = vmatpush.msra.mxu0 %v1012
    %1791 = vmatpush.msra.mxu0 %v1008
    %1792 = vmatpush.msra.mxu0 %v1004
    %1793 = vmatpush.msra.mxu0 %v1000
    %1794 = vmatmul.f32.gmra.mxu0 %v1160
    %v1795 = vpop.f32.mrf.mxu0
    %v1796 = vadd.f32 %v1776, %v1795
    %1797 = vdwg.mxu0
    %1798 = vmatpush.msra.mxu0 %v1124
    %1799 = vmatpush.msra.mxu0 %v1120
    %1800 = vmatpush.msra.mxu0 %v1116
    %1801 = vmatpush.msra.mxu0 %v1112
    %1802 = vmatpush.msra.mxu0 %v1108
    %1803 = vmatpush.msra.mxu0 %v1104
    %1804 = vmatpush.msra.mxu0 %v1100
    %1805 = vmatpush.msra.mxu0 %v1096
    %1806 = vmatpush.msra.mxu0 %v1092
    %1807 = vmatpush.msra.mxu0 %v1088
    %1808 = vmatpush.msra.mxu0 %v1084
    %1809 = vmatpush.msra.mxu0 %v1080
    %1810 = vmatpush.msra.mxu0 %v1076
    %1811 = vmatpush.msra.mxu0 %v1072
    %1812 = vmatpush.msra.mxu0 %v1068
    %1813 = vmatpush.msra.mxu0 %v1064
    %1814 = vmatmul.f32.gmra.mxu0 %v1161
    %v1815 = vpop.f32.mrf.mxu0
    %v1816 = vadd.f32 %v1796, %v1815
    %1817 = vdwg.mxu0
    %1818 = vmatpush.msra.mxu0 %v165
    %1819 = vmatpush.msra.mxu0 %v161
    %1820 = vmatpush.msra.mxu0 %v157
    %1821 = vmatpush.msra.mxu0 %v153
    %1822 = vmatpush.msra.mxu0 %v149
    %1823 = vmatpush.msra.mxu0 %v145
    %1824 = vmatpush.msra.mxu0 %v141
    %1825 = vmatpush.msra.mxu0 %v137
    %1826 = vmatpush.msra.mxu0 %v133
    %1827 = vmatpush.msra.mxu0 %v129
    %1828 = vmatpush.msra.mxu0 %v125
    %1829 = vmatpush.msra.mxu0 %v121
    %1830 = vmatpush.msra.mxu0 %v117
    %1831 = vmatpush.msra.mxu0 %v113
    %1832 = vmatpush.msra.mxu0 %v109
    %1833 = vmatpush.msra.mxu0 %v105
    %1834 = vmatmul.f32.gmra.mxu0 %v1144
    %v1835 = vpop.f32.mrf.mxu0
    %v1836 = vadd.f32 %v1131, %v1835
    %1837 = vdwg.mxu0
    %1838 = vmatpush.msra.mxu0 %v229
    %1839 = vmatpush.msra.mxu0 %v225
    %1840 = vmatpush.msra.mxu0 %v221
    %1841 = vmatpush.msra.mxu0 %v217
    %1842 = vmatpush.msra.mxu0 %v213
    %1843 = vmatpush.msra.mxu0 %v209
    %1844 = vmatpush.msra.mxu0 %v205
    %1845 = vmatpush.msra.mxu0 %v201
    %1846 = vmatpush.msra.mxu0 %v197
    %1847 = vmatpush.msra.mxu0 %v193
    %1848 = vmatpush.msra.mxu0 %v189
    %1849 = vmatpush.msra.mxu0 %v185
    %1850 = vmatpush.msra.mxu0 %v181
    %1851 = vmatpush.msra.mxu0 %v177
    %1852 = vmatpush.msra.mxu0 %v173
    %1853 = vmatpush.msra.mxu0 %v169
    %1854 = vmatmul.f32.gmra.mxu0 %v1145
    %v1855 = vpop.f32.mrf.mxu0
    %v1856 = vadd.f32 %v1836, %v1855
    %1857 = vdwg.mxu0
    %1858 = vmatpush.msra.mxu0 %v293
    %1859 = vmatpush.msra.mxu0 %v289
    %1860 = vmatpush.msra.mxu0 %v285
    %1861 = vmatpush.msra.mxu0 %v281
    %1862 = vmatpush.msra.mxu0 %v277
    %1863 = vmatpush.msra.mxu0 %v273
    %1864 = vmatpush.msra.mxu0 %v269
    %1865 = vmatpush.msra.mxu0 %v265
    %1866 = vmatpush.msra.mxu0 %v261
    %1867 = vmatpush.msra.mxu0 %v257
    %1868 = vmatpush.msra.mxu0 %v253
    %1869 = vmatpush.msra.mxu0 %v249
    %1870 = vmatpush.msra.mxu0 %v245
    %1871 = vmatpush.msra.mxu0 %v241
    %1872 = vmatpush.msra.mxu0 %v237
    %1873 = vmatpush.msra.mxu0 %v233
    %1874 = vmatmul.f32.gmra.mxu0 %v1146
    %v1875 = vpop.f32.mrf.mxu0
    %v1876 = vadd.f32 %v1856, %v1875
    %1877 = vdwg.mxu0
    %1878 = vmatpush.msra.mxu0 %v357
    %1879 = vmatpush.msra.mxu0 %v353
    %1880 = vmatpush.msra.mxu0 %v349
    %1881 = vmatpush.msra.mxu0 %v345
    %1882 = vmatpush.msra.mxu0 %v341
    %1883 = vmatpush.msra.mxu0 %v337
    %1884 = vmatpush.msra.mxu0 %v333
    %1885 = vmatpush.msra.mxu0 %v329
    %1886 = vmatpush.msra.mxu0 %v325
    %1887 = vmatpush.msra.mxu0 %v321
    %1888 = vmatpush.msra.mxu0 %v317
    %1889 = vmatpush.msra.mxu0 %v313
    %1890 = vmatpush.msra.mxu0 %v309
    %1891 = vmatpush.msra.mxu0 %v305
    %1892 = vmatpush.msra.mxu0 %v301
    %1893 = vmatpush.msra.mxu0 %v297
    %1894 = vmatmul.f32.gmra.mxu0 %v1147
    %v1895 = vpop.f32.mrf.mxu0
    %v1896 = vadd.f32 %v1876, %v1895
    %1897 = vdwg.mxu0
    %1898 = vmatpush.msra.mxu0 %v421
    %1899 = vmatpush.msra.mxu0 %v417
    %1900 = vmatpush.msra.mxu0 %v413
    %1901 = vmatpush.msra.mxu0 %v409
    %1902 = vmatpush.msra.mxu0 %v405
    %1903 = vmatpush.msra.mxu0 %v401
    %1904 = vmatpush.msra.mxu0 %v397
    %1905 = vmatpush.msra.mxu0 %v393
    %1906 = vmatpush.msra.mxu0 %v389
    %1907 = vmatpush.msra.mxu0 %v385
    %1908 = vmatpush.msra.mxu0 %v381
    %1909 = vmatpush.msra.mxu0 %v377
    %1910 = vmatpush.msra.mxu0 %v373
    %1911 = vmatpush.msra.mxu0 %v369
    %1912 = vmatpush.msra.mxu0 %v365
    %1913 = vmatpush.msra.mxu0 %v361
    %1914 = vmatmul.f32.gmra.mxu0 %v1148
    %v1915 = vpop.f32.mrf.mxu0
    %v1916 = vadd.f32 %v1896, %v1915
    %1917 = vdwg.mxu0
    %1918 = vmatpush.msra.mxu0 %v485
    %1919 = vmatpush.msra.mxu0 %v481
    %1920 = vmatpush.msra.mxu0 %v477
    %1921 = vmatpush.msra.mxu0 %v473
    %1922 = vmatpush.msra.mxu0 %v469
    %1923 = vmatpush.msra.mxu0 %v465
    %1924 = vmatpush.msra.mxu0 %v461
    %1925 = vmatpush.msra.mxu0 %v457
    %1926 = vmatpush.msra.mxu0 %v453
    %1927 = vmatpush.msra.mxu0 %v449
    %1928 = vmatpush.msra.mxu0 %v445
    %1929 = vmatpush.msra.mxu0 %v441
    %1930 = vmatpush.msra.mxu0 %v437
    %1931 = vmatpush.msra.mxu0 %v433
    %1932 = vmatpush.msra.mxu0 %v429
    %1933 = vmatpush.msra.mxu0 %v425
    %1934 = vmatmul.f32.gmra.mxu0 %v1149
    %v1935 = vpop.f32.mrf.mxu0
    %v1936 = vadd.f32 %v1916, %v1935
    %1937 = vdwg.mxu0
    %1938 = vmatpush.msra.mxu0 %v549
    %1939 = vmatpush.msra.mxu0 %v545
    %1940 = vmatpush.msra.mxu0 %v541
    %1941 = vmatpush.msra.mxu0 %v537
    %1942 = vmatpush.msra.mxu0 %v533
    %1943 = vmatpush.msra.mxu0 %v529
    %1944 = vmatpush.msra.mxu0 %v525
    %1945 = vmatpush.msra.mxu0 %v521
    %1946 = vmatpush.msra.mxu0 %v517
    %1947 = vmatpush.msra.mxu0 %v513
    %1948 = vmatpush.msra.mxu0 %v509
    %1949 = vmatpush.msra.mxu0 %v505
    %1950 = vmatpush.msra.mxu0 %v501
    %1951 = vmatpush.msra.mxu0 %v497
    %1952 = vmatpush.msra.mxu0 %v493
    %1953 = vmatpush.msra.mxu0 %v489
    %1954 = vmatmul.f32.gmra.mxu0 %v1150
    %v1955 = vpop.f32.mrf.mxu0
    %v1956 = vadd.f32 %v1936, %v1955
    %1957 = vdwg.mxu0
    %1958 = vmatpush.msra.mxu0 %v613
    %1959 = vmatpush.msra.mxu0 %v609
    %1960 = vmatpush.msra.mxu0 %v605
    %1961 = vmatpush.msra.mxu0 %v601
    %1962 = vmatpush.msra.mxu0 %v597
    %1963 = vmatpush.msra.mxu0 %v593
    %1964 = vmatpush.msra.mxu0 %v589
    %1965 = vmatpush.msra.mxu0 %v585
    %1966 = vmatpush.msra.mxu0 %v581
    %1967 = vmatpush.msra.mxu0 %v577
    %1968 = vmatpush.msra.mxu0 %v573
    %1969 = vmatpush.msra.mxu0 %v569
    %1970 = vmatpush.msra.mxu0 %v565
    %1971 = vmatpush.msra.mxu0 %v561
    %1972 = vmatpush.msra.mxu0 %v557
    %1973 = vmatpush.msra.mxu0 %v553
    %1974 = vmatmul.f32.gmra.mxu0 %v1151
    %v1975 = vpop.f32.mrf.mxu0
    %v1976 = vadd.f32 %v1956, %v1975
    %1977 = vdwg.mxu0
    %1978 = vmatpush.msra.mxu0 %v677
    %1979 = vmatpush.msra.mxu0 %v673
    %1980 = vmatpush.msra.mxu0 %v669
    %1981 = vmatpush.msra.mxu0 %v665
    %1982 = vmatpush.msra.mxu0 %v661
    %1983 = vmatpush.msra.mxu0 %v657
    %1984 = vmatpush.msra.mxu0 %v653
    %1985 = vmatpush.msra.mxu0 %v649
    %1986 = vmatpush.msra.mxu0 %v645
    %1987 = vmatpush.msra.mxu0 %v641
    %1988 = vmatpush.msra.mxu0 %v637
    %1989 = vmatpush.msra.mxu0 %v633
    %1990 = vmatpush.msra.mxu0 %v629
    %1991 = vmatpush.msra.mxu0 %v625
    %1992 = vmatpush.msra.mxu0 %v621
    %1993 = vmatpush.msra.mxu0 %v617
    %1994 = vmatmul.f32.gmra.mxu0 %v1154
    %v1995 = vpop.f32.mrf.mxu0
    %v1996 = vadd.f32 %v1976, %v1995
    %1997 = vdwg.mxu0
    %1998 = vmatpush.msra.mxu0 %v741
    %1999 = vmatpush.msra.mxu0 %v737
    %2000 = vmatpush.msra.mxu0 %v733
    %2001 = vmatpush.msra.mxu0 %v729
    %2002 = vmatpush.msra.mxu0 %v725
    %2003 = vmatpush.msra.mxu0 %v721
    %2004 = vmatpush.msra.mxu0 %v717
    %2005 = vmatpush.msra.mxu0 %v713
    %2006 = vmatpush.msra.mxu0 %v709
    %2007 = vmatpush.msra.mxu0 %v705
    %2008 = vmatpush.msra.mxu0 %v701
    %2009 = vmatpush.msra.mxu0 %v697
    %2010 = vmatpush.msra.mxu0 %v693
    %2011 = vmatpush.msra.mxu0 %v689
    %2012 = vmatpush.msra.mxu0 %v685
    %2013 = vmatpush.msra.mxu0 %v681
    %2014 = vmatmul.f32.gmra.mxu0 %v1155
    %v2015 = vpop.f32.mrf.mxu0
    %v2016 = vadd.f32 %v1996, %v2015
    %2017 = vdwg.mxu0
    %2018 = vmatpush.msra.mxu0 %v805
    %2019 = vmatpush.msra.mxu0 %v801
    %2020 = vmatpush.msra.mxu0 %v797
    %2021 = vmatpush.msra.mxu0 %v793
    %2022 = vmatpush.msra.mxu0 %v789
    %2023 = vmatpush.msra.mxu0 %v785
    %2024 = vmatpush.msra.mxu0 %v781
    %2025 = vmatpush.msra.mxu0 %v777
    %2026 = vmatpush.msra.mxu0 %v773
    %2027 = vmatpush.msra.mxu0 %v769
    %2028 = vmatpush.msra.mxu0 %v765
    %2029 = vmatpush.msra.mxu0 %v761
    %2030 = vmatpush.msra.mxu0 %v757
    %2031 = vmatpush.msra.mxu0 %v753
    %2032 = vmatpush.msra.mxu0 %v749
    %2033 = vmatpush.msra.mxu0 %v745
    %2034 = vmatmul.f32.gmra.mxu0 %v1156
    %v2035 = vpop.f32.mrf.mxu0
    %v2036 = vadd.f32 %v2016, %v2035
    %2037 = vdwg.mxu0
    %2038 = vmatpush.msra.mxu0 %v869
    %2039 = vmatpush.msra.mxu0 %v865
    %2040 = vmatpush.msra.mxu0 %v861
    %2041 = vmatpush.msra.mxu0 %v857
    %2042 = vmatpush.msra.mxu0 %v853
    %2043 = vmatpush.msra.mxu0 %v849
    %2044 = vmatpush.msra.mxu0 %v845
    %2045 = vmatpush.msra.mxu0 %v841
    %2046 = vmatpush.msra.mxu0 %v837
    %2047 = vmatpush.msra.mxu0 %v833
    %2048 = vmatpush.msra.mxu0 %v829
    %2049 = vmatpush.msra.mxu0 %v825
    %2050 = vmatpush.msra.mxu0 %v821
    %2051 = vmatpush.msra.mxu0 %v817
    %2052 = vmatpush.msra.mxu0 %v813
    %2053 = vmatpush.msra.mxu0 %v809
    %2054 = vmatmul.f32.gmra.mxu0 %v1157
    %v2055 = vpop.f32.mrf.mxu0
    %v2056 = vadd.f32 %v2036, %v2055
    %2057 = vdwg.mxu0
    %2058 = vmatpush.msra.mxu0 %v933
    %2059 = vmatpush.msra.mxu0 %v929
    %2060 = vmatpush.msra.mxu0 %v925
    %2061 = vmatpush.msra.mxu0 %v921
    %2062 = vmatpush.msra.mxu0 %v917
    %2063 = vmatpush.msra.mxu0 %v913
    %2064 = vmatpush.msra.mxu0 %v909
    %2065 = vmatpush.msra.mxu0 %v905
    %2066 = vmatpush.msra.mxu0 %v901
    %2067 = vmatpush.msra.mxu0 %v897
    %2068 = vmatpush.msra.mxu0 %v893
    %2069 = vmatpush.msra.mxu0 %v889
    %2070 = vmatpush.msra.mxu0 %v885
    %2071 = vmatpush.msra.mxu0 %v881
    %2072 = vmatpush.msra.mxu0 %v877
    %2073 = vmatpush.msra.mxu0 %v873
    %2074 = vmatmul.f32.gmra.mxu0 %v1158
    %v2075 = vpop.f32.mrf.mxu0
    %v2076 = vadd.f32 %v2056, %v2075
    %2077 = vdwg.mxu0
    %2078 = vmatpush.msra.mxu0 %v997
    %2079 = vmatpush.msra.mxu0 %v993
    %2080 = vmatpush.msra.mxu0 %v989
    %2081 = vmatpush.msra.mxu0 %v985
    %2082 = vmatpush.msra.mxu0 %v981
    %2083 = vmatpush.msra.mxu0 %v977
    %2084 = vmatpush.msra.mxu0 %v973
    %2085 = vmatpush.msra.mxu0 %v969
    %2086 = vmatpush.msra.mxu0 %v965
    %2087 = vmatpush.msra.mxu0 %v961
    %2088 = vmatpush.msra.mxu0 %v957
    %2089 = vmatpush.msra.mxu0 %v953
    %2090 = vmatpush.msra.mxu0 %v949
    %2091 = vmatpush.msra.mxu0 %v945
    %2092 = vmatpush.msra.mxu0 %v941
    %2093 = vmatpush.msra.mxu0 %v937
    %2094 = vmatmul.f32.gmra.mxu0 %v1159
    %v2095 = vpop.f32.mrf.mxu0
    %v2096 = vadd.f32 %v2076, %v2095
    %2097 = vdwg.mxu0
    %2098 = vmatpush.msra.mxu0 %v1061
    %2099 = vmatpush.msra.mxu0 %v1057
    %2100 = vmatpush.msra.mxu0 %v1053
    %2101 = vmatpush.msra.mxu0 %v1049
    %2102 = vmatpush.msra.mxu0 %v1045
    %2103 = vmatpush.msra.mxu0 %v1041
    %2104 = vmatpush.msra.mxu0 %v1037
    %2105 = vmatpush.msra.mxu0 %v1033
    %2106 = vmatpush.msra.mxu0 %v1029
    %2107 = vmatpush.msra.mxu0 %v1025
    %2108 = vmatpush.msra.mxu0 %v1021
    %2109 = vmatpush.msra.mxu0 %v1017
    %2110 = vmatpush.msra.mxu0 %v1013
    %2111 = vmatpush.msra.mxu0 %v1009
    %2112 = vmatpush.msra.mxu0 %v1005
    %2113 = vmatpush.msra.mxu0 %v1001
    %2114 = vmatmul.f32.gmra.mxu0 %v1160
    %v2115 = vpop.f32.mrf.mxu0
    %v2116 = vadd.f32 %v2096, %v2115
    %2117 = vdwg.mxu0
    %2118 = vmatpush.msra.mxu0 %v1125
    %2119 = vmatpush.msra.mxu0 %v1121
    %2120 = vmatpush.msra.mxu0 %v1117
    %2121 = vmatpush.msra.mxu0 %v1113
    %2122 = vmatpush.msra.mxu0 %v1109
    %2123 = vmatpush.msra.mxu0 %v1105
    %2124 = vmatpush.msra.mxu0 %v1101
    %2125 = vmatpush.msra.mxu0 %v1097
    %2126 = vmatpush.msra.mxu0 %v1093
    %2127 = vmatpush.msra.mxu0 %v1089
    %2128 = vmatpush.msra.mxu0 %v1085
    %2129 = vmatpush.msra.mxu0 %v1081
    %2130 = vmatpush.msra.mxu0 %v1077
    %2131 = vmatpush.msra.mxu0 %v1073
    %2132 = vmatpush.msra.mxu0 %v1069
    %2133 = vmatpush.msra.mxu0 %v1065
    %2134 = vmatmul.f32.gmra.mxu0 %v1161
    %v2135 = vpop.f32.mrf.mxu0
    %v2136 = vadd.f32 %v2116, %v2135
    %2137 = vdwg.mxu0
    %2138 = vmatpush.msra.mxu0 %v166
    %2139 = vmatpush.msra.mxu0 %v162
    %2140 = vmatpush.msra.mxu0 %v158
    %2141 = vmatpush.msra.mxu0 %v154
    %2142 = vmatpush.msra.mxu0 %v150
    %2143 = vmatpush.msra.mxu0 %v146
    %2144 = vmatpush.msra.mxu0 %v142
    %2145 = vmatpush.msra.mxu0 %v138
    %2146 = vmatpush.msra.mxu0 %v134
    %2147 = vmatpush.msra.mxu0 %v130
    %2148 = vmatpush.msra.mxu0 %v126
    %2149 = vmatpush.msra.mxu0 %v122
    %2150 = vmatpush.msra.mxu0 %v118
    %2151 = vmatpush.msra.mxu0 %v114
    %2152 = vmatpush.msra.mxu0 %v110
    %2153 = vmatpush.msra.mxu0 %v106
    %2154 = vmatmul.f32.gmra.mxu0 %v1144
    %v2155 = vpop.f32.mrf.mxu0
    %v2156 = vadd.f32 %v1132, %v2155
    %2157 = vdwg.mxu0
    %2158 = vmatpush.msra.mxu0 %v230
    %2159 = vmatpush.msra.mxu0 %v226
    %2160 = vmatpush.msra.mxu0 %v222
    %2161 = vmatpush.msra.mxu0 %v218
    %2162 = vmatpush.msra.mxu0 %v214
    %2163 = vmatpush.msra.mxu0 %v210
    %2164 = vmatpush.msra.mxu0 %v206
    %2165 = vmatpush.msra.mxu0 %v202
    %2166 = vmatpush.msra.mxu0 %v198
    %2167 = vmatpush.msra.mxu0 %v194
    %2168 = vmatpush.msra.mxu0 %v190
    %2169 = vmatpush.msra.mxu0 %v186
    %2170 = vmatpush.msra.mxu0 %v182
    %2171 = vmatpush.msra.mxu0 %v178
    %2172 = vmatpush.msra.mxu0 %v174
    %2173 = vmatpush.msra.mxu0 %v170
    %2174 = vmatmul.f32.gmra.mxu0 %v1145
    %v2175 = vpop.f32.mrf.mxu0
    %v2176 = vadd.f32 %v2156, %v2175
    %2177 = vdwg.mxu0
    %2178 = vmatpush.msra.mxu0 %v294
    %2179 = vmatpush.msra.mxu0 %v290
    %2180 = vmatpush.msra.mxu0 %v286
    %2181 = vmatpush.msra.mxu0 %v282
    %2182 = vmatpush.msra.mxu0 %v278
    %2183 = vmatpush.msra.mxu0 %v274
    %2184 = vmatpush.msra.mxu0 %v270
    %2185 = vmatpush.msra.mxu0 %v266
    %2186 = vmatpush.msra.mxu0 %v262
    %2187 = vmatpush.msra.mxu0 %v258
    %2188 = vmatpush.msra.mxu0 %v254
    %2189 = vmatpush.msra.mxu0 %v250
    %2190 = vmatpush.msra.mxu0 %v246
    %2191 = vmatpush.msra.mxu0 %v242
    %2192 = vmatpush.msra.mxu0 %v238
    %2193 = vmatpush.msra.mxu0 %v234
    %2194 = vmatmul.f32.gmra.mxu0 %v1146
    %v2195 = vpop.f32.mrf.mxu0
    %v2196 = vadd.f32 %v2176, %v2195
    %2197 = vdwg.mxu0
    %2198 = vmatpush.msra.mxu0 %v358
    %2199 = vmatpush.msra.mxu0 %v354
    %2200 = vmatpush.msra.mxu0 %v350
    %2201 = vmatpush.msra.mxu0 %v346
    %2202 = vmatpush.msra.mxu0 %v342
    %2203 = vmatpush.msra.mxu0 %v338
    %2204 = vmatpush.msra.mxu0 %v334
    %2205 = vmatpush.msra.mxu0 %v330
    %2206 = vmatpush.msra.mxu0 %v326
    %2207 = vmatpush.msra.mxu0 %v322
    %2208 = vmatpush.msra.mxu0 %v318
    %2209 = vmatpush.msra.mxu0 %v314
    %2210 = vmatpush.msra.mxu0 %v310
    %2211 = vmatpush.msra.mxu0 %v306
    %2212 = vmatpush.msra.mxu0 %v302
    %2213 = vmatpush.msra.mxu0 %v298
    %2214 = vmatmul.f32.gmra.mxu0 %v1147
    %v2215 = vpop.f32.mrf.mxu0
    %v2216 = vadd.f32 %v2196, %v2215
    %2217 = vdwg.mxu0
    %2218 = vmatpush.msra.mxu0 %v422
    %2219 = vmatpush.msra.mxu0 %v418
    %2220 = vmatpush.msra.mxu0 %v414
    %2221 = vmatpush.msra.mxu0 %v410
    %2222 = vmatpush.msra.mxu0 %v406
    %2223 = vmatpush.msra.mxu0 %v402
    %2224 = vmatpush.msra.mxu0 %v398
    %2225 = vmatpush.msra.mxu0 %v394
    %2226 = vmatpush.msra.mxu0 %v390
    %2227 = vmatpush.msra.mxu0 %v386
    %2228 = vmatpush.msra.mxu0 %v382
    %2229 = vmatpush.msra.mxu0 %v378
    %2230 = vmatpush.msra.mxu0 %v374
    %2231 = vmatpush.msra.mxu0 %v370
    %2232 = vmatpush.msra.mxu0 %v366
    %2233 = vmatpush.msra.mxu0 %v362
    %2234 = vmatmul.f32.gmra.mxu0 %v1148
    %v2235 = vpop.f32.mrf.mxu0
    %v2236 = vadd.f32 %v2216, %v2235
    %2237 = vdwg.mxu0
    %2238 = vmatpush.msra.mxu0 %v486
    %2239 = vmatpush.msra.mxu0 %v482
    %2240 = vmatpush.msra.mxu0 %v478
    %2241 = vmatpush.msra.mxu0 %v474
    %2242 = vmatpush.msra.mxu0 %v470
    %2243 = vmatpush.msra.mxu0 %v466
    %2244 = vmatpush.msra.mxu0 %v462
    %2245 = vmatpush.msra.mxu0 %v458
    %2246 = vmatpush.msra.mxu0 %v454
    %2247 = vmatpush.msra.mxu0 %v450
    %2248 = vmatpush.msra.mxu0 %v446
    %2249 = vmatpush.msra.mxu0 %v442
    %2250 = vmatpush.msra.mxu0 %v438
    %2251 = vmatpush.msra.mxu0 %v434
    %2252 = vmatpush.msra.mxu0 %v430
    %2253 = vmatpush.msra.mxu0 %v426
    %2254 = vmatmul.f32.gmra.mxu0 %v1149
    %v2255 = vpop.f32.mrf.mxu0
    %v2256 = vadd.f32 %v2236, %v2255
    %2257 = vdwg.mxu0
    %2258 = vmatpush.msra.mxu0 %v550
    %2259 = vmatpush.msra.mxu0 %v546
    %2260 = vmatpush.msra.mxu0 %v542
    %2261 = vmatpush.msra.mxu0 %v538
    %2262 = vmatpush.msra.mxu0 %v534
    %2263 = vmatpush.msra.mxu0 %v530
    %2264 = vmatpush.msra.mxu0 %v526
    %2265 = vmatpush.msra.mxu0 %v522
    %2266 = vmatpush.msra.mxu0 %v518
    %2267 = vmatpush.msra.mxu0 %v514
    %2268 = vmatpush.msra.mxu0 %v510
    %2269 = vmatpush.msra.mxu0 %v506
    %2270 = vmatpush.msra.mxu0 %v502
    %2271 = vmatpush.msra.mxu0 %v498
    %2272 = vmatpush.msra.mxu0 %v494
    %2273 = vmatpush.msra.mxu0 %v490
    %2274 = vmatmul.f32.gmra.mxu0 %v1150
    %v2275 = vpop.f32.mrf.mxu0
    %v2276 = vadd.f32 %v2256, %v2275
    %2277 = vdwg.mxu0
    %2278 = vmatpush.msra.mxu0 %v614
    %2279 = vmatpush.msra.mxu0 %v610
    %2280 = vmatpush.msra.mxu0 %v606
    %2281 = vmatpush.msra.mxu0 %v602
    %2282 = vmatpush.msra.mxu0 %v598
    %2283 = vmatpush.msra.mxu0 %v594
    %2284 = vmatpush.msra.mxu0 %v590
    %2285 = vmatpush.msra.mxu0 %v586
    %2286 = vmatpush.msra.mxu0 %v582
    %2287 = vmatpush.msra.mxu0 %v578
    %2288 = vmatpush.msra.mxu0 %v574
    %2289 = vmatpush.msra.mxu0 %v570
    %2290 = vmatpush.msra.mxu0 %v566
    %2291 = vmatpush.msra.mxu0 %v562
    %2292 = vmatpush.msra.mxu0 %v558
    %2293 = vmatpush.msra.mxu0 %v554
    %2294 = vmatmul.f32.gmra.mxu0 %v1151
    %v2295 = vpop.f32.mrf.mxu0
    %v2296 = vadd.f32 %v2276, %v2295
    %2297 = vdwg.mxu0
    %2298 = vmatpush.msra.mxu0 %v678
    %2299 = vmatpush.msra.mxu0 %v674
    %2300 = vmatpush.msra.mxu0 %v670
    %2301 = vmatpush.msra.mxu0 %v666
    %2302 = vmatpush.msra.mxu0 %v662
    %2303 = vmatpush.msra.mxu0 %v658
    %2304 = vmatpush.msra.mxu0 %v654
    %2305 = vmatpush.msra.mxu0 %v650
    %2306 = vmatpush.msra.mxu0 %v646
    %2307 = vmatpush.msra.mxu0 %v642
    %2308 = vmatpush.msra.mxu0 %v638
    %2309 = vmatpush.msra.mxu0 %v634
    %2310 = vmatpush.msra.mxu0 %v630
    %2311 = vmatpush.msra.mxu0 %v626
    %2312 = vmatpush.msra.mxu0 %v622
    %2313 = vmatpush.msra.mxu0 %v618
    %2314 = vmatmul.f32.gmra.mxu0 %v1154
    %v2315 = vpop.f32.mrf.mxu0
    %v2316 = vadd.f32 %v2296, %v2315
    %2317 = vdwg.mxu0
    %2318 = vmatpush.msra.mxu0 %v742
    %2319 = vmatpush.msra.mxu0 %v738
    %2320 = vmatpush.msra.mxu0 %v734
    %2321 = vmatpush.msra.mxu0 %v730
    %2322 = vmatpush.msra.mxu0 %v726
    %2323 = vmatpush.msra.mxu0 %v722
    %2324 = vmatpush.msra.mxu0 %v718
    %2325 = vmatpush.msra.mxu0 %v714
    %2326 = vmatpush.msra.mxu0 %v710
    %2327 = vmatpush.msra.mxu0 %v706
    %2328 = vmatpush.msra.mxu0 %v702
    %2329 = vmatpush.msra.mxu0 %v698
    %2330 = vmatpush.msra.mxu0 %v694
    %2331 = vmatpush.msra.mxu0 %v690
    %2332 = vmatpush.msra.mxu0 %v686
    %2333 = vmatpush.msra.mxu0 %v682
    %2334 = vmatmul.f32.gmra.mxu0 %v1155
    %v2335 = vpop.f32.mrf.mxu0
    %v2336 = vadd.f32 %v2316, %v2335
    %2337 = vdwg.mxu0
    %2338 = vmatpush.msra.mxu0 %v806
    %2339 = vmatpush.msra.mxu0 %v802
    %2340 = vmatpush.msra.mxu0 %v798
    %2341 = vmatpush.msra.mxu0 %v794
    %2342 = vmatpush.msra.mxu0 %v790
    %2343 = vmatpush.msra.mxu0 %v786
    %2344 = vmatpush.msra.mxu0 %v782
    %2345 = vmatpush.msra.mxu0 %v778
    %2346 = vmatpush.msra.mxu0 %v774
    %2347 = vmatpush.msra.mxu0 %v770
    %2348 = vmatpush.msra.mxu0 %v766
    %2349 = vmatpush.msra.mxu0 %v762
    %2350 = vmatpush.msra.mxu0 %v758
    %2351 = vmatpush.msra.mxu0 %v754
    %2352 = vmatpush.msra.mxu0 %v750
    %2353 = vmatpush.msra.mxu0 %v746
    %2354 = vmatmul.f32.gmra.mxu0 %v1156
    %v2355 = vpop.f32.mrf.mxu0
    %v2356 = vadd.f32 %v2336, %v2355
    %2357 = vdwg.mxu0
    %2358 = vmatpush.msra.mxu0 %v870
    %2359 = vmatpush.msra.mxu0 %v866
    %2360 = vmatpush.msra.mxu0 %v862
    %2361 = vmatpush.msra.mxu0 %v858
    %2362 = vmatpush.msra.mxu0 %v854
    %2363 = vmatpush.msra.mxu0 %v850
    %2364 = vmatpush.msra.mxu0 %v846
    %2365 = vmatpush.msra.mxu0 %v842
    %2366 = vmatpush.msra.mxu0 %v838
    %2367 = vmatpush.msra.mxu0 %v834
    %2368 = vmatpush.msra.mxu0 %v830
    %2369 = vmatpush.msra.mxu0 %v826
    %2370 = vmatpush.msra.mxu0 %v822
    %2371 = vmatpush.msra.mxu0 %v818
    %2372 = vmatpush.msra.mxu0 %v814
    %2373 = vmatpush.msra.mxu0 %v810
    %2374 = vmatmul.f32.gmra.mxu0 %v1157
    %v2375 = vpop.f32.mrf.mxu0
    %v2376 = vadd.f32 %v2356, %v2375
    %2377 = vdwg.mxu0
    %2378 = vmatpush.msra.mxu0 %v934
    %2379 = vmatpush.msra.mxu0 %v930
    %2380 = vmatpush.msra.mxu0 %v926
    %2381 = vmatpush.msra.mxu0 %v922
    %2382 = vmatpush.msra.mxu0 %v918
    %2383 = vmatpush.msra.mxu0 %v914
    %2384 = vmatpush.msra.mxu0 %v910
    %2385 = vmatpush.msra.mxu0 %v906
    %2386 = vmatpush.msra.mxu0 %v902
    %2387 = vmatpush.msra.mxu0 %v898
    %2388 = vmatpush.msra.mxu0 %v894
    %2389 = vmatpush.msra.mxu0 %v890
    %2390 = vmatpush.msra.mxu0 %v886
    %2391 = vmatpush.msra.mxu0 %v882
    %2392 = vmatpush.msra.mxu0 %v878
    %2393 = vmatpush.msra.mxu0 %v874
    %2394 = vmatmul.f32.gmra.mxu0 %v1158
    %v2395 = vpop.f32.mrf.mxu0
    %v2396 = vadd.f32 %v2376, %v2395
    %2397 = vdwg.mxu0
    %2398 = vmatpush.msra.mxu0 %v998
    %2399 = vmatpush.msra.mxu0 %v994
    %2400 = vmatpush.msra.mxu0 %v990
    %2401 = vmatpush.msra.mxu0 %v986
    %2402 = vmatpush.msra.mxu0 %v982
    %2403 = vmatpush.msra.mxu0 %v978
    %2404 = vmatpush.msra.mxu0 %v974
    %2405 = vmatpush.msra.mxu0 %v970
    %2406 = vmatpush.msra.mxu0 %v966
    %2407 = vmatpush.msra.mxu0 %v962
    %2408 = vmatpush.msra.mxu0 %v958
    %2409 = vmatpush.msra.mxu0 %v954
    %2410 = vmatpush.msra.mxu0 %v950
    %2411 = vmatpush.msra.mxu0 %v946
    %2412 = vmatpush.msra.mxu0 %v942
    %2413 = vmatpush.msra.mxu0 %v938
    %2414 = vmatmul.f32.gmra.mxu0 %v1159
    %v2415 = vpop.f32.mrf.mxu0
    %v2416 = vadd.f32 %v2396, %v2415
    %2417 = vdwg.mxu0
    %2418 = vmatpush.msra.mxu0 %v1062
    %2419 = vmatpush.msra.mxu0 %v1058
    %2420 = vmatpush.msra.mxu0 %v1054
    %2421 = vmatpush.msra.mxu0 %v1050
    %2422 = vmatpush.msra.mxu0 %v1046
    %2423 = vmatpush.msra.mxu0 %v1042
    %2424 = vmatpush.msra.mxu0 %v1038
    %2425 = vmatpush.msra.mxu0 %v1034
    %2426 = vmatpush.msra.mxu0 %v1030
    %2427 = vmatpush.msra.mxu0 %v1026
    %2428 = vmatpush.msra.mxu0 %v1022
    %2429 = vmatpush.msra.mxu0 %v1018
    %2430 = vmatpush.msra.mxu0 %v1014
    %2431 = vmatpush.msra.mxu0 %v1010
    %2432 = vmatpush.msra.mxu0 %v1006
    %2433 = vmatpush.msra.mxu0 %v1002
    %2434 = vmatmul.f32.gmra.mxu0 %v1160
    %v2435 = vpop.f32.mrf.mxu0
    %v2436 = vadd.f32 %v2416, %v2435
    %2437 = vdwg.mxu0
    %2438 = vmatpush.msra.mxu0 %v1126
    %2439 = vmatpush.msra.mxu0 %v1122
    %2440 = vmatpush.msra.mxu0 %v1118
    %2441 = vmatpush.msra.mxu0 %v1114
    %2442 = vmatpush.msra.mxu0 %v1110
    %2443 = vmatpush.msra.mxu0 %v1106
    %2444 = vmatpush.msra.mxu0 %v1102
    %2445 = vmatpush.msra.mxu0 %v1098
    %2446 = vmatpush.msra.mxu0 %v1094
    %2447 = vmatpush.msra.mxu0 %v1090
    %2448 = vmatpush.msra.mxu0 %v1086
    %2449 = vmatpush.msra.mxu0 %v1082
    %2450 = vmatpush.msra.mxu0 %v1078
    %2451 = vmatpush.msra.mxu0 %v1074
    %2452 = vmatpush.msra.mxu0 %v1070
    %2453 = vmatpush.msra.mxu0 %v1066
    %2454 = vmatmul.f32.gmra.mxu0 %v1161
    %v2455 = vpop.f32.mrf.mxu0
    %v2456 = vadd.f32 %v2436, %v2455
    %2457 = vdwg.mxu0
    %v2458 = vmax.f32 %v1496, 0.0
    %v2459 = vmax.f32 %v1816, 0.0
    %v2460 = vmax.f32 %v2136, 0.0
    %v2461 = vmax.f32 %v2456, 0.0
    %v2462 = vld [vmem:[#allocation7] sm:$0xff]
    %v2463 = vld [vmem:[#allocation7 + $0x8] sm:$0xff]
    %v2464 = vld [vmem:[#allocation7 + $0x10] sm:$0xff]
    %v2465 = vld [vmem:[#allocation7 + $0x18] sm:$0xff]
    %v2466 = vld [vmem:[#allocation7 + $0x20] sm:$0xff]
    %v2467 = vld [vmem:[#allocation7 + $0x28] sm:$0xff]
    %v2468 = vld [vmem:[#allocation7 + $0x30] sm:$0xff]
    %v2469 = vld [vmem:[#allocation7 + $0x38] sm:$0xff]
    %v2470 = vld [vmem:[#allocation7 + $0x40] sm:$0xff]
    %v2471 = vld [vmem:[#allocation7 + $0x48] sm:$0xff]
    %v2472 = vld [vmem:[#allocation7 + $0x50] sm:$0xff]
    %v2473 = vld [vmem:[#allocation7 + $0x58] sm:$0xff]
    %v2474 = vld [vmem:[#allocation7 + $0x60] sm:$0xff]
    %v2475 = vld [vmem:[#allocation7 + $0x68] sm:$0xff]
    %v2476 = vld [vmem:[#allocation7 + $0x70] sm:$0xff]
    %v2477 = vld [vmem:[#allocation7 + $0x78] sm:$0xff]
    %v2478 = vld [vmem:[#allocation7 + $0x80] sm:$0xff]
    %v2479 = vld [vmem:[#allocation7 + $0x88] sm:$0xff]
    %v2480 = vld [vmem:[#allocation7 + $0x90] sm:$0xff]
    %v2481 = vld [vmem:[#allocation7 + $0x98] sm:$0xff]
    %v2482 = vld [vmem:[#allocation7 + $0xa0] sm:$0xff]
    %v2483 = vld [vmem:[#allocation7 + $0xa8] sm:$0xff]
    %v2484 = vld [vmem:[#allocation7 + $0xb0] sm:$0xff]
    %v2485 = vld [vmem:[#allocation7 + $0xb8] sm:$0xff]
    %v2486 = vld [vmem:[#allocation7 + $0xc0] sm:$0xff]
    %v2487 = vld [vmem:[#allocation7 + $0xc8] sm:$0xff]
    %v2488 = vld [vmem:[#allocation7 + $0xd0] sm:$0xff]
    %v2489 = vld [vmem:[#allocation7 + $0xd8] sm:$0xff]
    %v2490 = vld [vmem:[#allocation7 + $0xe0] sm:$0xff]
    %v2491 = vld [vmem:[#allocation7 + $0xe8] sm:$0xff]
    %v2492 = vld [vmem:[#allocation7 + $0xf0] sm:$0xff]
    %v2493 = vld [vmem:[#allocation7 + $0xf8] sm:$0xff]
    %v2494 = vld [vmem:[#allocation7 + $0x100] sm:$0xff]
    %v2495 = vld [vmem:[#allocation7 + $0x108] sm:$0xff]
    %v2496 = vld [vmem:[#allocation7 + $0x110] sm:$0xff]
    %v2497 = vld [vmem:[#allocation7 + $0x118] sm:$0xff]
    %v2498 = vld [vmem:[#allocation7 + $0x120] sm:$0xff]
    %v2499 = vld [vmem:[#allocation7 + $0x128] sm:$0xff]
    %v2500 = vld [vmem:[#allocation7 + $0x130] sm:$0xff]
    %v2501 = vld [vmem:[#allocation7 + $0x138] sm:$0xff]
    %v2502 = vld [vmem:[#allocation7 + $0x140] sm:$0xff]
    %v2503 = vld [vmem:[#allocation7 + $0x148] sm:$0xff]
    %v2504 = vld [vmem:[#allocation7 + $0x150] sm:$0xff]
    %v2505 = vld [vmem:[#allocation7 + $0x158] sm:$0xff]
    %v2506 = vld [vmem:[#allocation7 + $0x160] sm:$0xff]
    %v2507 = vld [vmem:[#allocation7 + $0x168] sm:$0xff]
    %v2508 = vld [vmem:[#allocation7 + $0x170] sm:$0xff]
    %v2509 = vld [vmem:[#allocation7 + $0x178] sm:$0xff]
    %v2510 = vld [vmem:[#allocation7 + $0x180] sm:$0xff]
    %v2511 = vld [vmem:[#allocation7 + $0x188] sm:$0xff]
    %v2512 = vld [vmem:[#allocation7 + $0x190] sm:$0xff]
    %v2513 = vld [vmem:[#allocation7 + $0x198] sm:$0xff]
    %v2514 = vld [vmem:[#allocation7 + $0x1a0] sm:$0xff]
    %v2515 = vld [vmem:[#allocation7 + $0x1a8] sm:$0xff]
    %v2516 = vld [vmem:[#allocation7 + $0x1b0] sm:$0xff]
    %v2517 = vld [vmem:[#allocation7 + $0x1b8] sm:$0xff]
    %v2518 = vld [vmem:[#allocation7 + $0x1c0] sm:$0xff]
    %v2519 = vld [vmem:[#allocation7 + $0x1c8] sm:$0xff]
    %v2520 = vld [vmem:[#allocation7 + $0x1d0] sm:$0xff]
    %v2521 = vld [vmem:[#allocation7 + $0x1d8] sm:$0xff]
    %v2522 = vld [vmem:[#allocation7 + $0x1e0] sm:$0xff]
    %v2523 = vld [vmem:[#allocation7 + $0x1e8] sm:$0xff]
    %v2524 = vld [vmem:[#allocation7 + $0x1f0] sm:$0xff]
    %v2525 = vld [vmem:[#allocation7 + $0x1f8] sm:$0xff]
    %v2526 = vld [vmem:[#allocation7 + $0x200] sm:$0xff]
    %v2527 = vld [vmem:[#allocation7 + $0x208] sm:$0xff]
    %v2528 = vld [vmem:[#allocation7 + $0x210] sm:$0xff]
    %v2529 = vld [vmem:[#allocation7 + $0x218] sm:$0xff]
    %v2530 = vld [vmem:[#allocation7 + $0x220] sm:$0xff]
    %v2531 = vld [vmem:[#allocation7 + $0x228] sm:$0xff]
    %v2532 = vld [vmem:[#allocation7 + $0x230] sm:$0xff]
    %v2533 = vld [vmem:[#allocation7 + $0x238] sm:$0xff]
    %v2534 = vld [vmem:[#allocation7 + $0x240] sm:$0xff]
    %v2535 = vld [vmem:[#allocation7 + $0x248] sm:$0xff]
    %v2536 = vld [vmem:[#allocation7 + $0x250] sm:$0xff]
    %v2537 = vld [vmem:[#allocation7 + $0x258] sm:$0xff]
    %v2538 = vld [vmem:[#allocation7 + $0x260] sm:$0xff]
    %v2539 = vld [vmem:[#allocation7 + $0x268] sm:$0xff]
    %v2540 = vld [vmem:[#allocation7 + $0x270] sm:$0xff]
    %v2541 = vld [vmem:[#allocation7 + $0x278] sm:$0xff]
    %v2542 = vld [vmem:[#allocation7 + $0x280] sm:$0xff]
    %v2543 = vld [vmem:[#allocation7 + $0x288] sm:$0xff]
    %v2544 = vld [vmem:[#allocation7 + $0x290] sm:$0xff]
    %v2545 = vld [vmem:[#allocation7 + $0x298] sm:$0xff]
    %v2546 = vld [vmem:[#allocation7 + $0x2a0] sm:$0xff]
    %v2547 = vld [vmem:[#allocation7 + $0x2a8] sm:$0xff]
    %v2548 = vld [vmem:[#allocation7 + $0x2b0] sm:$0xff]
    %v2549 = vld [vmem:[#allocation7 + $0x2b8] sm:$0xff]
    %v2550 = vld [vmem:[#allocation7 + $0x2c0] sm:$0xff]
    %v2551 = vld [vmem:[#allocation7 + $0x2c8] sm:$0xff]
    %v2552 = vld [vmem:[#allocation7 + $0x2d0] sm:$0xff]
    %v2553 = vld [vmem:[#allocation7 + $0x2d8] sm:$0xff]
    %v2554 = vld [vmem:[#allocation7 + $0x2e0] sm:$0xff]
    %v2555 = vld [vmem:[#allocation7 + $0x2e8] sm:$0xff]
    %v2556 = vld [vmem:[#allocation7 + $0x2f0] sm:$0xff]
    %v2557 = vld [vmem:[#allocation7 + $0x2f8] sm:$0xff]
    %v2558 = vld [vmem:[#allocation7 + $0x300] sm:$0xff]
    %v2559 = vld [vmem:[#allocation7 + $0x308] sm:$0xff]
    %v2560 = vld [vmem:[#allocation7 + $0x310] sm:$0xff]
    %v2561 = vld [vmem:[#allocation7 + $0x318] sm:$0xff]
    %v2562 = vld [vmem:[#allocation7 + $0x320] sm:$0xff]
    %v2563 = vld [vmem:[#allocation7 + $0x328] sm:$0xff]
    %v2564 = vld [vmem:[#allocation7 + $0x330] sm:$0xff]
    %v2565 = vld [vmem:[#allocation7 + $0x338] sm:$0xff]
    %v2566 = vld [vmem:[#allocation7 + $0x340] sm:$0xff]
    %v2567 = vld [vmem:[#allocation7 + $0x348] sm:$0xff]
    %v2568 = vld [vmem:[#allocation7 + $0x350] sm:$0xff]
    %v2569 = vld [vmem:[#allocation7 + $0x358] sm:$0xff]
    %v2570 = vld [vmem:[#allocation7 + $0x360] sm:$0xff]
    %v2571 = vld [vmem:[#allocation7 + $0x368] sm:$0xff]
    %v2572 = vld [vmem:[#allocation7 + $0x370] sm:$0xff]
    %v2573 = vld [vmem:[#allocation7 + $0x378] sm:$0xff]
    %v2574 = vld [vmem:[#allocation7 + $0x380] sm:$0xff]
    %v2575 = vld [vmem:[#allocation7 + $0x388] sm:$0xff]
    %v2576 = vld [vmem:[#allocation7 + $0x390] sm:$0xff]
    %v2577 = vld [vmem:[#allocation7 + $0x398] sm:$0xff]
    %v2578 = vld [vmem:[#allocation7 + $0x3a0] sm:$0xff]
    %v2579 = vld [vmem:[#allocation7 + $0x3a8] sm:$0xff]
    %v2580 = vld [vmem:[#allocation7 + $0x3b0] sm:$0xff]
    %v2581 = vld [vmem:[#allocation7 + $0x3b8] sm:$0xff]
    %v2582 = vld [vmem:[#allocation7 + $0x3c0] sm:$0xff]
    %v2583 = vld [vmem:[#allocation7 + $0x3c8] sm:$0xff]
    %v2584 = vld [vmem:[#allocation7 + $0x3d0] sm:$0xff]
    %v2585 = vld [vmem:[#allocation7 + $0x3d8] sm:$0xff]
    %v2586 = vld [vmem:[#allocation7 + $0x3e0] sm:$0xff]
    %v2587 = vld [vmem:[#allocation7 + $0x3e8] sm:$0xff]
    %v2588 = vld [vmem:[#allocation7 + $0x3f0] sm:$0xff]
    %v2589 = vld [vmem:[#allocation7 + $0x3f8] sm:$0xff]
    %v2590 = vld [vmem:[#allocation8] sm:$0x3]
    %v2592 = vperm.slane %v2590, 0
    %v2593 = vperm.slane %v2590, 1
    %2596 = vmatpush.msra.mxu0 %v2492
    %2597 = vmatpush.msra.mxu0 %v2490
    %2598 = vmatpush.msra.mxu0 %v2488
    %2599 = vmatpush.msra.mxu0 %v2486
    %2600 = vmatpush.msra.mxu0 %v2484
    %2601 = vmatpush.msra.mxu0 %v2482
    %2602 = vmatpush.msra.mxu0 %v2480
    %2603 = vmatpush.msra.mxu0 %v2478
    %2604 = vmatpush.msra.mxu0 %v2476
    %2605 = vmatpush.msra.mxu0 %v2474
    %2606 = vmatpush.msra.mxu0 %v2472
    %2607 = vmatpush.msra.mxu0 %v2470
    %2608 = vmatpush.msra.mxu0 %v2468
    %2609 = vmatpush.msra.mxu0 %v2466
    %2610 = vmatpush.msra.mxu0 %v2464
    %2611 = vmatpush.msra.mxu0 %v2462
    %2612 = vmatmul.f32.gmra.mxu0 %v2458
    %v2613 = vpop.f32.mrf.mxu0
    %v2614 = vadd.f32 %v2592, %v2613
    %2615 = vdwg.mxu0
    %2616 = vmatpush.msra.mxu0 %v2524
    %2617 = vmatpush.msra.mxu0 %v2522
    %2618 = vmatpush.msra.mxu0 %v2520
    %2619 = vmatpush.msra.mxu0 %v2518
    %2620 = vmatpush.msra.mxu0 %v2516
    %2621 = vmatpush.msra.mxu0 %v2514
    %2622 = vmatpush.msra.mxu0 %v2512
    %2623 = vmatpush.msra.mxu0 %v2510
    %2624 = vmatpush.msra.mxu0 %v2508
    %2625 = vmatpush.msra.mxu0 %v2506
    %2626 = vmatpush.msra.mxu0 %v2504
    %2627 = vmatpush.msra.mxu0 %v2502
    %2628 = vmatpush.msra.mxu0 %v2500
    %2629 = vmatpush.msra.mxu0 %v2498
    %2630 = vmatpush.msra.mxu0 %v2496
    %2631 = vmatpush.msra.mxu0 %v2494
    %2632 = vmatmul.f32.gmra.mxu0 %v2459
    %v2633 = vpop.f32.mrf.mxu0
    %v2634 = vadd.f32 %v2614, %v2633
    %2635 = vdwg.mxu0
    %2636 = vmatpush.msra.mxu0 %v2556
    %2637 = vmatpush.msra.mxu0 %v2554
    %2638 = vmatpush.msra.mxu0 %v2552
    %2639 = vmatpush.msra.mxu0 %v2550
    %2640 = vmatpush.msra.mxu0 %v2548
    %2641 = vmatpush.msra.mxu0 %v2546
    %2642 = vmatpush.msra.mxu0 %v2544
    %2643 = vmatpush.msra.mxu0 %v2542
    %2644 = vmatpush.msra.mxu0 %v2540
    %2645 = vmatpush.msra.mxu0 %v2538
    %2646 = vmatpush.msra.mxu0 %v2536
    %2647 = vmatpush.msra.mxu0 %v2534
    %2648 = vmatpush.msra.mxu0 %v2532
    %2649 = vmatpush.msra.mxu0 %v2530
    %2650 = vmatpush.msra.mxu0 %v2528
    %2651 = vmatpush.msra.mxu0 %v2526
    %2652 = vmatmul.f32.gmra.mxu0 %v2460
    %v2653 = vpop.f32.mrf.mxu0
    %v2654 = vadd.f32 %v2634, %v2653
    %2655 = vdwg.mxu0
    %2656 = vmatpush.msra.mxu0 %v2588
    %2657 = vmatpush.msra.mxu0 %v2586
    %2658 = vmatpush.msra.mxu0 %v2584
    %2659 = vmatpush.msra.mxu0 %v2582
    %2660 = vmatpush.msra.mxu0 %v2580
    %2661 = vmatpush.msra.mxu0 %v2578
    %2662 = vmatpush.msra.mxu0 %v2576
    %2663 = vmatpush.msra.mxu0 %v2574
    %2664 = vmatpush.msra.mxu0 %v2572
    %2665 = vmatpush.msra.mxu0 %v2570
    %2666 = vmatpush.msra.mxu0 %v2568
    %2667 = vmatpush.msra.mxu0 %v2566
    %2668 = vmatpush.msra.mxu0 %v2564
    %2669 = vmatpush.msra.mxu0 %v2562
    %2670 = vmatpush.msra.mxu0 %v2560
    %2671 = vmatpush.msra.mxu0 %v2558
    %2672 = vmatmul.f32.gmra.mxu0 %v2461
    %v2673 = vpop.f32.mrf.mxu0
    %v2674 = vadd.f32 %v2654, %v2673
    %2675 = vdwg.mxu0
    %2676 = vmatpush.msra.mxu0 %v2493
    %2677 = vmatpush.msra.mxu0 %v2491
    %2678 = vmatpush.msra.mxu0 %v2489
    %2679 = vmatpush.msra.mxu0 %v2487
    %2680 = vmatpush.msra.mxu0 %v2485
    %2681 = vmatpush.msra.mxu0 %v2483
    %2682 = vmatpush.msra.mxu0 %v2481
    %2683 = vmatpush.msra.mxu0 %v2479
    %2684 = vmatpush.msra.mxu0 %v2477
    %2685 = vmatpush.msra.mxu0 %v2475
    %2686 = vmatpush.msra.mxu0 %v2473
    %2687 = vmatpush.msra.mxu0 %v2471
    %2688 = vmatpush.msra.mxu0 %v2469
    %2689 = vmatpush.msra.mxu0 %v2467
    %2690 = vmatpush.msra.mxu0 %v2465
    %2691 = vmatpush.msra.mxu0 %v2463
    %2692 = vmatmul.f32.gmra.mxu0 %v2458
    %v2693 = vpop.f32.mrf.mxu0
    %v2694 = vadd.f32 %v2593, %v2693
    %2695 = vdwg.mxu0
    %2696 = vmatpush.msra.mxu0 %v2525
    %2697 = vmatpush.msra.mxu0 %v2523
    %2698 = vmatpush.msra.mxu0 %v2521
    %2699 = vmatpush.msra.mxu0 %v2519
    %2700 = vmatpush.msra.mxu0 %v2517
    %2701 = vmatpush.msra.mxu0 %v2515
    %2702 = vmatpush.msra.mxu0 %v2513
    %2703 = vmatpush.msra.mxu0 %v2511
    %2704 = vmatpush.msra.mxu0 %v2509
    %2705 = vmatpush.msra.mxu0 %v2507
    %2706 = vmatpush.msra.mxu0 %v2505
    %2707 = vmatpush.msra.mxu0 %v2503
    %2708 = vmatpush.msra.mxu0 %v2501
    %2709 = vmatpush.msra.mxu0 %v2499
    %2710 = vmatpush.msra.mxu0 %v2497
    %2711 = vmatpush.msra.mxu0 %v2495
    %2712 = vmatmul.f32.gmra.mxu0 %v2459
    %v2713 = vpop.f32.mrf.mxu0
    %v2714 = vadd.f32 %v2694, %v2713
    %2715 = vdwg.mxu0
    %2716 = vmatpush.msra.mxu0 %v2557
    %2717 = vmatpush.msra.mxu0 %v2555
    %2718 = vmatpush.msra.mxu0 %v2553
    %2719 = vmatpush.msra.mxu0 %v2551
    %2720 = vmatpush.msra.mxu0 %v2549
    %2721 = vmatpush.msra.mxu0 %v2547
    %2722 = vmatpush.msra.mxu0 %v2545
    %2723 = vmatpush.msra.mxu0 %v2543
    %2724 = vmatpush.msra.mxu0 %v2541
    %2725 = vmatpush.msra.mxu0 %v2539
    %2726 = vmatpush.msra.mxu0 %v2537
    %2727 = vmatpush.msra.mxu0 %v2535
    %2728 = vmatpush.msra.mxu0 %v2533
    %2729 = vmatpush.msra.mxu0 %v2531
    %2730 = vmatpush.msra.mxu0 %v2529
    %2731 = vmatpush.msra.mxu0 %v2527
    %2732 = vmatmul.f32.gmra.mxu0 %v2460
    %v2733 = vpop.f32.mrf.mxu0
    %v2734 = vadd.f32 %v2714, %v2733
    %2735 = vdwg.mxu0
    %2736 = vmatpush.msra.mxu0 %v2589
    %2737 = vmatpush.msra.mxu0 %v2587
    %2738 = vmatpush.msra.mxu0 %v2585
    %2739 = vmatpush.msra.mxu0 %v2583
    %2740 = vmatpush.msra.mxu0 %v2581
    %2741 = vmatpush.msra.mxu0 %v2579
    %2742 = vmatpush.msra.mxu0 %v2577
    %2743 = vmatpush.msra.mxu0 %v2575
    %2744 = vmatpush.msra.mxu0 %v2573
    %2745 = vmatpush.msra.mxu0 %v2571
    %2746 = vmatpush.msra.mxu0 %v2569
    %2747 = vmatpush.msra.mxu0 %v2567
    %2748 = vmatpush.msra.mxu0 %v2565
    %2749 = vmatpush.msra.mxu0 %v2563
    %2750 = vmatpush.msra.mxu0 %v2561
    %2751 = vmatpush.msra.mxu0 %v2559
    %2752 = vmatmul.f32.gmra.mxu0 %v2461
    %v2753 = vpop.f32.mrf.mxu0
    %v2754 = vadd.f32 %v2734, %v2753
    %2755 = vdwg.mxu0
    %v2756 = vmax.f32 %v2674, 0.0
    %v2757 = vmax.f32 %v2754, 0.0
    %v2758 = vld [vmem:[%s5] sm:$0xff]
    %v2759 = vld [vmem:[%s5 + $0x8] sm:$0xff]
    %v2760 = vld [vmem:[%s5 + $0x10] sm:$0xff]
    %v2761 = vld [vmem:[%s5 + $0x18] sm:$0xff]
    %v2762 = vld [vmem:[%s5 + $0x20] sm:$0xff]
    %v2763 = vld [vmem:[%s5 + $0x28] sm:$0xff]
    %v2764 = vld [vmem:[%s5 + $0x30] sm:$0xff]
    %v2765 = vld [vmem:[%s5 + $0x38] sm:$0xff]
    %v2766 = vld [vmem:[%s5 + $0x40] sm:$0xff]
    %v2767 = vld [vmem:[%s5 + $0x48] sm:$0xff]
    %v2768 = vld [vmem:[%s5 + $0x50] sm:$0xff]
    %v2769 = vld [vmem:[%s5 + $0x58] sm:$0xff]
    %v2770 = vld [vmem:[%s5 + $0x60] sm:$0xff]
    %v2771 = vld [vmem:[%s5 + $0x68] sm:$0xff]
    %v2772 = vld [vmem:[%s5 + $0x70] sm:$0xff]
    %v2773 = vld [vmem:[%s5 + $0x78] sm:$0xff]
    %v2774 = vld [vmem:[%s5 + $0x80] sm:$0xff]
    %v2775 = vld [vmem:[%s5 + $0x88] sm:$0xff]
    %v2776 = vld [vmem:[%s5 + $0x90] sm:$0xff]
    %v2777 = vld [vmem:[%s5 + $0x98] sm:$0xff]
    %v2778 = vld [vmem:[%s5 + $0xa0] sm:$0xff]
    %v2779 = vld [vmem:[%s5 + $0xa8] sm:$0xff]
    %v2780 = vld [vmem:[%s5 + $0xb0] sm:$0xff]
    %v2781 = vld [vmem:[%s5 + $0xb8] sm:$0xff]
    %v2782 = vld [vmem:[%s5 + $0xc0] sm:$0xff]
    %v2783 = vld [vmem:[%s5 + $0xc8] sm:$0xff]
    %v2784 = vld [vmem:[%s5 + $0xd0] sm:$0xff]
    %v2785 = vld [vmem:[%s5 + $0xd8] sm:$0xff]
    %v2786 = vld [vmem:[%s5 + $0xe0] sm:$0xff]
    %v2787 = vld [vmem:[%s5 + $0xe8] sm:$0xff]
    %v2788 = vld [vmem:[%s5 + $0xf0] sm:$0xff]
    %v2789 = vld [vmem:[%s5 + $0xf8] sm:$0xff]
    %v2790 = vld [vmem:[#allocation10] sm:$0x1]
    %v2792 = vperm.slane %v2790, 0
    %2794 = vmatpush.msra.mxu0 %v2773
    %2795 = vmatpush.msra.mxu0 %v2772
    %2796 = vmatpush.msra.mxu0 %v2771
    %2797 = vmatpush.msra.mxu0 %v2770
    %2798 = vmatpush.msra.mxu0 %v2769
    %2799 = vmatpush.msra.mxu0 %v2768
    %2800 = vmatpush.msra.mxu0 %v2767
    %2801 = vmatpush.msra.mxu0 %v2766
    %2802 = vmatpush.msra.mxu0 %v2765
    %2803 = vmatpush.msra.mxu0 %v2764
    %2804 = vmatpush.msra.mxu0 %v2763
    %2805 = vmatpush.msra.mxu0 %v2762
    %2806 = vmatpush.msra.mxu0 %v2761
    %2807 = vmatpush.msra.mxu0 %v2760
    %2808 = vmatpush.msra.mxu0 %v2759
    %2809 = vmatpush.msra.mxu0 %v2758
    %2810 = vmatmul.f32.gmra.mxu0 %v2756
    %v2811 = vpop.f32.mrf.mxu0
    %v2812 = vadd.f32 %v2792, %v2811
    %2813 = vdwg.mxu0
    %2814 = vmatpush.msra.mxu0 %v2789
    %2815 = vmatpush.msra.mxu0 %v2788
    %2816 = vmatpush.msra.mxu0 %v2787
    %2817 = vmatpush.msra.mxu0 %v2786
    %2818 = vmatpush.msra.mxu0 %v2785
    %2819 = vmatpush.msra.mxu0 %v2784
    %2820 = vmatpush.msra.mxu0 %v2783
    %2821 = vmatpush.msra.mxu0 %v2782
    %2822 = vmatpush.msra.mxu0 %v2781
    %2823 = vmatpush.msra.mxu0 %v2780
    %2824 = vmatpush.msra.mxu0 %v2779
    %2825 = vmatpush.msra.mxu0 %v2778
    %2826 = vmatpush.msra.mxu0 %v2777
    %2827 = vmatpush.msra.mxu0 %v2776
    %2828 = vmatpush.msra.mxu0 %v2775
    %2829 = vmatpush.msra.mxu0 %v2774
    %2830 = vmatmul.f32.gmra.mxu0 %v2757
    %v2831 = vpop.f32.mrf.mxu0
    %v2832 = vadd.f32 %v2812, %v2831
    %2833 = vdwg.mxu0
    %vm2834 = vcmask 74752
    %2835 = vst.msk [vmem:[#allocation11] sm:$0x3] %vm2834, %v2832
    // Predicated region
    $region50: #{cnn_forward.3} parent=1 // pred_check
      _
    $region51: #{cnn_forward.3} parent=1 // pred_check_branch
      %2837 = sbr.rel (0) target = $region53
    $region52: #{cnn_forward.3} parent=1 // pred_region
      %2839 = vsyncadd [#allocation4], 0
      %s2841 = sshll.u32 [#allocation11], 4
      %s2842 = int_to_ptr.vmem [resolvable:$true] %s2841
      %s2843 = sshll.u32 %s7, 4
      %s2844 = int_to_ptr.hbm [resolvable:$true] %s2843
      %2846 = dma.vmem_to_hbm [thread:$0]  %s2842, 32, %s2844, [#allocation4]
    $region53: #{cnn_forward.3} parent=1 // pred_fallthru
      _
    // Predicated region
    $region54: #{cnn_forward.3} parent=1 // pred_check
      _
    $region55: #{cnn_forward.3} parent=1 // pred_check_branch
      %2848 = sbr.rel (0) target = $region57
    $region56: #{cnn_forward.3} parent=1 // pred_region
      %2850 = dma.done [#allocation4], 32
    $region57: #{cnn_forward.3} parent=1 // pred_fallthru
      _
    %2851 = vsyncpa [#allocation3], 1
    %2852 = vsyncpa [#allocation6], 1
    %2853 = vsyncpa [#allocation9], 1
    %2854 = vsyncpa [#allocation4], 1

// kernel: cnn_forward.2
$region0: #{cnn_forward.2}
  #allocation0 [shape = 'u32[]', space=smem, size = 0x4, offset = 0x4, fixed_abs, tag = 'smem constant byte address 0x4 - core index']
  #allocation1 [shape = 'u32[72,128]{1,0:T(1,128)}', space=vmem, size = 0x9000, scoped, tag = 'internal scratch']
  #allocation2 [shape = 'f32[18,18,32]{2,1,0:T(8,128)}', space=vmem, size = 0x36000, scoped, tag = 'scratch operand']
  #allocation3 [shape = 'f32[10,10,64]{2,1,0:T(8,128)}', space=vmem, size = 0x14000, scoped, tag = 'scratch operand']
  %s0 = inlined_call_operand.vmem [shape: f32[2,1024,27], index: 0, kind: input, shape index: {}]
  %s1 = inlined_call_operand.hbm [shape: f32[27,32], index: 1, kind: input, shape index: {}]
  %s2 = inlined_call_operand.hbm [shape: f32[1,32], index: 2, kind: input, shape index: {}]
  %s3 = inlined_call_operand.vmem [shape: f32[3,96,64], index: 3, kind: input, shape index: {}]
  %s4 = inlined_call_operand.hbm [shape: f32[1,64], index: 4, kind: input, shape index: {}]
  %s5 = inlined_call_operand.hbm [shape: f32[3,192,128], index: 5, kind: input, shape index: {}]
  %s6 = inlined_call_operand.hbm [shape: f32[1,128], index: 6, kind: input, shape index: {}]
  %s7 = inlined_call_operand.vmem [shape: f32[2,4,4,128], index: 7, kind: output, shape index: {}]
  %s8 = sld [smem:[#allocation0]]
  $region81: #{cnn_forward.2} parent=0
    _
  %s10 = ssub.s32 1, %s8
  %s11 = scalar_select 0, %s10, %s8
  $region1: #{cnn_forward.2} parent=0
    #allocation4 [shape = 'u8[16384]{0}', space=vmem, size = 0x4000, scoped, tag = 'input window, operand 1, single buffered']
    #allocation5 [shape = 's32[2]{0}', space=sflag, size = 0x8, scoped, tag = 'scoped memory for cnn_forward.2']
    #allocation6 [shape = 'u8[512]{0}', space=vmem, size = 0x400, scoped, tag = 'input window, operand 2, single buffered']
    #allocation7 [shape = 's32[1]{0}', space=sflag, size = 0x4, scoped, tag = 'scoped memory for cnn_forward.2']
    #allocation8 [shape = 'u8[512]{0}', space=vmem, size = 0x400, scoped, tag = 'input window, operand 4, single buffered']
    #allocation9 [shape = 'u8[294912]{0}', space=vmem, size = 0x48000, scoped, tag = 'input window, operand 5, single buffered']
    #allocation10 [shape = 's32[1]{0}', space=sflag, size = 0x4, scoped, tag = 'scoped memory for cnn_forward.2']
    #allocation11 [shape = 'u8[512]{0}', space=vmem, size = 0x400, scoped, tag = 'input window, operand 6, single buffered']
    %12 = vsyncpa [#allocation5], 0
    %13 = vsyncpa [#allocation7], 0
    %14 = vsyncpa [#allocation10], 0
    loop: start=0, step=1, limit=4
    $region2: #{cnn_forward.2} parent=1 // loop_pre_header
      _
    $region3: #{cnn_forward.2} parent=1 // loop_header
      %s16 = sphi 0, %s20
      %p17 = scmp.ge.s32.totalorder %s16, 4
      %s26 = sphi 0, %s28
      %s29 = sphi 0, %s26
      %s30 = sphi 0, %s29
      %s46 = sphi 0, %s30
      %s50 = sphi 0, %s50
      %s52 = sphi 0, %s50
      %s53 = sphi 0, %s52
      %s67 = sphi 0, %s53
      %s71 = sphi 0, %s71
      %s73 = sphi 0, %s71
      %s74 = sphi 0, %s73
      %s88 = sphi 0, %s74
      %s92 = sphi 0, %s92
      %s94 = sphi 0, %s92
      %s95 = sphi 0, %s94
      %s109 = sphi 0, %s95
      %s113 = sphi 0, %s113
      %s115 = sphi 0, %s113
      %s116 = sphi 0, %s115
      %s130 = sphi 0, %s116
      %s134 = sphi 0, %s134
      %s136 = sphi 0, %s134
      %s137 = sphi 0, %s136
      %s151 = sphi 0, %s137
      %s155 = sphi 0, %s155
      %s157 = sphi 0, %s155
      %s158 = sphi 0, %s157
      %s172 = sphi 0, %s158
      %s178 = sphi 0, %s180
      %s181 = sphi 0, %s178
      %s182 = sphi 0, %s181
      %s198 = sphi 0, %s182
    $region4: #{cnn_forward.2} parent=1 // loop_header_branch
      %19 = sbr.rel (%p17) target = $region8
    $region5: #{cnn_forward.2} parent=1 // loop_body
      %s21 = ssub.s32 %s16, 1
      %s22 = ssub.s32 %s16, 2
      %s23 = sadd.s32 %s16, 1
      %s24 = ssub.s32 %s16, %s23
      %p25 = scmp.eq.s32.totalorder %s24, 0
      %s27 = sadd.s32 %s26, 1
      %s28 = scalar_select %p25, %s26, %s27
      %p31 = pneg %p25
      %p32 = scmp.eq.s32.totalorder %s16, 1
      %p33 = por %p31, %p32
      %p34 = scmp.ne.s32.totalorder %s26, %s29
      %p35 = scmp.eq.s32.totalorder %s16, 0
      %p36 = por %p34, %p35
      %p37 = scmp.ne.s32.totalorder %s26, %s29
      %p38 = scmp.eq.s32.totalorder %s21, 1
      %p39 = por %p37, %p38
      %p40 = scmp.ne.s32.totalorder %s29, %s30
      %p41 = scmp.eq.s32.totalorder %s21, 0
      %p42 = por %p40, %p41
      %p43 = scmp.ne.s32.totalorder %s29, %s30
      %p44 = scmp.eq.s32.totalorder %s22, 1
      %p45 = por %p43, %p44
      %p47 = scmp.ne.s32.totalorder %s30, %s46
      %p48 = scmp.eq.s32.totalorder %s22, 0
      %p49 = por %p47, %p48
      %s51 = sadd.s32 %s50, 1
      %p54 = scmp.eq.s32.totalorder %s16, 1
      %p55 = scmp.ne.s32.totalorder %s50, %s52
      %p56 = scmp.eq.s32.totalorder %s16, 0
      %p57 = por %p55, %p56
      %p58 = scmp.ne.s32.totalorder %s50, %s52
      %p59 = scmp.eq.s32.totalorder %s21, 1
      %p60 = por %p58, %p59
      %p61 = scmp.ne.s32.totalorder %s52, %s53
      %p62 = scmp.eq.s32.totalorder %s21, 0
      %p63 = por %p61, %p62
      %p64 = scmp.ne.s32.totalorder %s52, %s53
      %p65 = scmp.eq.s32.totalorder %s22, 1
      %p66 = por %p64, %p65
      %p68 = scmp.ne.s32.totalorder %s53, %s67
      %p69 = scmp.eq.s32.totalorder %s22, 0
      %p70 = por %p68, %p69
      %s72 = sadd.s32 %s71, 1
      %p75 = scmp.eq.s32.totalorder %s16, 1
      %p76 = scmp.ne.s32.totalorder %s71, %s73
      %p77 = scmp.eq.s32.totalorder %s16, 0
      %p78 = por %p76, %p77
      %p79 = scmp.ne.s32.totalorder %s71, %s73
      %p80 = scmp.eq.s32.totalorder %s21, 1
      %p81 = por %p79, %p80
      %p82 = scmp.ne.s32.totalorder %s73, %s74
      %p83 = scmp.eq.s32.totalorder %s21, 0
      %p84 = por %p82, %p83
      %p85 = scmp.ne.s32.totalorder %s73, %s74
      %p86 = scmp.eq.s32.totalorder %s22, 1
      %p87 = por %p85, %p86
      %p89 = scmp.ne.s32.totalorder %s74, %s88
      %p90 = scmp.eq.s32.totalorder %s22, 0
      %p91 = por %p89, %p90
      %s93 = sadd.s32 %s92, 1
      %p96 = scmp.eq.s32.totalorder %s16, 1
      %p97 = scmp.ne.s32.totalorder %s92, %s94
      %p98 = scmp.eq.s32.totalorder %s16, 0
      %p99 = por %p97, %p98
      %p100 = scmp.ne.s32.totalorder %s92, %s94
      %p101 = scmp.eq.s32.totalorder %s21, 1
      %p102 = por %p100, %p101
      %p103 = scmp.ne.s32.totalorder %s94, %s95
      %p104 = scmp.eq.s32.totalorder %s21, 0
      %p105 = por %p103, %p104
      %p106 = scmp.ne.s32.totalorder %s94, %s95
      %p107 = scmp.eq.s32.totalorder %s22, 1
      %p108 = por %p106, %p107
      %p110 = scmp.ne.s32.totalorder %s95, %s109
      %p111 = scmp.eq.s32.totalorder %s22, 0
      %p112 = por %p110, %p111
      %s114 = sadd.s32 %s113, 1
      %p117 = scmp.eq.s32.totalorder %s16, 1
      %p118 = scmp.ne.s32.totalorder %s113, %s115
      %p119 = scmp.eq.s32.totalorder %s16, 0
      %p120 = por %p118, %p119
      %p121 = scmp.ne.s32.totalorder %s113, %s115
      %p122 = scmp.eq.s32.totalorder %s21, 1
      %p123 = por %p121, %p122
      %p124 = scmp.ne.s32.totalorder %s115, %s116
      %p125 = scmp.eq.s32.totalorder %s21, 0
      %p126 = por %p124, %p125
      %p127 = scmp.ne.s32.totalorder %s115, %s116
      %p128 = scmp.eq.s32.totalorder %s22, 1
      %p129 = por %p127, %p128
      %p131 = scmp.ne.s32.totalorder %s116, %s130
      %p132 = scmp.eq.s32.totalorder %s22, 0
      %p133 = por %p131, %p132
      %s135 = sadd.s32 %s134, 1
      %p138 = scmp.eq.s32.totalorder %s16, 1
      %p139 = scmp.ne.s32.totalorder %s134, %s136
      %p140 = scmp.eq.s32.totalorder %s16, 0
      %p141 = por %p139, %p140
      %p142 = scmp.ne.s32.totalorder %s134, %s136
      %p143 = scmp.eq.s32.totalorder %s21, 1
      %p144 = por %p142, %p143
      %p145 = scmp.ne.s32.totalorder %s136, %s137
      %p146 = scmp.eq.s32.totalorder %s21, 0
      %p147 = por %p145, %p146
      %p148 = scmp.ne.s32.totalorder %s136, %s137
      %p149 = scmp.eq.s32.totalorder %s22, 1
      %p150 = por %p148, %p149
      %p152 = scmp.ne.s32.totalorder %s137, %s151
      %p153 = scmp.eq.s32.totalorder %s22, 0
      %p154 = por %p152, %p153
      %s156 = sadd.s32 %s155, 1
      %p159 = scmp.eq.s32.totalorder %s16, 1
      %p160 = scmp.ne.s32.totalorder %s155, %s157
      %p161 = scmp.eq.s32.totalorder %s16, 0
      %p162 = por %p160, %p161
      %p163 = scmp.ne.s32.totalorder %s155, %s157
      %p164 = scmp.eq.s32.totalorder %s21, 1
      %p165 = por %p163, %p164
      %p166 = scmp.ne.s32.totalorder %s157, %s158
      %p167 = scmp.eq.s32.totalorder %s21, 0
      %p168 = por %p166, %p167
      %p169 = scmp.ne.s32.totalorder %s157, %s158
      %p170 = scmp.eq.s32.totalorder %s22, 1
      %p171 = por %p169, %p170
      %p173 = scmp.ne.s32.totalorder %s158, %s172
      %p174 = scmp.eq.s32.totalorder %s22, 0
      %p175 = por %p173, %p174
      %s176 = ssub.s32 %s16, %s23
      %p177 = scmp.eq.s32.totalorder %s176, 0
      %s179 = sadd.s32 %s178, 1
      %s180 = scalar_select %p177, %s178, %s179
      %p183 = pneg %p177
      %p184 = scmp.eq.s32.totalorder %s16, 1
      %p185 = por %p183, %p184
      %p186 = scmp.ne.s32.totalorder %s178, %s181
      %p187 = scmp.eq.s32.totalorder %s16, 0
      %p188 = por %p186, %p187
      %p189 = scmp.ne.s32.totalorder %s178, %s181
      %p190 = scmp.eq.s32.totalorder %s21, 1
      %p191 = por %p189, %p190
      %p192 = scmp.ne.s32.totalorder %s181, %s182
      %p193 = scmp.eq.s32.totalorder %s21, 0
      %p194 = por %p192, %p193
      %p195 = scmp.ne.s32.totalorder %s181, %s182
      %p196 = scmp.eq.s32.totalorder %s22, 1
      %p197 = por %p195, %p196
      %p199 = scmp.ne.s32.totalorder %s182, %s198
      %p200 = scmp.eq.s32.totalorder %s22, 0
      %p201 = por %p199, %p200
      %p202 = scmp.le.s32.totalorder 1, %s16
      %p203 = scmp.lt.s32.totalorder %s16, 3
      %p204 = pnand %p202, %p203
      %p205 = pneg %p204
      // Predicated region
      $region9: #{cnn_forward.2} parent=5 // pred_check
        _
      $region10: #{cnn_forward.2} parent=5 // pred_check_branch
        %207 = sbr.rel (%p204) target = $region12
      $region11: #{cnn_forward.2} parent=5 // pred_region
        %s208 = ssub.s32 %s16, 1
        // Predicated region
        $region13: #{cnn_forward.2} parent=11 // pred_check
          %p209 = pneg %p63
        $region14: #{cnn_forward.2} parent=11 // pred_check_branch
          %211 = sbr.rel (%p209) target = $region16
        $region15: #{cnn_forward.2} parent=11 // pred_region
          %213 = vsyncadd [#allocation5], 0
          %s214 = sshll.u32 %s1, 4
          %s215 = int_to_ptr.hbm [resolvable:$true] %s214
          %s216 = sshll.u32 [#allocation4], 4
          %s217 = int_to_ptr.vmem [resolvable:$true] %s216
          %222 = dma.hbm_to_vmem [thread:$0]  %s215, 512, %s217, [#allocation5], 128, 128, 8
        $region16: #{cnn_forward.2} parent=11 // pred_fallthru
          _
        // Predicated region
        $region17: #{cnn_forward.2} parent=11 // pred_check
          %p223 = pneg %p84
        $region18: #{cnn_forward.2} parent=11 // pred_check_branch
          %225 = sbr.rel (%p223) target = $region20
        $region19: #{cnn_forward.2} parent=11 // pred_region
          %227 = vsyncadd [#allocation7], 0
          %s229 = sshll.u32 %s2, 4
          %s230 = int_to_ptr.hbm [resolvable:$true] %s229
          %s231 = sshll.u32 [#allocation6], 4
          %s232 = int_to_ptr.vmem [resolvable:$true] %s231
          %234 = dma.hbm_to_vmem [thread:$0]  %s230, 16, %s232, [#allocation7]
        $region20: #{cnn_forward.2} parent=11 // pred_fallthru
          _
        // Predicated region
        $region21: #{cnn_forward.2} parent=11 // pred_check
          %p235 = pneg %p105
        $region22: #{cnn_forward.2} parent=11 // pred_check_branch
          %237 = sbr.rel (%p235) target = $region24
        $region23: #{cnn_forward.2} parent=11 // pred_region
          _
        $region24: #{cnn_forward.2} parent=11 // pred_fallthru
          _
        // Predicated region
        $region25: #{cnn_forward.2} parent=11 // pred_check
          %p238 = pneg %p126
        $region26: #{cnn_forward.2} parent=11 // pred_check_branch
          %240 = sbr.rel (%p238) target = $region28
        $region27: #{cnn_forward.2} parent=11 // pred_region
          %242 = vsyncadd [#allocation7], 0
          %s244 = sshll.u32 %s4, 4
          %s245 = int_to_ptr.hbm [resolvable:$true] %s244
          %s246 = sshll.u32 [#allocation8], 4
          %s247 = int_to_ptr.vmem [resolvable:$true] %s246
          %249 = dma.hbm_to_vmem [thread:$0]  %s245, 16, %s247, [#allocation7]
        $region28: #{cnn_forward.2} parent=11 // pred_fallthru
          _
        // Predicated region
        $region29: #{cnn_forward.2} parent=11 // pred_check
          %p250 = pneg %p147
        $region30: #{cnn_forward.2} parent=11 // pred_check_branch
          %252 = sbr.rel (%p250) target = $region32
        $region31: #{cnn_forward.2} parent=11 // pred_region
          %254 = vsyncadd [#allocation10], 0
          %s255 = sshll.u32 %s5, 4
          %s256 = int_to_ptr.hbm [resolvable:$true] %s255
          %s257 = sshll.u32 [#allocation9], 4
          %s258 = int_to_ptr.vmem [resolvable:$true] %s257
          %263 = dma.hbm_to_vmem [thread:$0]  %s256, 9216, %s258, [#allocation10], 128, 128, 8
        $region32: #{cnn_forward.2} parent=11 // pred_fallthru
          _
        // Predicated region
        $region33: #{cnn_forward.2} parent=11 // pred_check
          %p264 = pneg %p168
        $region34: #{cnn_forward.2} parent=11 // pred_check_branch
          %266 = sbr.rel (%p264) target = $region36
        $region35: #{cnn_forward.2} parent=11 // pred_region
          %268 = vsyncadd [#allocation10], 0
          %s270 = sshll.u32 %s6, 4
          %s271 = int_to_ptr.hbm [resolvable:$true] %s270
          %s272 = sshll.u32 [#allocation11], 4
          %s273 = int_to_ptr.vmem [resolvable:$true] %s272
          %275 = dma.hbm_to_vmem [thread:$0]  %s271, 16, %s273, [#allocation10]
        $region36: #{cnn_forward.2} parent=11 // pred_fallthru
          _
      $region12: #{cnn_forward.2} parent=5 // pred_fallthru
        _
      %p276 = scmp.lt.s32.totalorder %s16, 2
      // Predicated region
      $region37: #{cnn_forward.2} parent=5 // pred_check
        %p277 = pneg %p276
      $region38: #{cnn_forward.2} parent=5 // pred_check_branch
        %279 = sbr.rel (%p277) target = $region40
      $region39: #{cnn_forward.2} parent=5 // pred_region
        // Predicated region
        $region41: #{cnn_forward.2} parent=39 // pred_check
          %p280 = pneg %p36
        $region42: #{cnn_forward.2} parent=39 // pred_check_branch
          %282 = sbr.rel (%p280) target = $region44
        $region43: #{cnn_forward.2} parent=39 // pred_region
          %p283 = scmp.lt.s32.totalorder %s16, 1
          %s284 = scalar_select %p283, %s16, 1
          %s285 = smul.addr %s284, 128
          %s286 = smul.addr %s285, 8
          %s287 = scalar_lea.vmem %s0, %s286
        $region44: #{cnn_forward.2} parent=39 // pred_fallthru
          _
      $region40: #{cnn_forward.2} parent=5 // pred_fallthru
        _
      %p288 = scmp.le.s32.totalorder 1, %s16
      %p289 = scmp.lt.s32.totalorder %s16, 3
      %p290 = pnand %p288, %p289
      %p291 = pneg %p290
      // Predicated region
      $region45: #{cnn_forward.2} parent=5 // pred_check
        _
      $region46: #{cnn_forward.2} parent=5 // pred_check_branch
        %293 = sbr.rel (%p290) target = $region48
      $region47: #{cnn_forward.2} parent=5 // pred_region
        %s294 = ssub.s32 %s16, 1
        // Predicated region
        $region49: #{cnn_forward.2} parent=47 // pred_check
          %p295 = pneg %p63
        $region50: #{cnn_forward.2} parent=47 // pred_check_branch
          %297 = sbr.rel (%p295) target = $region52
        $region51: #{cnn_forward.2} parent=47 // pred_region
          %299 = dma.done [#allocation5], 512
        $region52: #{cnn_forward.2} parent=47 // pred_fallthru
          _
        // Predicated region
        $region53: #{cnn_forward.2} parent=47 // pred_check
          %p300 = pneg %p84
        $region54: #{cnn_forward.2} parent=47 // pred_check_branch
          %302 = sbr.rel (%p300) target = $region56
        $region55: #{cnn_forward.2} parent=47 // pred_region
          %304 = dma.done [#allocation7], 16
        $region56: #{cnn_forward.2} parent=47 // pred_fallthru
          _
        // Predicated region
        $region57: #{cnn_forward.2} parent=47 // pred_check
          %p305 = pneg %p126
        $region58: #{cnn_forward.2} parent=47 // pred_check_branch
          %307 = sbr.rel (%p305) target = $region60
        $region59: #{cnn_forward.2} parent=47 // pred_region
          %309 = dma.done [#allocation7], 16
        $region60: #{cnn_forward.2} parent=47 // pred_fallthru
          _
        // Predicated region
        $region61: #{cnn_forward.2} parent=47 // pred_check
          %p310 = pneg %p147
        $region62: #{cnn_forward.2} parent=47 // pred_check_branch
          %312 = sbr.rel (%p310) target = $region64
        $region63: #{cnn_forward.2} parent=47 // pred_region
          %314 = dma.done [#allocation10], 9216
        $region64: #{cnn_forward.2} parent=47 // pred_fallthru
          _
        // Predicated region
        $region65: #{cnn_forward.2} parent=47 // pred_check
          %p315 = pneg %p168
        $region66: #{cnn_forward.2} parent=47 // pred_check_branch
          %317 = sbr.rel (%p315) target = $region68
        $region67: #{cnn_forward.2} parent=47 // pred_region
          %319 = dma.done [#allocation10], 16
        $region68: #{cnn_forward.2} parent=47 // pred_fallthru
          _
        %p320 = scmp.lt.s32.totalorder %s21, 1
        %s321 = scalar_select %p320, %s21, 1
        %s322 = smul.addr %s321, 128
        %s323 = smul.addr %s322, 8
        %s324 = scalar_lea.vmem %s0, %s323
        %p325 = pneg %p42
        %p326 = pneg %p39
        %p327 = pneg %p63
        %p328 = pneg %p60
        %p329 = pneg %p84
        %p330 = pneg %p81
        %p331 = pneg %p105
        %p332 = pneg %p102
        %p333 = pneg %p126
        %p334 = pneg %p123
        %p335 = pneg %p147
        %p336 = pneg %p144
        %p337 = pneg %p168
        %p338 = pneg %p165
        %p339 = pneg %p194
        %p340 = pneg %p191
        %p341 = scmp.lt.s32.totalorder %s21, 1
        %s342 = scalar_select %p341, %s21, 1
        %s343 = smul.addr %s342, 4
        %s344 = smul.addr %s343, 4
        %s345 = scalar_lea.vmem %s7, %s344
        %p346 = scmp.lt.s32.totalorder %s21, 1
        %s347 = scalar_select %p346, %s21, 1
        %s348 = smul.addr %s347, 128
        %s349 = smul.addr %s348, 8
        %s350 = scalar_lea.vmem %s0, %s349
        %p351 = scmp.lt.s32.totalorder %s21, 1
        %s352 = scalar_select %p351, %s21, 1
        %s353 = smul.addr %s352, 4
        %s354 = smul.addr %s353, 4
        %s355 = scalar_lea.vmem %s7, %s354
        %vm356 = vcmask 261120
        %357 = vst.msk [vmem:[#allocation2] sm:$0xff] %vm356, 0.0
        %358 = vst.msk [vmem:[#allocation2 + $0x8] sm:$0xff] %vm356, 0.0
        %vm359 = vcmask 254976
        %360 = vst.msk [vmem:[#allocation2 + $0x10] sm:$0x3] %vm359, 0.0
        %361 = vst.msk [vmem:[#allocation2 + $0x18] sm:$0xff] %vm356, 0.0
        %362 = vst.msk [vmem:[#allocation2 + $0x20] sm:$0xff] %vm356, 0.0
        %363 = vst.msk [vmem:[#allocation2 + $0x28] sm:$0x3] %vm359, 0.0
        %364 = vst.msk [vmem:[#allocation2 + $0x30] sm:$0xff] %vm356, 0.0
        %365 = vst.msk [vmem:[#allocation2 + $0x38] sm:$0xff] %vm356, 0.0
        %366 = vst.msk [vmem:[#allocation2 + $0x40] sm:$0x3] %vm359, 0.0
        %367 = vst.msk [vmem:[#allocation2 + $0x48] sm:$0xff] %vm356, 0.0
        %368 = vst.msk [vmem:[#allocation2 + $0x50] sm:$0xff] %vm356, 0.0
        %369 = vst.msk [vmem:[#allocation2 + $0x58] sm:$0x3] %vm359, 0.0
        %370 = vst.msk [vmem:[#allocation2 + $0x60] sm:$0xff] %vm356, 0.0
        %371 = vst.msk [vmem:[#allocation2 + $0x68] sm:$0xff] %vm356, 0.0
        %372 = vst.msk [vmem:[#allocation2 + $0x70] sm:$0x3] %vm359, 0.0
        %373 = vst.msk [vmem:[#allocation2 + $0x78] sm:$0xff] %vm356, 0.0
        %374 = vst.msk [vmem:[#allocation2 + $0x80] sm:$0xff] %vm356, 0.0
        %375 = vst.msk [vmem:[#allocation2 + $0x88] sm:$0x3] %vm359, 0.0
        %376 = vst.msk [vmem:[#allocation2 + $0x90] sm:$0xff] %vm356, 0.0
        %377 = vst.msk [vmem:[#allocation2 + $0x98] sm:$0xff] %vm356, 0.0
        %378 = vst.msk [vmem:[#allocation2 + $0xa0] sm:$0x3] %vm359, 0.0
        %379 = vst.msk [vmem:[#allocation2 + $0xa8] sm:$0xff] %vm356, 0.0
        %380 = vst.msk [vmem:[#allocation2 + $0xb0] sm:$0xff] %vm356, 0.0
        %381 = vst.msk [vmem:[#allocation2 + $0xb8] sm:$0x3] %vm359, 0.0
        %382 = vst.msk [vmem:[#allocation2 + $0xc0] sm:$0xff] %vm356, 0.0
        %383 = vst.msk [vmem:[#allocation2 + $0xc8] sm:$0xff] %vm356, 0.0
        %384 = vst.msk [vmem:[#allocation2 + $0xd0] sm:$0x3] %vm359, 0.0
        %385 = vst.msk [vmem:[#allocation2 + $0xd8] sm:$0xff] %vm356, 0.0
        %386 = vst.msk [vmem:[#allocation2 + $0xe0] sm:$0xff] %vm356, 0.0
        %387 = vst.msk [vmem:[#allocation2 + $0xe8] sm:$0x3] %vm359, 0.0
        %388 = vst.msk [vmem:[#allocation2 + $0xf0] sm:$0xff] %vm356, 0.0
        %389 = vst.msk [vmem:[#allocation2 + $0xf8] sm:$0xff] %vm356, 0.0
        %390 = vst.msk [vmem:[#allocation2 + $0x100] sm:$0x3] %vm359, 0.0
        %391 = vst.msk [vmem:[#allocation2 + $0x108] sm:$0xff] %vm356, 0.0
        %392 = vst.msk [vmem:[#allocation2 + $0x110] sm:$0xff] %vm356, 0.0
        %393 = vst.msk [vmem:[#allocation2 + $0x118] sm:$0x3] %vm359, 0.0
        %394 = vst.msk [vmem:[#allocation2 + $0x120] sm:$0xff] %vm356, 0.0
        %395 = vst.msk [vmem:[#allocation2 + $0x128] sm:$0xff] %vm356, 0.0
        %396 = vst.msk [vmem:[#allocation2 + $0x130] sm:$0x3] %vm359, 0.0
        %397 = vst.msk [vmem:[#allocation2 + $0x138] sm:$0xff] %vm356, 0.0
        %398 = vst.msk [vmem:[#allocation2 + $0x140] sm:$0xff] %vm356, 0.0
        %399 = vst.msk [vmem:[#allocation2 + $0x148] sm:$0x3] %vm359, 0.0
        %400 = vst.msk [vmem:[#allocation2 + $0x150] sm:$0xff] %vm356, 0.0
        %401 = vst.msk [vmem:[#allocation2 + $0x158] sm:$0xff] %vm356, 0.0
        %402 = vst.msk [vmem:[#allocation2 + $0x160] sm:$0x3] %vm359, 0.0
        %403 = vst.msk [vmem:[#allocation2 + $0x168] sm:$0xff] %vm356, 0.0
        %404 = vst.msk [vmem:[#allocation2 + $0x170] sm:$0xff] %vm356, 0.0
        %405 = vst.msk [vmem:[#allocation2 + $0x178] sm:$0x3] %vm359, 0.0
        %406 = vst.msk [vmem:[#allocation2 + $0x180] sm:$0xff] %vm356, 0.0
        %407 = vst.msk [vmem:[#allocation2 + $0x188] sm:$0xff] %vm356, 0.0
        %408 = vst.msk [vmem:[#allocation2 + $0x190] sm:$0x3] %vm359, 0.0
        %409 = vst.msk [vmem:[#allocation2 + $0x198] sm:$0xff] %vm356, 0.0
        %410 = vst.msk [vmem:[#allocation2 + $0x1a0] sm:$0xff] %vm356, 0.0
        %411 = vst.msk [vmem:[#allocation2 + $0x1a8] sm:$0x3] %vm359, 0.0
        %v412 = vld [vmem:[%s350] sm:$0xff]
        %v413 = vld [vmem:[%s350 + $0x8] sm:$0xff]
        %v414 = vld [vmem:[%s350 + $0x10] sm:$0xff]
        %v415 = vld [vmem:[%s350 + $0x18] sm:$0xff]
        %v416 = vld [vmem:[%s350 + $0x20] sm:$0xff]
        %v417 = vld [vmem:[%s350 + $0x28] sm:$0xff]
        %v418 = vld [vmem:[%s350 + $0x30] sm:$0xff]
        %v419 = vld [vmem:[%s350 + $0x38] sm:$0xff]
        %v420 = vld [vmem:[%s350 + $0x40] sm:$0xff]
        %v421 = vld [vmem:[%s350 + $0x48] sm:$0xff]
        %v422 = vld [vmem:[%s350 + $0x50] sm:$0xff]
        %v423 = vld [vmem:[%s350 + $0x58] sm:$0xff]
        %v424 = vld [vmem:[%s350 + $0x60] sm:$0xff]
        %v425 = vld [vmem:[%s350 + $0x68] sm:$0xff]
        %v426 = vld [vmem:[%s350 + $0x70] sm:$0xff]
        %v427 = vld [vmem:[%s350 + $0x78] sm:$0xff]
        %v428 = vld [vmem:[%s350 + $0x80] sm:$0xff]
        %v429 = vld [vmem:[%s350 + $0x88] sm:$0xff]
        %v430 = vld [vmem:[%s350 + $0x90] sm:$0xff]
        %v431 = vld [vmem:[%s350 + $0x98] sm:$0xff]
        %v432 = vld [vmem:[%s350 + $0xa0] sm:$0xff]
        %v433 = vld [vmem:[%s350 + $0xa8] sm:$0xff]
        %v434 = vld [vmem:[%s350 + $0xb0] sm:$0xff]
        %v435 = vld [vmem:[%s350 + $0xb8] sm:$0xff]
        %v436 = vld [vmem:[%s350 + $0xc0] sm:$0xff]
        %v437 = vld [vmem:[%s350 + $0xc8] sm:$0xff]
        %v438 = vld [vmem:[%s350 + $0xd0] sm:$0xff]
        %v439 = vld [vmem:[%s350 + $0xd8] sm:$0xff]
        %v440 = vld [vmem:[%s350 + $0xe0] sm:$0xff]
        %v441 = vld [vmem:[%s350 + $0xe8] sm:$0xff]
        %v442 = vld [vmem:[%s350 + $0xf0] sm:$0xff]
        %v443 = vld [vmem:[%s350 + $0xf8] sm:$0xff]
        %v444 = vld [vmem:[#allocation4] sm:$0xff]
        %v445 = vld [vmem:[#allocation4 + $0x8] sm:$0xff]
        %v446 = vld [vmem:[#allocation4 + $0x10] sm:$0xff]
        %v447 = vld [vmem:[#allocation4 + $0x18] sm:$0x7]
        %v448 = vld [vmem:[#allocation6] sm:$0x1]
        %v450 = vperm.slane %v448, 0
        %vm452 = vcmask 220160
        %v454 = vsel %vm452, %v412, 0
        %v457 = vsel %vm452, %v413, 0
        %v460 = vsel %vm452, %v414, 0
        %v463 = vsel %vm452, %v415, 0
        %v466 = vsel %vm452, %v416, 0
        %v469 = vsel %vm452, %v417, 0
        %v472 = vsel %vm452, %v418, 0
        %v475 = vsel %vm452, %v419, 0
        %v478 = vsel %vm452, %v420, 0
        %v481 = vsel %vm452, %v421, 0
        %v484 = vsel %vm452, %v422, 0
        %v487 = vsel %vm452, %v423, 0
        %v490 = vsel %vm452, %v424, 0
        %v493 = vsel %vm452, %v425, 0
        %v496 = vsel %vm452, %v426, 0
        %v499 = vsel %vm452, %v427, 0
        %v502 = vsel %vm452, %v428, 0
        %v505 = vsel %vm452, %v429, 0
        %v508 = vsel %vm452, %v430, 0
        %v511 = vsel %vm452, %v431, 0
        %v514 = vsel %vm452, %v432, 0
        %v517 = vsel %vm452, %v433, 0
        %v520 = vsel %vm452, %v434, 0
        %v523 = vsel %vm452, %v435, 0
        %v526 = vsel %vm452, %v436, 0
        %v529 = vsel %vm452, %v437, 0
        %v532 = vsel %vm452, %v438, 0
        %v535 = vsel %vm452, %v439, 0
        %v538 = vsel %vm452, %v440, 0
        %v541 = vsel %vm452, %v441, 0
        %v544 = vsel %vm452, %v442, 0
        %v547 = vsel %vm452, %v443, 0
        %vm549 = vcmask 1042432
        %v551 = vsel %vm549, %v447, 0
        %553 = vmatpush.msra.mxu0 0.0
        %554 = vmatpush.msra.mxu0 0.0
        %555 = vmatpush.msra.mxu0 0.0
        %556 = vmatpush.msra.mxu0 0.0
        %557 = vmatpush.msra.mxu0 0.0
        %558 = vmatpush.msra.mxu0 0.0
        %559 = vmatpush.msra.mxu0 0.0
        %560 = vmatpush.msra.mxu0 0.0
        %561 = vmatpush.msra.mxu0 0.0
        %562 = vmatpush.msra.mxu0 0.0
        %563 = vmatpush.msra.mxu0 0.0
        %564 = vmatpush.msra.mxu0 0.0
        %565 = vmatpush.msra.mxu0 %v551
        %566 = vmatpush.msra.mxu0 %v446
        %567 = vmatpush.msra.mxu0 %v445
        %568 = vmatpush.msra.mxu0 %v444
        %569 = vmatmul.f32.gmra.mxu0 %v454
        %v570 = vpop.f32.mrf.mxu0
        %v571 = vadd.f32 %v450, %v570
        %572 = vmatmul.f32.gmra.mxu0 %v457
        %v573 = vpop.f32.mrf.mxu0
        %v574 = vadd.f32 %v450, %v573
        %575 = vmatmul.f32.gmra.mxu0 %v460
        %v576 = vpop.f32.mrf.mxu0
        %v577 = vadd.f32 %v450, %v576
        %578 = vmatmul.f32.gmra.mxu0 %v463
        %v579 = vpop.f32.mrf.mxu0
        %v580 = vadd.f32 %v450, %v579
        %581 = vmatmul.f32.gmra.mxu0 %v466
        %v582 = vpop.f32.mrf.mxu0
        %v583 = vadd.f32 %v450, %v582
        %584 = vmatmul.f32.gmra.mxu0 %v469
        %v585 = vpop.f32.mrf.mxu0
        %v586 = vadd.f32 %v450, %v585
        %587 = vmatmul.f32.gmra.mxu0 %v472
        %v588 = vpop.f32.mrf.mxu0
        %v589 = vadd.f32 %v450, %v588
        %590 = vmatmul.f32.gmra.mxu0 %v475
        %v591 = vpop.f32.mrf.mxu0
        %v592 = vadd.f32 %v450, %v591
        %593 = vmatmul.f32.gmra.mxu0 %v478
        %v594 = vpop.f32.mrf.mxu0
        %v595 = vadd.f32 %v450, %v594
        %596 = vmatmul.f32.gmra.mxu0 %v481
        %v597 = vpop.f32.mrf.mxu0
        %v598 = vadd.f32 %v450, %v597
        %599 = vmatmul.f32.gmra.mxu0 %v484
        %v600 = vpop.f32.mrf.mxu0
        %v601 = vadd.f32 %v450, %v600
        %602 = vmatmul.f32.gmra.mxu0 %v487
        %v603 = vpop.f32.mrf.mxu0
        %v604 = vadd.f32 %v450, %v603
        %605 = vmatmul.f32.gmra.mxu0 %v490
        %v606 = vpop.f32.mrf.mxu0
        %v607 = vadd.f32 %v450, %v606
        %608 = vmatmul.f32.gmra.mxu0 %v493
        %v609 = vpop.f32.mrf.mxu0
        %v610 = vadd.f32 %v450, %v609
        %611 = vmatmul.f32.gmra.mxu0 %v496
        %v612 = vpop.f32.mrf.mxu0
        %v613 = vadd.f32 %v450, %v612
        %614 = vmatmul.f32.gmra.mxu0 %v499
        %v615 = vpop.f32.mrf.mxu0
        %v616 = vadd.f32 %v450, %v615
        %617 = vmatmul.f32.gmra.mxu0 %v502
        %v618 = vpop.f32.mrf.mxu0
        %v619 = vadd.f32 %v450, %v618
        %620 = vmatmul.f32.gmra.mxu0 %v505
        %v621 = vpop.f32.mrf.mxu0
        %v622 = vadd.f32 %v450, %v621
        %623 = vmatmul.f32.gmra.mxu0 %v508
        %v624 = vpop.f32.mrf.mxu0
        %v625 = vadd.f32 %v450, %v624
        %626 = vmatmul.f32.gmra.mxu0 %v511
        %v627 = vpop.f32.mrf.mxu0
        %v628 = vadd.f32 %v450, %v627
        %629 = vmatmul.f32.gmra.mxu0 %v514
        %v630 = vpop.f32.mrf.mxu0
        %v631 = vadd.f32 %v450, %v630
        %632 = vmatmul.f32.gmra.mxu0 %v517
        %v633 = vpop.f32.mrf.mxu0
        %v634 = vadd.f32 %v450, %v633
        %635 = vmatmul.f32.gmra.mxu0 %v520
        %v636 = vpop.f32.mrf.mxu0
        %v637 = vadd.f32 %v450, %v636
        %638 = vmatmul.f32.gmra.mxu0 %v523
        %v639 = vpop.f32.mrf.mxu0
        %v640 = vadd.f32 %v450, %v639
        %641 = vmatmul.f32.gmra.mxu0 %v526
        %v642 = vpop.f32.mrf.mxu0
        %v643 = vadd.f32 %v450, %v642
        %644 = vmatmul.f32.gmra.mxu0 %v529
        %v645 = vpop.f32.mrf.mxu0
        %v646 = vadd.f32 %v450, %v645
        %647 = vmatmul.f32.gmra.mxu0 %v532
        %v648 = vpop.f32.mrf.mxu0
        %v649 = vadd.f32 %v450, %v648
        %650 = vmatmul.f32.gmra.mxu0 %v535
        %v651 = vpop.f32.mrf.mxu0
        %v652 = vadd.f32 %v450, %v651
        %653 = vmatmul.f32.gmra.mxu0 %v538
        %v654 = vpop.f32.mrf.mxu0
        %v655 = vadd.f32 %v450, %v654
        %656 = vmatmul.f32.gmra.mxu0 %v541
        %v657 = vpop.f32.mrf.mxu0
        %v658 = vadd.f32 %v450, %v657
        %659 = vmatmul.f32.gmra.mxu0 %v544
        %v660 = vpop.f32.mrf.mxu0
        %v661 = vadd.f32 %v450, %v660
        %662 = vmatmul.f32.gmra.mxu0 %v547
        %v663 = vpop.f32.mrf.mxu0
        %v664 = vadd.f32 %v450, %v663
        %665 = vdwg.mxu0
        %v666 = vmax.f32 %v571, 0.0
        %v667 = vmax.f32 %v574, 0.0
        %v668 = vmax.f32 %v577, 0.0
        %v669 = vmax.f32 %v580, 0.0
        %v670 = vmax.f32 %v583, 0.0
        %v671 = vmax.f32 %v586, 0.0
        %v672 = vmax.f32 %v589, 0.0
        %v673 = vmax.f32 %v592, 0.0
        %v674 = vmax.f32 %v595, 0.0
        %v675 = vmax.f32 %v598, 0.0
        %v676 = vmax.f32 %v601, 0.0
        %v677 = vmax.f32 %v604, 0.0
        %v678 = vmax.f32 %v607, 0.0
        %v679 = vmax.f32 %v610, 0.0
        %v680 = vmax.f32 %v613, 0.0
        %v681 = vmax.f32 %v616, 0.0
        %v682 = vmax.f32 %v619, 0.0
        %v683 = vmax.f32 %v622, 0.0
        %v684 = vmax.f32 %v625, 0.0
        %v685 = vmax.f32 %v628, 0.0
        %v686 = vmax.f32 %v631, 0.0
        %v687 = vmax.f32 %v634, 0.0
        %v688 = vmax.f32 %v637, 0.0
        %v689 = vmax.f32 %v640, 0.0
        %v690 = vmax.f32 %v643, 0.0
        %v691 = vmax.f32 %v646, 0.0
        %v692 = vmax.f32 %v649, 0.0
        %v693 = vmax.f32 %v652, 0.0
        %v694 = vmax.f32 %v655, 0.0
        %v695 = vmax.f32 %v658, 0.0
        %v696 = vmax.f32 %v661, 0.0
        %v697 = vmax.f32 %v664, 0.0
        %v730 = vrot.slane %v666, 2
        %v731 = vrot.slane %v666, 4
        %v732 = vrot.slane %v666, 6
        %v733 = vrot.slane %v667, 2
        %v734 = vrot.slane %v667, 4
        %v735 = vrot.slane %v667, 6
        %v736 = vrot.slane %v668, 2
        %v737 = vrot.slane %v668, 4
        %v738 = vrot.slane %v668, 6
        %v739 = vrot.slane %v669, 2
        %v740 = vrot.slane %v669, 4
        %v741 = vrot.slane %v669, 6
        %v742 = vrot.slane %v670, 2
        %v743 = vrot.slane %v670, 4
        %v744 = vrot.slane %v670, 6
        %v745 = vrot.slane %v671, 2
        %v746 = vrot.slane %v671, 4
        %v747 = vrot.slane %v671, 6
        %v748 = vrot.slane %v672, 2
        %v749 = vrot.slane %v672, 4
        %v750 = vrot.slane %v672, 6
        %v751 = vrot.slane %v673, 2
        %v752 = vrot.slane %v673, 4
        %v753 = vrot.slane %v673, 6
        %v754 = vrot.slane %v674, 2
        %v755 = vrot.slane %v674, 4
        %v756 = vrot.slane %v674, 6
        %v757 = vrot.slane %v675, 2
        %v758 = vrot.slane %v675, 4
        %v759 = vrot.slane %v675, 6
        %v760 = vrot.slane %v676, 2
        %v761 = vrot.slane %v676, 4
        %v762 = vrot.slane %v676, 6
        %v763 = vrot.slane %v677, 2
        %v764 = vrot.slane %v677, 4
        %v765 = vrot.slane %v677, 6
        %v766 = vrot.slane %v678, 2
        %v767 = vrot.slane %v678, 4
        %v768 = vrot.slane %v678, 6
        %v769 = vrot.slane %v679, 2
        %v770 = vrot.slane %v679, 4
        %v771 = vrot.slane %v679, 6
        %v772 = vrot.slane %v680, 2
        %v773 = vrot.slane %v680, 4
        %v774 = vrot.slane %v680, 6
        %v775 = vrot.slane %v681, 2
        %v776 = vrot.slane %v681, 4
        %v777 = vrot.slane %v681, 6
        %v778 = vrot.slane %v682, 2
        %v779 = vrot.slane %v682, 4
        %v780 = vrot.slane %v682, 6
        %v781 = vrot.slane %v683, 2
        %v782 = vrot.slane %v683, 4
        %v783 = vrot.slane %v683, 6
        %v784 = vrot.slane %v684, 2
        %v785 = vrot.slane %v684, 4
        %v786 = vrot.slane %v684, 6
        %v787 = vrot.slane %v685, 2
        %v788 = vrot.slane %v685, 4
        %v789 = vrot.slane %v685, 6
        %v790 = vrot.slane %v686, 2
        %v791 = vrot.slane %v686, 4
        %v792 = vrot.slane %v686, 6
        %v793 = vrot.slane %v687, 2
        %v794 = vrot.slane %v687, 4
        %v795 = vrot.slane %v687, 6
        %v796 = vrot.slane %v688, 2
        %v797 = vrot.slane %v688, 4
        %v798 = vrot.slane %v688, 6
        %v799 = vrot.slane %v689, 2
        %v800 = vrot.slane %v689, 4
        %v801 = vrot.slane %v689, 6
        %v802 = vrot.slane %v690, 2
        %v803 = vrot.slane %v690, 4
        %v804 = vrot.slane %v690, 6
        %v805 = vrot.slane %v691, 2
        %v806 = vrot.slane %v691, 4
        %v807 = vrot.slane %v691, 6
        %v808 = vrot.slane %v692, 2
        %v809 = vrot.slane %v692, 4
        %v810 = vrot.slane %v692, 6
        %v811 = vrot.slane %v693, 2
        %v812 = vrot.slane %v693, 4
        %v813 = vrot.slane %v693, 6
        %v814 = vrot.slane %v694, 2
        %v815 = vrot.slane %v694, 4
        %v816 = vrot.slane %v694, 6
        %v817 = vrot.slane %v695, 2
        %v818 = vrot.slane %v695, 4
        %v819 = vrot.slane %v695, 6
        %v820 = vrot.slane %v696, 2
        %v821 = vrot.slane %v696, 4
        %v822 = vrot.slane %v696, 6
        %v823 = vrot.slane %v697, 2
        %v824 = vrot.slane %v697, 4
        %v825 = vrot.slane %v697, 6
        %v922 = vsel %vm359, %v666, -inf
        %v923 = vsel %vm359, %v670, -inf
        %v924 = vmax.f32 %v922, %v923
        %v925 = vrot.slane %v924, 4
        %v926 = vmax.f32 %v924, %v925
        %v927 = vrot.slane %v926, 2
        %v928 = vmax.f32 %v926, %v927
        %v929 = vrot.slane %v928, 1
        %v930 = vmax.f32 %v928, %v929
        %v931 = vsel %vm359, %v730, -inf
        %v932 = vsel %vm359, %v742, -inf
        %v933 = vmax.f32 %v931, %v932
        %v934 = vrot.slane %v933, 4
        %v935 = vmax.f32 %v933, %v934
        %v936 = vrot.slane %v935, 2
        %v937 = vmax.f32 %v935, %v936
        %v938 = vrot.slane %v937, 1
        %v939 = vmax.f32 %v937, %v938
        %v940 = vsel %vm359, %v731, -inf
        %v941 = vsel %vm359, %v743, -inf
        %v942 = vmax.f32 %v940, %v941
        %v943 = vrot.slane %v942, 4
        %v944 = vmax.f32 %v942, %v943
        %v945 = vrot.slane %v944, 2
        %v946 = vmax.f32 %v944, %v945
        %v947 = vrot.slane %v946, 1
        %v948 = vmax.f32 %v946, %v947
        %v949 = vsel %vm359, %v732, -inf
        %v950 = vsel %vm359, %v744, -inf
        %v951 = vmax.f32 %v949, %v950
        %v952 = vrot.slane %v951, 4
        %v953 = vmax.f32 %v951, %v952
        %v954 = vrot.slane %v953, 2
        %v955 = vmax.f32 %v953, %v954
        %v956 = vrot.slane %v955, 1
        %v957 = vmax.f32 %v955, %v956
        %v958 = vsel %vm359, %v667, -inf
        %v959 = vsel %vm359, %v671, -inf
        %v960 = vmax.f32 %v958, %v959
        %v961 = vrot.slane %v960, 4
        %v962 = vmax.f32 %v960, %v961
        %v963 = vrot.slane %v962, 2
        %v964 = vmax.f32 %v962, %v963
        %v965 = vrot.slane %v964, 1
        %v966 = vmax.f32 %v964, %v965
        %v967 = vsel %vm359, %v733, -inf
        %v968 = vsel %vm359, %v745, -inf
        %v969 = vmax.f32 %v967, %v968
        %v970 = vrot.slane %v969, 4
        %v971 = vmax.f32 %v969, %v970
        %v972 = vrot.slane %v971, 2
        %v973 = vmax.f32 %v971, %v972
        %v974 = vrot.slane %v973, 1
        %v975 = vmax.f32 %v973, %v974
        %v976 = vsel %vm359, %v734, -inf
        %v977 = vsel %vm359, %v746, -inf
        %v978 = vmax.f32 %v976, %v977
        %v979 = vrot.slane %v978, 4
        %v980 = vmax.f32 %v978, %v979
        %v981 = vrot.slane %v980, 2
        %v982 = vmax.f32 %v980, %v981
        %v983 = vrot.slane %v982, 1
        %v984 = vmax.f32 %v982, %v983
        %v985 = vsel %vm359, %v735, -inf
        %v986 = vsel %vm359, %v747, -inf
        %v987 = vmax.f32 %v985, %v986
        %v988 = vrot.slane %v987, 4
        %v989 = vmax.f32 %v987, %v988
        %v990 = vrot.slane %v989, 2
        %v991 = vmax.f32 %v989, %v990
        %v992 = vrot.slane %v991, 1
        %v993 = vmax.f32 %v991, %v992
        %v994 = vsel %vm359, %v668, -inf
        %v995 = vsel %vm359, %v672, -inf
        %v996 = vmax.f32 %v994, %v995
        %v997 = vrot.slane %v996, 4
        %v998 = vmax.f32 %v996, %v997
        %v999 = vrot.slane %v998, 2
        %v1000 = vmax.f32 %v998, %v999
        %v1001 = vrot.slane %v1000, 1
        %v1002 = vmax.f32 %v1000, %v1001
        %v1003 = vsel %vm359, %v736, -inf
        %v1004 = vsel %vm359, %v748, -inf
        %v1005 = vmax.f32 %v1003, %v1004
        %v1006 = vrot.slane %v1005, 4
        %v1007 = vmax.f32 %v1005, %v1006
        %v1008 = vrot.slane %v1007, 2
        %v1009 = vmax.f32 %v1007, %v1008
        %v1010 = vrot.slane %v1009, 1
        %v1011 = vmax.f32 %v1009, %v1010
        %v1012 = vsel %vm359, %v737, -inf
        %v1013 = vsel %vm359, %v749, -inf
        %v1014 = vmax.f32 %v1012, %v1013
        %v1015 = vrot.slane %v1014, 4
        %v1016 = vmax.f32 %v1014, %v1015
        %v1017 = vrot.slane %v1016, 2
        %v1018 = vmax.f32 %v1016, %v1017
        %v1019 = vrot.slane %v1018, 1
        %v1020 = vmax.f32 %v1018, %v1019
        %v1021 = vsel %vm359, %v738, -inf
        %v1022 = vsel %vm359, %v750, -inf
        %v1023 = vmax.f32 %v1021, %v1022
        %v1024 = vrot.slane %v1023, 4
        %v1025 = vmax.f32 %v1023, %v1024
        %v1026 = vrot.slane %v1025, 2
        %v1027 = vmax.f32 %v1025, %v1026
        %v1028 = vrot.slane %v1027, 1
        %v1029 = vmax.f32 %v1027, %v1028
        %v1030 = vsel %vm359, %v669, -inf
        %v1031 = vsel %vm359, %v673, -inf
        %v1032 = vmax.f32 %v1030, %v1031
        %v1033 = vrot.slane %v1032, 4
        %v1034 = vmax.f32 %v1032, %v1033
        %v1035 = vrot.slane %v1034, 2
        %v1036 = vmax.f32 %v1034, %v1035
        %v1037 = vrot.slane %v1036, 1
        %v1038 = vmax.f32 %v1036, %v1037
        %v1039 = vsel %vm359, %v739, -inf
        %v1040 = vsel %vm359, %v751, -inf
        %v1041 = vmax.f32 %v1039, %v1040
        %v1042 = vrot.slane %v1041, 4
        %v1043 = vmax.f32 %v1041, %v1042
        %v1044 = vrot.slane %v1043, 2
        %v1045 = vmax.f32 %v1043, %v1044
        %v1046 = vrot.slane %v1045, 1
        %v1047 = vmax.f32 %v1045, %v1046
        %v1048 = vsel %vm359, %v740, -inf
        %v1049 = vsel %vm359, %v752, -inf
        %v1050 = vmax.f32 %v1048, %v1049
        %v1051 = vrot.slane %v1050, 4
        %v1052 = vmax.f32 %v1050, %v1051
        %v1053 = vrot.slane %v1052, 2
        %v1054 = vmax.f32 %v1052, %v1053
        %v1055 = vrot.slane %v1054, 1
        %v1056 = vmax.f32 %v1054, %v1055
        %v1057 = vsel %vm359, %v741, -inf
        %v1058 = vsel %vm359, %v753, -inf
        %v1059 = vmax.f32 %v1057, %v1058
        %v1060 = vrot.slane %v1059, 4
        %v1061 = vmax.f32 %v1059, %v1060
        %v1062 = vrot.slane %v1061, 2
        %v1063 = vmax.f32 %v1061, %v1062
        %v1064 = vrot.slane %v1063, 1
        %v1065 = vmax.f32 %v1063, %v1064
        %v1066 = vsel %vm359, %v674, -inf
        %v1067 = vsel %vm359, %v678, -inf
        %v1068 = vmax.f32 %v1066, %v1067
        %v1069 = vrot.slane %v1068, 4
        %v1070 = vmax.f32 %v1068, %v1069
        %v1071 = vrot.slane %v1070, 2
        %v1072 = vmax.f32 %v1070, %v1071
        %v1073 = vrot.slane %v1072, 1
        %v1074 = vmax.f32 %v1072, %v1073
        %v1075 = vsel %vm359, %v754, -inf
        %v1076 = vsel %vm359, %v766, -inf
        %v1077 = vmax.f32 %v1075, %v1076
        %v1078 = vrot.slane %v1077, 4
        %v1079 = vmax.f32 %v1077, %v1078
        %v1080 = vrot.slane %v1079, 2
        %v1081 = vmax.f32 %v1079, %v1080
        %v1082 = vrot.slane %v1081, 1
        %v1083 = vmax.f32 %v1081, %v1082
        %v1084 = vsel %vm359, %v755, -inf
        %v1085 = vsel %vm359, %v767, -inf
        %v1086 = vmax.f32 %v1084, %v1085
        %v1087 = vrot.slane %v1086, 4
        %v1088 = vmax.f32 %v1086, %v1087
        %v1089 = vrot.slane %v1088, 2
        %v1090 = vmax.f32 %v1088, %v1089
        %v1091 = vrot.slane %v1090, 1
        %v1092 = vmax.f32 %v1090, %v1091
        %v1093 = vsel %vm359, %v756, -inf
        %v1094 = vsel %vm359, %v768, -inf
        %v1095 = vmax.f32 %v1093, %v1094
        %v1096 = vrot.slane %v1095, 4
        %v1097 = vmax.f32 %v1095, %v1096
        %v1098 = vrot.slane %v1097, 2
        %v1099 = vmax.f32 %v1097, %v1098
        %v1100 = vrot.slane %v1099, 1
        %v1101 = vmax.f32 %v1099, %v1100
        %v1102 = vsel %vm359, %v675, -inf
        %v1103 = vsel %vm359, %v679, -inf
        %v1104 = vmax.f32 %v1102, %v1103
        %v1105 = vrot.slane %v1104, 4
        %v1106 = vmax.f32 %v1104, %v1105
        %v1107 = vrot.slane %v1106, 2
        %v1108 = vmax.f32 %v1106, %v1107
        %v1109 = vrot.slane %v1108, 1
        %v1110 = vmax.f32 %v1108, %v1109
        %v1111 = vsel %vm359, %v757, -inf
        %v1112 = vsel %vm359, %v769, -inf
        %v1113 = vmax.f32 %v1111, %v1112
        %v1114 = vrot.slane %v1113, 4
        %v1115 = vmax.f32 %v1113, %v1114
        %v1116 = vrot.slane %v1115, 2
        %v1117 = vmax.f32 %v1115, %v1116
        %v1118 = vrot.slane %v1117, 1
        %v1119 = vmax.f32 %v1117, %v1118
        %v1120 = vsel %vm359, %v758, -inf
        %v1121 = vsel %vm359, %v770, -inf
        %v1122 = vmax.f32 %v1120, %v1121
        %v1123 = vrot.slane %v1122, 4
        %v1124 = vmax.f32 %v1122, %v1123
        %v1125 = vrot.slane %v1124, 2
        %v1126 = vmax.f32 %v1124, %v1125
        %v1127 = vrot.slane %v1126, 1
        %v1128 = vmax.f32 %v1126, %v1127
        %v1129 = vsel %vm359, %v759, -inf
        %v1130 = vsel %vm359, %v771, -inf
        %v1131 = vmax.f32 %v1129, %v1130
        %v1132 = vrot.slane %v1131, 4
        %v1133 = vmax.f32 %v1131, %v1132
        %v1134 = vrot.slane %v1133, 2
        %v1135 = vmax.f32 %v1133, %v1134
        %v1136 = vrot.slane %v1135, 1
        %v1137 = vmax.f32 %v1135, %v1136
        %v1138 = vsel %vm359, %v676, -inf
        %v1139 = vsel %vm359, %v680, -inf
        %v1140 = vmax.f32 %v1138, %v1139
        %v1141 = vrot.slane %v1140, 4
        %v1142 = vmax.f32 %v1140, %v1141
        %v1143 = vrot.slane %v1142, 2
        %v1144 = vmax.f32 %v1142, %v1143
        %v1145 = vrot.slane %v1144, 1
        %v1146 = vmax.f32 %v1144, %v1145
        %v1147 = vsel %vm359, %v760, -inf
        %v1148 = vsel %vm359, %v772, -inf
        %v1149 = vmax.f32 %v1147, %v1148
        %v1150 = vrot.slane %v1149, 4
        %v1151 = vmax.f32 %v1149, %v1150
        %v1152 = vrot.slane %v1151, 2
        %v1153 = vmax.f32 %v1151, %v1152
        %v1154 = vrot.slane %v1153, 1
        %v1155 = vmax.f32 %v1153, %v1154
        %v1156 = vsel %vm359, %v761, -inf
        %v1157 = vsel %vm359, %v773, -inf
        %v1158 = vmax.f32 %v1156, %v1157
        %v1159 = vrot.slane %v1158, 4
        %v1160 = vmax.f32 %v1158, %v1159
        %v1161 = vrot.slane %v1160, 2
        %v1162 = vmax.f32 %v1160, %v1161
        %v1163 = vrot.slane %v1162, 1
        %v1164 = vmax.f32 %v1162, %v1163
        %v1165 = vsel %vm359, %v762, -inf
        %v1166 = vsel %vm359, %v774, -inf
        %v1167 = vmax.f32 %v1165, %v1166
        %v1168 = vrot.slane %v1167, 4
        %v1169 = vmax.f32 %v1167, %v1168
        %v1170 = vrot.slane %v1169, 2
        %v1171 = vmax.f32 %v1169, %v1170
        %v1172 = vrot.slane %v1171, 1
        %v1173 = vmax.f32 %v1171, %v1172
        %v1174 = vsel %vm359, %v677, -inf
        %v1175 = vsel %vm359, %v681, -inf
        %v1176 = vmax.f32 %v1174, %v1175
        %v1177 = vrot.slane %v1176, 4
        %v1178 = vmax.f32 %v1176, %v1177
        %v1179 = vrot.slane %v1178, 2
        %v1180 = vmax.f32 %v1178, %v1179
        %v1181 = vrot.slane %v1180, 1
        %v1182 = vmax.f32 %v1180, %v1181
        %v1183 = vsel %vm359, %v763, -inf
        %v1184 = vsel %vm359, %v775, -inf
        %v1185 = vmax.f32 %v1183, %v1184
        %v1186 = vrot.slane %v1185, 4
        %v1187 = vmax.f32 %v1185, %v1186
        %v1188 = vrot.slane %v1187, 2
        %v1189 = vmax.f32 %v1187, %v1188
        %v1190 = vrot.slane %v1189, 1
        %v1191 = vmax.f32 %v1189, %v1190
        %v1192 = vsel %vm359, %v764, -inf
        %v1193 = vsel %vm359, %v776, -inf
        %v1194 = vmax.f32 %v1192, %v1193
        %v1195 = vrot.slane %v1194, 4
        %v1196 = vmax.f32 %v1194, %v1195
        %v1197 = vrot.slane %v1196, 2
        %v1198 = vmax.f32 %v1196, %v1197
        %v1199 = vrot.slane %v1198, 1
        %v1200 = vmax.f32 %v1198, %v1199
        %v1201 = vsel %vm359, %v765, -inf
        %v1202 = vsel %vm359, %v777, -inf
        %v1203 = vmax.f32 %v1201, %v1202
        %v1204 = vrot.slane %v1203, 4
        %v1205 = vmax.f32 %v1203, %v1204
        %v1206 = vrot.slane %v1205, 2
        %v1207 = vmax.f32 %v1205, %v1206
        %v1208 = vrot.slane %v1207, 1
        %v1209 = vmax.f32 %v1207, %v1208
        %v1210 = vsel %vm359, %v682, -inf
        %v1211 = vsel %vm359, %v686, -inf
        %v1212 = vmax.f32 %v1210, %v1211
        %v1213 = vrot.slane %v1212, 4
        %v1214 = vmax.f32 %v1212, %v1213
        %v1215 = vrot.slane %v1214, 2
        %v1216 = vmax.f32 %v1214, %v1215
        %v1217 = vrot.slane %v1216, 1
        %v1218 = vmax.f32 %v1216, %v1217
        %v1219 = vsel %vm359, %v778, -inf
        %v1220 = vsel %vm359, %v790, -inf
        %v1221 = vmax.f32 %v1219, %v1220
        %v1222 = vrot.slane %v1221, 4
        %v1223 = vmax.f32 %v1221, %v1222
        %v1224 = vrot.slane %v1223, 2
        %v1225 = vmax.f32 %v1223, %v1224
        %v1226 = vrot.slane %v1225, 1
        %v1227 = vmax.f32 %v1225, %v1226
        %v1228 = vsel %vm359, %v779, -inf
        %v1229 = vsel %vm359, %v791, -inf
        %v1230 = vmax.f32 %v1228, %v1229
        %v1231 = vrot.slane %v1230, 4
        %v1232 = vmax.f32 %v1230, %v1231
        %v1233 = vrot.slane %v1232, 2
        %v1234 = vmax.f32 %v1232, %v1233
        %v1235 = vrot.slane %v1234, 1
        %v1236 = vmax.f32 %v1234, %v1235
        %v1237 = vsel %vm359, %v780, -inf
        %v1238 = vsel %vm359, %v792, -inf
        %v1239 = vmax.f32 %v1237, %v1238
        %v1240 = vrot.slane %v1239, 4
        %v1241 = vmax.f32 %v1239, %v1240
        %v1242 = vrot.slane %v1241, 2
        %v1243 = vmax.f32 %v1241, %v1242
        %v1244 = vrot.slane %v1243, 1
        %v1245 = vmax.f32 %v1243, %v1244
        %v1246 = vsel %vm359, %v683, -inf
        %v1247 = vsel %vm359, %v687, -inf
        %v1248 = vmax.f32 %v1246, %v1247
        %v1249 = vrot.slane %v1248, 4
        %v1250 = vmax.f32 %v1248, %v1249
        %v1251 = vrot.slane %v1250, 2
        %v1252 = vmax.f32 %v1250, %v1251
        %v1253 = vrot.slane %v1252, 1
        %v1254 = vmax.f32 %v1252, %v1253
        %v1255 = vsel %vm359, %v781, -inf
        %v1256 = vsel %vm359, %v793, -inf
        %v1257 = vmax.f32 %v1255, %v1256
        %v1258 = vrot.slane %v1257, 4
        %v1259 = vmax.f32 %v1257, %v1258
        %v1260 = vrot.slane %v1259, 2
        %v1261 = vmax.f32 %v1259, %v1260
        %v1262 = vrot.slane %v1261, 1
        %v1263 = vmax.f32 %v1261, %v1262
        %v1264 = vsel %vm359, %v782, -inf
        %v1265 = vsel %vm359, %v794, -inf
        %v1266 = vmax.f32 %v1264, %v1265
        %v1267 = vrot.slane %v1266, 4
        %v1268 = vmax.f32 %v1266, %v1267
        %v1269 = vrot.slane %v1268, 2
        %v1270 = vmax.f32 %v1268, %v1269
        %v1271 = vrot.slane %v1270, 1
        %v1272 = vmax.f32 %v1270, %v1271
        %v1273 = vsel %vm359, %v783, -inf
        %v1274 = vsel %vm359, %v795, -inf
        %v1275 = vmax.f32 %v1273, %v1274
        %v1276 = vrot.slane %v1275, 4
        %v1277 = vmax.f32 %v1275, %v1276
        %v1278 = vrot.slane %v1277, 2
        %v1279 = vmax.f32 %v1277, %v1278
        %v1280 = vrot.slane %v1279, 1
        %v1281 = vmax.f32 %v1279, %v1280
        %v1282 = vsel %vm359, %v684, -inf
        %v1283 = vsel %vm359, %v688, -inf
        %v1284 = vmax.f32 %v1282, %v1283
        %v1285 = vrot.slane %v1284, 4
        %v1286 = vmax.f32 %v1284, %v1285
        %v1287 = vrot.slane %v1286, 2
        %v1288 = vmax.f32 %v1286, %v1287
        %v1289 = vrot.slane %v1288, 1
        %v1290 = vmax.f32 %v1288, %v1289
        %v1291 = vsel %vm359, %v784, -inf
        %v1292 = vsel %vm359, %v796, -inf
        %v1293 = vmax.f32 %v1291, %v1292
        %v1294 = vrot.slane %v1293, 4
        %v1295 = vmax.f32 %v1293, %v1294
        %v1296 = vrot.slane %v1295, 2
        %v1297 = vmax.f32 %v1295, %v1296
        %v1298 = vrot.slane %v1297, 1
        %v1299 = vmax.f32 %v1297, %v1298
        %v1300 = vsel %vm359, %v785, -inf
        %v1301 = vsel %vm359, %v797, -inf
        %v1302 = vmax.f32 %v1300, %v1301
        %v1303 = vrot.slane %v1302, 4
        %v1304 = vmax.f32 %v1302, %v1303
        %v1305 = vrot.slane %v1304, 2
        %v1306 = vmax.f32 %v1304, %v1305
        %v1307 = vrot.slane %v1306, 1
        %v1308 = vmax.f32 %v1306, %v1307
        %v1309 = vsel %vm359, %v786, -inf
        %v1310 = vsel %vm359, %v798, -inf
        %v1311 = vmax.f32 %v1309, %v1310
        %v1312 = vrot.slane %v1311, 4
        %v1313 = vmax.f32 %v1311, %v1312
        %v1314 = vrot.slane %v1313, 2
        %v1315 = vmax.f32 %v1313, %v1314
        %v1316 = vrot.slane %v1315, 1
        %v1317 = vmax.f32 %v1315, %v1316
        %v1318 = vsel %vm359, %v685, -inf
        %v1319 = vsel %vm359, %v689, -inf
        %v1320 = vmax.f32 %v1318, %v1319
        %v1321 = vrot.slane %v1320, 4
        %v1322 = vmax.f32 %v1320, %v1321
        %v1323 = vrot.slane %v1322, 2
        %v1324 = vmax.f32 %v1322, %v1323
        %v1325 = vrot.slane %v1324, 1
        %v1326 = vmax.f32 %v1324, %v1325
        %v1327 = vsel %vm359, %v787, -inf
        %v1328 = vsel %vm359, %v799, -inf
        %v1329 = vmax.f32 %v1327, %v1328
        %v1330 = vrot.slane %v1329, 4
        %v1331 = vmax.f32 %v1329, %v1330
        %v1332 = vrot.slane %v1331, 2
        %v1333 = vmax.f32 %v1331, %v1332
        %v1334 = vrot.slane %v1333, 1
        %v1335 = vmax.f32 %v1333, %v1334
        %v1336 = vsel %vm359, %v788, -inf
        %v1337 = vsel %vm359, %v800, -inf
        %v1338 = vmax.f32 %v1336, %v1337
        %v1339 = vrot.slane %v1338, 4
        %v1340 = vmax.f32 %v1338, %v1339
        %v1341 = vrot.slane %v1340, 2
        %v1342 = vmax.f32 %v1340, %v1341
        %v1343 = vrot.slane %v1342, 1
        %v1344 = vmax.f32 %v1342, %v1343
        %v1345 = vsel %vm359, %v789, -inf
        %v1346 = vsel %vm359, %v801, -inf
        %v1347 = vmax.f32 %v1345, %v1346
        %v1348 = vrot.slane %v1347, 4
        %v1349 = vmax.f32 %v1347, %v1348
        %v1350 = vrot.slane %v1349, 2
        %v1351 = vmax.f32 %v1349, %v1350
        %v1352 = vrot.slane %v1351, 1
        %v1353 = vmax.f32 %v1351, %v1352
        %v1354 = vsel %vm359, %v690, -inf
        %v1355 = vsel %vm359, %v694, -inf
        %v1356 = vmax.f32 %v1354, %v1355
        %v1357 = vrot.slane %v1356, 4
        %v1358 = vmax.f32 %v1356, %v1357
        %v1359 = vrot.slane %v1358, 2
        %v1360 = vmax.f32 %v1358, %v1359
        %v1361 = vrot.slane %v1360, 1
        %v1362 = vmax.f32 %v1360, %v1361
        %v1363 = vsel %vm359, %v802, -inf
        %v1364 = vsel %vm359, %v814, -inf
        %v1365 = vmax.f32 %v1363, %v1364
        %v1366 = vrot.slane %v1365, 4
        %v1367 = vmax.f32 %v1365, %v1366
        %v1368 = vrot.slane %v1367, 2
        %v1369 = vmax.f32 %v1367, %v1368
        %v1370 = vrot.slane %v1369, 1
        %v1371 = vmax.f32 %v1369, %v1370
        %v1372 = vsel %vm359, %v803, -inf
        %v1373 = vsel %vm359, %v815, -inf
        %v1374 = vmax.f32 %v1372, %v1373
        %v1375 = vrot.slane %v1374, 4
        %v1376 = vmax.f32 %v1374, %v1375
        %v1377 = vrot.slane %v1376, 2
        %v1378 = vmax.f32 %v1376, %v1377
        %v1379 = vrot.slane %v1378, 1
        %v1380 = vmax.f32 %v1378, %v1379
        %v1381 = vsel %vm359, %v804, -inf
        %v1382 = vsel %vm359, %v816, -inf
        %v1383 = vmax.f32 %v1381, %v1382
        %v1384 = vrot.slane %v1383, 4
        %v1385 = vmax.f32 %v1383, %v1384
        %v1386 = vrot.slane %v1385, 2
        %v1387 = vmax.f32 %v1385, %v1386
        %v1388 = vrot.slane %v1387, 1
        %v1389 = vmax.f32 %v1387, %v1388
        %v1390 = vsel %vm359, %v691, -inf
        %v1391 = vsel %vm359, %v695, -inf
        %v1392 = vmax.f32 %v1390, %v1391
        %v1393 = vrot.slane %v1392, 4
        %v1394 = vmax.f32 %v1392, %v1393
        %v1395 = vrot.slane %v1394, 2
        %v1396 = vmax.f32 %v1394, %v1395
        %v1397 = vrot.slane %v1396, 1
        %v1398 = vmax.f32 %v1396, %v1397
        %v1399 = vsel %vm359, %v805, -inf
        %v1400 = vsel %vm359, %v817, -inf
        %v1401 = vmax.f32 %v1399, %v1400
        %v1402 = vrot.slane %v1401, 4
        %v1403 = vmax.f32 %v1401, %v1402
        %v1404 = vrot.slane %v1403, 2
        %v1405 = vmax.f32 %v1403, %v1404
        %v1406 = vrot.slane %v1405, 1
        %v1407 = vmax.f32 %v1405, %v1406
        %v1408 = vsel %vm359, %v806, -inf
        %v1409 = vsel %vm359, %v818, -inf
        %v1410 = vmax.f32 %v1408, %v1409
        %v1411 = vrot.slane %v1410, 4
        %v1412 = vmax.f32 %v1410, %v1411
        %v1413 = vrot.slane %v1412, 2
        %v1414 = vmax.f32 %v1412, %v1413
        %v1415 = vrot.slane %v1414, 1
        %v1416 = vmax.f32 %v1414, %v1415
        %v1417 = vsel %vm359, %v807, -inf
        %v1418 = vsel %vm359, %v819, -inf
        %v1419 = vmax.f32 %v1417, %v1418
        %v1420 = vrot.slane %v1419, 4
        %v1421 = vmax.f32 %v1419, %v1420
        %v1422 = vrot.slane %v1421, 2
        %v1423 = vmax.f32 %v1421, %v1422
        %v1424 = vrot.slane %v1423, 1
        %v1425 = vmax.f32 %v1423, %v1424
        %v1426 = vsel %vm359, %v692, -inf
        %v1427 = vsel %vm359, %v696, -inf
        %v1428 = vmax.f32 %v1426, %v1427
        %v1429 = vrot.slane %v1428, 4
        %v1430 = vmax.f32 %v1428, %v1429
        %v1431 = vrot.slane %v1430, 2
        %v1432 = vmax.f32 %v1430, %v1431
        %v1433 = vrot.slane %v1432, 1
        %v1434 = vmax.f32 %v1432, %v1433
        %v1435 = vsel %vm359, %v808, -inf
        %v1436 = vsel %vm359, %v820, -inf
        %v1437 = vmax.f32 %v1435, %v1436
        %v1438 = vrot.slane %v1437, 4
        %v1439 = vmax.f32 %v1437, %v1438
        %v1440 = vrot.slane %v1439, 2
        %v1441 = vmax.f32 %v1439, %v1440
        %v1442 = vrot.slane %v1441, 1
        %v1443 = vmax.f32 %v1441, %v1442
        %v1444 = vsel %vm359, %v809, -inf
        %v1445 = vsel %vm359, %v821, -inf
        %v1446 = vmax.f32 %v1444, %v1445
        %v1447 = vrot.slane %v1446, 4
        %v1448 = vmax.f32 %v1446, %v1447
        %v1449 = vrot.slane %v1448, 2
        %v1450 = vmax.f32 %v1448, %v1449
        %v1451 = vrot.slane %v1450, 1
        %v1452 = vmax.f32 %v1450, %v1451
        %v1453 = vsel %vm359, %v810, -inf
        %v1454 = vsel %vm359, %v822, -inf
        %v1455 = vmax.f32 %v1453, %v1454
        %v1456 = vrot.slane %v1455, 4
        %v1457 = vmax.f32 %v1455, %v1456
        %v1458 = vrot.slane %v1457, 2
        %v1459 = vmax.f32 %v1457, %v1458
        %v1460 = vrot.slane %v1459, 1
        %v1461 = vmax.f32 %v1459, %v1460
        %v1462 = vsel %vm359, %v693, -inf
        %v1463 = vsel %vm359, %v697, -inf
        %v1464 = vmax.f32 %v1462, %v1463
        %v1465 = vrot.slane %v1464, 4
        %v1466 = vmax.f32 %v1464, %v1465
        %v1467 = vrot.slane %v1466, 2
        %v1468 = vmax.f32 %v1466, %v1467
        %v1469 = vrot.slane %v1468, 1
        %v1470 = vmax.f32 %v1468, %v1469
        %v1471 = vsel %vm359, %v811, -inf
        %v1472 = vsel %vm359, %v823, -inf
        %v1473 = vmax.f32 %v1471, %v1472
        %v1474 = vrot.slane %v1473, 4
        %v1475 = vmax.f32 %v1473, %v1474
        %v1476 = vrot.slane %v1475, 2
        %v1477 = vmax.f32 %v1475, %v1476
        %v1478 = vrot.slane %v1477, 1
        %v1479 = vmax.f32 %v1477, %v1478
        %v1480 = vsel %vm359, %v812, -inf
        %v1481 = vsel %vm359, %v824, -inf
        %v1482 = vmax.f32 %v1480, %v1481
        %v1483 = vrot.slane %v1482, 4
        %v1484 = vmax.f32 %v1482, %v1483
        %v1485 = vrot.slane %v1484, 2
        %v1486 = vmax.f32 %v1484, %v1485
        %v1487 = vrot.slane %v1486, 1
        %v1488 = vmax.f32 %v1486, %v1487
        %v1489 = vsel %vm359, %v813, -inf
        %v1490 = vsel %vm359, %v825, -inf
        %v1491 = vmax.f32 %v1489, %v1490
        %v1492 = vrot.slane %v1491, 4
        %v1493 = vmax.f32 %v1491, %v1492
        %v1494 = vrot.slane %v1493, 2
        %v1495 = vmax.f32 %v1493, %v1494
        %v1496 = vrot.slane %v1495, 1
        %v1497 = vmax.f32 %v1495, %v1496
        %vm1562 = vcmask 1041409
        %v1563 = vsel %vm1562, %v939, %v930
        %vm1564 = vcmask 1042434
        %v1565 = vsel %vm1564, %v948, %v1563
        %vm1566 = vcmask 1043459
        %v1567 = vsel %vm1566, %v957, %v1565
        %vm1568 = vcmask 1044484
        %v1569 = vsel %vm1568, %v966, %v1567
        %vm1570 = vcmask 1045509
        %v1571 = vsel %vm1570, %v975, %v1569
        %vm1572 = vcmask 1046534
        %v1573 = vsel %vm1572, %v984, %v1571
        %vm1574 = vcmask 1047559
        %v1575 = vsel %vm1574, %v993, %v1573
        %v1576 = vsel %vm1562, %v1011, %v1002
        %v1577 = vsel %vm1564, %v1020, %v1576
        %v1578 = vsel %vm1566, %v1029, %v1577
        %v1579 = vsel %vm1568, %v1038, %v1578
        %v1580 = vsel %vm1570, %v1047, %v1579
        %v1581 = vsel %vm1572, %v1056, %v1580
        %v1582 = vsel %vm1574, %v1065, %v1581
        %v1583 = vsel %vm1562, %v1083, %v1074
        %v1584 = vsel %vm1564, %v1092, %v1583
        %v1585 = vsel %vm1566, %v1101, %v1584
        %v1586 = vsel %vm1568, %v1110, %v1585
        %v1587 = vsel %vm1570, %v1119, %v1586
        %v1588 = vsel %vm1572, %v1128, %v1587
        %v1589 = vsel %vm1574, %v1137, %v1588
        %v1590 = vsel %vm1562, %v1155, %v1146
        %v1591 = vsel %vm1564, %v1164, %v1590
        %v1592 = vsel %vm1566, %v1173, %v1591
        %v1593 = vsel %vm1568, %v1182, %v1592
        %v1594 = vsel %vm1570, %v1191, %v1593
        %v1595 = vsel %vm1572, %v1200, %v1594
        %v1596 = vsel %vm1574, %v1209, %v1595
        %v1597 = vsel %vm1562, %v1227, %v1218
        %v1598 = vsel %vm1564, %v1236, %v1597
        %v1599 = vsel %vm1566, %v1245, %v1598
        %v1600 = vsel %vm1568, %v1254, %v1599
        %v1601 = vsel %vm1570, %v1263, %v1600
        %v1602 = vsel %vm1572, %v1272, %v1601
        %v1603 = vsel %vm1574, %v1281, %v1602
        %v1604 = vsel %vm1562, %v1299, %v1290
        %v1605 = vsel %vm1564, %v1308, %v1604
        %v1606 = vsel %vm1566, %v1317, %v1605
        %v1607 = vsel %vm1568, %v1326, %v1606
        %v1608 = vsel %vm1570, %v1335, %v1607
        %v1609 = vsel %vm1572, %v1344, %v1608
        %v1610 = vsel %vm1574, %v1353, %v1609
        %v1611 = vsel %vm1562, %v1371, %v1362
        %v1612 = vsel %vm1564, %v1380, %v1611
        %v1613 = vsel %vm1566, %v1389, %v1612
        %v1614 = vsel %vm1568, %v1398, %v1613
        %v1615 = vsel %vm1570, %v1407, %v1614
        %v1616 = vsel %vm1572, %v1416, %v1615
        %v1617 = vsel %vm1574, %v1425, %v1616
        %v1618 = vsel %vm1562, %v1443, %v1434
        %v1619 = vsel %vm1564, %v1452, %v1618
        %v1620 = vsel %vm1566, %v1461, %v1619
        %v1621 = vsel %vm1568, %v1470, %v1620
        %v1622 = vsel %vm1570, %v1479, %v1621
        %v1623 = vsel %vm1572, %v1488, %v1622
        %v1624 = vsel %vm1574, %v1497, %v1623
        %s1633 = scalar_lea.vmem [#allocation2], 24
        %1634 = vst.msk [vmem:[%s1633 + $0x1] sm:$0xff] %vm356, %v1575
        %1635 = vst.msk [vmem:[%s1633 + $0x9] sm:$0xff] %vm356, %v1582
        %1636 = vst.msk [vmem:[%s1633 + $0x19] sm:$0xff] %vm356, %v1589
        %1637 = vst.msk [vmem:[%s1633 + $0x21] sm:$0xff] %vm356, %v1596
        %1638 = vst.msk [vmem:[%s1633 + $0x31] sm:$0xff] %vm356, %v1603
        %1639 = vst.msk [vmem:[%s1633 + $0x39] sm:$0xff] %vm356, %v1610
        %1640 = vst.msk [vmem:[%s1633 + $0x49] sm:$0xff] %vm356, %v1617
        %1641 = vst.msk [vmem:[%s1633 + $0x51] sm:$0xff] %vm356, %v1624
        %v1642 = vld [vmem:[%s350 + $0x100] sm:$0xff]
        %v1643 = vld [vmem:[%s350 + $0x108] sm:$0xff]
        %v1644 = vld [vmem:[%s350 + $0x110] sm:$0xff]
        %v1645 = vld [vmem:[%s350 + $0x118] sm:$0xff]
        %v1646 = vld [vmem:[%s350 + $0x120] sm:$0xff]
        %v1647 = vld [vmem:[%s350 + $0x128] sm:$0xff]
        %v1648 = vld [vmem:[%s350 + $0x130] sm:$0xff]
        %v1649 = vld [vmem:[%s350 + $0x138] sm:$0xff]
        %v1650 = vld [vmem:[%s350 + $0x140] sm:$0xff]
        %v1651 = vld [vmem:[%s350 + $0x148] sm:$0xff]
        %v1652 = vld [vmem:[%s350 + $0x150] sm:$0xff]
        %v1653 = vld [vmem:[%s350 + $0x158] sm:$0xff]
        %v1654 = vld [vmem:[%s350 + $0x160] sm:$0xff]
        %v1655 = vld [vmem:[%s350 + $0x168] sm:$0xff]
        %v1656 = vld [vmem:[%s350 + $0x170] sm:$0xff]
        %v1657 = vld [vmem:[%s350 + $0x178] sm:$0xff]
        %v1658 = vld [vmem:[%s350 + $0x180] sm:$0xff]
        %v1659 = vld [vmem:[%s350 + $0x188] sm:$0xff]
        %v1660 = vld [vmem:[%s350 + $0x190] sm:$0xff]
        %v1661 = vld [vmem:[%s350 + $0x198] sm:$0xff]
        %v1662 = vld [vmem:[%s350 + $0x1a0] sm:$0xff]
        %v1663 = vld [vmem:[%s350 + $0x1a8] sm:$0xff]
        %v1664 = vld [vmem:[%s350 + $0x1b0] sm:$0xff]
        %v1665 = vld [vmem:[%s350 + $0x1b8] sm:$0xff]
        %v1666 = vld [vmem:[%s350 + $0x1c0] sm:$0xff]
        %v1667 = vld [vmem:[%s350 + $0x1c8] sm:$0xff]
        %v1668 = vld [vmem:[%s350 + $0x1d0] sm:$0xff]
        %v1669 = vld [vmem:[%s350 + $0x1d8] sm:$0xff]
        %v1670 = vld [vmem:[%s350 + $0x1e0] sm:$0xff]
        %v1671 = vld [vmem:[%s350 + $0x1e8] sm:$0xff]
        %v1672 = vld [vmem:[%s350 + $0x1f0] sm:$0xff]
        %v1673 = vld [vmem:[%s350 + $0x1f8] sm:$0xff]
        %v1674 = vld [vmem:[#allocation4] sm:$0xff]
        %v1675 = vld [vmem:[#allocation4 + $0x8] sm:$0xff]
        %v1676 = vld [vmem:[#allocation4 + $0x10] sm:$0xff]
        %v1677 = vld [vmem:[#allocation4 + $0x18] sm:$0x7]
        %v1678 = vld [vmem:[#allocation6] sm:$0x1]
        %v1680 = vperm.slane %v1678, 0
        %v1683 = vsel %vm452, %v1642, 0
        %v1686 = vsel %vm452, %v1643, 0
        %v1689 = vsel %vm452, %v1644, 0
        %v1692 = vsel %vm452, %v1645, 0
        %v1695 = vsel %vm452, %v1646, 0
        %v1698 = vsel %vm452, %v1647, 0
        %v1701 = vsel %vm452, %v1648, 0
        %v1704 = vsel %vm452, %v1649, 0
        %v1707 = vsel %vm452, %v1650, 0
        %v1710 = vsel %vm452, %v1651, 0
        %v1713 = vsel %vm452, %v1652, 0
        %v1716 = vsel %vm452, %v1653, 0
        %v1719 = vsel %vm452, %v1654, 0
        %v1722 = vsel %vm452, %v1655, 0
        %v1725 = vsel %vm452, %v1656, 0
        %v1728 = vsel %vm452, %v1657, 0
        %v1731 = vsel %vm452, %v1658, 0
        %v1734 = vsel %vm452, %v1659, 0
        %v1737 = vsel %vm452, %v1660, 0
        %v1740 = vsel %vm452, %v1661, 0
        %v1743 = vsel %vm452, %v1662, 0
        %v1746 = vsel %vm452, %v1663, 0
        %v1749 = vsel %vm452, %v1664, 0
        %v1752 = vsel %vm452, %v1665, 0
        %v1755 = vsel %vm452, %v1666, 0
        %v1758 = vsel %vm452, %v1667, 0
        %v1761 = vsel %vm452, %v1668, 0
        %v1764 = vsel %vm452, %v1669, 0
        %v1767 = vsel %vm452, %v1670, 0
        %v1770 = vsel %vm452, %v1671, 0
        %v1773 = vsel %vm452, %v1672, 0
        %v1776 = vsel %vm452, %v1673, 0
        %v1779 = vsel %vm549, %v1677, 0
        %1781 = vmatpush.msra.mxu0 0.0
        %1782 = vmatpush.msra.mxu0 0.0
        %1783 = vmatpush.msra.mxu0 0.0
        %1784 = vmatpush.msra.mxu0 0.0
        %1785 = vmatpush.msra.mxu0 0.0
        %1786 = vmatpush.msra.mxu0 0.0
        %1787 = vmatpush.msra.mxu0 0.0
        %1788 = vmatpush.msra.mxu0 0.0
        %1789 = vmatpush.msra.mxu0 0.0
        %1790 = vmatpush.msra.mxu0 0.0
        %1791 = vmatpush.msra.mxu0 0.0
        %1792 = vmatpush.msra.mxu0 0.0
        %1793 = vmatpush.msra.mxu0 %v1779
        %1794 = vmatpush.msra.mxu0 %v1676
        %1795 = vmatpush.msra.mxu0 %v1675
        %1796 = vmatpush.msra.mxu0 %v1674
        %1797 = vmatmul.f32.gmra.mxu0 %v1683
        %v1798 = vpop.f32.mrf.mxu0
        %v1799 = vadd.f32 %v1680, %v1798
        %1800 = vmatmul.f32.gmra.mxu0 %v1686
        %v1801 = vpop.f32.mrf.mxu0
        %v1802 = vadd.f32 %v1680, %v1801
        %1803 = vmatmul.f32.gmra.mxu0 %v1689
        %v1804 = vpop.f32.mrf.mxu0
        %v1805 = vadd.f32 %v1680, %v1804
        %1806 = vmatmul.f32.gmra.mxu0 %v1692
        %v1807 = vpop.f32.mrf.mxu0
        %v1808 = vadd.f32 %v1680, %v1807
        %1809 = vmatmul.f32.gmra.mxu0 %v1695
        %v1810 = vpop.f32.mrf.mxu0
        %v1811 = vadd.f32 %v1680, %v1810
        %1812 = vmatmul.f32.gmra.mxu0 %v1698
        %v1813 = vpop.f32.mrf.mxu0
        %v1814 = vadd.f32 %v1680, %v1813
        %1815 = vmatmul.f32.gmra.mxu0 %v1701
        %v1816 = vpop.f32.mrf.mxu0
        %v1817 = vadd.f32 %v1680, %v1816
        %1818 = vmatmul.f32.gmra.mxu0 %v1704
        %v1819 = vpop.f32.mrf.mxu0
        %v1820 = vadd.f32 %v1680, %v1819
        %1821 = vmatmul.f32.gmra.mxu0 %v1707
        %v1822 = vpop.f32.mrf.mxu0
        %v1823 = vadd.f32 %v1680, %v1822
        %1824 = vmatmul.f32.gmra.mxu0 %v1710
        %v1825 = vpop.f32.mrf.mxu0
        %v1826 = vadd.f32 %v1680, %v1825
        %1827 = vmatmul.f32.gmra.mxu0 %v1713
        %v1828 = vpop.f32.mrf.mxu0
        %v1829 = vadd.f32 %v1680, %v1828
        %1830 = vmatmul.f32.gmra.mxu0 %v1716
        %v1831 = vpop.f32.mrf.mxu0
        %v1832 = vadd.f32 %v1680, %v1831
        %1833 = vmatmul.f32.gmra.mxu0 %v1719
        %v1834 = vpop.f32.mrf.mxu0
        %v1835 = vadd.f32 %v1680, %v1834
        %1836 = vmatmul.f32.gmra.mxu0 %v1722
        %v1837 = vpop.f32.mrf.mxu0
        %v1838 = vadd.f32 %v1680, %v1837
        %1839 = vmatmul.f32.gmra.mxu0 %v1725
        %v1840 = vpop.f32.mrf.mxu0
        %v1841 = vadd.f32 %v1680, %v1840
        %1842 = vmatmul.f32.gmra.mxu0 %v1728
        %v1843 = vpop.f32.mrf.mxu0
        %v1844 = vadd.f32 %v1680, %v1843
        %1845 = vmatmul.f32.gmra.mxu0 %v1731
        %v1846 = vpop.f32.mrf.mxu0
        %v1847 = vadd.f32 %v1680, %v1846
        %1848 = vmatmul.f32.gmra.mxu0 %v1734
        %v1849 = vpop.f32.mrf.mxu0
        %v1850 = vadd.f32 %v1680, %v1849
        %1851 = vmatmul.f32.gmra.mxu0 %v1737
        %v1852 = vpop.f32.mrf.mxu0
        %v1853 = vadd.f32 %v1680, %v1852
        %1854 = vmatmul.f32.gmra.mxu0 %v1740
        %v1855 = vpop.f32.mrf.mxu0
        %v1856 = vadd.f32 %v1680, %v1855
        %1857 = vmatmul.f32.gmra.mxu0 %v1743
        %v1858 = vpop.f32.mrf.mxu0
        %v1859 = vadd.f32 %v1680, %v1858
        %1860 = vmatmul.f32.gmra.mxu0 %v1746
        %v1861 = vpop.f32.mrf.mxu0
        %v1862 = vadd.f32 %v1680, %v1861
        %1863 = vmatmul.f32.gmra.mxu0 %v1749
        %v1864 = vpop.f32.mrf.mxu0
        %v1865 = vadd.f32 %v1680, %v1864
        %1866 = vmatmul.f32.gmra.mxu0 %v1752
        %v1867 = vpop.f32.mrf.mxu0
        %v1868 = vadd.f32 %v1680, %v1867
        %1869 = vmatmul.f32.gmra.mxu0 %v1755
        %v1870 = vpop.f32.mrf.mxu0
        %v1871 = vadd.f32 %v1680, %v1870
        %1872 = vmatmul.f32.gmra.mxu0 %v1758
        %v1873 = vpop.f32.mrf.mxu0
        %v1874 = vadd.f32 %v1680, %v1873
        %1875 = vmatmul.f32.gmra.mxu0 %v1761
        %v1876 = vpop.f32.mrf.mxu0
        %v1877 = vadd.f32 %v1680, %v1876
        %1878 = vmatmul.f32.gmra.mxu0 %v1764
        %v1879 = vpop.f32.mrf.mxu0
        %v1880 = vadd.f32 %v1680, %v1879
        %1881 = vmatmul.f32.gmra.mxu0 %v1767
        %v1882 = vpop.f32.mrf.mxu0
        %v1883 = vadd.f32 %v1680, %v1882
        %1884 = vmatmul.f32.gmra.mxu0 %v1770
        %v1885 = vpop.f32.mrf.mxu0
        %v1886 = vadd.f32 %v1680, %v1885
        %1887 = vmatmul.f32.gmra.mxu0 %v1773
        %v1888 = vpop.f32.mrf.mxu0
        %v1889 = vadd.f32 %v1680, %v1888
        %1890 = vmatmul.f32.gmra.mxu0 %v1776
        %v1891 = vpop.f32.mrf.mxu0
        %v1892 = vadd.f32 %v1680, %v1891
        %1893 = vdwg.mxu0
        %v1894 = vmax.f32 %v1799, 0.0
        %v1895 = vmax.f32 %v1802, 0.0
        %v1896 = vmax.f32 %v1805, 0.0
        %v1897 = vmax.f32 %v1808, 0.0
        %v1898 = vmax.f32 %v1811, 0.0
        %v1899 = vmax.f32 %v1814, 0.0
        %v1900 = vmax.f32 %v1817, 0.0
        %v1901 = vmax.f32 %v1820, 0.0
        %v1902 = vmax.f32 %v1823, 0.0
        %v1903 = vmax.f32 %v1826, 0.0
        %v1904 = vmax.f32 %v1829, 0.0
        %v1905 = vmax.f32 %v1832, 0.0
        %v1906 = vmax.f32 %v1835, 0.0
        %v1907 = vmax.f32 %v1838, 0.0
        %v1908 = vmax.f32 %v1841, 0.0
        %v1909 = vmax.f32 %v1844, 0.0
        %v1910 = vmax.f32 %v1847, 0.0
        %v1911 = vmax.f32 %v1850, 0.0
        %v1912 = vmax.f32 %v1853, 0.0
        %v1913 = vmax.f32 %v1856, 0.0
        %v1914 = vmax.f32 %v1859, 0.0
        %v1915 = vmax.f32 %v1862, 0.0
        %v1916 = vmax.f32 %v1865, 0.0
        %v1917 = vmax.f32 %v1868, 0.0
        %v1918 = vmax.f32 %v1871, 0.0
        %v1919 = vmax.f32 %v1874, 0.0
        %v1920 = vmax.f32 %v1877, 0.0
        %v1921 = vmax.f32 %v1880, 0.0
        %v1922 = vmax.f32 %v1883, 0.0
        %v1923 = vmax.f32 %v1886, 0.0
        %v1924 = vmax.f32 %v1889, 0.0
        %v1925 = vmax.f32 %v1892, 0.0
        %v1958 = vrot.slane %v1894, 2
        %v1959 = vrot.slane %v1894, 4
        %v1960 = vrot.slane %v1894, 6
        %v1961 = vrot.slane %v1895, 2
        %v1962 = vrot.slane %v1895, 4
        %v1963 = vrot.slane %v1895, 6
        %v1964 = vrot.slane %v1896, 2
        %v1965 = vrot.slane %v1896, 4
        %v1966 = vrot.slane %v1896, 6
        %v1967 = vrot.slane %v1897, 2
        %v1968 = vrot.slane %v1897, 4
        %v1969 = vrot.slane %v1897, 6
        %v1970 = vrot.slane %v1898, 2
        %v1971 = vrot.slane %v1898, 4
        %v1972 = vrot.slane %v1898, 6
        %v1973 = vrot.slane %v1899, 2
        %v1974 = vrot.slane %v1899, 4
        %v1975 = vrot.slane %v1899, 6
        %v1976 = vrot.slane %v1900, 2
        %v1977 = vrot.slane %v1900, 4
        %v1978 = vrot.slane %v1900, 6
        %v1979 = vrot.slane %v1901, 2
        %v1980 = vrot.slane %v1901, 4
        %v1981 = vrot.slane %v1901, 6
        %v1982 = vrot.slane %v1902, 2
        %v1983 = vrot.slane %v1902, 4
        %v1984 = vrot.slane %v1902, 6
        %v1985 = vrot.slane %v1903, 2
        %v1986 = vrot.slane %v1903, 4
        %v1987 = vrot.slane %v1903, 6
        %v1988 = vrot.slane %v1904, 2
        %v1989 = vrot.slane %v1904, 4
        %v1990 = vrot.slane %v1904, 6
        %v1991 = vrot.slane %v1905, 2
        %v1992 = vrot.slane %v1905, 4
        %v1993 = vrot.slane %v1905, 6
        %v1994 = vrot.slane %v1906, 2
        %v1995 = vrot.slane %v1906, 4
        %v1996 = vrot.slane %v1906, 6
        %v1997 = vrot.slane %v1907, 2
        %v1998 = vrot.slane %v1907, 4
        %v1999 = vrot.slane %v1907, 6
        %v2000 = vrot.slane %v1908, 2
        %v2001 = vrot.slane %v1908, 4
        %v2002 = vrot.slane %v1908, 6
        %v2003 = vrot.slane %v1909, 2
        %v2004 = vrot.slane %v1909, 4
        %v2005 = vrot.slane %v1909, 6
        %v2006 = vrot.slane %v1910, 2
        %v2007 = vrot.slane %v1910, 4
        %v2008 = vrot.slane %v1910, 6
        %v2009 = vrot.slane %v1911, 2
        %v2010 = vrot.slane %v1911, 4
        %v2011 = vrot.slane %v1911, 6
        %v2012 = vrot.slane %v1912, 2
        %v2013 = vrot.slane %v1912, 4
        %v2014 = vrot.slane %v1912, 6
        %v2015 = vrot.slane %v1913, 2
        %v2016 = vrot.slane %v1913, 4
        %v2017 = vrot.slane %v1913, 6
        %v2018 = vrot.slane %v1914, 2
        %v2019 = vrot.slane %v1914, 4
        %v2020 = vrot.slane %v1914, 6
        %v2021 = vrot.slane %v1915, 2
        %v2022 = vrot.slane %v1915, 4
        %v2023 = vrot.slane %v1915, 6
        %v2024 = vrot.slane %v1916, 2
        %v2025 = vrot.slane %v1916, 4
        %v2026 = vrot.slane %v1916, 6
        %v2027 = vrot.slane %v1917, 2
        %v2028 = vrot.slane %v1917, 4
        %v2029 = vrot.slane %v1917, 6
        %v2030 = vrot.slane %v1918, 2
        %v2031 = vrot.slane %v1918, 4
        %v2032 = vrot.slane %v1918, 6
        %v2033 = vrot.slane %v1919, 2
        %v2034 = vrot.slane %v1919, 4
        %v2035 = vrot.slane %v1919, 6
        %v2036 = vrot.slane %v1920, 2
        %v2037 = vrot.slane %v1920, 4
        %v2038 = vrot.slane %v1920, 6
        %v2039 = vrot.slane %v1921, 2
        %v2040 = vrot.slane %v1921, 4
        %v2041 = vrot.slane %v1921, 6
        %v2042 = vrot.slane %v1922, 2
        %v2043 = vrot.slane %v1922, 4
        %v2044 = vrot.slane %v1922, 6
        %v2045 = vrot.slane %v1923, 2
        %v2046 = vrot.slane %v1923, 4
        %v2047 = vrot.slane %v1923, 6
        %v2048 = vrot.slane %v1924, 2
        %v2049 = vrot.slane %v1924, 4
        %v2050 = vrot.slane %v1924, 6
        %v2051 = vrot.slane %v1925, 2
        %v2052 = vrot.slane %v1925, 4
        %v2053 = vrot.slane %v1925, 6
        %v2150 = vsel %vm359, %v1894, -inf
        %v2151 = vsel %vm359, %v1898, -inf
        %v2152 = vmax.f32 %v2150, %v2151
        %v2153 = vrot.slane %v2152, 4
        %v2154 = vmax.f32 %v2152, %v2153
        %v2155 = vrot.slane %v2154, 2
        %v2156 = vmax.f32 %v2154, %v2155
        %v2157 = vrot.slane %v2156, 1
        %v2158 = vmax.f32 %v2156, %v2157
        %v2159 = vsel %vm359, %v1958, -inf
        %v2160 = vsel %vm359, %v1970, -inf
        %v2161 = vmax.f32 %v2159, %v2160
        %v2162 = vrot.slane %v2161, 4
        %v2163 = vmax.f32 %v2161, %v2162
        %v2164 = vrot.slane %v2163, 2
        %v2165 = vmax.f32 %v2163, %v2164
        %v2166 = vrot.slane %v2165, 1
        %v2167 = vmax.f32 %v2165, %v2166
        %v2168 = vsel %vm359, %v1959, -inf
        %v2169 = vsel %vm359, %v1971, -inf
        %v2170 = vmax.f32 %v2168, %v2169
        %v2171 = vrot.slane %v2170, 4
        %v2172 = vmax.f32 %v2170, %v2171
        %v2173 = vrot.slane %v2172, 2
        %v2174 = vmax.f32 %v2172, %v2173
        %v2175 = vrot.slane %v2174, 1
        %v2176 = vmax.f32 %v2174, %v2175
        %v2177 = vsel %vm359, %v1960, -inf
        %v2178 = vsel %vm359, %v1972, -inf
        %v2179 = vmax.f32 %v2177, %v2178
        %v2180 = vrot.slane %v2179, 4
        %v2181 = vmax.f32 %v2179, %v2180
        %v2182 = vrot.slane %v2181, 2
        %v2183 = vmax.f32 %v2181, %v2182
        %v2184 = vrot.slane %v2183, 1
        %v2185 = vmax.f32 %v2183, %v2184
        %v2186 = vsel %vm359, %v1895, -inf
        %v2187 = vsel %vm359, %v1899, -inf
        %v2188 = vmax.f32 %v2186, %v2187
        %v2189 = vrot.slane %v2188, 4
        %v2190 = vmax.f32 %v2188, %v2189
        %v2191 = vrot.slane %v2190, 2
        %v2192 = vmax.f32 %v2190, %v2191
        %v2193 = vrot.slane %v2192, 1
        %v2194 = vmax.f32 %v2192, %v2193
        %v2195 = vsel %vm359, %v1961, -inf
        %v2196 = vsel %vm359, %v1973, -inf
        %v2197 = vmax.f32 %v2195, %v2196
        %v2198 = vrot.slane %v2197, 4
        %v2199 = vmax.f32 %v2197, %v2198
        %v2200 = vrot.slane %v2199, 2
        %v2201 = vmax.f32 %v2199, %v2200
        %v2202 = vrot.slane %v2201, 1
        %v2203 = vmax.f32 %v2201, %v2202
        %v2204 = vsel %vm359, %v1962, -inf
        %v2205 = vsel %vm359, %v1974, -inf
        %v2206 = vmax.f32 %v2204, %v2205
        %v2207 = vrot.slane %v2206, 4
        %v2208 = vmax.f32 %v2206, %v2207
        %v2209 = vrot.slane %v2208, 2
        %v2210 = vmax.f32 %v2208, %v2209
        %v2211 = vrot.slane %v2210, 1
        %v2212 = vmax.f32 %v2210, %v2211
        %v2213 = vsel %vm359, %v1963, -inf
        %v2214 = vsel %vm359, %v1975, -inf
        %v2215 = vmax.f32 %v2213, %v2214
        %v2216 = vrot.slane %v2215, 4
        %v2217 = vmax.f32 %v2215, %v2216
        %v2218 = vrot.slane %v2217, 2
        %v2219 = vmax.f32 %v2217, %v2218
        %v2220 = vrot.slane %v2219, 1
        %v2221 = vmax.f32 %v2219, %v2220
        %v2222 = vsel %vm359, %v1896, -inf
        %v2223 = vsel %vm359, %v1900, -inf
        %v2224 = vmax.f32 %v2222, %v2223
        %v2225 = vrot.slane %v2224, 4
        %v2226 = vmax.f32 %v2224, %v2225
        %v2227 = vrot.slane %v2226, 2
        %v2228 = vmax.f32 %v2226, %v2227
        %v2229 = vrot.slane %v2228, 1
        %v2230 = vmax.f32 %v2228, %v2229
        %v2231 = vsel %vm359, %v1964, -inf
        %v2232 = vsel %vm359, %v1976, -inf
        %v2233 = vmax.f32 %v2231, %v2232
        %v2234 = vrot.slane %v2233, 4
        %v2235 = vmax.f32 %v2233, %v2234
        %v2236 = vrot.slane %v2235, 2
        %v2237 = vmax.f32 %v2235, %v2236
        %v2238 = vrot.slane %v2237, 1
        %v2239 = vmax.f32 %v2237, %v2238
        %v2240 = vsel %vm359, %v1965, -inf
        %v2241 = vsel %vm359, %v1977, -inf
        %v2242 = vmax.f32 %v2240, %v2241
        %v2243 = vrot.slane %v2242, 4
        %v2244 = vmax.f32 %v2242, %v2243
        %v2245 = vrot.slane %v2244, 2
        %v2246 = vmax.f32 %v2244, %v2245
        %v2247 = vrot.slane %v2246, 1
        %v2248 = vmax.f32 %v2246, %v2247
        %v2249 = vsel %vm359, %v1966, -inf
        %v2250 = vsel %vm359, %v1978, -inf
        %v2251 = vmax.f32 %v2249, %v2250
        %v2252 = vrot.slane %v2251, 4
        %v2253 = vmax.f32 %v2251, %v2252
        %v2254 = vrot.slane %v2253, 2
        %v2255 = vmax.f32 %v2253, %v2254
        %v2256 = vrot.slane %v2255, 1
        %v2257 = vmax.f32 %v2255, %v2256
        %v2258 = vsel %vm359, %v1897, -inf
        %v2259 = vsel %vm359, %v1901, -inf
        %v2260 = vmax.f32 %v2258, %v2259
        %v2261 = vrot.slane %v2260, 4
        %v2262 = vmax.f32 %v2260, %v2261
        %v2263 = vrot.slane %v2262, 2
        %v2264 = vmax.f32 %v2262, %v2263
        %v2265 = vrot.slane %v2264, 1
        %v2266 = vmax.f32 %v2264, %v2265
        %v2267 = vsel %vm359, %v1967, -inf
        %v2268 = vsel %vm359, %v1979, -inf
        %v2269 = vmax.f32 %v2267, %v2268
        %v2270 = vrot.slane %v2269, 4
        %v2271 = vmax.f32 %v2269, %v2270
        %v2272 = vrot.slane %v2271, 2
        %v2273 = vmax.f32 %v2271, %v2272
        %v2274 = vrot.slane %v2273, 1
        %v2275 = vmax.f32 %v2273, %v2274
        %v2276 = vsel %vm359, %v1968, -inf
        %v2277 = vsel %vm359, %v1980, -inf
        %v2278 = vmax.f32 %v2276, %v2277
        %v2279 = vrot.slane %v2278, 4
        %v2280 = vmax.f32 %v2278, %v2279
        %v2281 = vrot.slane %v2280, 2
        %v2282 = vmax.f32 %v2280, %v2281
        %v2283 = vrot.slane %v2282, 1
        %v2284 = vmax.f32 %v2282, %v2283
        %v2285 = vsel %vm359, %v1969, -inf
        %v2286 = vsel %vm359, %v1981, -inf
        %v2287 = vmax.f32 %v2285, %v2286
        %v2288 = vrot.slane %v2287, 4
        %v2289 = vmax.f32 %v2287, %v2288
        %v2290 = vrot.slane %v2289, 2
        %v2291 = vmax.f32 %v2289, %v2290
        %v2292 = vrot.slane %v2291, 1
        %v2293 = vmax.f32 %v2291, %v2292
        %v2294 = vsel %vm359, %v1902, -inf
        %v2295 = vsel %vm359, %v1906, -inf
        %v2296 = vmax.f32 %v2294, %v2295
        %v2297 = vrot.slane %v2296, 4
        %v2298 = vmax.f32 %v2296, %v2297
        %v2299 = vrot.slane %v2298, 2
        %v2300 = vmax.f32 %v2298, %v2299
        %v2301 = vrot.slane %v2300, 1
        %v2302 = vmax.f32 %v2300, %v2301
        %v2303 = vsel %vm359, %v1982, -inf
        %v2304 = vsel %vm359, %v1994, -inf
        %v2305 = vmax.f32 %v2303, %v2304
        %v2306 = vrot.slane %v2305, 4
        %v2307 = vmax.f32 %v2305, %v2306
        %v2308 = vrot.slane %v2307, 2
        %v2309 = vmax.f32 %v2307, %v2308
        %v2310 = vrot.slane %v2309, 1
        %v2311 = vmax.f32 %v2309, %v2310
        %v2312 = vsel %vm359, %v1983, -inf
        %v2313 = vsel %vm359, %v1995, -inf
        %v2314 = vmax.f32 %v2312, %v2313
        %v2315 = vrot.slane %v2314, 4
        %v2316 = vmax.f32 %v2314, %v2315
        %v2317 = vrot.slane %v2316, 2
        %v2318 = vmax.f32 %v2316, %v2317
        %v2319 = vrot.slane %v2318, 1
        %v2320 = vmax.f32 %v2318, %v2319
        %v2321 = vsel %vm359, %v1984, -inf
        %v2322 = vsel %vm359, %v1996, -inf
        %v2323 = vmax.f32 %v2321, %v2322
        %v2324 = vrot.slane %v2323, 4
        %v2325 = vmax.f32 %v2323, %v2324
        %v2326 = vrot.slane %v2325, 2
        %v2327 = vmax.f32 %v2325, %v2326
        %v2328 = vrot.slane %v2327, 1
        %v2329 = vmax.f32 %v2327, %v2328
        %v2330 = vsel %vm359, %v1903, -inf
        %v2331 = vsel %vm359, %v1907, -inf
        %v2332 = vmax.f32 %v2330, %v2331
        %v2333 = vrot.slane %v2332, 4
        %v2334 = vmax.f32 %v2332, %v2333
        %v2335 = vrot.slane %v2334, 2
        %v2336 = vmax.f32 %v2334, %v2335
        %v2337 = vrot.slane %v2336, 1
        %v2338 = vmax.f32 %v2336, %v2337
        %v2339 = vsel %vm359, %v1985, -inf
        %v2340 = vsel %vm359, %v1997, -inf
        %v2341 = vmax.f32 %v2339, %v2340
        %v2342 = vrot.slane %v2341, 4
        %v2343 = vmax.f32 %v2341, %v2342
        %v2344 = vrot.slane %v2343, 2
        %v2345 = vmax.f32 %v2343, %v2344
        %v2346 = vrot.slane %v2345, 1
        %v2347 = vmax.f32 %v2345, %v2346
        %v2348 = vsel %vm359, %v1986, -inf
        %v2349 = vsel %vm359, %v1998, -inf
        %v2350 = vmax.f32 %v2348, %v2349
        %v2351 = vrot.slane %v2350, 4
        %v2352 = vmax.f32 %v2350, %v2351
        %v2353 = vrot.slane %v2352, 2
        %v2354 = vmax.f32 %v2352, %v2353
        %v2355 = vrot.slane %v2354, 1
        %v2356 = vmax.f32 %v2354, %v2355
        %v2357 = vsel %vm359, %v1987, -inf
        %v2358 = vsel %vm359, %v1999, -inf
        %v2359 = vmax.f32 %v2357, %v2358
        %v2360 = vrot.slane %v2359, 4
        %v2361 = vmax.f32 %v2359, %v2360
        %v2362 = vrot.slane %v2361, 2
        %v2363 = vmax.f32 %v2361, %v2362
        %v2364 = vrot.slane %v2363, 1
        %v2365 = vmax.f32 %v2363, %v2364
        %v2366 = vsel %vm359, %v1904, -inf
        %v2367 = vsel %vm359, %v1908, -inf
        %v2368 = vmax.f32 %v2366, %v2367
        %v2369 = vrot.slane %v2368, 4
        %v2370 = vmax.f32 %v2368, %v2369
        %v2371 = vrot.slane %v2370, 2
        %v2372 = vmax.f32 %v2370, %v2371
        %v2373 = vrot.slane %v2372, 1
        %v2374 = vmax.f32 %v2372, %v2373
        %v2375 = vsel %vm359, %v1988, -inf
        %v2376 = vsel %vm359, %v2000, -inf
        %v2377 = vmax.f32 %v2375, %v2376
        %v2378 = vrot.slane %v2377, 4
        %v2379 = vmax.f32 %v2377, %v2378
        %v2380 = vrot.slane %v2379, 2
        %v2381 = vmax.f32 %v2379, %v2380
        %v2382 = vrot.slane %v2381, 1
        %v2383 = vmax.f32 %v2381, %v2382
        %v2384 = vsel %vm359, %v1989, -inf
        %v2385 = vsel %vm359, %v2001, -inf
        %v2386 = vmax.f32 %v2384, %v2385
        %v2387 = vrot.slane %v2386, 4
        %v2388 = vmax.f32 %v2386, %v2387
        %v2389 = vrot.slane %v2388, 2
        %v2390 = vmax.f32 %v2388, %v2389
        %v2391 = vrot.slane %v2390, 1
        %v2392 = vmax.f32 %v2390, %v2391
        %v2393 = vsel %vm359, %v1990, -inf
        %v2394 = vsel %vm359, %v2002, -inf
        %v2395 = vmax.f32 %v2393, %v2394
        %v2396 = vrot.slane %v2395, 4
        %v2397 = vmax.f32 %v2395, %v2396
        %v2398 = vrot.slane %v2397, 2
        %v2399 = vmax.f32 %v2397, %v2398
        %v2400 = vrot.slane %v2399, 1
        %v2401 = vmax.f32 %v2399, %v2400
        %v2402 = vsel %vm359, %v1905, -inf
        %v2403 = vsel %vm359, %v1909, -inf
        %v2404 = vmax.f32 %v2402, %v2403
        %v2405 = vrot.slane %v2404, 4
        %v2406 = vmax.f32 %v2404, %v2405
        %v2407 = vrot.slane %v2406, 2
        %v2408 = vmax.f32 %v2406, %v2407
        %v2409 = vrot.slane %v2408, 1
        %v2410 = vmax.f32 %v2408, %v2409
        %v2411 = vsel %vm359, %v1991, -inf
        %v2412 = vsel %vm359, %v2003, -inf
        %v2413 = vmax.f32 %v2411, %v2412
        %v2414 = vrot.slane %v2413, 4
        %v2415 = vmax.f32 %v2413, %v2414
        %v2416 = vrot.slane %v2415, 2
        %v2417 = vmax.f32 %v2415, %v2416
        %v2418 = vrot.slane %v2417, 1
        %v2419 = vmax.f32 %v2417, %v2418
        %v2420 = vsel %vm359, %v1992, -inf
        %v2421 = vsel %vm359, %v2004, -inf
        %v2422 = vmax.f32 %v2420, %v2421
        %v2423 = vrot.slane %v2422, 4
        %v2424 = vmax.f32 %v2422, %v2423
        %v2425 = vrot.slane %v2424, 2
        %v2426 = vmax.f32 %v2424, %v2425
        %v2427 = vrot.slane %v2426, 1
        %v2428 = vmax.f32 %v2426, %v2427
        %v2429 = vsel %vm359, %v1993, -inf
        %v2430 = vsel %vm359, %v2005, -inf
        %v2431 = vmax.f32 %v2429, %v2430
        %v2432 = vrot.slane %v2431, 4
        %v2433 = vmax.f32 %v2431, %v2432
        %v2434 = vrot.slane %v2433, 2
        %v2435 = vmax.f32 %v2433, %v2434
        %v2436 = vrot.slane %v2435, 1
        %v2437 = vmax.f32 %v2435, %v2436
        %v2438 = vsel %vm359, %v1910, -inf
        %v2439 = vsel %vm359, %v1914, -inf
        %v2440 = vmax.f32 %v2438, %v2439
        %v2441 = vrot.slane %v2440, 4
        %v2442 = vmax.f32 %v2440, %v2441
        %v2443 = vrot.slane %v2442, 2
        %v2444 = vmax.f32 %v2442, %v2443
        %v2445 = vrot.slane %v2444, 1
        %v2446 = vmax.f32 %v2444, %v2445
        %v2447 = vsel %vm359, %v2006, -inf
        %v2448 = vsel %vm359, %v2018, -inf
        %v2449 = vmax.f32 %v2447, %v2448
        %v2450 = vrot.slane %v2449, 4
        %v2451 = vmax.f32 %v2449, %v2450
        %v2452 = vrot.slane %v2451, 2
        %v2453 = vmax.f32 %v2451, %v2452
        %v2454 = vrot.slane %v2453, 1
        %v2455 = vmax.f32 %v2453, %v2454
        %v2456 = vsel %vm359, %v2007, -inf
        %v2457 = vsel %vm359, %v2019, -inf
        %v2458 = vmax.f32 %v2456, %v2457
        %v2459 = vrot.slane %v2458, 4
        %v2460 = vmax.f32 %v2458, %v2459
        %v2461 = vrot.slane %v2460, 2
        %v2462 = vmax.f32 %v2460, %v2461
        %v2463 = vrot.slane %v2462, 1
        %v2464 = vmax.f32 %v2462, %v2463
        %v2465 = vsel %vm359, %v2008, -inf
        %v2466 = vsel %vm359, %v2020, -inf
        %v2467 = vmax.f32 %v2465, %v2466
        %v2468 = vrot.slane %v2467, 4
        %v2469 = vmax.f32 %v2467, %v2468
        %v2470 = vrot.slane %v2469, 2
        %v2471 = vmax.f32 %v2469, %v2470
        %v2472 = vrot.slane %v2471, 1
        %v2473 = vmax.f32 %v2471, %v2472
        %v2474 = vsel %vm359, %v1911, -inf
        %v2475 = vsel %vm359, %v1915, -inf
        %v2476 = vmax.f32 %v2474, %v2475
        %v2477 = vrot.slane %v2476, 4
        %v2478 = vmax.f32 %v2476, %v2477
        %v2479 = vrot.slane %v2478, 2
        %v2480 = vmax.f32 %v2478, %v2479
        %v2481 = vrot.slane %v2480, 1
        %v2482 = vmax.f32 %v2480, %v2481
        %v2483 = vsel %vm359, %v2009, -inf
        %v2484 = vsel %vm359, %v2021, -inf
        %v2485 = vmax.f32 %v2483, %v2484
        %v2486 = vrot.slane %v2485, 4
        %v2487 = vmax.f32 %v2485, %v2486
        %v2488 = vrot.slane %v2487, 2
        %v2489 = vmax.f32 %v2487, %v2488
        %v2490 = vrot.slane %v2489, 1
        %v2491 = vmax.f32 %v2489, %v2490
        %v2492 = vsel %vm359, %v2010, -inf
        %v2493 = vsel %vm359, %v2022, -inf
        %v2494 = vmax.f32 %v2492, %v2493
        %v2495 = vrot.slane %v2494, 4
        %v2496 = vmax.f32 %v2494, %v2495
        %v2497 = vrot.slane %v2496, 2
        %v2498 = vmax.f32 %v2496, %v2497
        %v2499 = vrot.slane %v2498, 1
        %v2500 = vmax.f32 %v2498, %v2499
        %v2501 = vsel %vm359, %v2011, -inf
        %v2502 = vsel %vm359, %v2023, -inf
        %v2503 = vmax.f32 %v2501, %v2502
        %v2504 = vrot.slane %v2503, 4
        %v2505 = vmax.f32 %v2503, %v2504
        %v2506 = vrot.slane %v2505, 2
        %v2507 = vmax.f32 %v2505, %v2506
        %v2508 = vrot.slane %v2507, 1
        %v2509 = vmax.f32 %v2507, %v2508
        %v2510 = vsel %vm359, %v1912, -inf
        %v2511 = vsel %vm359, %v1916, -inf
        %v2512 = vmax.f32 %v2510, %v2511
        %v2513 = vrot.slane %v2512, 4
        %v2514 = vmax.f32 %v2512, %v2513
        %v2515 = vrot.slane %v2514, 2
        %v2516 = vmax.f32 %v2514, %v2515
        %v2517 = vrot.slane %v2516, 1
        %v2518 = vmax.f32 %v2516, %v2517
        %v2519 = vsel %vm359, %v2012, -inf
        %v2520 = vsel %vm359, %v2024, -inf
        %v2521 = vmax.f32 %v2519, %v2520
        %v2522 = vrot.slane %v2521, 4
        %v2523 = vmax.f32 %v2521, %v2522
        %v2524 = vrot.slane %v2523, 2
        %v2525 = vmax.f32 %v2523, %v2524
        %v2526 = vrot.slane %v2525, 1
        %v2527 = vmax.f32 %v2525, %v2526
        %v2528 = vsel %vm359, %v2013, -inf
        %v2529 = vsel %vm359, %v2025, -inf
        %v2530 = vmax.f32 %v2528, %v2529
        %v2531 = vrot.slane %v2530, 4
        %v2532 = vmax.f32 %v2530, %v2531
        %v2533 = vrot.slane %v2532, 2
        %v2534 = vmax.f32 %v2532, %v2533
        %v2535 = vrot.slane %v2534, 1
        %v2536 = vmax.f32 %v2534, %v2535
        %v2537 = vsel %vm359, %v2014, -inf
        %v2538 = vsel %vm359, %v2026, -inf
        %v2539 = vmax.f32 %v2537, %v2538
        %v2540 = vrot.slane %v2539, 4
        %v2541 = vmax.f32 %v2539, %v2540
        %v2542 = vrot.slane %v2541, 2
        %v2543 = vmax.f32 %v2541, %v2542
        %v2544 = vrot.slane %v2543, 1
        %v2545 = vmax.f32 %v2543, %v2544
        %v2546 = vsel %vm359, %v1913, -inf
        %v2547 = vsel %vm359, %v1917, -inf
        %v2548 = vmax.f32 %v2546, %v2547
        %v2549 = vrot.slane %v2548, 4
        %v2550 = vmax.f32 %v2548, %v2549
        %v2551 = vrot.slane %v2550, 2
        %v2552 = vmax.f32 %v2550, %v2551
        %v2553 = vrot.slane %v2552, 1
        %v2554 = vmax.f32 %v2552, %v2553
        %v2555 = vsel %vm359, %v2015, -inf
        %v2556 = vsel %vm359, %v2027, -inf
        %v2557 = vmax.f32 %v2555, %v2556
        %v2558 = vrot.slane %v2557, 4
        %v2559 = vmax.f32 %v2557, %v2558
        %v2560 = vrot.slane %v2559, 2
        %v2561 = vmax.f32 %v2559, %v2560
        %v2562 = vrot.slane %v2561, 1
        %v2563 = vmax.f32 %v2561, %v2562
        %v2564 = vsel %vm359, %v2016, -inf
        %v2565 = vsel %vm359, %v2028, -inf
        %v2566 = vmax.f32 %v2564, %v2565
        %v2567 = vrot.slane %v2566, 4
        %v2568 = vmax.f32 %v2566, %v2567
        %v2569 = vrot.slane %v2568, 2
        %v2570 = vmax.f32 %v2568, %v2569
        %v2571 = vrot.slane %v2570, 1
        %v2572 = vmax.f32 %v2570, %v2571
        %v2573 = vsel %vm359, %v2017, -inf
        %v2574 = vsel %vm359, %v2029, -inf
        %v2575 = vmax.f32 %v2573, %v2574
        %v2576 = vrot.slane %v2575, 4
        %v2577 = vmax.f32 %v2575, %v2576
        %v2578 = vrot.slane %v2577, 2
        %v2579 = vmax.f32 %v2577, %v2578
        %v2580 = vrot.slane %v2579, 1
        %v2581 = vmax.f32 %v2579, %v2580
        %v2582 = vsel %vm359, %v1918, -inf
        %v2583 = vsel %vm359, %v1922, -inf
        %v2584 = vmax.f32 %v2582, %v2583
        %v2585 = vrot.slane %v2584, 4
        %v2586 = vmax.f32 %v2584, %v2585
        %v2587 = vrot.slane %v2586, 2
        %v2588 = vmax.f32 %v2586, %v2587
        %v2589 = vrot.slane %v2588, 1
        %v2590 = vmax.f32 %v2588, %v2589
        %v2591 = vsel %vm359, %v2030, -inf
        %v2592 = vsel %vm359, %v2042, -inf
        %v2593 = vmax.f32 %v2591, %v2592
        %v2594 = vrot.slane %v2593, 4
        %v2595 = vmax.f32 %v2593, %v2594
        %v2596 = vrot.slane %v2595, 2
        %v2597 = vmax.f32 %v2595, %v2596
        %v2598 = vrot.slane %v2597, 1
        %v2599 = vmax.f32 %v2597, %v2598
        %v2600 = vsel %vm359, %v2031, -inf
        %v2601 = vsel %vm359, %v2043, -inf
        %v2602 = vmax.f32 %v2600, %v2601
        %v2603 = vrot.slane %v2602, 4
        %v2604 = vmax.f32 %v2602, %v2603
        %v2605 = vrot.slane %v2604, 2
        %v2606 = vmax.f32 %v2604, %v2605
        %v2607 = vrot.slane %v2606, 1
        %v2608 = vmax.f32 %v2606, %v2607
        %v2609 = vsel %vm359, %v2032, -inf
        %v2610 = vsel %vm359, %v2044, -inf
        %v2611 = vmax.f32 %v2609, %v2610
        %v2612 = vrot.slane %v2611, 4
        %v2613 = vmax.f32 %v2611, %v2612
        %v2614 = vrot.slane %v2613, 2
        %v2615 = vmax.f32 %v2613, %v2614
        %v2616 = vrot.slane %v2615, 1
        %v2617 = vmax.f32 %v2615, %v2616
        %v2618 = vsel %vm359, %v1919, -inf
        %v2619 = vsel %vm359, %v1923, -inf
        %v2620 = vmax.f32 %v2618, %v2619
        %v2621 = vrot.slane %v2620, 4
        %v2622 = vmax.f32 %v2620, %v2621
        %v2623 = vrot.slane %v2622, 2
        %v2624 = vmax.f32 %v2622, %v2623
        %v2625 = vrot.slane %v2624, 1
        %v2626 = vmax.f32 %v2624, %v2625
        %v2627 = vsel %vm359, %v2033, -inf
        %v2628 = vsel %vm359, %v2045, -inf
        %v2629 = vmax.f32 %v2627, %v2628
        %v2630 = vrot.slane %v2629, 4
        %v2631 = vmax.f32 %v2629, %v2630
        %v2632 = vrot.slane %v2631, 2
        %v2633 = vmax.f32 %v2631, %v2632
        %v2634 = vrot.slane %v2633, 1
        %v2635 = vmax.f32 %v2633, %v2634
        %v2636 = vsel %vm359, %v2034, -inf
        %v2637 = vsel %vm359, %v2046, -inf
        %v2638 = vmax.f32 %v2636, %v2637
        %v2639 = vrot.slane %v2638, 4
        %v2640 = vmax.f32 %v2638, %v2639
        %v2641 = vrot.slane %v2640, 2
        %v2642 = vmax.f32 %v2640, %v2641
        %v2643 = vrot.slane %v2642, 1
        %v2644 = vmax.f32 %v2642, %v2643
        %v2645 = vsel %vm359, %v2035, -inf
        %v2646 = vsel %vm359, %v2047, -inf
        %v2647 = vmax.f32 %v2645, %v2646
        %v2648 = vrot.slane %v2647, 4
        %v2649 = vmax.f32 %v2647, %v2648
        %v2650 = vrot.slane %v2649, 2
        %v2651 = vmax.f32 %v2649, %v2650
        %v2652 = vrot.slane %v2651, 1
        %v2653 = vmax.f32 %v2651, %v2652
        %v2654 = vsel %vm359, %v1920, -inf
        %v2655 = vsel %vm359, %v1924, -inf
        %v2656 = vmax.f32 %v2654, %v2655
        %v2657 = vrot.slane %v2656, 4
        %v2658 = vmax.f32 %v2656, %v2657
        %v2659 = vrot.slane %v2658, 2
        %v2660 = vmax.f32 %v2658, %v2659
        %v2661 = vrot.slane %v2660, 1
        %v2662 = vmax.f32 %v2660, %v2661
        %v2663 = vsel %vm359, %v2036, -inf
        %v2664 = vsel %vm359, %v2048, -inf
        %v2665 = vmax.f32 %v2663, %v2664
        %v2666 = vrot.slane %v2665, 4
        %v2667 = vmax.f32 %v2665, %v2666
        %v2668 = vrot.slane %v2667, 2
        %v2669 = vmax.f32 %v2667, %v2668
        %v2670 = vrot.slane %v2669, 1
        %v2671 = vmax.f32 %v2669, %v2670
        %v2672 = vsel %vm359, %v2037, -inf
        %v2673 = vsel %vm359, %v2049, -inf
        %v2674 = vmax.f32 %v2672, %v2673
        %v2675 = vrot.slane %v2674, 4
        %v2676 = vmax.f32 %v2674, %v2675
        %v2677 = vrot.slane %v2676, 2
        %v2678 = vmax.f32 %v2676, %v2677
        %v2679 = vrot.slane %v2678, 1
        %v2680 = vmax.f32 %v2678, %v2679
        %v2681 = vsel %vm359, %v2038, -inf
        %v2682 = vsel %vm359, %v2050, -inf
        %v2683 = vmax.f32 %v2681, %v2682
        %v2684 = vrot.slane %v2683, 4
        %v2685 = vmax.f32 %v2683, %v2684
        %v2686 = vrot.slane %v2685, 2
        %v2687 = vmax.f32 %v2685, %v2686
        %v2688 = vrot.slane %v2687, 1
        %v2689 = vmax.f32 %v2687, %v2688
        %v2690 = vsel %vm359, %v1921, -inf
        %v2691 = vsel %vm359, %v1925, -inf
        %v2692 = vmax.f32 %v2690, %v2691
        %v2693 = vrot.slane %v2692, 4
        %v2694 = vmax.f32 %v2692, %v2693
        %v2695 = vrot.slane %v2694, 2
        %v2696 = vmax.f32 %v2694, %v2695
        %v2697 = vrot.slane %v2696, 1
        %v2698 = vmax.f32 %v2696, %v2697
        %v2699 = vsel %vm359, %v2039, -inf
        %v2700 = vsel %vm359, %v2051, -inf
        %v2701 = vmax.f32 %v2699, %v2700
        %v2702 = vrot.slane %v2701, 4
        %v2703 = vmax.f32 %v2701, %v2702
        %v2704 = vrot.slane %v2703, 2
        %v2705 = vmax.f32 %v2703, %v2704
        %v2706 = vrot.slane %v2705, 1
        %v2707 = vmax.f32 %v2705, %v2706
        %v2708 = vsel %vm359, %v2040, -inf
        %v2709 = vsel %vm359, %v2052, -inf
        %v2710 = vmax.f32 %v2708, %v2709
        %v2711 = vrot.slane %v2710, 4
        %v2712 = vmax.f32 %v2710, %v2711
        %v2713 = vrot.slane %v2712, 2
        %v2714 = vmax.f32 %v2712, %v2713
        %v2715 = vrot.slane %v2714, 1
        %v2716 = vmax.f32 %v2714, %v2715
        %v2717 = vsel %vm359, %v2041, -inf
        %v2718 = vsel %vm359, %v2053, -inf
        %v2719 = vmax.f32 %v2717, %v2718
        %v2720 = vrot.slane %v2719, 4
        %v2721 = vmax.f32 %v2719, %v2720
        %v2722 = vrot.slane %v2721, 2
        %v2723 = vmax.f32 %v2721, %v2722
        %v2724 = vrot.slane %v2723, 1
        %v2725 = vmax.f32 %v2723, %v2724
        %v2790 = vsel %vm1562, %v2167, %v2158
        %v2791 = vsel %vm1564, %v2176, %v2790
        %v2792 = vsel %vm1566, %v2185, %v2791
        %v2793 = vsel %vm1568, %v2194, %v2792
        %v2794 = vsel %vm1570, %v2203, %v2793
        %v2795 = vsel %vm1572, %v2212, %v2794
        %v2796 = vsel %vm1574, %v2221, %v2795
        %v2797 = vsel %vm1562, %v2239, %v2230
        %v2798 = vsel %vm1564, %v2248, %v2797
        %v2799 = vsel %vm1566, %v2257, %v2798
        %v2800 = vsel %vm1568, %v2266, %v2799
        %v2801 = vsel %vm1570, %v2275, %v2800
        %v2802 = vsel %vm1572, %v2284, %v2801
        %v2803 = vsel %vm1574, %v2293, %v2802
        %v2804 = vsel %vm1562, %v2311, %v2302
        %v2805 = vsel %vm1564, %v2320, %v2804
        %v2806 = vsel %vm1566, %v2329, %v2805
        %v2807 = vsel %vm1568, %v2338, %v2806
        %v2808 = vsel %vm1570, %v2347, %v2807
        %v2809 = vsel %vm1572, %v2356, %v2808
        %v2810 = vsel %vm1574, %v2365, %v2809
        %v2811 = vsel %vm1562, %v2383, %v2374
        %v2812 = vsel %vm1564, %v2392, %v2811
        %v2813 = vsel %vm1566, %v2401, %v2812
        %v2814 = vsel %vm1568, %v2410, %v2813
        %v2815 = vsel %vm1570, %v2419, %v2814
        %v2816 = vsel %vm1572, %v2428, %v2815
        %v2817 = vsel %vm1574, %v2437, %v2816
        %v2818 = vsel %vm1562, %v2455, %v2446
        %v2819 = vsel %vm1564, %v2464, %v2818
        %v2820 = vsel %vm1566, %v2473, %v2819
        %v2821 = vsel %vm1568, %v2482, %v2820
        %v2822 = vsel %vm1570, %v2491, %v2821
        %v2823 = vsel %vm1572, %v2500, %v2822
        %v2824 = vsel %vm1574, %v2509, %v2823
        %v2825 = vsel %vm1562, %v2527, %v2518
        %v2826 = vsel %vm1564, %v2536, %v2825
        %v2827 = vsel %vm1566, %v2545, %v2826
        %v2828 = vsel %vm1568, %v2554, %v2827
        %v2829 = vsel %vm1570, %v2563, %v2828
        %v2830 = vsel %vm1572, %v2572, %v2829
        %v2831 = vsel %vm1574, %v2581, %v2830
        %v2832 = vsel %vm1562, %v2599, %v2590
        %v2833 = vsel %vm1564, %v2608, %v2832
        %v2834 = vsel %vm1566, %v2617, %v2833
        %v2835 = vsel %vm1568, %v2626, %v2834
        %v2836 = vsel %vm1570, %v2635, %v2835
        %v2837 = vsel %vm1572, %v2644, %v2836
        %v2838 = vsel %vm1574, %v2653, %v2837
        %v2839 = vsel %vm1562, %v2671, %v2662
        %v2840 = vsel %vm1564, %v2680, %v2839
        %v2841 = vsel %vm1566, %v2689, %v2840
        %v2842 = vsel %vm1568, %v2698, %v2841
        %v2843 = vsel %vm1570, %v2707, %v2842
        %v2844 = vsel %vm1572, %v2716, %v2843
        %v2845 = vsel %vm1574, %v2725, %v2844
        %s2854 = scalar_lea.vmem [#allocation2], 120
        %2855 = vst.msk [vmem:[%s2854 + $0x1] sm:$0xff] %vm356, %v2796
        %2856 = vst.msk [vmem:[%s2854 + $0x9] sm:$0xff] %vm356, %v2803
        %2857 = vst.msk [vmem:[%s2854 + $0x19] sm:$0xff] %vm356, %v2810
        %2858 = vst.msk [vmem:[%s2854 + $0x21] sm:$0xff] %vm356, %v2817
        %2859 = vst.msk [vmem:[%s2854 + $0x31] sm:$0xff] %vm356, %v2824
        %2860 = vst.msk [vmem:[%s2854 + $0x39] sm:$0xff] %vm356, %v2831
        %2861 = vst.msk [vmem:[%s2854 + $0x49] sm:$0xff] %vm356, %v2838
        %2862 = vst.msk [vmem:[%s2854 + $0x51] sm:$0xff] %vm356, %v2845
        %v2863 = vld [vmem:[%s350 + $0x200] sm:$0xff]
        %v2864 = vld [vmem:[%s350 + $0x208] sm:$0xff]
        %v2865 = vld [vmem:[%s350 + $0x210] sm:$0xff]
        %v2866 = vld [vmem:[%s350 + $0x218] sm:$0xff]
        %v2867 = vld [vmem:[%s350 + $0x220] sm:$0xff]
        %v2868 = vld [vmem:[%s350 + $0x228] sm:$0xff]
        %v2869 = vld [vmem:[%s350 + $0x230] sm:$0xff]
        %v2870 = vld [vmem:[%s350 + $0x238] sm:$0xff]
        %v2871 = vld [vmem:[%s350 + $0x240] sm:$0xff]
        %v2872 = vld [vmem:[%s350 + $0x248] sm:$0xff]
        %v2873 = vld [vmem:[%s350 + $0x250] sm:$0xff]
        %v2874 = vld [vmem:[%s350 + $0x258] sm:$0xff]
        %v2875 = vld [vmem:[%s350 + $0x260] sm:$0xff]
        %v2876 = vld [vmem:[%s350 + $0x268] sm:$0xff]
        %v2877 = vld [vmem:[%s350 + $0x270] sm:$0xff]
        %v2878 = vld [vmem:[%s350 + $0x278] sm:$0xff]
        %v2879 = vld [vmem:[%s350 + $0x280] sm:$0xff]
        %v2880 = vld [vmem:[%s350 + $0x288] sm:$0xff]
        %v2881 = vld [vmem:[%s350 + $0x290] sm:$0xff]
        %v2882 = vld [vmem:[%s350 + $0x298] sm:$0xff]
        %v2883 = vld [vmem:[%s350 + $0x2a0] sm:$0xff]
        %v2884 = vld [vmem:[%s350 + $0x2a8] sm:$0xff]
        %v2885 = vld [vmem:[%s350 + $0x2b0] sm:$0xff]
        %v2886 = vld [vmem:[%s350 + $0x2b8] sm:$0xff]
        %v2887 = vld [vmem:[%s350 + $0x2c0] sm:$0xff]
        %v2888 = vld [vmem:[%s350 + $0x2c8] sm:$0xff]
        %v2889 = vld [vmem:[%s350 + $0x2d0] sm:$0xff]
        %v2890 = vld [vmem:[%s350 + $0x2d8] sm:$0xff]
        %v2891 = vld [vmem:[%s350 + $0x2e0] sm:$0xff]
        %v2892 = vld [vmem:[%s350 + $0x2e8] sm:$0xff]
        %v2893 = vld [vmem:[%s350 + $0x2f0] sm:$0xff]
        %v2894 = vld [vmem:[%s350 + $0x2f8] sm:$0xff]
        %v2895 = vld [vmem:[#allocation4] sm:$0xff]
        %v2896 = vld [vmem:[#allocation4 + $0x8] sm:$0xff]
        %v2897 = vld [vmem:[#allocation4 + $0x10] sm:$0xff]
        %v2898 = vld [vmem:[#allocation4 + $0x18] sm:$0x7]
        %v2899 = vld [vmem:[#allocation6] sm:$0x1]
        %v2901 = vperm.slane %v2899, 0
        %v2904 = vsel %vm452, %v2863, 0
        %v2907 = vsel %vm452, %v2864, 0
        %v2910 = vsel %vm452, %v2865, 0
        %v2913 = vsel %vm452, %v2866, 0
        %v2916 = vsel %vm452, %v2867, 0
        %v2919 = vsel %vm452, %v2868, 0
        %v2922 = vsel %vm452, %v2869, 0
        %v2925 = vsel %vm452, %v2870, 0
        %v2928 = vsel %vm452, %v2871, 0
        %v2931 = vsel %vm452, %v2872, 0
        %v2934 = vsel %vm452, %v2873, 0
        %v2937 = vsel %vm452, %v2874, 0
        %v2940 = vsel %vm452, %v2875, 0
        %v2943 = vsel %vm452, %v2876, 0
        %v2946 = vsel %vm452, %v2877, 0
        %v2949 = vsel %vm452, %v2878, 0
        %v2952 = vsel %vm452, %v2879, 0
        %v2955 = vsel %vm452, %v2880, 0
        %v2958 = vsel %vm452, %v2881, 0
        %v2961 = vsel %vm452, %v2882, 0
        %v2964 = vsel %vm452, %v2883, 0
        %v2967 = vsel %vm452, %v2884, 0
        %v2970 = vsel %vm452, %v2885, 0
        %v2973 = vsel %vm452, %v2886, 0
        %v2976 = vsel %vm452, %v2887, 0
        %v2979 = vsel %vm452, %v2888, 0
        %v2982 = vsel %vm452, %v2889, 0
        %v2985 = vsel %vm452, %v2890, 0
        %v2988 = vsel %vm452, %v2891, 0
        %v2991 = vsel %vm452, %v2892, 0
        %v2994 = vsel %vm452, %v2893, 0
        %v2997 = vsel %vm452, %v2894, 0
        %v3000 = vsel %vm549, %v2898, 0
        %3002 = vmatpush.msra.mxu0 0.0
        %3003 = vmatpush.msra.mxu0 0.0
        %3004 = vmatpush.msra.mxu0 0.0
        %3005 = vmatpush.msra.mxu0 0.0
        %3006 = vmatpush.msra.mxu0 0.0
        %3007 = vmatpush.msra.mxu0 0.0
        %3008 = vmatpush.msra.mxu0 0.0
        %3009 = vmatpush.msra.mxu0 0.0
        %3010 = vmatpush.msra.mxu0 0.0
        %3011 = vmatpush.msra.mxu0 0.0
        %3012 = vmatpush.msra.mxu0 0.0
        %3013 = vmatpush.msra.mxu0 0.0
        %3014 = vmatpush.msra.mxu0 %v3000
        %3015 = vmatpush.msra.mxu0 %v2897
        %3016 = vmatpush.msra.mxu0 %v2896
        %3017 = vmatpush.msra.mxu0 %v2895
        %3018 = vmatmul.f32.gmra.mxu0 %v2904
        %v3019 = vpop.f32.mrf.mxu0
        %v3020 = vadd.f32 %v2901, %v3019
        %3021 = vmatmul.f32.gmra.mxu0 %v2907
        %v3022 = vpop.f32.mrf.mxu0
        %v3023 = vadd.f32 %v2901, %v3022
        %3024 = vmatmul.f32.gmra.mxu0 %v2910
        %v3025 = vpop.f32.mrf.mxu0
        %v3026 = vadd.f32 %v2901, %v3025
        %3027 = vmatmul.f32.gmra.mxu0 %v2913
        %v3028 = vpop.f32.mrf.mxu0
        %v3029 = vadd.f32 %v2901, %v3028
        %3030 = vmatmul.f32.gmra.mxu0 %v2916
        %v3031 = vpop.f32.mrf.mxu0
        %v3032 = vadd.f32 %v2901, %v3031
        %3033 = vmatmul.f32.gmra.mxu0 %v2919
        %v3034 = vpop.f32.mrf.mxu0
        %v3035 = vadd.f32 %v2901, %v3034
        %3036 = vmatmul.f32.gmra.mxu0 %v2922
        %v3037 = vpop.f32.mrf.mxu0
        %v3038 = vadd.f32 %v2901, %v3037
        %3039 = vmatmul.f32.gmra.mxu0 %v2925
        %v3040 = vpop.f32.mrf.mxu0
        %v3041 = vadd.f32 %v2901, %v3040
        %3042 = vmatmul.f32.gmra.mxu0 %v2928
        %v3043 = vpop.f32.mrf.mxu0
        %v3044 = vadd.f32 %v2901, %v3043
        %3045 = vmatmul.f32.gmra.mxu0 %v2931
        %v3046 = vpop.f32.mrf.mxu0
        %v3047 = vadd.f32 %v2901, %v3046
        %3048 = vmatmul.f32.gmra.mxu0 %v2934
        %v3049 = vpop.f32.mrf.mxu0
        %v3050 = vadd.f32 %v2901, %v3049
        %3051 = vmatmul.f32.gmra.mxu0 %v2937
        %v3052 = vpop.f32.mrf.mxu0
        %v3053 = vadd.f32 %v2901, %v3052
        %3054 = vmatmul.f32.gmra.mxu0 %v2940
        %v3055 = vpop.f32.mrf.mxu0
        %v3056 = vadd.f32 %v2901, %v3055
        %3057 = vmatmul.f32.gmra.mxu0 %v2943
        %v3058 = vpop.f32.mrf.mxu0
        %v3059 = vadd.f32 %v2901, %v3058
        %3060 = vmatmul.f32.gmra.mxu0 %v2946
        %v3061 = vpop.f32.mrf.mxu0
        %v3062 = vadd.f32 %v2901, %v3061
        %3063 = vmatmul.f32.gmra.mxu0 %v2949
        %v3064 = vpop.f32.mrf.mxu0
        %v3065 = vadd.f32 %v2901, %v3064
        %3066 = vmatmul.f32.gmra.mxu0 %v2952
        %v3067 = vpop.f32.mrf.mxu0
        %v3068 = vadd.f32 %v2901, %v3067
        %3069 = vmatmul.f32.gmra.mxu0 %v2955
        %v3070 = vpop.f32.mrf.mxu0
        %v3071 = vadd.f32 %v2901, %v3070
        %3072 = vmatmul.f32.gmra.mxu0 %v2958
        %v3073 = vpop.f32.mrf.mxu0
        %v3074 = vadd.f32 %v2901, %v3073
        %3075 = vmatmul.f32.gmra.mxu0 %v2961
        %v3076 = vpop.f32.mrf.mxu0
        %v3077 = vadd.f32 %v2901, %v3076
        %3078 = vmatmul.f32.gmra.mxu0 %v2964
        %v3079 = vpop.f32.mrf.mxu0
        %v3080 = vadd.f32 %v2901, %v3079
        %3081 = vmatmul.f32.gmra.mxu0 %v2967
        %v3082 = vpop.f32.mrf.mxu0
        %v3083 = vadd.f32 %v2901, %v3082
        %3084 = vmatmul.f32.gmra.mxu0 %v2970
        %v3085 = vpop.f32.mrf.mxu0
        %v3086 = vadd.f32 %v2901, %v3085
        %3087 = vmatmul.f32.gmra.mxu0 %v2973
        %v3088 = vpop.f32.mrf.mxu0
        %v3089 = vadd.f32 %v2901, %v3088
        %3090 = vmatmul.f32.gmra.mxu0 %v2976
        %v3091 = vpop.f32.mrf.mxu0
        %v3092 = vadd.f32 %v2901, %v3091
        %3093 = vmatmul.f32.gmra.mxu0 %v2979
        %v3094 = vpop.f32.mrf.mxu0
        %v3095 = vadd.f32 %v2901, %v3094
        %3096 = vmatmul.f32.gmra.mxu0 %v2982
        %v3097 = vpop.f32.mrf.mxu0
        %v3098 = vadd.f32 %v2901, %v3097
        %3099 = vmatmul.f32.gmra.mxu0 %v2985
        %v3100 = vpop.f32.mrf.mxu0
        %v3101 = vadd.f32 %v2901, %v3100
        %3102 = vmatmul.f32.gmra.mxu0 %v2988
        %v3103 = vpop.f32.mrf.mxu0
        %v3104 = vadd.f32 %v2901, %v3103
        %3105 = vmatmul.f32.gmra.mxu0 %v2991
        %v3106 = vpop.f32.mrf.mxu0
        %v3107 = vadd.f32 %v2901, %v3106
        %3108 = vmatmul.f32.gmra.mxu0 %v2994
        %v3109 = vpop.f32.mrf.mxu0
        %v3110 = vadd.f32 %v2901, %v3109
        %3111 = vmatmul.f32.gmra.mxu0 %v2997
        %v3112 = vpop.f32.mrf.mxu0
        %v3113 = vadd.f32 %v2901, %v3112
        %3114 = vdwg.mxu0
        %v3115 = vmax.f32 %v3020, 0.0
        %v3116 = vmax.f32 %v3023, 0.0
        %v3117 = vmax.f32 %v3026, 0.0
        %v3118 = vmax.f32 %v3029, 0.0
        %v3119 = vmax.f32 %v3032, 0.0
        %v3120 = vmax.f32 %v3035, 0.0
        %v3121 = vmax.f32 %v3038, 0.0
        %v3122 = vmax.f32 %v3041, 0.0
        %v3123 = vmax.f32 %v3044, 0.0
        %v3124 = vmax.f32 %v3047, 0.0
        %v3125 = vmax.f32 %v3050, 0.0
        %v3126 = vmax.f32 %v3053, 0.0
        %v3127 = vmax.f32 %v3056, 0.0
        %v3128 = vmax.f32 %v3059, 0.0
        %v3129 = vmax.f32 %v3062, 0.0
        %v3130 = vmax.f32 %v3065, 0.0
        %v3131 = vmax.f32 %v3068, 0.0
        %v3132 = vmax.f32 %v3071, 0.0
        %v3133 = vmax.f32 %v3074, 0.0
        %v3134 = vmax.f32 %v3077, 0.0
        %v3135 = vmax.f32 %v3080, 0.0
        %v3136 = vmax.f32 %v3083, 0.0
        %v3137 = vmax.f32 %v3086, 0.0
        %v3138 = vmax.f32 %v3089, 0.0
        %v3139 = vmax.f32 %v3092, 0.0
        %v3140 = vmax.f32 %v3095, 0.0
        %v3141 = vmax.f32 %v3098, 0.0
        %v3142 = vmax.f32 %v3101, 0.0
        %v3143 = vmax.f32 %v3104, 0.0
        %v3144 = vmax.f32 %v3107, 0.0
        %v3145 = vmax.f32 %v3110, 0.0
        %v3146 = vmax.f32 %v3113, 0.0
        %v3179 = vrot.slane %v3115, 2
        %v3180 = vrot.slane %v3115, 4
        %v3181 = vrot.slane %v3115, 6
        %v3182 = vrot.slane %v3116, 2
        %v3183 = vrot.slane %v3116, 4
        %v3184 = vrot.slane %v3116, 6
        %v3185 = vrot.slane %v3117, 2
        %v3186 = vrot.slane %v3117, 4
        %v3187 = vrot.slane %v3117, 6
        %v3188 = vrot.slane %v3118, 2
        %v3189 = vrot.slane %v3118, 4
        %v3190 = vrot.slane %v3118, 6
        %v3191 = vrot.slane %v3119, 2
        %v3192 = vrot.slane %v3119, 4
        %v3193 = vrot.slane %v3119, 6
        %v3194 = vrot.slane %v3120, 2
        %v3195 = vrot.slane %v3120, 4
        %v3196 = vrot.slane %v3120, 6
        %v3197 = vrot.slane %v3121, 2
        %v3198 = vrot.slane %v3121, 4
        %v3199 = vrot.slane %v3121, 6
        %v3200 = vrot.slane %v3122, 2
        %v3201 = vrot.slane %v3122, 4
        %v3202 = vrot.slane %v3122, 6
        %v3203 = vrot.slane %v3123, 2
        %v3204 = vrot.slane %v3123, 4
        %v3205 = vrot.slane %v3123, 6
        %v3206 = vrot.slane %v3124, 2
        %v3207 = vrot.slane %v3124, 4
        %v3208 = vrot.slane %v3124, 6
        %v3209 = vrot.slane %v3125, 2
        %v3210 = vrot.slane %v3125, 4
        %v3211 = vrot.slane %v3125, 6
        %v3212 = vrot.slane %v3126, 2
        %v3213 = vrot.slane %v3126, 4
        %v3214 = vrot.slane %v3126, 6
        %v3215 = vrot.slane %v3127, 2
        %v3216 = vrot.slane %v3127, 4
        %v3217 = vrot.slane %v3127, 6
        %v3218 = vrot.slane %v3128, 2
        %v3219 = vrot.slane %v3128, 4
        %v3220 = vrot.slane %v3128, 6
        %v3221 = vrot.slane %v3129, 2
        %v3222 = vrot.slane %v3129, 4
        %v3223 = vrot.slane %v3129, 6
        %v3224 = vrot.slane %v3130, 2
        %v3225 = vrot.slane %v3130, 4
        %v3226 = vrot.slane %v3130, 6
        %v3227 = vrot.slane %v3131, 2
        %v3228 = vrot.slane %v3131, 4
        %v3229 = vrot.slane %v3131, 6
        %v3230 = vrot.slane %v3132, 2
        %v3231 = vrot.slane %v3132, 4
        %v3232 = vrot.slane %v3132, 6
        %v3233 = vrot.slane %v3133, 2
        %v3234 = vrot.slane %v3133, 4
        %v3235 = vrot.slane %v3133, 6
        %v3236 = vrot.slane %v3134, 2
        %v3237 = vrot.slane %v3134, 4
        %v3238 = vrot.slane %v3134, 6
        %v3239 = vrot.slane %v3135, 2
        %v3240 = vrot.slane %v3135, 4
        %v3241 = vrot.slane %v3135, 6
        %v3242 = vrot.slane %v3136, 2
        %v3243 = vrot.slane %v3136, 4
        %v3244 = vrot.slane %v3136, 6
        %v3245 = vrot.slane %v3137, 2
        %v3246 = vrot.slane %v3137, 4
        %v3247 = vrot.slane %v3137, 6
        %v3248 = vrot.slane %v3138, 2
        %v3249 = vrot.slane %v3138, 4
        %v3250 = vrot.slane %v3138, 6
        %v3251 = vrot.slane %v3139, 2
        %v3252 = vrot.slane %v3139, 4
        %v3253 = vrot.slane %v3139, 6
        %v3254 = vrot.slane %v3140, 2
        %v3255 = vrot.slane %v3140, 4
        %v3256 = vrot.slane %v3140, 6
        %v3257 = vrot.slane %v3141, 2
        %v3258 = vrot.slane %v3141, 4
        %v3259 = vrot.slane %v3141, 6
        %v3260 = vrot.slane %v3142, 2
        %v3261 = vrot.slane %v3142, 4
        %v3262 = vrot.slane %v3142, 6
        %v3263 = vrot.slane %v3143, 2
        %v3264 = vrot.slane %v3143, 4
        %v3265 = vrot.slane %v3143, 6
        %v3266 = vrot.slane %v3144, 2
        %v3267 = vrot.slane %v3144, 4
        %v3268 = vrot.slane %v3144, 6
        %v3269 = vrot.slane %v3145, 2
        %v3270 = vrot.slane %v3145, 4
        %v3271 = vrot.slane %v3145, 6
        %v3272 = vrot.slane %v3146, 2
        %v3273 = vrot.slane %v3146, 4
        %v3274 = vrot.slane %v3146, 6
        %v3371 = vsel %vm359, %v3115, -inf
        %v3372 = vsel %vm359, %v3119, -inf
        %v3373 = vmax.f32 %v3371, %v3372
        %v3374 = vrot.slane %v3373, 4
        %v3375 = vmax.f32 %v3373, %v3374
        %v3376 = vrot.slane %v3375, 2
        %v3377 = vmax.f32 %v3375, %v3376
        %v3378 = vrot.slane %v3377, 1
        %v3379 = vmax.f32 %v3377, %v3378
        %v3380 = vsel %vm359, %v3179, -inf
        %v3381 = vsel %vm359, %v3191, -inf
        %v3382 = vmax.f32 %v3380, %v3381
        %v3383 = vrot.slane %v3382, 4
        %v3384 = vmax.f32 %v3382, %v3383
        %v3385 = vrot.slane %v3384, 2
        %v3386 = vmax.f32 %v3384, %v3385
        %v3387 = vrot.slane %v3386, 1
        %v3388 = vmax.f32 %v3386, %v3387
        %v3389 = vsel %vm359, %v3180, -inf
        %v3390 = vsel %vm359, %v3192, -inf
        %v3391 = vmax.f32 %v3389, %v3390
        %v3392 = vrot.slane %v3391, 4
        %v3393 = vmax.f32 %v3391, %v3392
        %v3394 = vrot.slane %v3393, 2
        %v3395 = vmax.f32 %v3393, %v3394
        %v3396 = vrot.slane %v3395, 1
        %v3397 = vmax.f32 %v3395, %v3396
        %v3398 = vsel %vm359, %v3181, -inf
        %v3399 = vsel %vm359, %v3193, -inf
        %v3400 = vmax.f32 %v3398, %v3399
        %v3401 = vrot.slane %v3400, 4
        %v3402 = vmax.f32 %v3400, %v3401
        %v3403 = vrot.slane %v3402, 2
        %v3404 = vmax.f32 %v3402, %v3403
        %v3405 = vrot.slane %v3404, 1
        %v3406 = vmax.f32 %v3404, %v3405
        %v3407 = vsel %vm359, %v3116, -inf
        %v3408 = vsel %vm359, %v3120, -inf
        %v3409 = vmax.f32 %v3407, %v3408
        %v3410 = vrot.slane %v3409, 4
        %v3411 = vmax.f32 %v3409, %v3410
        %v3412 = vrot.slane %v3411, 2
        %v3413 = vmax.f32 %v3411, %v3412
        %v3414 = vrot.slane %v3413, 1
        %v3415 = vmax.f32 %v3413, %v3414
        %v3416 = vsel %vm359, %v3182, -inf
        %v3417 = vsel %vm359, %v3194, -inf
        %v3418 = vmax.f32 %v3416, %v3417
        %v3419 = vrot.slane %v3418, 4
        %v3420 = vmax.f32 %v3418, %v3419
        %v3421 = vrot.slane %v3420, 2
        %v3422 = vmax.f32 %v3420, %v3421
        %v3423 = vrot.slane %v3422, 1
        %v3424 = vmax.f32 %v3422, %v3423
        %v3425 = vsel %vm359, %v3183, -inf
        %v3426 = vsel %vm359, %v3195, -inf
        %v3427 = vmax.f32 %v3425, %v3426
        %v3428 = vrot.slane %v3427, 4
        %v3429 = vmax.f32 %v3427, %v3428
        %v3430 = vrot.slane %v3429, 2
        %v3431 = vmax.f32 %v3429, %v3430
        %v3432 = vrot.slane %v3431, 1
        %v3433 = vmax.f32 %v3431, %v3432
        %v3434 = vsel %vm359, %v3184, -inf
        %v3435 = vsel %vm359, %v3196, -inf
        %v3436 = vmax.f32 %v3434, %v3435
        %v3437 = vrot.slane %v3436, 4
        %v3438 = vmax.f32 %v3436, %v3437
        %v3439 = vrot.slane %v3438, 2
        %v3440 = vmax.f32 %v3438, %v3439
        %v3441 = vrot.slane %v3440, 1
        %v3442 = vmax.f32 %v3440, %v3441
        %v3443 = vsel %vm359, %v3117, -inf
        %v3444 = vsel %vm359, %v3121, -inf
        %v3445 = vmax.f32 %v3443, %v3444
        %v3446 = vrot.slane %v3445, 4
        %v3447 = vmax.f32 %v3445, %v3446
        %v3448 = vrot.slane %v3447, 2
        %v3449 = vmax.f32 %v3447, %v3448
        %v3450 = vrot.slane %v3449, 1
        %v3451 = vmax.f32 %v3449, %v3450
        %v3452 = vsel %vm359, %v3185, -inf
        %v3453 = vsel %vm359, %v3197, -inf
        %v3454 = vmax.f32 %v3452, %v3453
        %v3455 = vrot.slane %v3454, 4
        %v3456 = vmax.f32 %v3454, %v3455
        %v3457 = vrot.slane %v3456, 2
        %v3458 = vmax.f32 %v3456, %v3457
        %v3459 = vrot.slane %v3458, 1
        %v3460 = vmax.f32 %v3458, %v3459
        %v3461 = vsel %vm359, %v3186, -inf
        %v3462 = vsel %vm359, %v3198, -inf
        %v3463 = vmax.f32 %v3461, %v3462
        %v3464 = vrot.slane %v3463, 4
        %v3465 = vmax.f32 %v3463, %v3464
        %v3466 = vrot.slane %v3465, 2
        %v3467 = vmax.f32 %v3465, %v3466
        %v3468 = vrot.slane %v3467, 1
        %v3469 = vmax.f32 %v3467, %v3468
        %v3470 = vsel %vm359, %v3187, -inf
        %v3471 = vsel %vm359, %v3199, -inf
        %v3472 = vmax.f32 %v3470, %v3471
        %v3473 = vrot.slane %v3472, 4
        %v3474 = vmax.f32 %v3472, %v3473
        %v3475 = vrot.slane %v3474, 2
        %v3476 = vmax.f32 %v3474, %v3475
        %v3477 = vrot.slane %v3476, 1
        %v3478 = vmax.f32 %v3476, %v3477
        %v3479 = vsel %vm359, %v3118, -inf
        %v3480 = vsel %vm359, %v3122, -inf
        %v3481 = vmax.f32 %v3479, %v3480
        %v3482 = vrot.slane %v3481, 4
        %v3483 = vmax.f32 %v3481, %v3482
        %v3484 = vrot.slane %v3483, 2
        %v3485 = vmax.f32 %v3483, %v3484
        %v3486 = vrot.slane %v3485, 1
        %v3487 = vmax.f32 %v3485, %v3486
        %v3488 = vsel %vm359, %v3188, -inf
        %v3489 = vsel %vm359, %v3200, -inf
        %v3490 = vmax.f32 %v3488, %v3489
        %v3491 = vrot.slane %v3490, 4
        %v3492 = vmax.f32 %v3490, %v3491
        %v3493 = vrot.slane %v3492, 2
        %v3494 = vmax.f32 %v3492, %v3493
        %v3495 = vrot.slane %v3494, 1
        %v3496 = vmax.f32 %v3494, %v3495
        %v3497 = vsel %vm359, %v3189, -inf
        %v3498 = vsel %vm359, %v3201, -inf
        %v3499 = vmax.f32 %v3497, %v3498
        %v3500 = vrot.slane %v3499, 4
        %v3501 = vmax.f32 %v3499, %v3500
        %v3502 = vrot.slane %v3501, 2
        %v3503 = vmax.f32 %v3501, %v3502
        %v3504 = vrot.slane %v3503, 1
        %v3505 = vmax.f32 %v3503, %v3504
        %v3506 = vsel %vm359, %v3190, -inf
        %v3507 = vsel %vm359, %v3202, -inf
        %v3508 = vmax.f32 %v3506, %v3507
        %v3509 = vrot.slane %v3508, 4
        %v3510 = vmax.f32 %v3508, %v3509
        %v3511 = vrot.slane %v3510, 2
        %v3512 = vmax.f32 %v3510, %v3511
        %v3513 = vrot.slane %v3512, 1
        %v3514 = vmax.f32 %v3512, %v3513
        %v3515 = vsel %vm359, %v3123, -inf
        %v3516 = vsel %vm359, %v3127, -inf
        %v3517 = vmax.f32 %v3515, %v3516
        %v3518 = vrot.slane %v3517, 4
        %v3519 = vmax.f32 %v3517, %v3518
        %v3520 = vrot.slane %v3519, 2
        %v3521 = vmax.f32 %v3519, %v3520
        %v3522 = vrot.slane %v3521, 1
        %v3523 = vmax.f32 %v3521, %v3522
        %v3524 = vsel %vm359, %v3203, -inf
        %v3525 = vsel %vm359, %v3215, -inf
        %v3526 = vmax.f32 %v3524, %v3525
        %v3527 = vrot.slane %v3526, 4
        %v3528 = vmax.f32 %v3526, %v3527
        %v3529 = vrot.slane %v3528, 2
        %v3530 = vmax.f32 %v3528, %v3529
        %v3531 = vrot.slane %v3530, 1
        %v3532 = vmax.f32 %v3530, %v3531
        %v3533 = vsel %vm359, %v3204, -inf
        %v3534 = vsel %vm359, %v3216, -inf
        %v3535 = vmax.f32 %v3533, %v3534
        %v3536 = vrot.slane %v3535, 4
        %v3537 = vmax.f32 %v3535, %v3536
        %v3538 = vrot.slane %v3537, 2
        %v3539 = vmax.f32 %v3537, %v3538
        %v3540 = vrot.slane %v3539, 1
        %v3541 = vmax.f32 %v3539, %v3540
        %v3542 = vsel %vm359, %v3205, -inf
        %v3543 = vsel %vm359, %v3217, -inf
        %v3544 = vmax.f32 %v3542, %v3543
        %v3545 = vrot.slane %v3544, 4
        %v3546 = vmax.f32 %v3544, %v3545
        %v3547 = vrot.slane %v3546, 2
        %v3548 = vmax.f32 %v3546, %v3547
        %v3549 = vrot.slane %v3548, 1
        %v3550 = vmax.f32 %v3548, %v3549
        %v3551 = vsel %vm359, %v3124, -inf
        %v3552 = vsel %vm359, %v3128, -inf
        %v3553 = vmax.f32 %v3551, %v3552
        %v3554 = vrot.slane %v3553, 4
        %v3555 = vmax.f32 %v3553, %v3554
        %v3556 = vrot.slane %v3555, 2
        %v3557 = vmax.f32 %v3555, %v3556
        %v3558 = vrot.slane %v3557, 1
        %v3559 = vmax.f32 %v3557, %v3558
        %v3560 = vsel %vm359, %v3206, -inf
        %v3561 = vsel %vm359, %v3218, -inf
        %v3562 = vmax.f32 %v3560, %v3561
        %v3563 = vrot.slane %v3562, 4
        %v3564 = vmax.f32 %v3562, %v3563
        %v3565 = vrot.slane %v3564, 2
        %v3566 = vmax.f32 %v3564, %v3565
        %v3567 = vrot.slane %v3566, 1
        %v3568 = vmax.f32 %v3566, %v3567
        %v3569 = vsel %vm359, %v3207, -inf
        %v3570 = vsel %vm359, %v3219, -inf
        %v3571 = vmax.f32 %v3569, %v3570
        %v3572 = vrot.slane %v3571, 4
        %v3573 = vmax.f32 %v3571, %v3572
        %v3574 = vrot.slane %v3573, 2
        %v3575 = vmax.f32 %v3573, %v3574
        %v3576 = vrot.slane %v3575, 1
        %v3577 = vmax.f32 %v3575, %v3576
        %v3578 = vsel %vm359, %v3208, -inf
        %v3579 = vsel %vm359, %v3220, -inf
        %v3580 = vmax.f32 %v3578, %v3579
        %v3581 = vrot.slane %v3580, 4
        %v3582 = vmax.f32 %v3580, %v3581
        %v3583 = vrot.slane %v3582, 2
        %v3584 = vmax.f32 %v3582, %v3583
        %v3585 = vrot.slane %v3584, 1
        %v3586 = vmax.f32 %v3584, %v3585
        %v3587 = vsel %vm359, %v3125, -inf
        %v3588 = vsel %vm359, %v3129, -inf
        %v3589 = vmax.f32 %v3587, %v3588
        %v3590 = vrot.slane %v3589, 4
        %v3591 = vmax.f32 %v3589, %v3590
        %v3592 = vrot.slane %v3591, 2
        %v3593 = vmax.f32 %v3591, %v3592
        %v3594 = vrot.slane %v3593, 1
        %v3595 = vmax.f32 %v3593, %v3594
        %v3596 = vsel %vm359, %v3209, -inf
        %v3597 = vsel %vm359, %v3221, -inf
        %v3598 = vmax.f32 %v3596, %v3597
        %v3599 = vrot.slane %v3598, 4
        %v3600 = vmax.f32 %v3598, %v3599
        %v3601 = vrot.slane %v3600, 2
        %v3602 = vmax.f32 %v3600, %v3601
        %v3603 = vrot.slane %v3602, 1
        %v3604 = vmax.f32 %v3602, %v3603
        %v3605 = vsel %vm359, %v3210, -inf
        %v3606 = vsel %vm359, %v3222, -inf
        %v3607 = vmax.f32 %v3605, %v3606
        %v3608 = vrot.slane %v3607, 4
        %v3609 = vmax.f32 %v3607, %v3608
        %v3610 = vrot.slane %v3609, 2
        %v3611 = vmax.f32 %v3609, %v3610
        %v3612 = vrot.slane %v3611, 1
        %v3613 = vmax.f32 %v3611, %v3612
        %v3614 = vsel %vm359, %v3211, -inf
        %v3615 = vsel %vm359, %v3223, -inf
        %v3616 = vmax.f32 %v3614, %v3615
        %v3617 = vrot.slane %v3616, 4
        %v3618 = vmax.f32 %v3616, %v3617
        %v3619 = vrot.slane %v3618, 2
        %v3620 = vmax.f32 %v3618, %v3619
        %v3621 = vrot.slane %v3620, 1
        %v3622 = vmax.f32 %v3620, %v3621
        %v3623 = vsel %vm359, %v3126, -inf
        %v3624 = vsel %vm359, %v3130, -inf
        %v3625 = vmax.f32 %v3623, %v3624
        %v3626 = vrot.slane %v3625, 4
        %v3627 = vmax.f32 %v3625, %v3626
        %v3628 = vrot.slane %v3627, 2
        %v3629 = vmax.f32 %v3627, %v3628
        %v3630 = vrot.slane %v3629, 1
        %v3631 = vmax.f32 %v3629, %v3630
        %v3632 = vsel %vm359, %v3212, -inf
        %v3633 = vsel %vm359, %v3224, -inf
        %v3634 = vmax.f32 %v3632, %v3633
        %v3635 = vrot.slane %v3634, 4
        %v3636 = vmax.f32 %v3634, %v3635
        %v3637 = vrot.slane %v3636, 2
        %v3638 = vmax.f32 %v3636, %v3637
        %v3639 = vrot.slane %v3638, 1
        %v3640 = vmax.f32 %v3638, %v3639
        %v3641 = vsel %vm359, %v3213, -inf
        %v3642 = vsel %vm359, %v3225, -inf
        %v3643 = vmax.f32 %v3641, %v3642
        %v3644 = vrot.slane %v3643, 4
        %v3645 = vmax.f32 %v3643, %v3644
        %v3646 = vrot.slane %v3645, 2
        %v3647 = vmax.f32 %v3645, %v3646
        %v3648 = vrot.slane %v3647, 1
        %v3649 = vmax.f32 %v3647, %v3648
        %v3650 = vsel %vm359, %v3214, -inf
        %v3651 = vsel %vm359, %v3226, -inf
        %v3652 = vmax.f32 %v3650, %v3651
        %v3653 = vrot.slane %v3652, 4
        %v3654 = vmax.f32 %v3652, %v3653
        %v3655 = vrot.slane %v3654, 2
        %v3656 = vmax.f32 %v3654, %v3655
        %v3657 = vrot.slane %v3656, 1
        %v3658 = vmax.f32 %v3656, %v3657
        %v3659 = vsel %vm359, %v3131, -inf
        %v3660 = vsel %vm359, %v3135, -inf
        %v3661 = vmax.f32 %v3659, %v3660
        %v3662 = vrot.slane %v3661, 4
        %v3663 = vmax.f32 %v3661, %v3662
        %v3664 = vrot.slane %v3663, 2
        %v3665 = vmax.f32 %v3663, %v3664
        %v3666 = vrot.slane %v3665, 1
        %v3667 = vmax.f32 %v3665, %v3666
        %v3668 = vsel %vm359, %v3227, -inf
        %v3669 = vsel %vm359, %v3239, -inf
        %v3670 = vmax.f32 %v3668, %v3669
        %v3671 = vrot.slane %v3670, 4
        %v3672 = vmax.f32 %v3670, %v3671
        %v3673 = vrot.slane %v3672, 2
        %v3674 = vmax.f32 %v3672, %v3673
        %v3675 = vrot.slane %v3674, 1
        %v3676 = vmax.f32 %v3674, %v3675
        %v3677 = vsel %vm359, %v3228, -inf
        %v3678 = vsel %vm359, %v3240, -inf
        %v3679 = vmax.f32 %v3677, %v3678
        %v3680 = vrot.slane %v3679, 4
        %v3681 = vmax.f32 %v3679, %v3680
        %v3682 = vrot.slane %v3681, 2
        %v3683 = vmax.f32 %v3681, %v3682
        %v3684 = vrot.slane %v3683, 1
        %v3685 = vmax.f32 %v3683, %v3684
        %v3686 = vsel %vm359, %v3229, -inf
        %v3687 = vsel %vm359, %v3241, -inf
        %v3688 = vmax.f32 %v3686, %v3687
        %v3689 = vrot.slane %v3688, 4
        %v3690 = vmax.f32 %v3688, %v3689
        %v3691 = vrot.slane %v3690, 2
        %v3692 = vmax.f32 %v3690, %v3691
        %v3693 = vrot.slane %v3692, 1
        %v3694 = vmax.f32 %v3692, %v3693
        %v3695 = vsel %vm359, %v3132, -inf
        %v3696 = vsel %vm359, %v3136, -inf
        %v3697 = vmax.f32 %v3695, %v3696
        %v3698 = vrot.slane %v3697, 4
        %v3699 = vmax.f32 %v3697, %v3698
        %v3700 = vrot.slane %v3699, 2
        %v3701 = vmax.f32 %v3699, %v3700
        %v3702 = vrot.slane %v3701, 1
        %v3703 = vmax.f32 %v3701, %v3702
        %v3704 = vsel %vm359, %v3230, -inf
        %v3705 = vsel %vm359, %v3242, -inf
        %v3706 = vmax.f32 %v3704, %v3705
        %v3707 = vrot.slane %v3706, 4
        %v3708 = vmax.f32 %v3706, %v3707
        %v3709 = vrot.slane %v3708, 2
        %v3710 = vmax.f32 %v3708, %v3709
        %v3711 = vrot.slane %v3710, 1
        %v3712 = vmax.f32 %v3710, %v3711
        %v3713 = vsel %vm359, %v3231, -inf
        %v3714 = vsel %vm359, %v3243, -inf
        %v3715 = vmax.f32 %v3713, %v3714
        %v3716 = vrot.slane %v3715, 4
        %v3717 = vmax.f32 %v3715, %v3716
        %v3718 = vrot.slane %v3717, 2
        %v3719 = vmax.f32 %v3717, %v3718
        %v3720 = vrot.slane %v3719, 1
        %v3721 = vmax.f32 %v3719, %v3720
        %v3722 = vsel %vm359, %v3232, -inf
        %v3723 = vsel %vm359, %v3244, -inf
        %v3724 = vmax.f32 %v3722, %v3723
        %v3725 = vrot.slane %v3724, 4
        %v3726 = vmax.f32 %v3724, %v3725
        %v3727 = vrot.slane %v3726, 2
        %v3728 = vmax.f32 %v3726, %v3727
        %v3729 = vrot.slane %v3728, 1
        %v3730 = vmax.f32 %v3728, %v3729
        %v3731 = vsel %vm359, %v3133, -inf
        %v3732 = vsel %vm359, %v3137, -inf
        %v3733 = vmax.f32 %v3731, %v3732
        %v3734 = vrot.slane %v3733, 4
        %v3735 = vmax.f32 %v3733, %v3734
        %v3736 = vrot.slane %v3735, 2
        %v3737 = vmax.f32 %v3735, %v3736
        %v3738 = vrot.slane %v3737, 1
        %v3739 = vmax.f32 %v3737, %v3738
        %v3740 = vsel %vm359, %v3233, -inf
        %v3741 = vsel %vm359, %v3245, -inf
        %v3742 = vmax.f32 %v3740, %v3741
        %v3743 = vrot.slane %v3742, 4
        %v3744 = vmax.f32 %v3742, %v3743
        %v3745 = vrot.slane %v3744, 2
        %v3746 = vmax.f32 %v3744, %v3745
        %v3747 = vrot.slane %v3746, 1
        %v3748 = vmax.f32 %v3746, %v3747
        %v3749 = vsel %vm359, %v3234, -inf
        %v3750 = vsel %vm359, %v3246, -inf
        %v3751 = vmax.f32 %v3749, %v3750
        %v3752 = vrot.slane %v3751, 4
        %v3753 = vmax.f32 %v3751, %v3752
        %v3754 = vrot.slane %v3753, 2
        %v3755 = vmax.f32 %v3753, %v3754
        %v3756 = vrot.slane %v3755, 1
        %v3757 = vmax.f32 %v3755, %v3756
        %v3758 = vsel %vm359, %v3235, -inf
        %v3759 = vsel %vm359, %v3247, -inf
        %v3760 = vmax.f32 %v3758, %v3759
        %v3761 = vrot.slane %v3760, 4
        %v3762 = vmax.f32 %v3760, %v3761
        %v3763 = vrot.slane %v3762, 2
        %v3764 = vmax.f32 %v3762, %v3763
        %v3765 = vrot.slane %v3764, 1
        %v3766 = vmax.f32 %v3764, %v3765
        %v3767 = vsel %vm359, %v3134, -inf
        %v3768 = vsel %vm359, %v3138, -inf
        %v3769 = vmax.f32 %v3767, %v3768
        %v3770 = vrot.slane %v3769, 4
        %v3771 = vmax.f32 %v3769, %v3770
        %v3772 = vrot.slane %v3771, 2
        %v3773 = vmax.f32 %v3771, %v3772
        %v3774 = vrot.slane %v3773, 1
        %v3775 = vmax.f32 %v3773, %v3774
        %v3776 = vsel %vm359, %v3236, -inf
        %v3777 = vsel %vm359, %v3248, -inf
        %v3778 = vmax.f32 %v3776, %v3777
        %v3779 = vrot.slane %v3778, 4
        %v3780 = vmax.f32 %v3778, %v3779
        %v3781 = vrot.slane %v3780, 2
        %v3782 = vmax.f32 %v3780, %v3781
        %v3783 = vrot.slane %v3782, 1
        %v3784 = vmax.f32 %v3782, %v3783
        %v3785 = vsel %vm359, %v3237, -inf
        %v3786 = vsel %vm359, %v3249, -inf
        %v3787 = vmax.f32 %v3785, %v3786
        %v3788 = vrot.slane %v3787, 4
        %v3789 = vmax.f32 %v3787, %v3788
        %v3790 = vrot.slane %v3789, 2
        %v3791 = vmax.f32 %v3789, %v3790
        %v3792 = vrot.slane %v3791, 1
        %v3793 = vmax.f32 %v3791, %v3792
        %v3794 = vsel %vm359, %v3238, -inf
        %v3795 = vsel %vm359, %v3250, -inf
        %v3796 = vmax.f32 %v3794, %v3795
        %v3797 = vrot.slane %v3796, 4
        %v3798 = vmax.f32 %v3796, %v3797
        %v3799 = vrot.slane %v3798, 2
        %v3800 = vmax.f32 %v3798, %v3799
        %v3801 = vrot.slane %v3800, 1
        %v3802 = vmax.f32 %v3800, %v3801
        %v3803 = vsel %vm359, %v3139, -inf
        %v3804 = vsel %vm359, %v3143, -inf
        %v3805 = vmax.f32 %v3803, %v3804
        %v3806 = vrot.slane %v3805, 4
        %v3807 = vmax.f32 %v3805, %v3806
        %v3808 = vrot.slane %v3807, 2
        %v3809 = vmax.f32 %v3807, %v3808
        %v3810 = vrot.slane %v3809, 1
        %v3811 = vmax.f32 %v3809, %v3810
        %v3812 = vsel %vm359, %v3251, -inf
        %v3813 = vsel %vm359, %v3263, -inf
        %v3814 = vmax.f32 %v3812, %v3813
        %v3815 = vrot.slane %v3814, 4
        %v3816 = vmax.f32 %v3814, %v3815
        %v3817 = vrot.slane %v3816, 2
        %v3818 = vmax.f32 %v3816, %v3817
        %v3819 = vrot.slane %v3818, 1
        %v3820 = vmax.f32 %v3818, %v3819
        %v3821 = vsel %vm359, %v3252, -inf
        %v3822 = vsel %vm359, %v3264, -inf
        %v3823 = vmax.f32 %v3821, %v3822
        %v3824 = vrot.slane %v3823, 4
        %v3825 = vmax.f32 %v3823, %v3824
        %v3826 = vrot.slane %v3825, 2
        %v3827 = vmax.f32 %v3825, %v3826
        %v3828 = vrot.slane %v3827, 1
        %v3829 = vmax.f32 %v3827, %v3828
        %v3830 = vsel %vm359, %v3253, -inf
        %v3831 = vsel %vm359, %v3265, -inf
        %v3832 = vmax.f32 %v3830, %v3831
        %v3833 = vrot.slane %v3832, 4
        %v3834 = vmax.f32 %v3832, %v3833
        %v3835 = vrot.slane %v3834, 2
        %v3836 = vmax.f32 %v3834, %v3835
        %v3837 = vrot.slane %v3836, 1
        %v3838 = vmax.f32 %v3836, %v3837
        %v3839 = vsel %vm359, %v3140, -inf
        %v3840 = vsel %vm359, %v3144, -inf
        %v3841 = vmax.f32 %v3839, %v3840
        %v3842 = vrot.slane %v3841, 4
        %v3843 = vmax.f32 %v3841, %v3842
        %v3844 = vrot.slane %v3843, 2
        %v3845 = vmax.f32 %v3843, %v3844
        %v3846 = vrot.slane %v3845, 1
        %v3847 = vmax.f32 %v3845, %v3846
        %v3848 = vsel %vm359, %v3254, -inf
        %v3849 = vsel %vm359, %v3266, -inf
        %v3850 = vmax.f32 %v3848, %v3849
        %v3851 = vrot.slane %v3850, 4
        %v3852 = vmax.f32 %v3850, %v3851
        %v3853 = vrot.slane %v3852, 2
        %v3854 = vmax.f32 %v3852, %v3853
        %v3855 = vrot.slane %v3854, 1
        %v3856 = vmax.f32 %v3854, %v3855
        %v3857 = vsel %vm359, %v3255, -inf
        %v3858 = vsel %vm359, %v3267, -inf
        %v3859 = vmax.f32 %v3857, %v3858
        %v3860 = vrot.slane %v3859, 4
        %v3861 = vmax.f32 %v3859, %v3860
        %v3862 = vrot.slane %v3861, 2
        %v3863 = vmax.f32 %v3861, %v3862
        %v3864 = vrot.slane %v3863, 1
        %v3865 = vmax.f32 %v3863, %v3864
        %v3866 = vsel %vm359, %v3256, -inf
        %v3867 = vsel %vm359, %v3268, -inf
        %v3868 = vmax.f32 %v3866, %v3867
        %v3869 = vrot.slane %v3868, 4
        %v3870 = vmax.f32 %v3868, %v3869
        %v3871 = vrot.slane %v3870, 2
        %v3872 = vmax.f32 %v3870, %v3871
        %v3873 = vrot.slane %v3872, 1
        %v3874 = vmax.f32 %v3872, %v3873
        %v3875 = vsel %vm359, %v3141, -inf
        %v3876 = vsel %vm359, %v3145, -inf
        %v3877 = vmax.f32 %v3875, %v3876
        %v3878 = vrot.slane %v3877, 4
        %v3879 = vmax.f32 %v3877, %v3878
        %v3880 = vrot.slane %v3879, 2
        %v3881 = vmax.f32 %v3879, %v3880
        %v3882 = vrot.slane %v3881, 1
        %v3883 = vmax.f32 %v3881, %v3882
        %v3884 = vsel %vm359, %v3257, -inf
        %v3885 = vsel %vm359, %v3269, -inf
        %v3886 = vmax.f32 %v3884, %v3885
        %v3887 = vrot.slane %v3886, 4
        %v3888 = vmax.f32 %v3886, %v3887
        %v3889 = vrot.slane %v3888, 2
        %v3890 = vmax.f32 %v3888, %v3889
        %v3891 = vrot.slane %v3890, 1
        %v3892 = vmax.f32 %v3890, %v3891
        %v3893 = vsel %vm359, %v3258, -inf
        %v3894 = vsel %vm359, %v3270, -inf
        %v3895 = vmax.f32 %v3893, %v3894
        %v3896 = vrot.slane %v3895, 4
        %v3897 = vmax.f32 %v3895, %v3896
        %v3898 = vrot.slane %v3897, 2
        %v3899 = vmax.f32 %v3897, %v3898
        %v3900 = vrot.slane %v3899, 1
        %v3901 = vmax.f32 %v3899, %v3900
        %v3902 = vsel %vm359, %v3259, -inf
        %v3903 = vsel %vm359, %v3271, -inf
        %v3904 = vmax.f32 %v3902, %v3903
        %v3905 = vrot.slane %v3904, 4
        %v3906 = vmax.f32 %v3904, %v3905
        %v3907 = vrot.slane %v3906, 2
        %v3908 = vmax.f32 %v3906, %v3907
        %v3909 = vrot.slane %v3908, 1
        %v3910 = vmax.f32 %v3908, %v3909
        %v3911 = vsel %vm359, %v3142, -inf
        %v3912 = vsel %vm359, %v3146, -inf
        %v3913 = vmax.f32 %v3911, %v3912
        %v3914 = vrot.slane %v3913, 4
        %v3915 = vmax.f32 %v3913, %v3914
        %v3916 = vrot.slane %v3915, 2
        %v3917 = vmax.f32 %v3915, %v3916
        %v3918 = vrot.slane %v3917, 1
        %v3919 = vmax.f32 %v3917, %v3918
        %v3920 = vsel %vm359, %v3260, -inf
        %v3921 = vsel %vm359, %v3272, -inf
        %v3922 = vmax.f32 %v3920, %v3921
        %v3923 = vrot.slane %v3922, 4
        %v3924 = vmax.f32 %v3922, %v3923
        %v3925 = vrot.slane %v3924, 2
        %v3926 = vmax.f32 %v3924, %v3925
        %v3927 = vrot.slane %v3926, 1
        %v3928 = vmax.f32 %v3926, %v3927
        %v3929 = vsel %vm359, %v3261, -inf
        %v3930 = vsel %vm359, %v3273, -inf
        %v3931 = vmax.f32 %v3929, %v3930
        %v3932 = vrot.slane %v3931, 4
        %v3933 = vmax.f32 %v3931, %v3932
        %v3934 = vrot.slane %v3933, 2
        %v3935 = vmax.f32 %v3933, %v3934
        %v3936 = vrot.slane %v3935, 1
        %v3937 = vmax.f32 %v3935, %v3936
        %v3938 = vsel %vm359, %v3262, -inf
        %v3939 = vsel %vm359, %v3274, -inf
        %v3940 = vmax.f32 %v3938, %v3939
        %v3941 = vrot.slane %v3940, 4
        %v3942 = vmax.f32 %v3940, %v3941
        %v3943 = vrot.slane %v3942, 2
        %v3944 = vmax.f32 %v3942, %v3943
        %v3945 = vrot.slane %v3944, 1
        %v3946 = vmax.f32 %v3944, %v3945
        %v4011 = vsel %vm1562, %v3388, %v3379
        %v4012 = vsel %vm1564, %v3397, %v4011
        %v4013 = vsel %vm1566, %v3406, %v4012
        %v4014 = vsel %vm1568, %v3415, %v4013
        %v4015 = vsel %vm1570, %v3424, %v4014
        %v4016 = vsel %vm1572, %v3433, %v4015
        %v4017 = vsel %vm1574, %v3442, %v4016
        %v4018 = vsel %vm1562, %v3460, %v3451
        %v4019 = vsel %vm1564, %v3469, %v4018
        %v4020 = vsel %vm1566, %v3478, %v4019
        %v4021 = vsel %vm1568, %v3487, %v4020
        %v4022 = vsel %vm1570, %v3496, %v4021
        %v4023 = vsel %vm1572, %v3505, %v4022
        %v4024 = vsel %vm1574, %v3514, %v4023
        %v4025 = vsel %vm1562, %v3532, %v3523
        %v4026 = vsel %vm1564, %v3541, %v4025
        %v4027 = vsel %vm1566, %v3550, %v4026
        %v4028 = vsel %vm1568, %v3559, %v4027
        %v4029 = vsel %vm1570, %v3568, %v4028
        %v4030 = vsel %vm1572, %v3577, %v4029
        %v4031 = vsel %vm1574, %v3586, %v4030
        %v4032 = vsel %vm1562, %v3604, %v3595
        %v4033 = vsel %vm1564, %v3613, %v4032
        %v4034 = vsel %vm1566, %v3622, %v4033
        %v4035 = vsel %vm1568, %v3631, %v4034
        %v4036 = vsel %vm1570, %v3640, %v4035
        %v4037 = vsel %vm1572, %v3649, %v4036
        %v4038 = vsel %vm1574, %v3658, %v4037
        %v4039 = vsel %vm1562, %v3676, %v3667
        %v4040 = vsel %vm1564, %v3685, %v4039
        %v4041 = vsel %vm1566, %v3694, %v4040
        %v4042 = vsel %vm1568, %v3703, %v4041
        %v4043 = vsel %vm1570, %v3712, %v4042
        %v4044 = vsel %vm1572, %v3721, %v4043
        %v4045 = vsel %vm1574, %v3730, %v4044
        %v4046 = vsel %vm1562, %v3748, %v3739
        %v4047 = vsel %vm1564, %v3757, %v4046
        %v4048 = vsel %vm1566, %v3766, %v4047
        %v4049 = vsel %vm1568, %v3775, %v4048
        %v4050 = vsel %vm1570, %v3784, %v4049
        %v4051 = vsel %vm1572, %v3793, %v4050
        %v4052 = vsel %vm1574, %v3802, %v4051
        %v4053 = vsel %vm1562, %v3820, %v3811
        %v4054 = vsel %vm1564, %v3829, %v4053
        %v4055 = vsel %vm1566, %v3838, %v4054
        %v4056 = vsel %vm1568, %v3847, %v4055
        %v4057 = vsel %vm1570, %v3856, %v4056
        %v4058 = vsel %vm1572, %v3865, %v4057
        %v4059 = vsel %vm1574, %v3874, %v4058
        %v4060 = vsel %vm1562, %v3892, %v3883
        %v4061 = vsel %vm1564, %v3901, %v4060
        %v4062 = vsel %vm1566, %v3910, %v4061
        %v4063 = vsel %vm1568, %v3919, %v4062
        %v4064 = vsel %vm1570, %v3928, %v4063
        %v4065 = vsel %vm1572, %v3937, %v4064
        %v4066 = vsel %vm1574, %v3946, %v4065
        %s4075 = scalar_lea.vmem [#allocation2], 216
        %4076 = vst.msk [vmem:[%s4075 + $0x1] sm:$0xff] %vm356, %v4017
        %4077 = vst.msk [vmem:[%s4075 + $0x9] sm:$0xff] %vm356, %v4024
        %4078 = vst.msk [vmem:[%s4075 + $0x19] sm:$0xff] %vm356, %v4031
        %4079 = vst.msk [vmem:[%s4075 + $0x21] sm:$0xff] %vm356, %v4038
        %4080 = vst.msk [vmem:[%s4075 + $0x31] sm:$0xff] %vm356, %v4045
        %4081 = vst.msk [vmem:[%s4075 + $0x39] sm:$0xff] %vm356, %v4052
        %4082 = vst.msk [vmem:[%s4075 + $0x49] sm:$0xff] %vm356, %v4059
        %4083 = vst.msk [vmem:[%s4075 + $0x51] sm:$0xff] %vm356, %v4066
        %v4084 = vld [vmem:[%s350 + $0x300] sm:$0xff]
        %v4085 = vld [vmem:[%s350 + $0x308] sm:$0xff]
        %v4086 = vld [vmem:[%s350 + $0x310] sm:$0xff]
        %v4087 = vld [vmem:[%s350 + $0x318] sm:$0xff]
        %v4088 = vld [vmem:[%s350 + $0x320] sm:$0xff]
        %v4089 = vld [vmem:[%s350 + $0x328] sm:$0xff]
        %v4090 = vld [vmem:[%s350 + $0x330] sm:$0xff]
        %v4091 = vld [vmem:[%s350 + $0x338] sm:$0xff]
        %v4092 = vld [vmem:[%s350 + $0x340] sm:$0xff]
        %v4093 = vld [vmem:[%s350 + $0x348] sm:$0xff]
        %v4094 = vld [vmem:[%s350 + $0x350] sm:$0xff]
        %v4095 = vld [vmem:[%s350 + $0x358] sm:$0xff]
        %v4096 = vld [vmem:[%s350 + $0x360] sm:$0xff]
        %v4097 = vld [vmem:[%s350 + $0x368] sm:$0xff]
        %v4098 = vld [vmem:[%s350 + $0x370] sm:$0xff]
        %v4099 = vld [vmem:[%s350 + $0x378] sm:$0xff]
        %v4100 = vld [vmem:[%s350 + $0x380] sm:$0xff]
        %v4101 = vld [vmem:[%s350 + $0x388] sm:$0xff]
        %v4102 = vld [vmem:[%s350 + $0x390] sm:$0xff]
        %v4103 = vld [vmem:[%s350 + $0x398] sm:$0xff]
        %v4104 = vld [vmem:[%s350 + $0x3a0] sm:$0xff]
        %v4105 = vld [vmem:[%s350 + $0x3a8] sm:$0xff]
        %v4106 = vld [vmem:[%s350 + $0x3b0] sm:$0xff]
        %v4107 = vld [vmem:[%s350 + $0x3b8] sm:$0xff]
        %v4108 = vld [vmem:[%s350 + $0x3c0] sm:$0xff]
        %v4109 = vld [vmem:[%s350 + $0x3c8] sm:$0xff]
        %v4110 = vld [vmem:[%s350 + $0x3d0] sm:$0xff]
        %v4111 = vld [vmem:[%s350 + $0x3d8] sm:$0xff]
        %v4112 = vld [vmem:[%s350 + $0x3e0] sm:$0xff]
        %v4113 = vld [vmem:[%s350 + $0x3e8] sm:$0xff]
        %v4114 = vld [vmem:[%s350 + $0x3f0] sm:$0xff]
        %v4115 = vld [vmem:[%s350 + $0x3f8] sm:$0xff]
        %v4116 = vld [vmem:[#allocation4] sm:$0xff]
        %v4117 = vld [vmem:[#allocation4 + $0x8] sm:$0xff]
        %v4118 = vld [vmem:[#allocation4 + $0x10] sm:$0xff]
        %v4119 = vld [vmem:[#allocation4 + $0x18] sm:$0x7]
        %v4120 = vld [vmem:[#allocation6] sm:$0x1]
        %v4122 = vperm.slane %v4120, 0
        %v4125 = vsel %vm452, %v4084, 0
        %v4128 = vsel %vm452, %v4085, 0
        %v4131 = vsel %vm452, %v4086, 0
        %v4134 = vsel %vm452, %v4087, 0
        %v4137 = vsel %vm452, %v4088, 0
        %v4140 = vsel %vm452, %v4089, 0
        %v4143 = vsel %vm452, %v4090, 0
        %v4146 = vsel %vm452, %v4091, 0
        %v4149 = vsel %vm452, %v4092, 0
        %v4152 = vsel %vm452, %v4093, 0
        %v4155 = vsel %vm452, %v4094, 0
        %v4158 = vsel %vm452, %v4095, 0
        %v4161 = vsel %vm452, %v4096, 0
        %v4164 = vsel %vm452, %v4097, 0
        %v4167 = vsel %vm452, %v4098, 0
        %v4170 = vsel %vm452, %v4099, 0
        %v4173 = vsel %vm452, %v4100, 0
        %v4176 = vsel %vm452, %v4101, 0
        %v4179 = vsel %vm452, %v4102, 0
        %v4182 = vsel %vm452, %v4103, 0
        %v4185 = vsel %vm452, %v4104, 0
        %v4188 = vsel %vm452, %v4105, 0
        %v4191 = vsel %vm452, %v4106, 0
        %v4194 = vsel %vm452, %v4107, 0
        %v4197 = vsel %vm452, %v4108, 0
        %v4200 = vsel %vm452, %v4109, 0
        %v4203 = vsel %vm452, %v4110, 0
        %v4206 = vsel %vm452, %v4111, 0
        %v4209 = vsel %vm452, %v4112, 0
        %v4212 = vsel %vm452, %v4113, 0
        %v4215 = vsel %vm452, %v4114, 0
        %v4218 = vsel %vm452, %v4115, 0
        %v4221 = vsel %vm549, %v4119, 0
        %4223 = vmatpush.msra.mxu0 0.0
        %4224 = vmatpush.msra.mxu0 0.0
        %4225 = vmatpush.msra.mxu0 0.0
        %4226 = vmatpush.msra.mxu0 0.0
        %4227 = vmatpush.msra.mxu0 0.0
        %4228 = vmatpush.msra.mxu0 0.0
        %4229 = vmatpush.msra.mxu0 0.0
        %4230 = vmatpush.msra.mxu0 0.0
        %4231 = vmatpush.msra.mxu0 0.0
        %4232 = vmatpush.msra.mxu0 0.0
        %4233 = vmatpush.msra.mxu0 0.0
        %4234 = vmatpush.msra.mxu0 0.0
        %4235 = vmatpush.msra.mxu0 %v4221
        %4236 = vmatpush.msra.mxu0 %v4118
        %4237 = vmatpush.msra.mxu0 %v4117
        %4238 = vmatpush.msra.mxu0 %v4116
        %4239 = vmatmul.f32.gmra.mxu0 %v4125
        %v4240 = vpop.f32.mrf.mxu0
        %v4241 = vadd.f32 %v4122, %v4240
        %4242 = vmatmul.f32.gmra.mxu0 %v4128
        %v4243 = vpop.f32.mrf.mxu0
        %v4244 = vadd.f32 %v4122, %v4243
        %4245 = vmatmul.f32.gmra.mxu0 %v4131
        %v4246 = vpop.f32.mrf.mxu0
        %v4247 = vadd.f32 %v4122, %v4246
        %4248 = vmatmul.f32.gmra.mxu0 %v4134
        %v4249 = vpop.f32.mrf.mxu0
        %v4250 = vadd.f32 %v4122, %v4249
        %4251 = vmatmul.f32.gmra.mxu0 %v4137
        %v4252 = vpop.f32.mrf.mxu0
        %v4253 = vadd.f32 %v4122, %v4252
        %4254 = vmatmul.f32.gmra.mxu0 %v4140
        %v4255 = vpop.f32.mrf.mxu0
        %v4256 = vadd.f32 %v4122, %v4255
        %4257 = vmatmul.f32.gmra.mxu0 %v4143
        %v4258 = vpop.f32.mrf.mxu0
        %v4259 = vadd.f32 %v4122, %v4258
        %4260 = vmatmul.f32.gmra.mxu0 %v4146
        %v4261 = vpop.f32.mrf.mxu0
        %v4262 = vadd.f32 %v4122, %v4261
        %4263 = vmatmul.f32.gmra.mxu0 %v4149
        %v4264 = vpop.f32.mrf.mxu0
        %v4265 = vadd.f32 %v4122, %v4264
        %4266 = vmatmul.f32.gmra.mxu0 %v4152
        %v4267 = vpop.f32.mrf.mxu0
        %v4268 = vadd.f32 %v4122, %v4267
        %4269 = vmatmul.f32.gmra.mxu0 %v4155
        %v4270 = vpop.f32.mrf.mxu0
        %v4271 = vadd.f32 %v4122, %v4270
        %4272 = vmatmul.f32.gmra.mxu0 %v4158
        %v4273 = vpop.f32.mrf.mxu0
        %v4274 = vadd.f32 %v4122, %v4273
        %4275 = vmatmul.f32.gmra.mxu0 %v4161
        %v4276 = vpop.f32.mrf.mxu0
        %v4277 = vadd.f32 %v4122, %v4276
        %4278 = vmatmul.f32.gmra.mxu0 %v4164
        %v4279 = vpop.f32.mrf.mxu0
        %v4280 = vadd.f32 %v4122, %v4279
        %4281 = vmatmul.f32.gmra.mxu0 %v4167
        %v4282 = vpop.f32.mrf.mxu0
        %v4283 = vadd.f32 %v4122, %v4282
        %4284 = vmatmul.f32.gmra.mxu0 %v4170
        %v4285 = vpop.f32.mrf.mxu0
        %v4286 = vadd.f32 %v4122, %v4285
        %4287 = vmatmul.f32.gmra.mxu0 %v4173
        %v4288 = vpop.f32.mrf.mxu0
        %v4289 = vadd.f32 %v4122, %v4288
        %4290 = vmatmul.f32.gmra.mxu0 %v4176
        %v4291 = vpop.f32.mrf.mxu0
        %v4292 = vadd.f32 %v4122, %v4291
        %4293 = vmatmul.f32.gmra.mxu0 %v4179
        %v4294 = vpop.f32.mrf.mxu0
        %v4295 = vadd.f32 %v4122, %v4294
        %4296 = vmatmul.f32.gmra.mxu0 %v4182
        %v4297 = vpop.f32.mrf.mxu0
        %v4298 = vadd.f32 %v4122, %v4297
        %4299 = vmatmul.f32.gmra.mxu0 %v4185
        %v4300 = vpop.f32.mrf.mxu0
        %v4301 = vadd.f32 %v4122, %v4300
        %4302 = vmatmul.f32.gmra.mxu0 %v4188
        %v4303 = vpop.f32.mrf.mxu0
        %v4304 = vadd.f32 %v4122, %v4303
        %4305 = vmatmul.f32.gmra.mxu0 %v4191
        %v4306 = vpop.f32.mrf.mxu0
        %v4307 = vadd.f32 %v4122, %v4306
        %4308 = vmatmul.f32.gmra.mxu0 %v4194
        %v4309 = vpop.f32.mrf.mxu0
        %v4310 = vadd.f32 %v4122, %v4309
        %4311 = vmatmul.f32.gmra.mxu0 %v4197
        %v4312 = vpop.f32.mrf.mxu0
        %v4313 = vadd.f32 %v4122, %v4312
        %4314 = vmatmul.f32.gmra.mxu0 %v4200
        %v4315 = vpop.f32.mrf.mxu0
        %v4316 = vadd.f32 %v4122, %v4315
        %4317 = vmatmul.f32.gmra.mxu0 %v4203
        %v4318 = vpop.f32.mrf.mxu0
        %v4319 = vadd.f32 %v4122, %v4318
        %4320 = vmatmul.f32.gmra.mxu0 %v4206
        %v4321 = vpop.f32.mrf.mxu0
        %v4322 = vadd.f32 %v4122, %v4321
        %4323 = vmatmul.f32.gmra.mxu0 %v4209
        %v4324 = vpop.f32.mrf.mxu0
        %v4325 = vadd.f32 %v4122, %v4324
        %4326 = vmatmul.f32.gmra.mxu0 %v4212
        %v4327 = vpop.f32.mrf.mxu0
        %v4328 = vadd.f32 %v4122, %v4327
        %4329 = vmatmul.f32.gmra.mxu0 %v4215
        %v4330 = vpop.f32.mrf.mxu0
        %v4331 = vadd.f32 %v4122, %v4330
        %4332 = vmatmul.f32.gmra.mxu0 %v4218
        %v4333 = vpop.f32.mrf.mxu0
        %v4334 = vadd.f32 %v4122, %v4333
        %4335 = vdwg.mxu0
        %v4336 = vmax.f32 %v4241, 0.0
        %v4337 = vmax.f32 %v4244, 0.0
        %v4338 = vmax.f32 %v4247, 0.0
        %v4339 = vmax.f32 %v4250, 0.0
        %v4340 = vmax.f32 %v4253, 0.0
        %v4341 = vmax.f32 %v4256, 0.0
        %v4342 = vmax.f32 %v4259, 0.0
        %v4343 = vmax.f32 %v4262, 0.0
        %v4344 = vmax.f32 %v4265, 0.0
        %v4345 = vmax.f32 %v4268, 0.0
        %v4346 = vmax.f32 %v4271, 0.0
        %v4347 = vmax.f32 %v4274, 0.0
        %v4348 = vmax.f32 %v4277, 0.0
        %v4349 = vmax.f32 %v4280, 0.0
        %v4350 = vmax.f32 %v4283, 0.0
        %v4351 = vmax.f32 %v4286, 0.0
        %v4352 = vmax.f32 %v4289, 0.0
        %v4353 = vmax.f32 %v4292, 0.0
        %v4354 = vmax.f32 %v4295, 0.0
        %v4355 = vmax.f32 %v4298, 0.0
        %v4356 = vmax.f32 %v4301, 0.0
        %v4357 = vmax.f32 %v4304, 0.0
        %v4358 = vmax.f32 %v4307, 0.0
        %v4359 = vmax.f32 %v4310, 0.0
        %v4360 = vmax.f32 %v4313, 0.0
        %v4361 = vmax.f32 %v4316, 0.0
        %v4362 = vmax.f32 %v4319, 0.0
        %v4363 = vmax.f32 %v4322, 0.0
        %v4364 = vmax.f32 %v4325, 0.0
        %v4365 = vmax.f32 %v4328, 0.0
        %v4366 = vmax.f32 %v4331, 0.0
        %v4367 = vmax.f32 %v4334, 0.0
        %v4400 = vrot.slane %v4336, 2
        %v4401 = vrot.slane %v4336, 4
        %v4402 = vrot.slane %v4336, 6
        %v4403 = vrot.slane %v4337, 2
        %v4404 = vrot.slane %v4337, 4
        %v4405 = vrot.slane %v4337, 6
        %v4406 = vrot.slane %v4338, 2
        %v4407 = vrot.slane %v4338, 4
        %v4408 = vrot.slane %v4338, 6
        %v4409 = vrot.slane %v4339, 2
        %v4410 = vrot.slane %v4339, 4
        %v4411 = vrot.slane %v4339, 6
        %v4412 = vrot.slane %v4340, 2
        %v4413 = vrot.slane %v4340, 4
        %v4414 = vrot.slane %v4340, 6
        %v4415 = vrot.slane %v4341, 2
        %v4416 = vrot.slane %v4341, 4
        %v4417 = vrot.slane %v4341, 6
        %v4418 = vrot.slane %v4342, 2
        %v4419 = vrot.slane %v4342, 4
        %v4420 = vrot.slane %v4342, 6
        %v4421 = vrot.slane %v4343, 2
        %v4422 = vrot.slane %v4343, 4
        %v4423 = vrot.slane %v4343, 6
        %v4424 = vrot.slane %v4344, 2
        %v4425 = vrot.slane %v4344, 4
        %v4426 = vrot.slane %v4344, 6
        %v4427 = vrot.slane %v4345, 2
        %v4428 = vrot.slane %v4345, 4
        %v4429 = vrot.slane %v4345, 6
        %v4430 = vrot.slane %v4346, 2
        %v4431 = vrot.slane %v4346, 4
        %v4432 = vrot.slane %v4346, 6
        %v4433 = vrot.slane %v4347, 2
        %v4434 = vrot.slane %v4347, 4
        %v4435 = vrot.slane %v4347, 6
        %v4436 = vrot.slane %v4348, 2
        %v4437 = vrot.slane %v4348, 4
        %v4438 = vrot.slane %v4348, 6
        %v4439 = vrot.slane %v4349, 2
        %v4440 = vrot.slane %v4349, 4
        %v4441 = vrot.slane %v4349, 6
        %v4442 = vrot.slane %v4350, 2
        %v4443 = vrot.slane %v4350, 4
        %v4444 = vrot.slane %v4350, 6
        %v4445 = vrot.slane %v4351, 2
        %v4446 = vrot.slane %v4351, 4
        %v4447 = vrot.slane %v4351, 6
        %v4448 = vrot.slane %v4352, 2
        %v4449 = vrot.slane %v4352, 4
        %v4450 = vrot.slane %v4352, 6
        %v4451 = vrot.slane %v4353, 2
        %v4452 = vrot.slane %v4353, 4
        %v4453 = vrot.slane %v4353, 6
        %v4454 = vrot.slane %v4354, 2
        %v4455 = vrot.slane %v4354, 4
        %v4456 = vrot.slane %v4354, 6
        %v4457 = vrot.slane %v4355, 2
        %v4458 = vrot.slane %v4355, 4
        %v4459 = vrot.slane %v4355, 6
        %v4460 = vrot.slane %v4356, 2
        %v4461 = vrot.slane %v4356, 4
        %v4462 = vrot.slane %v4356, 6
        %v4463 = vrot.slane %v4357, 2
        %v4464 = vrot.slane %v4357, 4
        %v4465 = vrot.slane %v4357, 6
        %v4466 = vrot.slane %v4358, 2
        %v4467 = vrot.slane %v4358, 4
        %v4468 = vrot.slane %v4358, 6
        %v4469 = vrot.slane %v4359, 2
        %v4470 = vrot.slane %v4359, 4
        %v4471 = vrot.slane %v4359, 6
        %v4472 = vrot.slane %v4360, 2
        %v4473 = vrot.slane %v4360, 4
        %v4474 = vrot.slane %v4360, 6
        %v4475 = vrot.slane %v4361, 2
        %v4476 = vrot.slane %v4361, 4
        %v4477 = vrot.slane %v4361, 6
        %v4478 = vrot.slane %v4362, 2
        %v4479 = vrot.slane %v4362, 4
        %v4480 = vrot.slane %v4362, 6
        %v4481 = vrot.slane %v4363, 2
        %v4482 = vrot.slane %v4363, 4
        %v4483 = vrot.slane %v4363, 6
        %v4484 = vrot.slane %v4364, 2
        %v4485 = vrot.slane %v4364, 4
        %v4486 = vrot.slane %v4364, 6
        %v4487 = vrot.slane %v4365, 2
        %v4488 = vrot.slane %v4365, 4
        %v4489 = vrot.slane %v4365, 6
        %v4490 = vrot.slane %v4366, 2
        %v4491 = vrot.slane %v4366, 4
        %v4492 = vrot.slane %v4366, 6
        %v4493 = vrot.slane %v4367, 2
        %v4494 = vrot.slane %v4367, 4
        %v4495 = vrot.slane %v4367, 6
        %v4592 = vsel %vm359, %v4336, -inf
        %v4593 = vsel %vm359, %v4340, -inf
        %v4594 = vmax.f32 %v4592, %v4593
        %v4595 = vrot.slane %v4594, 4
        %v4596 = vmax.f32 %v4594, %v4595
        %v4597 = vrot.slane %v4596, 2
        %v4598 = vmax.f32 %v4596, %v4597
        %v4599 = vrot.slane %v4598, 1
        %v4600 = vmax.f32 %v4598, %v4599
        %v4601 = vsel %vm359, %v4400, -inf
        %v4602 = vsel %vm359, %v4412, -inf
        %v4603 = vmax.f32 %v4601, %v4602
        %v4604 = vrot.slane %v4603, 4
        %v4605 = vmax.f32 %v4603, %v4604
        %v4606 = vrot.slane %v4605, 2
        %v4607 = vmax.f32 %v4605, %v4606
        %v4608 = vrot.slane %v4607, 1
        %v4609 = vmax.f32 %v4607, %v4608
        %v4610 = vsel %vm359, %v4401, -inf
        %v4611 = vsel %vm359, %v4413, -inf
        %v4612 = vmax.f32 %v4610, %v4611
        %v4613 = vrot.slane %v4612, 4
        %v4614 = vmax.f32 %v4612, %v4613
        %v4615 = vrot.slane %v4614, 2
        %v4616 = vmax.f32 %v4614, %v4615
        %v4617 = vrot.slane %v4616, 1
        %v4618 = vmax.f32 %v4616, %v4617
        %v4619 = vsel %vm359, %v4402, -inf
        %v4620 = vsel %vm359, %v4414, -inf
        %v4621 = vmax.f32 %v4619, %v4620
        %v4622 = vrot.slane %v4621, 4
        %v4623 = vmax.f32 %v4621, %v4622
        %v4624 = vrot.slane %v4623, 2
        %v4625 = vmax.f32 %v4623, %v4624
        %v4626 = vrot.slane %v4625, 1
        %v4627 = vmax.f32 %v4625, %v4626
        %v4628 = vsel %vm359, %v4337, -inf
        %v4629 = vsel %vm359, %v4341, -inf
        %v4630 = vmax.f32 %v4628, %v4629
        %v4631 = vrot.slane %v4630, 4
        %v4632 = vmax.f32 %v4630, %v4631
        %v4633 = vrot.slane %v4632, 2
        %v4634 = vmax.f32 %v4632, %v4633
        %v4635 = vrot.slane %v4634, 1
        %v4636 = vmax.f32 %v4634, %v4635
        %v4637 = vsel %vm359, %v4403, -inf
        %v4638 = vsel %vm359, %v4415, -inf
        %v4639 = vmax.f32 %v4637, %v4638
        %v4640 = vrot.slane %v4639, 4
        %v4641 = vmax.f32 %v4639, %v4640
        %v4642 = vrot.slane %v4641, 2
        %v4643 = vmax.f32 %v4641, %v4642
        %v4644 = vrot.slane %v4643, 1
        %v4645 = vmax.f32 %v4643, %v4644
        %v4646 = vsel %vm359, %v4404, -inf
        %v4647 = vsel %vm359, %v4416, -inf
        %v4648 = vmax.f32 %v4646, %v4647
        %v4649 = vrot.slane %v4648, 4
        %v4650 = vmax.f32 %v4648, %v4649
        %v4651 = vrot.slane %v4650, 2
        %v4652 = vmax.f32 %v4650, %v4651
        %v4653 = vrot.slane %v4652, 1
        %v4654 = vmax.f32 %v4652, %v4653
        %v4655 = vsel %vm359, %v4405, -inf
        %v4656 = vsel %vm359, %v4417, -inf
        %v4657 = vmax.f32 %v4655, %v4656
        %v4658 = vrot.slane %v4657, 4
        %v4659 = vmax.f32 %v4657, %v4658
        %v4660 = vrot.slane %v4659, 2
        %v4661 = vmax.f32 %v4659, %v4660
        %v4662 = vrot.slane %v4661, 1
        %v4663 = vmax.f32 %v4661, %v4662
        %v4664 = vsel %vm359, %v4338, -inf
        %v4665 = vsel %vm359, %v4342, -inf
        %v4666 = vmax.f32 %v4664, %v4665
        %v4667 = vrot.slane %v4666, 4
        %v4668 = vmax.f32 %v4666, %v4667
        %v4669 = vrot.slane %v4668, 2
        %v4670 = vmax.f32 %v4668, %v4669
        %v4671 = vrot.slane %v4670, 1
        %v4672 = vmax.f32 %v4670, %v4671
        %v4673 = vsel %vm359, %v4406, -inf
        %v4674 = vsel %vm359, %v4418, -inf
        %v4675 = vmax.f32 %v4673, %v4674
        %v4676 = vrot.slane %v4675, 4
        %v4677 = vmax.f32 %v4675, %v4676
        %v4678 = vrot.slane %v4677, 2
        %v4679 = vmax.f32 %v4677, %v4678
        %v4680 = vrot.slane %v4679, 1
        %v4681 = vmax.f32 %v4679, %v4680
        %v4682 = vsel %vm359, %v4407, -inf
        %v4683 = vsel %vm359, %v4419, -inf
        %v4684 = vmax.f32 %v4682, %v4683
        %v4685 = vrot.slane %v4684, 4
        %v4686 = vmax.f32 %v4684, %v4685
        %v4687 = vrot.slane %v4686, 2
        %v4688 = vmax.f32 %v4686, %v4687
        %v4689 = vrot.slane %v4688, 1
        %v4690 = vmax.f32 %v4688, %v4689
        %v4691 = vsel %vm359, %v4408, -inf
        %v4692 = vsel %vm359, %v4420, -inf
        %v4693 = vmax.f32 %v4691, %v4692
        %v4694 = vrot.slane %v4693, 4
        %v4695 = vmax.f32 %v4693, %v4694
        %v4696 = vrot.slane %v4695, 2
        %v4697 = vmax.f32 %v4695, %v4696
        %v4698 = vrot.slane %v4697, 1
        %v4699 = vmax.f32 %v4697, %v4698
        %v4700 = vsel %vm359, %v4339, -inf
        %v4701 = vsel %vm359, %v4343, -inf
        %v4702 = vmax.f32 %v4700, %v4701
        %v4703 = vrot.slane %v4702, 4
        %v4704 = vmax.f32 %v4702, %v4703
        %v4705 = vrot.slane %v4704, 2
        %v4706 = vmax.f32 %v4704, %v4705
        %v4707 = vrot.slane %v4706, 1
        %v4708 = vmax.f32 %v4706, %v4707
        %v4709 = vsel %vm359, %v4409, -inf
        %v4710 = vsel %vm359, %v4421, -inf
        %v4711 = vmax.f32 %v4709, %v4710
        %v4712 = vrot.slane %v4711, 4
        %v4713 = vmax.f32 %v4711, %v4712
        %v4714 = vrot.slane %v4713, 2
        %v4715 = vmax.f32 %v4713, %v4714
        %v4716 = vrot.slane %v4715, 1
        %v4717 = vmax.f32 %v4715, %v4716
        %v4718 = vsel %vm359, %v4410, -inf
        %v4719 = vsel %vm359, %v4422, -inf
        %v4720 = vmax.f32 %v4718, %v4719
        %v4721 = vrot.slane %v4720, 4
        %v4722 = vmax.f32 %v4720, %v4721
        %v4723 = vrot.slane %v4722, 2
        %v4724 = vmax.f32 %v4722, %v4723
        %v4725 = vrot.slane %v4724, 1
        %v4726 = vmax.f32 %v4724, %v4725
        %v4727 = vsel %vm359, %v4411, -inf
        %v4728 = vsel %vm359, %v4423, -inf
        %v4729 = vmax.f32 %v4727, %v4728
        %v4730 = vrot.slane %v4729, 4
        %v4731 = vmax.f32 %v4729, %v4730
        %v4732 = vrot.slane %v4731, 2
        %v4733 = vmax.f32 %v4731, %v4732
        %v4734 = vrot.slane %v4733, 1
        %v4735 = vmax.f32 %v4733, %v4734
        %v4736 = vsel %vm359, %v4344, -inf
        %v4737 = vsel %vm359, %v4348, -inf
        %v4738 = vmax.f32 %v4736, %v4737
        %v4739 = vrot.slane %v4738, 4
        %v4740 = vmax.f32 %v4738, %v4739
        %v4741 = vrot.slane %v4740, 2
        %v4742 = vmax.f32 %v4740, %v4741
        %v4743 = vrot.slane %v4742, 1
        %v4744 = vmax.f32 %v4742, %v4743
        %v4745 = vsel %vm359, %v4424, -inf
        %v4746 = vsel %vm359, %v4436, -inf
        %v4747 = vmax.f32 %v4745, %v4746
        %v4748 = vrot.slane %v4747, 4
        %v4749 = vmax.f32 %v4747, %v4748
        %v4750 = vrot.slane %v4749, 2
        %v4751 = vmax.f32 %v4749, %v4750
        %v4752 = vrot.slane %v4751, 1
        %v4753 = vmax.f32 %v4751, %v4752
        %v4754 = vsel %vm359, %v4425, -inf
        %v4755 = vsel %vm359, %v4437, -inf
        %v4756 = vmax.f32 %v4754, %v4755
        %v4757 = vrot.slane %v4756, 4
        %v4758 = vmax.f32 %v4756, %v4757
        %v4759 = vrot.slane %v4758, 2
        %v4760 = vmax.f32 %v4758, %v4759
        %v4761 = vrot.slane %v4760, 1
        %v4762 = vmax.f32 %v4760, %v4761
        %v4763 = vsel %vm359, %v4426, -inf
        %v4764 = vsel %vm359, %v4438, -inf
        %v4765 = vmax.f32 %v4763, %v4764
        %v4766 = vrot.slane %v4765, 4
        %v4767 = vmax.f32 %v4765, %v4766
        %v4768 = vrot.slane %v4767, 2
        %v4769 = vmax.f32 %v4767, %v4768
        %v4770 = vrot.slane %v4769, 1
        %v4771 = vmax.f32 %v4769, %v4770
        %v4772 = vsel %vm359, %v4345, -inf
        %v4773 = vsel %vm359, %v4349, -inf
        %v4774 = vmax.f32 %v4772, %v4773
        %v4775 = vrot.slane %v4774, 4
        %v4776 = vmax.f32 %v4774, %v4775
        %v4777 = vrot.slane %v4776, 2
        %v4778 = vmax.f32 %v4776, %v4777
        %v4779 = vrot.slane %v4778, 1
        %v4780 = vmax.f32 %v4778, %v4779
        %v4781 = vsel %vm359, %v4427, -inf
        %v4782 = vsel %vm359, %v4439, -inf
        %v4783 = vmax.f32 %v4781, %v4782
        %v4784 = vrot.slane %v4783, 4
        %v4785 = vmax.f32 %v4783, %v4784
        %v4786 = vrot.slane %v4785, 2
        %v4787 = vmax.f32 %v4785, %v4786
        %v4788 = vrot.slane %v4787, 1
        %v4789 = vmax.f32 %v4787, %v4788
        %v4790 = vsel %vm359, %v4428, -inf
        %v4791 = vsel %vm359, %v4440, -inf
        %v4792 = vmax.f32 %v4790, %v4791
        %v4793 = vrot.slane %v4792, 4
        %v4794 = vmax.f32 %v4792, %v4793
        %v4795 = vrot.slane %v4794, 2
        %v4796 = vmax.f32 %v4794, %v4795
        %v4797 = vrot.slane %v4796, 1
        %v4798 = vmax.f32 %v4796, %v4797
        %v4799 = vsel %vm359, %v4429, -inf
        %v4800 = vsel %vm359, %v4441, -inf
        %v4801 = vmax.f32 %v4799, %v4800
        %v4802 = vrot.slane %v4801, 4
        %v4803 = vmax.f32 %v4801, %v4802
        %v4804 = vrot.slane %v4803, 2
        %v4805 = vmax.f32 %v4803, %v4804
        %v4806 = vrot.slane %v4805, 1
        %v4807 = vmax.f32 %v4805, %v4806
        %v4808 = vsel %vm359, %v4346, -inf
        %v4809 = vsel %vm359, %v4350, -inf
        %v4810 = vmax.f32 %v4808, %v4809
        %v4811 = vrot.slane %v4810, 4
        %v4812 = vmax.f32 %v4810, %v4811
        %v4813 = vrot.slane %v4812, 2
        %v4814 = vmax.f32 %v4812, %v4813
        %v4815 = vrot.slane %v4814, 1
        %v4816 = vmax.f32 %v4814, %v4815
        %v4817 = vsel %vm359, %v4430, -inf
        %v4818 = vsel %vm359, %v4442, -inf
        %v4819 = vmax.f32 %v4817, %v4818
        %v4820 = vrot.slane %v4819, 4
        %v4821 = vmax.f32 %v4819, %v4820
        %v4822 = vrot.slane %v4821, 2
        %v4823 = vmax.f32 %v4821, %v4822
        %v4824 = vrot.slane %v4823, 1
        %v4825 = vmax.f32 %v4823, %v4824
        %v4826 = vsel %vm359, %v4431, -inf
        %v4827 = vsel %vm359, %v4443, -inf
        %v4828 = vmax.f32 %v4826, %v4827
        %v4829 = vrot.slane %v4828, 4
        %v4830 = vmax.f32 %v4828, %v4829
        %v4831 = vrot.slane %v4830, 2
        %v4832 = vmax.f32 %v4830, %v4831
        %v4833 = vrot.slane %v4832, 1
        %v4834 = vmax.f32 %v4832, %v4833
        %v4835 = vsel %vm359, %v4432, -inf
        %v4836 = vsel %vm359, %v4444, -inf
        %v4837 = vmax.f32 %v4835, %v4836
        %v4838 = vrot.slane %v4837, 4
        %v4839 = vmax.f32 %v4837, %v4838
        %v4840 = vrot.slane %v4839, 2
        %v4841 = vmax.f32 %v4839, %v4840
        %v4842 = vrot.slane %v4841, 1
        %v4843 = vmax.f32 %v4841, %v4842
        %v4844 = vsel %vm359, %v4347, -inf
        %v4845 = vsel %vm359, %v4351, -inf
        %v4846 = vmax.f32 %v4844, %v4845
        %v4847 = vrot.slane %v4846, 4
        %v4848 = vmax.f32 %v4846, %v4847
        %v4849 = vrot.slane %v4848, 2
        %v4850 = vmax.f32 %v4848, %v4849
        %v4851 = vrot.slane %v4850, 1
        %v4852 = vmax.f32 %v4850, %v4851
        %v4853 = vsel %vm359, %v4433, -inf
        %v4854 = vsel %vm359, %v4445, -inf
        %v4855 = vmax.f32 %v4853, %v4854
        %v4856 = vrot.slane %v4855, 4
        %v4857 = vmax.f32 %v4855, %v4856
        %v4858 = vrot.slane %v4857, 2
        %v4859 = vmax.f32 %v4857, %v4858
        %v4860 = vrot.slane %v4859, 1
        %v4861 = vmax.f32 %v4859, %v4860
        %v4862 = vsel %vm359, %v4434, -inf
        %v4863 = vsel %vm359, %v4446, -inf
        %v4864 = vmax.f32 %v4862, %v4863
        %v4865 = vrot.slane %v4864, 4
        %v4866 = vmax.f32 %v4864, %v4865
        %v4867 = vrot.slane %v4866, 2
        %v4868 = vmax.f32 %v4866, %v4867
        %v4869 = vrot.slane %v4868, 1
        %v4870 = vmax.f32 %v4868, %v4869
        %v4871 = vsel %vm359, %v4435, -inf
        %v4872 = vsel %vm359, %v4447, -inf
        %v4873 = vmax.f32 %v4871, %v4872
        %v4874 = vrot.slane %v4873, 4
        %v4875 = vmax.f32 %v4873, %v4874
        %v4876 = vrot.slane %v4875, 2
        %v4877 = vmax.f32 %v4875, %v4876
        %v4878 = vrot.slane %v4877, 1
        %v4879 = vmax.f32 %v4877, %v4878
        %v4880 = vsel %vm359, %v4352, -inf
        %v4881 = vsel %vm359, %v4356, -inf
        %v4882 = vmax.f32 %v4880, %v4881
        %v4883 = vrot.slane %v4882, 4
        %v4884 = vmax.f32 %v4882, %v4883
        %v4885 = vrot.slane %v4884, 2
        %v4886 = vmax.f32 %v4884, %v4885
        %v4887 = vrot.slane %v4886, 1
        %v4888 = vmax.f32 %v4886, %v4887
        %v4889 = vsel %vm359, %v4448, -inf
        %v4890 = vsel %vm359, %v4460, -inf
        %v4891 = vmax.f32 %v4889, %v4890
        %v4892 = vrot.slane %v4891, 4
        %v4893 = vmax.f32 %v4891, %v4892
        %v4894 = vrot.slane %v4893, 2
        %v4895 = vmax.f32 %v4893, %v4894
        %v4896 = vrot.slane %v4895, 1
        %v4897 = vmax.f32 %v4895, %v4896
        %v4898 = vsel %vm359, %v4449, -inf
        %v4899 = vsel %vm359, %v4461, -inf
        %v4900 = vmax.f32 %v4898, %v4899
        %v4901 = vrot.slane %v4900, 4
        %v4902 = vmax.f32 %v4900, %v4901
        %v4903 = vrot.slane %v4902, 2
        %v4904 = vmax.f32 %v4902, %v4903
        %v4905 = vrot.slane %v4904, 1
        %v4906 = vmax.f32 %v4904, %v4905
        %v4907 = vsel %vm359, %v4450, -inf
        %v4908 = vsel %vm359, %v4462, -inf
        %v4909 = vmax.f32 %v4907, %v4908
        %v4910 = vrot.slane %v4909, 4
        %v4911 = vmax.f32 %v4909, %v4910
        %v4912 = vrot.slane %v4911, 2
        %v4913 = vmax.f32 %v4911, %v4912
        %v4914 = vrot.slane %v4913, 1
        %v4915 = vmax.f32 %v4913, %v4914
        %v4916 = vsel %vm359, %v4353, -inf
        %v4917 = vsel %vm359, %v4357, -inf
        %v4918 = vmax.f32 %v4916, %v4917
        %v4919 = vrot.slane %v4918, 4
        %v4920 = vmax.f32 %v4918, %v4919
        %v4921 = vrot.slane %v4920, 2
        %v4922 = vmax.f32 %v4920, %v4921
        %v4923 = vrot.slane %v4922, 1
        %v4924 = vmax.f32 %v4922, %v4923
        %v4925 = vsel %vm359, %v4451, -inf
        %v4926 = vsel %vm359, %v4463, -inf
        %v4927 = vmax.f32 %v4925, %v4926
        %v4928 = vrot.slane %v4927, 4
        %v4929 = vmax.f32 %v4927, %v4928
        %v4930 = vrot.slane %v4929, 2
        %v4931 = vmax.f32 %v4929, %v4930
        %v4932 = vrot.slane %v4931, 1
        %v4933 = vmax.f32 %v4931, %v4932
        %v4934 = vsel %vm359, %v4452, -inf
        %v4935 = vsel %vm359, %v4464, -inf
        %v4936 = vmax.f32 %v4934, %v4935
        %v4937 = vrot.slane %v4936, 4
        %v4938 = vmax.f32 %v4936, %v4937
        %v4939 = vrot.slane %v4938, 2
        %v4940 = vmax.f32 %v4938, %v4939
        %v4941 = vrot.slane %v4940, 1
        %v4942 = vmax.f32 %v4940, %v4941
        %v4943 = vsel %vm359, %v4453, -inf
        %v4944 = vsel %vm359, %v4465, -inf
        %v4945 = vmax.f32 %v4943, %v4944
        %v4946 = vrot.slane %v4945, 4
        %v4947 = vmax.f32 %v4945, %v4946
        %v4948 = vrot.slane %v4947, 2
        %v4949 = vmax.f32 %v4947, %v4948
        %v4950 = vrot.slane %v4949, 1
        %v4951 = vmax.f32 %v4949, %v4950
        %v4952 = vsel %vm359, %v4354, -inf
        %v4953 = vsel %vm359, %v4358, -inf
        %v4954 = vmax.f32 %v4952, %v4953
        %v4955 = vrot.slane %v4954, 4
        %v4956 = vmax.f32 %v4954, %v4955
        %v4957 = vrot.slane %v4956, 2
        %v4958 = vmax.f32 %v4956, %v4957
        %v4959 = vrot.slane %v4958, 1
        %v4960 = vmax.f32 %v4958, %v4959
        %v4961 = vsel %vm359, %v4454, -inf
        %v4962 = vsel %vm359, %v4466, -inf
        %v4963 = vmax.f32 %v4961, %v4962
        %v4964 = vrot.slane %v4963, 4
        %v4965 = vmax.f32 %v4963, %v4964
        %v4966 = vrot.slane %v4965, 2
        %v4967 = vmax.f32 %v4965, %v4966
        %v4968 = vrot.slane %v4967, 1
        %v4969 = vmax.f32 %v4967, %v4968
        %v4970 = vsel %vm359, %v4455, -inf
        %v4971 = vsel %vm359, %v4467, -inf
        %v4972 = vmax.f32 %v4970, %v4971
        %v4973 = vrot.slane %v4972, 4
        %v4974 = vmax.f32 %v4972, %v4973
        %v4975 = vrot.slane %v4974, 2
        %v4976 = vmax.f32 %v4974, %v4975
        %v4977 = vrot.slane %v4976, 1
        %v4978 = vmax.f32 %v4976, %v4977
        %v4979 = vsel %vm359, %v4456, -inf
        %v4980 = vsel %vm359, %v4468, -inf
        %v4981 = vmax.f32 %v4979, %v4980
        %v4982 = vrot.slane %v4981, 4
        %v4983 = vmax.f32 %v4981, %v4982
        %v4984 = vrot.slane %v4983, 2
        %v4985 = vmax.f32 %v4983, %v4984
        %v4986 = vrot.slane %v4985, 1
        %v4987 = vmax.f32 %v4985, %v4986
        %v4988 = vsel %vm359, %v4355, -inf
        %v4989 = vsel %vm359, %v4359, -inf
        %v4990 = vmax.f32 %v4988, %v4989
        %v4991 = vrot.slane %v4990, 4
        %v4992 = vmax.f32 %v4990, %v4991
        %v4993 = vrot.slane %v4992, 2
        %v4994 = vmax.f32 %v4992, %v4993
        %v4995 = vrot.slane %v4994, 1
        %v4996 = vmax.f32 %v4994, %v4995
        %v4997 = vsel %vm359, %v4457, -inf
        %v4998 = vsel %vm359, %v4469, -inf
        %v4999 = vmax.f32 %v4997, %v4998
        %v5000 = vrot.slane %v4999, 4
        %v5001 = vmax.f32 %v4999, %v5000
        %v5002 = vrot.slane %v5001, 2
        %v5003 = vmax.f32 %v5001, %v5002
        %v5004 = vrot.slane %v5003, 1
        %v5005 = vmax.f32 %v5003, %v5004
        %v5006 = vsel %vm359, %v4458, -inf
        %v5007 = vsel %vm359, %v4470, -inf
        %v5008 = vmax.f32 %v5006, %v5007
        %v5009 = vrot.slane %v5008, 4
        %v5010 = vmax.f32 %v5008, %v5009
        %v5011 = vrot.slane %v5010, 2
        %v5012 = vmax.f32 %v5010, %v5011
        %v5013 = vrot.slane %v5012, 1
        %v5014 = vmax.f32 %v5012, %v5013
        %v5015 = vsel %vm359, %v4459, -inf
        %v5016 = vsel %vm359, %v4471, -inf
        %v5017 = vmax.f32 %v5015, %v5016
        %v5018 = vrot.slane %v5017, 4
        %v5019 = vmax.f32 %v5017, %v5018
        %v5020 = vrot.slane %v5019, 2
        %v5021 = vmax.f32 %v5019, %v5020
        %v5022 = vrot.slane %v5021, 1
        %v5023 = vmax.f32 %v5021, %v5022
        %v5024 = vsel %vm359, %v4360, -inf
        %v5025 = vsel %vm359, %v4364, -inf
        %v5026 = vmax.f32 %v5024, %v5025
        %v5027 = vrot.slane %v5026, 4
        %v5028 = vmax.f32 %v5026, %v5027
        %v5029 = vrot.slane %v5028, 2
        %v5030 = vmax.f32 %v5028, %v5029
        %v5031 = vrot.slane %v5030, 1
        %v5032 = vmax.f32 %v5030, %v5031
        %v5033 = vsel %vm359, %v4472, -inf
        %v5034 = vsel %vm359, %v4484, -inf
        %v5035 = vmax.f32 %v5033, %v5034
        %v5036 = vrot.slane %v5035, 4
        %v5037 = vmax.f32 %v5035, %v5036
        %v5038 = vrot.slane %v5037, 2
        %v5039 = vmax.f32 %v5037, %v5038
        %v5040 = vrot.slane %v5039, 1
        %v5041 = vmax.f32 %v5039, %v5040
        %v5042 = vsel %vm359, %v4473, -inf
        %v5043 = vsel %vm359, %v4485, -inf
        %v5044 = vmax.f32 %v5042, %v5043
        %v5045 = vrot.slane %v5044, 4
        %v5046 = vmax.f32 %v5044, %v5045
        %v5047 = vrot.slane %v5046, 2
        %v5048 = vmax.f32 %v5046, %v5047
        %v5049 = vrot.slane %v5048, 1
        %v5050 = vmax.f32 %v5048, %v5049
        %v5051 = vsel %vm359, %v4474, -inf
        %v5052 = vsel %vm359, %v4486, -inf
        %v5053 = vmax.f32 %v5051, %v5052
        %v5054 = vrot.slane %v5053, 4
        %v5055 = vmax.f32 %v5053, %v5054
        %v5056 = vrot.slane %v5055, 2
        %v5057 = vmax.f32 %v5055, %v5056
        %v5058 = vrot.slane %v5057, 1
        %v5059 = vmax.f32 %v5057, %v5058
        %v5060 = vsel %vm359, %v4361, -inf
        %v5061 = vsel %vm359, %v4365, -inf
        %v5062 = vmax.f32 %v5060, %v5061
        %v5063 = vrot.slane %v5062, 4
        %v5064 = vmax.f32 %v5062, %v5063
        %v5065 = vrot.slane %v5064, 2
        %v5066 = vmax.f32 %v5064, %v5065
        %v5067 = vrot.slane %v5066, 1
        %v5068 = vmax.f32 %v5066, %v5067
        %v5069 = vsel %vm359, %v4475, -inf
        %v5070 = vsel %vm359, %v4487, -inf
        %v5071 = vmax.f32 %v5069, %v5070
        %v5072 = vrot.slane %v5071, 4
        %v5073 = vmax.f32 %v5071, %v5072
        %v5074 = vrot.slane %v5073, 2
        %v5075 = vmax.f32 %v5073, %v5074
        %v5076 = vrot.slane %v5075, 1
        %v5077 = vmax.f32 %v5075, %v5076
        %v5078 = vsel %vm359, %v4476, -inf
        %v5079 = vsel %vm359, %v4488, -inf
        %v5080 = vmax.f32 %v5078, %v5079
        %v5081 = vrot.slane %v5080, 4
        %v5082 = vmax.f32 %v5080, %v5081
        %v5083 = vrot.slane %v5082, 2
        %v5084 = vmax.f32 %v5082, %v5083
        %v5085 = vrot.slane %v5084, 1
        %v5086 = vmax.f32 %v5084, %v5085
        %v5087 = vsel %vm359, %v4477, -inf
        %v5088 = vsel %vm359, %v4489, -inf
        %v5089 = vmax.f32 %v5087, %v5088
        %v5090 = vrot.slane %v5089, 4
        %v5091 = vmax.f32 %v5089, %v5090
        %v5092 = vrot.slane %v5091, 2
        %v5093 = vmax.f32 %v5091, %v5092
        %v5094 = vrot.slane %v5093, 1
        %v5095 = vmax.f32 %v5093, %v5094
        %v5096 = vsel %vm359, %v4362, -inf
        %v5097 = vsel %vm359, %v4366, -inf
        %v5098 = vmax.f32 %v5096, %v5097
        %v5099 = vrot.slane %v5098, 4
        %v5100 = vmax.f32 %v5098, %v5099
        %v5101 = vrot.slane %v5100, 2
        %v5102 = vmax.f32 %v5100, %v5101
        %v5103 = vrot.slane %v5102, 1
        %v5104 = vmax.f32 %v5102, %v5103
        %v5105 = vsel %vm359, %v4478, -inf
        %v5106 = vsel %vm359, %v4490, -inf
        %v5107 = vmax.f32 %v5105, %v5106
        %v5108 = vrot.slane %v5107, 4
        %v5109 = vmax.f32 %v5107, %v5108
        %v5110 = vrot.slane %v5109, 2
        %v5111 = vmax.f32 %v5109, %v5110
        %v5112 = vrot.slane %v5111, 1
        %v5113 = vmax.f32 %v5111, %v5112
        %v5114 = vsel %vm359, %v4479, -inf
        %v5115 = vsel %vm359, %v4491, -inf
        %v5116 = vmax.f32 %v5114, %v5115
        %v5117 = vrot.slane %v5116, 4
        %v5118 = vmax.f32 %v5116, %v5117
        %v5119 = vrot.slane %v5118, 2
        %v5120 = vmax.f32 %v5118, %v5119
        %v5121 = vrot.slane %v5120, 1
        %v5122 = vmax.f32 %v5120, %v5121
        %v5123 = vsel %vm359, %v4480, -inf
        %v5124 = vsel %vm359, %v4492, -inf
        %v5125 = vmax.f32 %v5123, %v5124
        %v5126 = vrot.slane %v5125, 4
        %v5127 = vmax.f32 %v5125, %v5126
        %v5128 = vrot.slane %v5127, 2
        %v5129 = vmax.f32 %v5127, %v5128
        %v5130 = vrot.slane %v5129, 1
        %v5131 = vmax.f32 %v5129, %v5130
        %v5132 = vsel %vm359, %v4363, -inf
        %v5133 = vsel %vm359, %v4367, -inf
        %v5134 = vmax.f32 %v5132, %v5133
        %v5135 = vrot.slane %v5134, 4
        %v5136 = vmax.f32 %v5134, %v5135
        %v5137 = vrot.slane %v5136, 2
        %v5138 = vmax.f32 %v5136, %v5137
        %v5139 = vrot.slane %v5138, 1
        %v5140 = vmax.f32 %v5138, %v5139
        %v5141 = vsel %vm359, %v4481, -inf
        %v5142 = vsel %vm359, %v4493, -inf
        %v5143 = vmax.f32 %v5141, %v5142
        %v5144 = vrot.slane %v5143, 4
        %v5145 = vmax.f32 %v5143, %v5144
        %v5146 = vrot.slane %v5145, 2
        %v5147 = vmax.f32 %v5145, %v5146
        %v5148 = vrot.slane %v5147, 1
        %v5149 = vmax.f32 %v5147, %v5148
        %v5150 = vsel %vm359, %v4482, -inf
        %v5151 = vsel %vm359, %v4494, -inf
        %v5152 = vmax.f32 %v5150, %v5151
        %v5153 = vrot.slane %v5152, 4
        %v5154 = vmax.f32 %v5152, %v5153
        %v5155 = vrot.slane %v5154, 2
        %v5156 = vmax.f32 %v5154, %v5155
        %v5157 = vrot.slane %v5156, 1
        %v5158 = vmax.f32 %v5156, %v5157
        %v5159 = vsel %vm359, %v4483, -inf
        %v5160 = vsel %vm359, %v4495, -inf
        %v5161 = vmax.f32 %v5159, %v5160
        %v5162 = vrot.slane %v5161, 4
        %v5163 = vmax.f32 %v5161, %v5162
        %v5164 = vrot.slane %v5163, 2
        %v5165 = vmax.f32 %v5163, %v5164
        %v5166 = vrot.slane %v5165, 1
        %v5167 = vmax.f32 %v5165, %v5166
        %v5232 = vsel %vm1562, %v4609, %v4600
        %v5233 = vsel %vm1564, %v4618, %v5232
        %v5234 = vsel %vm1566, %v4627, %v5233
        %v5235 = vsel %vm1568, %v4636, %v5234
        %v5236 = vsel %vm1570, %v4645, %v5235
        %v5237 = vsel %vm1572, %v4654, %v5236
        %v5238 = vsel %vm1574, %v4663, %v5237
        %v5239 = vsel %vm1562, %v4681, %v4672
        %v5240 = vsel %vm1564, %v4690, %v5239
        %v5241 = vsel %vm1566, %v4699, %v5240
        %v5242 = vsel %vm1568, %v4708, %v5241
        %v5243 = vsel %vm1570, %v4717, %v5242
        %v5244 = vsel %vm1572, %v4726, %v5243
        %v5245 = vsel %vm1574, %v4735, %v5244
        %v5246 = vsel %vm1562, %v4753, %v4744
        %v5247 = vsel %vm1564, %v4762, %v5246
        %v5248 = vsel %vm1566, %v4771, %v5247
        %v5249 = vsel %vm1568, %v4780, %v5248
        %v5250 = vsel %vm1570, %v4789, %v5249
        %v5251 = vsel %vm1572, %v4798, %v5250
        %v5252 = vsel %vm1574, %v4807, %v5251
        %v5253 = vsel %vm1562, %v4825, %v4816
        %v5254 = vsel %vm1564, %v4834, %v5253
        %v5255 = vsel %vm1566, %v4843, %v5254
        %v5256 = vsel %vm1568, %v4852, %v5255
        %v5257 = vsel %vm1570, %v4861, %v5256
        %v5258 = vsel %vm1572, %v4870, %v5257
        %v5259 = vsel %vm1574, %v4879, %v5258
        %v5260 = vsel %vm1562, %v4897, %v4888
        %v5261 = vsel %vm1564, %v4906, %v5260
        %v5262 = vsel %vm1566, %v4915, %v5261
        %v5263 = vsel %vm1568, %v4924, %v5262
        %v5264 = vsel %vm1570, %v4933, %v5263
        %v5265 = vsel %vm1572, %v4942, %v5264
        %v5266 = vsel %vm1574, %v4951, %v5265
        %v5267 = vsel %vm1562, %v4969, %v4960
        %v5268 = vsel %vm1564, %v4978, %v5267
        %v5269 = vsel %vm1566, %v4987, %v5268
        %v5270 = vsel %vm1568, %v4996, %v5269
        %v5271 = vsel %vm1570, %v5005, %v5270
        %v5272 = vsel %vm1572, %v5014, %v5271
        %v5273 = vsel %vm1574, %v5023, %v5272
        %v5274 = vsel %vm1562, %v5041, %v5032
        %v5275 = vsel %vm1564, %v5050, %v5274
        %v5276 = vsel %vm1566, %v5059, %v5275
        %v5277 = vsel %vm1568, %v5068, %v5276
        %v5278 = vsel %vm1570, %v5077, %v5277
        %v5279 = vsel %vm1572, %v5086, %v5278
        %v5280 = vsel %vm1574, %v5095, %v5279
        %v5281 = vsel %vm1562, %v5113, %v5104
        %v5282 = vsel %vm1564, %v5122, %v5281
        %v5283 = vsel %vm1566, %v5131, %v5282
        %v5284 = vsel %vm1568, %v5140, %v5283
        %v5285 = vsel %vm1570, %v5149, %v5284
        %v5286 = vsel %vm1572, %v5158, %v5285
        %v5287 = vsel %vm1574, %v5167, %v5286
        %s5296 = scalar_lea.vmem [#allocation2], 312
        %5297 = vst.msk [vmem:[%s5296 + $0x1] sm:$0xff] %vm356, %v5238
        %5298 = vst.msk [vmem:[%s5296 + $0x9] sm:$0xff] %vm356, %v5245
        %5299 = vst.msk [vmem:[%s5296 + $0x19] sm:$0xff] %vm356, %v5252
        %5300 = vst.msk [vmem:[%s5296 + $0x21] sm:$0xff] %vm356, %v5259
        %5301 = vst.msk [vmem:[%s5296 + $0x31] sm:$0xff] %vm356, %v5266
        %5302 = vst.msk [vmem:[%s5296 + $0x39] sm:$0xff] %vm356, %v5273
        %5303 = vst.msk [vmem:[%s5296 + $0x49] sm:$0xff] %vm356, %v5280
        %5304 = vst.msk [vmem:[%s5296 + $0x51] sm:$0xff] %vm356, %v5287
        %vm5305 = vcmask 523264
        %5306 = vst.msk [vmem:[#allocation3] sm:$0xff] %vm5305, 0.0
        %vm5307 = vcmask 517120
        %5308 = vst.msk [vmem:[#allocation3 + $0x8] sm:$0x3] %vm5307, 0.0
        %5309 = vst.msk [vmem:[#allocation3 + $0x10] sm:$0xff] %vm5305, 0.0
        %5310 = vst.msk [vmem:[#allocation3 + $0x18] sm:$0x3] %vm5307, 0.0
        %5311 = vst.msk [vmem:[#allocation3 + $0x20] sm:$0xff] %vm5305, 0.0
        %5312 = vst.msk [vmem:[#allocation3 + $0x28] sm:$0x3] %vm5307, 0.0
        %5313 = vst.msk [vmem:[#allocation3 + $0x30] sm:$0xff] %vm5305, 0.0
        %5314 = vst.msk [vmem:[#allocation3 + $0x38] sm:$0x3] %vm5307, 0.0
        %5315 = vst.msk [vmem:[#allocation3 + $0x40] sm:$0xff] %vm5305, 0.0
        %5316 = vst.msk [vmem:[#allocation3 + $0x48] sm:$0x3] %vm5307, 0.0
        %5317 = vst.msk [vmem:[#allocation3 + $0x50] sm:$0xff] %vm5305, 0.0
        %5318 = vst.msk [vmem:[#allocation3 + $0x58] sm:$0x3] %vm5307, 0.0
        %5319 = vst.msk [vmem:[#allocation3 + $0x60] sm:$0xff] %vm5305, 0.0
        %5320 = vst.msk [vmem:[#allocation3 + $0x68] sm:$0x3] %vm5307, 0.0
        %5321 = vst.msk [vmem:[#allocation3 + $0x70] sm:$0xff] %vm5305, 0.0
        %5322 = vst.msk [vmem:[#allocation3 + $0x78] sm:$0x3] %vm5307, 0.0
        %5323 = vst.msk [vmem:[#allocation3 + $0x80] sm:$0xff] %vm5305, 0.0
        %5324 = vst.msk [vmem:[#allocation3 + $0x88] sm:$0x3] %vm5307, 0.0
        %5325 = vst.msk [vmem:[#allocation3 + $0x90] sm:$0xff] %vm5305, 0.0
        %5326 = vst.msk [vmem:[#allocation3 + $0x98] sm:$0x3] %vm5307, 0.0
        %v5327 = vld [vmem:[#allocation2] sm:$0xff]
        %v5328 = vld [vmem:[#allocation2 + $0x8] sm:$0xff]
        %v5329 = vld [vmem:[#allocation2 + $0x10] sm:$0x3]
        %v5330 = vld [vmem:[#allocation2 + $0x18] sm:$0xff]
        %v5331 = vld [vmem:[#allocation2 + $0x20] sm:$0xff]
        %v5332 = vld [vmem:[#allocation2 + $0x28] sm:$0x3]
        %v5333 = vld [vmem:[#allocation2 + $0x30] sm:$0xff]
        %v5334 = vld [vmem:[#allocation2 + $0x38] sm:$0xff]
        %v5335 = vld [vmem:[#allocation2 + $0x40] sm:$0x3]
        %v5336 = vld [vmem:[#allocation2 + $0x48] sm:$0xff]
        %v5337 = vld [vmem:[#allocation2 + $0x50] sm:$0xff]
        %v5338 = vld [vmem:[#allocation2 + $0x58] sm:$0x3]
        %v5339 = vld [vmem:[#allocation2 + $0x60] sm:$0xff]
        %v5340 = vld [vmem:[#allocation2 + $0x68] sm:$0xff]
        %v5341 = vld [vmem:[#allocation2 + $0x70] sm:$0x3]
        %v5342 = vld [vmem:[#allocation2 + $0x78] sm:$0xff]
        %v5343 = vld [vmem:[#allocation2 + $0x80] sm:$0xff]
        %v5344 = vld [vmem:[#allocation2 + $0x88] sm:$0x3]
        %v5345 = vld [vmem:[#allocation2 + $0x90] sm:$0xff]
        %v5346 = vld [vmem:[#allocation2 + $0x98] sm:$0xff]
        %v5347 = vld [vmem:[#allocation2 + $0xa0] sm:$0x3]
        %v5348 = vld [vmem:[#allocation2 + $0xa8] sm:$0xff]
        %v5349 = vld [vmem:[#allocation2 + $0xb0] sm:$0xff]
        %v5350 = vld [vmem:[#allocation2 + $0xb8] sm:$0x3]
        %v5351 = vld [vmem:[#allocation2 + $0xc0] sm:$0xff]
        %v5352 = vld [vmem:[#allocation2 + $0xc8] sm:$0xff]
        %v5353 = vld [vmem:[#allocation2 + $0xd0] sm:$0x3]
        %v5354 = vld [vmem:[#allocation2 + $0xd8] sm:$0xff]
        %v5355 = vld [vmem:[#allocation2 + $0xe0] sm:$0xff]
        %v5356 = vld [vmem:[#allocation2 + $0xe8] sm:$0x3]
        %v5357 = vld [vmem:[#allocation2 + $0xf0] sm:$0xff]
        %v5358 = vld [vmem:[#allocation2 + $0xf8] sm:$0xff]
        %v5359 = vld [vmem:[#allocation2 + $0x100] sm:$0x3]
        %v5360 = vld [vmem:[#allocation2 + $0x108] sm:$0xff]
        %v5361 = vld [vmem:[#allocation2 + $0x110] sm:$0xff]
        %v5362 = vld [vmem:[#allocation2 + $0x118] sm:$0x3]
        %v5363 = vld [vmem:[#allocation2 + $0x120] sm:$0xff]
        %v5364 = vld [vmem:[#allocation2 + $0x128] sm:$0xff]
        %v5365 = vld [vmem:[#allocation2 + $0x130] sm:$0x3]
        %v5366 = vld [vmem:[#allocation2 + $0x138] sm:$0xff]
        %v5367 = vld [vmem:[#allocation2 + $0x140] sm:$0xff]
        %v5368 = vld [vmem:[#allocation2 + $0x148] sm:$0x3]
        %v5369 = vld [vmem:[#allocation2 + $0x150] sm:$0xff]
        %v5370 = vld [vmem:[#allocation2 + $0x158] sm:$0xff]
        %v5371 = vld [vmem:[#allocation2 + $0x160] sm:$0x3]
        %v5372 = vld [vmem:[#allocation2 + $0x168] sm:$0xff]
        %v5373 = vld [vmem:[#allocation2 + $0x170] sm:$0xff]
        %v5374 = vld [vmem:[#allocation2 + $0x178] sm:$0x3]
        %v5375 = vld [vmem:[#allocation2 + $0x180] sm:$0xff]
        %v5376 = vld [vmem:[#allocation2 + $0x188] sm:$0xff]
        %v5377 = vld [vmem:[#allocation2 + $0x190] sm:$0x3]
        %v5378 = vld [vmem:[#allocation2 + $0x198] sm:$0xff]
        %v5379 = vld [vmem:[#allocation2 + $0x1a0] sm:$0xff]
        %v5380 = vld [vmem:[#allocation2 + $0x1a8] sm:$0x3]
        %vm5429 = vcmask 1046528
        %v5430 = vrot.slane %v5327, 1
        %v5431 = vrot.slane %v5328, 1
        %v5432 = vsel %vm5429, %v5430, %v5431
        %v5433 = vrot.slane %v5329, 1
        %v5434 = vsel %vm5429, %v5431, %v5433
        %v5435 = vrot.slane %v5330, 1
        %v5436 = vrot.slane %v5331, 1
        %v5437 = vsel %vm5429, %v5435, %v5436
        %v5438 = vrot.slane %v5332, 1
        %v5439 = vsel %vm5429, %v5436, %v5438
        %v5440 = vrot.slane %v5333, 1
        %v5441 = vrot.slane %v5334, 1
        %v5442 = vsel %vm5429, %v5440, %v5441
        %v5443 = vrot.slane %v5335, 1
        %v5444 = vsel %vm5429, %v5441, %v5443
        %v5445 = vrot.slane %v5336, 1
        %v5446 = vrot.slane %v5337, 1
        %v5447 = vsel %vm5429, %v5445, %v5446
        %v5448 = vrot.slane %v5338, 1
        %v5449 = vsel %vm5429, %v5446, %v5448
        %v5450 = vrot.slane %v5339, 1
        %v5451 = vrot.slane %v5340, 1
        %v5452 = vsel %vm5429, %v5450, %v5451
        %v5453 = vrot.slane %v5341, 1
        %v5454 = vsel %vm5429, %v5451, %v5453
        %v5455 = vrot.slane %v5342, 1
        %v5456 = vrot.slane %v5343, 1
        %v5457 = vsel %vm5429, %v5455, %v5456
        %v5458 = vrot.slane %v5344, 1
        %v5459 = vsel %vm5429, %v5456, %v5458
        %v5460 = vrot.slane %v5345, 1
        %v5461 = vrot.slane %v5346, 1
        %v5462 = vsel %vm5429, %v5460, %v5461
        %v5463 = vrot.slane %v5347, 1
        %v5464 = vsel %vm5429, %v5461, %v5463
        %v5465 = vrot.slane %v5348, 1
        %v5466 = vrot.slane %v5349, 1
        %v5467 = vsel %vm5429, %v5465, %v5466
        %v5468 = vrot.slane %v5350, 1
        %v5469 = vsel %vm5429, %v5466, %v5468
        %v5470 = vrot.slane %v5351, 1
        %v5471 = vrot.slane %v5352, 1
        %v5472 = vsel %vm5429, %v5470, %v5471
        %v5473 = vrot.slane %v5353, 1
        %v5474 = vsel %vm5429, %v5471, %v5473
        %v5475 = vrot.slane %v5354, 1
        %v5476 = vrot.slane %v5355, 1
        %v5477 = vsel %vm5429, %v5475, %v5476
        %v5478 = vrot.slane %v5356, 1
        %v5479 = vsel %vm5429, %v5476, %v5478
        %v5480 = vrot.slane %v5357, 1
        %v5481 = vrot.slane %v5358, 1
        %v5482 = vsel %vm5429, %v5480, %v5481
        %v5483 = vrot.slane %v5359, 1
        %v5484 = vsel %vm5429, %v5481, %v5483
        %v5485 = vrot.slane %v5360, 1
        %v5486 = vrot.slane %v5361, 1
        %v5487 = vsel %vm5429, %v5485, %v5486
        %v5488 = vrot.slane %v5362, 1
        %v5489 = vsel %vm5429, %v5486, %v5488
        %v5490 = vrot.slane %v5363, 1
        %v5491 = vrot.slane %v5364, 1
        %v5492 = vsel %vm5429, %v5490, %v5491
        %v5493 = vrot.slane %v5365, 1
        %v5494 = vsel %vm5429, %v5491, %v5493
        %v5495 = vrot.slane %v5366, 1
        %v5496 = vrot.slane %v5367, 1
        %v5497 = vsel %vm5429, %v5495, %v5496
        %v5498 = vrot.slane %v5368, 1
        %v5499 = vsel %vm5429, %v5496, %v5498
        %v5500 = vrot.slane %v5369, 1
        %v5501 = vrot.slane %v5370, 1
        %v5502 = vsel %vm5429, %v5500, %v5501
        %v5503 = vrot.slane %v5371, 1
        %v5504 = vsel %vm5429, %v5501, %v5503
        %v5505 = vrot.slane %v5372, 1
        %v5506 = vrot.slane %v5373, 1
        %v5507 = vsel %vm5429, %v5505, %v5506
        %v5508 = vrot.slane %v5374, 1
        %v5509 = vsel %vm5429, %v5506, %v5508
        %5510 = vrot.lane.b32.xlu0 %v5432, 32
        %v5511 = vpop.permute.xlu0 %5510
        %5512 = vrot.lane.b32.xlu0 %v5434, 32
        %v5513 = vpop.permute.xlu0 %5512
        %5514 = vrot.lane.b32.xlu0 %v5437, 32
        %v5515 = vpop.permute.xlu0 %5514
        %5516 = vrot.lane.b32.xlu0 %v5439, 32
        %v5517 = vpop.permute.xlu0 %5516
        %5518 = vrot.lane.b32.xlu0 %v5442, 32
        %v5519 = vpop.permute.xlu0 %5518
        %5520 = vrot.lane.b32.xlu0 %v5444, 32
        %v5521 = vpop.permute.xlu0 %5520
        %5522 = vrot.lane.b32.xlu0 %v5447, 32
        %v5523 = vpop.permute.xlu0 %5522
        %5524 = vrot.lane.b32.xlu0 %v5449, 32
        %v5525 = vpop.permute.xlu0 %5524
        %5526 = vrot.lane.b32.xlu0 %v5452, 32
        %v5527 = vpop.permute.xlu0 %5526
        %5528 = vrot.lane.b32.xlu0 %v5454, 32
        %v5529 = vpop.permute.xlu0 %5528
        %5530 = vrot.lane.b32.xlu0 %v5457, 32
        %v5531 = vpop.permute.xlu0 %5530
        %5532 = vrot.lane.b32.xlu0 %v5459, 32
        %v5533 = vpop.permute.xlu0 %5532
        %5534 = vrot.lane.b32.xlu0 %v5462, 32
        %v5535 = vpop.permute.xlu0 %5534
        %5536 = vrot.lane.b32.xlu0 %v5464, 32
        %v5537 = vpop.permute.xlu0 %5536
        %5538 = vrot.lane.b32.xlu0 %v5467, 32
        %v5539 = vpop.permute.xlu0 %5538
        %5540 = vrot.lane.b32.xlu0 %v5469, 32
        %v5541 = vpop.permute.xlu0 %5540
        %5542 = vrot.lane.b32.xlu0 %v5472, 32
        %v5543 = vpop.permute.xlu0 %5542
        %5544 = vrot.lane.b32.xlu0 %v5474, 32
        %v5545 = vpop.permute.xlu0 %5544
        %5546 = vrot.lane.b32.xlu0 %v5477, 32
        %v5547 = vpop.permute.xlu0 %5546
        %5548 = vrot.lane.b32.xlu0 %v5479, 32
        %v5549 = vpop.permute.xlu0 %5548
        %5550 = vrot.lane.b32.xlu0 %v5482, 32
        %v5551 = vpop.permute.xlu0 %5550
        %5552 = vrot.lane.b32.xlu0 %v5484, 32
        %v5553 = vpop.permute.xlu0 %5552
        %5554 = vrot.lane.b32.xlu0 %v5487, 32
        %v5555 = vpop.permute.xlu0 %5554
        %5556 = vrot.lane.b32.xlu0 %v5489, 32
        %v5557 = vpop.permute.xlu0 %5556
        %5558 = vrot.lane.b32.xlu0 %v5492, 32
        %v5559 = vpop.permute.xlu0 %5558
        %5560 = vrot.lane.b32.xlu0 %v5494, 32
        %v5561 = vpop.permute.xlu0 %5560
        %5562 = vrot.lane.b32.xlu0 %v5497, 32
        %v5563 = vpop.permute.xlu0 %5562
        %5564 = vrot.lane.b32.xlu0 %v5499, 32
        %v5565 = vpop.permute.xlu0 %5564
        %5566 = vrot.lane.b32.xlu0 %v5502, 32
        %v5567 = vpop.permute.xlu0 %5566
        %5568 = vrot.lane.b32.xlu0 %v5504, 32
        %v5569 = vpop.permute.xlu0 %5568
        %5570 = vrot.lane.b32.xlu0 %v5507, 32
        %v5571 = vpop.permute.xlu0 %5570
        %5572 = vrot.lane.b32.xlu0 %v5509, 32
        %v5573 = vpop.permute.xlu0 %5572
        %vm5606 = vcmask 1045504
        %v5607 = vrot.slane %v5327, 2
        %v5608 = vrot.slane %v5328, 2
        %v5609 = vsel %vm5606, %v5607, %v5608
        %v5610 = vrot.slane %v5329, 2
        %v5611 = vsel %vm5606, %v5608, %v5610
        %v5612 = vrot.slane %v5330, 2
        %v5613 = vrot.slane %v5331, 2
        %v5614 = vsel %vm5606, %v5612, %v5613
        %v5615 = vrot.slane %v5332, 2
        %v5616 = vsel %vm5606, %v5613, %v5615
        %v5617 = vrot.slane %v5333, 2
        %v5618 = vrot.slane %v5334, 2
        %v5619 = vsel %vm5606, %v5617, %v5618
        %v5620 = vrot.slane %v5335, 2
        %v5621 = vsel %vm5606, %v5618, %v5620
        %v5622 = vrot.slane %v5336, 2
        %v5623 = vrot.slane %v5337, 2
        %v5624 = vsel %vm5606, %v5622, %v5623
        %v5625 = vrot.slane %v5338, 2
        %v5626 = vsel %vm5606, %v5623, %v5625
        %v5627 = vrot.slane %v5339, 2
        %v5628 = vrot.slane %v5340, 2
        %v5629 = vsel %vm5606, %v5627, %v5628
        %v5630 = vrot.slane %v5341, 2
        %v5631 = vsel %vm5606, %v5628, %v5630
        %v5632 = vrot.slane %v5342, 2
        %v5633 = vrot.slane %v5343, 2
        %v5634 = vsel %vm5606, %v5632, %v5633
        %v5635 = vrot.slane %v5344, 2
        %v5636 = vsel %vm5606, %v5633, %v5635
        %v5637 = vrot.slane %v5345, 2
        %v5638 = vrot.slane %v5346, 2
        %v5639 = vsel %vm5606, %v5637, %v5638
        %v5640 = vrot.slane %v5347, 2
        %v5641 = vsel %vm5606, %v5638, %v5640
        %v5642 = vrot.slane %v5348, 2
        %v5643 = vrot.slane %v5349, 2
        %v5644 = vsel %vm5606, %v5642, %v5643
        %v5645 = vrot.slane %v5350, 2
        %v5646 = vsel %vm5606, %v5643, %v5645
        %v5647 = vrot.slane %v5351, 2
        %v5648 = vrot.slane %v5352, 2
        %v5649 = vsel %vm5606, %v5647, %v5648
        %v5650 = vrot.slane %v5353, 2
        %v5651 = vsel %vm5606, %v5648, %v5650
        %v5652 = vrot.slane %v5354, 2
        %v5653 = vrot.slane %v5355, 2
        %v5654 = vsel %vm5606, %v5652, %v5653
        %v5655 = vrot.slane %v5356, 2
        %v5656 = vsel %vm5606, %v5653, %v5655
        %v5657 = vrot.slane %v5357, 2
        %v5658 = vrot.slane %v5358, 2
        %v5659 = vsel %vm5606, %v5657, %v5658
        %v5660 = vrot.slane %v5359, 2
        %v5661 = vsel %vm5606, %v5658, %v5660
        %v5662 = vrot.slane %v5360, 2
        %v5663 = vrot.slane %v5361, 2
        %v5664 = vsel %vm5606, %v5662, %v5663
        %v5665 = vrot.slane %v5362, 2
        %v5666 = vsel %vm5606, %v5663, %v5665
        %v5667 = vrot.slane %v5363, 2
        %v5668 = vrot.slane %v5364, 2
        %v5669 = vsel %vm5606, %v5667, %v5668
        %v5670 = vrot.slane %v5365, 2
        %v5671 = vsel %vm5606, %v5668, %v5670
        %v5672 = vrot.slane %v5366, 2
        %v5673 = vrot.slane %v5367, 2
        %v5674 = vsel %vm5606, %v5672, %v5673
        %v5675 = vrot.slane %v5368, 2
        %v5676 = vsel %vm5606, %v5673, %v5675
        %v5677 = vrot.slane %v5369, 2
        %v5678 = vrot.slane %v5370, 2
        %v5679 = vsel %vm5606, %v5677, %v5678
        %v5680 = vrot.slane %v5371, 2
        %v5681 = vsel %vm5606, %v5678, %v5680
        %v5682 = vrot.slane %v5372, 2
        %v5683 = vrot.slane %v5373, 2
        %v5684 = vsel %vm5606, %v5682, %v5683
        %v5685 = vrot.slane %v5374, 2
        %v5686 = vsel %vm5606, %v5683, %v5685
        %5687 = vrot.lane.b32.xlu0 %v5609, 64
        %v5688 = vpop.permute.xlu0 %5687
        %5689 = vrot.lane.b32.xlu0 %v5611, 64
        %v5690 = vpop.permute.xlu0 %5689
        %5691 = vrot.lane.b32.xlu0 %v5614, 64
        %v5692 = vpop.permute.xlu0 %5691
        %5693 = vrot.lane.b32.xlu0 %v5616, 64
        %v5694 = vpop.permute.xlu0 %5693
        %5695 = vrot.lane.b32.xlu0 %v5619, 64
        %v5696 = vpop.permute.xlu0 %5695
        %5697 = vrot.lane.b32.xlu0 %v5621, 64
        %v5698 = vpop.permute.xlu0 %5697
        %5699 = vrot.lane.b32.xlu0 %v5624, 64
        %v5700 = vpop.permute.xlu0 %5699
        %5701 = vrot.lane.b32.xlu0 %v5626, 64
        %v5702 = vpop.permute.xlu0 %5701
        %5703 = vrot.lane.b32.xlu0 %v5629, 64
        %v5704 = vpop.permute.xlu0 %5703
        %5705 = vrot.lane.b32.xlu0 %v5631, 64
        %v5706 = vpop.permute.xlu0 %5705
        %5707 = vrot.lane.b32.xlu0 %v5634, 64
        %v5708 = vpop.permute.xlu0 %5707
        %5709 = vrot.lane.b32.xlu0 %v5636, 64
        %v5710 = vpop.permute.xlu0 %5709
        %5711 = vrot.lane.b32.xlu0 %v5639, 64
        %v5712 = vpop.permute.xlu0 %5711
        %5713 = vrot.lane.b32.xlu0 %v5641, 64
        %v5714 = vpop.permute.xlu0 %5713
        %5715 = vrot.lane.b32.xlu0 %v5644, 64
        %v5716 = vpop.permute.xlu0 %5715
        %5717 = vrot.lane.b32.xlu0 %v5646, 64
        %v5718 = vpop.permute.xlu0 %5717
        %5719 = vrot.lane.b32.xlu0 %v5649, 64
        %v5720 = vpop.permute.xlu0 %5719
        %5721 = vrot.lane.b32.xlu0 %v5651, 64
        %v5722 = vpop.permute.xlu0 %5721
        %5723 = vrot.lane.b32.xlu0 %v5654, 64
        %v5724 = vpop.permute.xlu0 %5723
        %5725 = vrot.lane.b32.xlu0 %v5656, 64
        %v5726 = vpop.permute.xlu0 %5725
        %5727 = vrot.lane.b32.xlu0 %v5659, 64
        %v5728 = vpop.permute.xlu0 %5727
        %5729 = vrot.lane.b32.xlu0 %v5661, 64
        %v5730 = vpop.permute.xlu0 %5729
        %5731 = vrot.lane.b32.xlu0 %v5664, 64
        %v5732 = vpop.permute.xlu0 %5731
        %5733 = vrot.lane.b32.xlu0 %v5666, 64
        %v5734 = vpop.permute.xlu0 %5733
        %5735 = vrot.lane.b32.xlu0 %v5669, 64
        %v5736 = vpop.permute.xlu0 %5735
        %5737 = vrot.lane.b32.xlu0 %v5671, 64
        %v5738 = vpop.permute.xlu0 %5737
        %5739 = vrot.lane.b32.xlu0 %v5674, 64
        %v5740 = vpop.permute.xlu0 %5739
        %5741 = vrot.lane.b32.xlu0 %v5676, 64
        %v5742 = vpop.permute.xlu0 %5741
        %5743 = vrot.lane.b32.xlu0 %v5679, 64
        %v5744 = vpop.permute.xlu0 %5743
        %5745 = vrot.lane.b32.xlu0 %v5681, 64
        %v5746 = vpop.permute.xlu0 %5745
        %5747 = vrot.lane.b32.xlu0 %v5684, 64
        %v5748 = vpop.permute.xlu0 %5747
        %5749 = vrot.lane.b32.xlu0 %v5686, 64
        %v5750 = vpop.permute.xlu0 %5749
        %v5783 = vsel %vm356, %v5327, %v5511
        %v5784 = vsel %vm356, %v5328, %v5513
        %v5785 = vsel %vm356, %v5330, %v5515
        %v5786 = vsel %vm356, %v5331, %v5517
        %v5787 = vsel %vm356, %v5333, %v5519
        %v5788 = vsel %vm356, %v5334, %v5521
        %v5789 = vsel %vm356, %v5336, %v5523
        %v5790 = vsel %vm356, %v5337, %v5525
        %v5791 = vsel %vm356, %v5339, %v5527
        %v5792 = vsel %vm356, %v5340, %v5529
        %v5793 = vsel %vm356, %v5342, %v5531
        %v5794 = vsel %vm356, %v5343, %v5533
        %v5795 = vsel %vm356, %v5345, %v5535
        %v5796 = vsel %vm356, %v5346, %v5537
        %v5797 = vsel %vm356, %v5348, %v5539
        %v5798 = vsel %vm356, %v5349, %v5541
        %v5799 = vsel %vm356, %v5351, %v5543
        %v5800 = vsel %vm356, %v5352, %v5545
        %v5801 = vsel %vm356, %v5354, %v5547
        %v5802 = vsel %vm356, %v5355, %v5549
        %v5803 = vsel %vm356, %v5357, %v5551
        %v5804 = vsel %vm356, %v5358, %v5553
        %v5805 = vsel %vm356, %v5360, %v5555
        %v5806 = vsel %vm356, %v5361, %v5557
        %v5807 = vsel %vm356, %v5363, %v5559
        %v5808 = vsel %vm356, %v5364, %v5561
        %v5809 = vsel %vm356, %v5366, %v5563
        %v5810 = vsel %vm356, %v5367, %v5565
        %v5811 = vsel %vm356, %v5369, %v5567
        %v5812 = vsel %vm356, %v5370, %v5569
        %v5813 = vsel %vm356, %v5372, %v5571
        %v5814 = vsel %vm356, %v5373, %v5573
        %v5815 = vsel %vm5305, %v5783, %v5688
        %v5816 = vsel %vm5305, %v5784, %v5690
        %v5817 = vsel %vm5305, %v5785, %v5692
        %v5818 = vsel %vm5305, %v5786, %v5694
        %v5819 = vsel %vm5305, %v5787, %v5696
        %v5820 = vsel %vm5305, %v5788, %v5698
        %v5821 = vsel %vm5305, %v5789, %v5700
        %v5822 = vsel %vm5305, %v5790, %v5702
        %v5823 = vsel %vm5305, %v5791, %v5704
        %v5824 = vsel %vm5305, %v5792, %v5706
        %v5825 = vsel %vm5305, %v5793, %v5708
        %v5826 = vsel %vm5305, %v5794, %v5710
        %v5827 = vsel %vm5305, %v5795, %v5712
        %v5828 = vsel %vm5305, %v5796, %v5714
        %v5829 = vsel %vm5305, %v5797, %v5716
        %v5830 = vsel %vm5305, %v5798, %v5718
        %v5831 = vsel %vm5305, %v5799, %v5720
        %v5832 = vsel %vm5305, %v5800, %v5722
        %v5833 = vsel %vm5305, %v5801, %v5724
        %v5834 = vsel %vm5305, %v5802, %v5726
        %v5835 = vsel %vm5305, %v5803, %v5728
        %v5836 = vsel %vm5305, %v5804, %v5730
        %v5837 = vsel %vm5305, %v5805, %v5732
        %v5838 = vsel %vm5305, %v5806, %v5734
        %v5839 = vsel %vm5305, %v5807, %v5736
        %v5840 = vsel %vm5305, %v5808, %v5738
        %v5841 = vsel %vm5305, %v5809, %v5740
        %v5842 = vsel %vm5305, %v5810, %v5742
        %v5843 = vsel %vm5305, %v5811, %v5744
        %v5844 = vsel %vm5305, %v5812, %v5746
        %v5845 = vsel %vm5305, %v5813, %v5748
        %v5846 = vsel %vm5305, %v5814, %v5750
        %v5847 = vld [vmem:[%s3] sm:$0xff]
        %v5848 = vld [vmem:[%s3 + $0x8] sm:$0xff]
        %v5849 = vld [vmem:[%s3 + $0x10] sm:$0xff]
        %v5850 = vld [vmem:[%s3 + $0x18] sm:$0xff]
        %v5851 = vld [vmem:[%s3 + $0x20] sm:$0xff]
        %v5852 = vld [vmem:[%s3 + $0x28] sm:$0xff]
        %v5853 = vld [vmem:[%s3 + $0x30] sm:$0xff]
        %v5854 = vld [vmem:[%s3 + $0x38] sm:$0xff]
        %v5855 = vld [vmem:[%s3 + $0x40] sm:$0xff]
        %v5856 = vld [vmem:[%s3 + $0x48] sm:$0xff]
        %v5857 = vld [vmem:[%s3 + $0x50] sm:$0xff]
        %v5858 = vld [vmem:[%s3 + $0x58] sm:$0xff]
        %v5862 = vrot.slane %v5375, 1
        %v5863 = vrot.slane %v5376, 1
        %v5864 = vsel %vm5429, %v5862, %v5863
        %v5865 = vrot.slane %v5377, 1
        %v5866 = vsel %vm5429, %v5863, %v5865
        %5867 = vrot.lane.b32.xlu0 %v5864, 32
        %v5868 = vpop.permute.xlu0 %5867
        %5869 = vrot.lane.b32.xlu0 %v5866, 32
        %v5870 = vpop.permute.xlu0 %5869
        %v5873 = vrot.slane %v5375, 2
        %v5874 = vrot.slane %v5376, 2
        %v5875 = vsel %vm5606, %v5873, %v5874
        %v5876 = vrot.slane %v5377, 2
        %v5877 = vsel %vm5606, %v5874, %v5876
        %5878 = vrot.lane.b32.xlu0 %v5875, 64
        %v5879 = vpop.permute.xlu0 %5878
        %5880 = vrot.lane.b32.xlu0 %v5877, 64
        %v5881 = vpop.permute.xlu0 %5880
        %v5884 = vsel %vm356, %v5375, %v5868
        %v5885 = vsel %vm356, %v5376, %v5870
        %v5886 = vsel %vm5305, %v5884, %v5879
        %v5887 = vsel %vm5305, %v5885, %v5881
        %s5888 = scalar_lea.vmem %s3, 96
        %v5889 = vld [vmem:[%s5888] sm:$0xff]
        %v5890 = vld [vmem:[%s5888 + $0x8] sm:$0xff]
        %v5891 = vld [vmem:[%s5888 + $0x10] sm:$0xff]
        %v5892 = vld [vmem:[%s5888 + $0x18] sm:$0xff]
        %v5893 = vld [vmem:[%s5888 + $0x20] sm:$0xff]
        %v5894 = vld [vmem:[%s5888 + $0x28] sm:$0xff]
        %v5895 = vld [vmem:[%s5888 + $0x30] sm:$0xff]
        %v5896 = vld [vmem:[%s5888 + $0x38] sm:$0xff]
        %v5897 = vld [vmem:[%s5888 + $0x40] sm:$0xff]
        %v5898 = vld [vmem:[%s5888 + $0x48] sm:$0xff]
        %v5899 = vld [vmem:[%s5888 + $0x50] sm:$0xff]
        %v5900 = vld [vmem:[%s5888 + $0x58] sm:$0xff]
        %vm5901 = vcmask 785408
        %v5903 = vsel %vm5901, %v5817, 0
        %v5906 = vsel %vm5901, %v5818, 0
        %v5909 = vsel %vm5901, %v5819, 0
        %v5912 = vsel %vm5901, %v5820, 0
        %v5915 = vsel %vm5901, %v5821, 0
        %v5918 = vsel %vm5901, %v5822, 0
        %v5921 = vsel %vm5901, %v5823, 0
        %v5924 = vsel %vm5901, %v5824, 0
        %v5927 = vsel %vm5901, %v5825, 0
        %v5930 = vsel %vm5901, %v5826, 0
        %v5933 = vsel %vm5901, %v5827, 0
        %v5936 = vsel %vm5901, %v5828, 0
        %v5939 = vsel %vm5901, %v5829, 0
        %v5942 = vsel %vm5901, %v5830, 0
        %v5945 = vsel %vm5901, %v5831, 0
        %v5948 = vsel %vm5901, %v5832, 0
        %v5951 = vsel %vm5901, %v5833, 0
        %v5954 = vsel %vm5901, %v5834, 0
        %v5957 = vsel %vm5901, %v5835, 0
        %v5960 = vsel %vm5901, %v5836, 0
        %v5963 = vsel %vm5901, %v5837, 0
        %v5966 = vsel %vm5901, %v5838, 0
        %v5969 = vsel %vm5901, %v5839, 0
        %v5972 = vsel %vm5901, %v5840, 0
        %v5975 = vsel %vm5901, %v5841, 0
        %v5978 = vsel %vm5901, %v5842, 0
        %v5981 = vsel %vm5901, %v5843, 0
        %v5984 = vsel %vm5901, %v5844, 0
        %v5987 = vsel %vm5901, %v5845, 0
        %v5990 = vsel %vm5901, %v5846, 0
        %v5993 = vsel %vm5901, %v5886, 0
        %v5996 = vsel %vm5901, %v5887, 0
        %5998 = vmatpush.msra.mxu0 0.0
        %5999 = vmatpush.msra.mxu0 0.0
        %6000 = vmatpush.msra.mxu0 0.0
        %6001 = vmatpush.msra.mxu0 0.0
        %6002 = vmatpush.msra.mxu0 %v5900
        %6003 = vmatpush.msra.mxu0 %v5899
        %6004 = vmatpush.msra.mxu0 %v5898
        %6005 = vmatpush.msra.mxu0 %v5897
        %6006 = vmatpush.msra.mxu0 %v5896
        %6007 = vmatpush.msra.mxu0 %v5895
        %6008 = vmatpush.msra.mxu0 %v5894
        %6009 = vmatpush.msra.mxu0 %v5893
        %6010 = vmatpush.msra.mxu0 %v5892
        %6011 = vmatpush.msra.mxu0 %v5891
        %6012 = vmatpush.msra.mxu0 %v5890
        %6013 = vmatpush.msra.mxu0 %v5889
        %6014 = vmatmul.f32.gmra.mxu0 %v5903
        %v6015 = vpop.f32.mrf.mxu0
        %v6016 = vadd.f32 0.0, %v6015
        %6017 = vmatmul.f32.gmra.mxu0 %v5906
        %v6018 = vpop.f32.mrf.mxu0
        %v6019 = vadd.f32 0.0, %v6018
        %6020 = vmatmul.f32.gmra.mxu0 %v5909
        %v6021 = vpop.f32.mrf.mxu0
        %v6022 = vadd.f32 0.0, %v6021
        %6023 = vmatmul.f32.gmra.mxu0 %v5912
        %v6024 = vpop.f32.mrf.mxu0
        %v6025 = vadd.f32 0.0, %v6024
        %6026 = vmatmul.f32.gmra.mxu0 %v5915
        %v6027 = vpop.f32.mrf.mxu0
        %v6028 = vadd.f32 0.0, %v6027
        %6029 = vmatmul.f32.gmra.mxu0 %v5918
        %v6030 = vpop.f32.mrf.mxu0
        %v6031 = vadd.f32 0.0, %v6030
        %6032 = vmatmul.f32.gmra.mxu0 %v5921
        %v6033 = vpop.f32.mrf.mxu0
        %v6034 = vadd.f32 0.0, %v6033
        %6035 = vmatmul.f32.gmra.mxu0 %v5924
        %v6036 = vpop.f32.mrf.mxu0
        %v6037 = vadd.f32 0.0, %v6036
        %6038 = vmatmul.f32.gmra.mxu0 %v5927
        %v6039 = vpop.f32.mrf.mxu0
        %v6040 = vadd.f32 0.0, %v6039
        %6041 = vmatmul.f32.gmra.mxu0 %v5930
        %v6042 = vpop.f32.mrf.mxu0
        %v6043 = vadd.f32 0.0, %v6042
        %6044 = vmatmul.f32.gmra.mxu0 %v5933
        %v6045 = vpop.f32.mrf.mxu0
        %v6046 = vadd.f32 0.0, %v6045
        %6047 = vmatmul.f32.gmra.mxu0 %v5936
        %v6048 = vpop.f32.mrf.mxu0
        %v6049 = vadd.f32 0.0, %v6048
        %6050 = vmatmul.f32.gmra.mxu0 %v5939
        %v6051 = vpop.f32.mrf.mxu0
        %v6052 = vadd.f32 0.0, %v6051
        %6053 = vmatmul.f32.gmra.mxu0 %v5942
        %v6054 = vpop.f32.mrf.mxu0
        %v6055 = vadd.f32 0.0, %v6054
        %6056 = vmatmul.f32.gmra.mxu0 %v5945
        %v6057 = vpop.f32.mrf.mxu0
        %v6058 = vadd.f32 0.0, %v6057
        %6059 = vmatmul.f32.gmra.mxu0 %v5948
        %v6060 = vpop.f32.mrf.mxu0
        %v6061 = vadd.f32 0.0, %v6060
        %6062 = vmatmul.f32.gmra.mxu0 %v5951
        %v6063 = vpop.f32.mrf.mxu0
        %v6064 = vadd.f32 0.0, %v6063
        %6065 = vmatmul.f32.gmra.mxu0 %v5954
        %v6066 = vpop.f32.mrf.mxu0
        %v6067 = vadd.f32 0.0, %v6066
        %6068 = vmatmul.f32.gmra.mxu0 %v5957
        %v6069 = vpop.f32.mrf.mxu0
        %v6070 = vadd.f32 0.0, %v6069
        %6071 = vmatmul.f32.gmra.mxu0 %v5960
        %v6072 = vpop.f32.mrf.mxu0
        %v6073 = vadd.f32 0.0, %v6072
        %6074 = vmatmul.f32.gmra.mxu0 %v5963
        %v6075 = vpop.f32.mrf.mxu0
        %v6076 = vadd.f32 0.0, %v6075
        %6077 = vmatmul.f32.gmra.mxu0 %v5966
        %v6078 = vpop.f32.mrf.mxu0
        %v6079 = vadd.f32 0.0, %v6078
        %6080 = vmatmul.f32.gmra.mxu0 %v5969
        %v6081 = vpop.f32.mrf.mxu0
        %v6082 = vadd.f32 0.0, %v6081
        %6083 = vmatmul.f32.gmra.mxu0 %v5972
        %v6084 = vpop.f32.mrf.mxu0
        %v6085 = vadd.f32 0.0, %v6084
        %6086 = vmatmul.f32.gmra.mxu0 %v5975
        %v6087 = vpop.f32.mrf.mxu0
        %v6088 = vadd.f32 0.0, %v6087
        %6089 = vmatmul.f32.gmra.mxu0 %v5978
        %v6090 = vpop.f32.mrf.mxu0
        %v6091 = vadd.f32 0.0, %v6090
        %6092 = vmatmul.f32.gmra.mxu0 %v5981
        %v6093 = vpop.f32.mrf.mxu0
        %v6094 = vadd.f32 0.0, %v6093
        %6095 = vmatmul.f32.gmra.mxu0 %v5984
        %v6096 = vpop.f32.mrf.mxu0
        %v6097 = vadd.f32 0.0, %v6096
        %6098 = vmatmul.f32.gmra.mxu0 %v5987
        %v6099 = vpop.f32.mrf.mxu0
        %v6100 = vadd.f32 0.0, %v6099
        %6101 = vmatmul.f32.gmra.mxu0 %v5990
        %v6102 = vpop.f32.mrf.mxu0
        %v6103 = vadd.f32 0.0, %v6102
        %6104 = vmatmul.f32.gmra.mxu0 %v5993
        %v6105 = vpop.f32.mrf.mxu0
        %v6106 = vadd.f32 0.0, %v6105
        %6107 = vmatmul.f32.gmra.mxu0 %v5996
        %v6108 = vpop.f32.mrf.mxu0
        %v6109 = vadd.f32 0.0, %v6108
        %6110 = vdwg.mxu0
        %v6112 = vsel %vm5901, %v5815, 0
        %v6115 = vsel %vm5901, %v5816, 0
        %6117 = vmatpush.msra.mxu0 0.0
        %6118 = vmatpush.msra.mxu0 0.0
        %6119 = vmatpush.msra.mxu0 0.0
        %6120 = vmatpush.msra.mxu0 0.0
        %6121 = vmatpush.msra.mxu0 %v5858
        %6122 = vmatpush.msra.mxu0 %v5857
        %6123 = vmatpush.msra.mxu0 %v5856
        %6124 = vmatpush.msra.mxu0 %v5855
        %6125 = vmatpush.msra.mxu0 %v5854
        %6126 = vmatpush.msra.mxu0 %v5853
        %6127 = vmatpush.msra.mxu0 %v5852
        %6128 = vmatpush.msra.mxu0 %v5851
        %6129 = vmatpush.msra.mxu0 %v5850
        %6130 = vmatpush.msra.mxu0 %v5849
        %6131 = vmatpush.msra.mxu0 %v5848
        %6132 = vmatpush.msra.mxu0 %v5847
        %6133 = vmatmul.f32.gmra.mxu0 %v6112
        %v6134 = vpop.f32.mrf.mxu0
        %v6135 = vadd.f32 %v6016, %v6134
        %6136 = vmatmul.f32.gmra.mxu0 %v6115
        %v6137 = vpop.f32.mrf.mxu0
        %v6138 = vadd.f32 %v6019, %v6137
        %6139 = vmatmul.f32.gmra.mxu0 %v5903
        %v6140 = vpop.f32.mrf.mxu0
        %v6141 = vadd.f32 %v6022, %v6140
        %6142 = vmatmul.f32.gmra.mxu0 %v5906
        %v6143 = vpop.f32.mrf.mxu0
        %v6144 = vadd.f32 %v6025, %v6143
        %6145 = vmatmul.f32.gmra.mxu0 %v5909
        %v6146 = vpop.f32.mrf.mxu0
        %v6147 = vadd.f32 %v6028, %v6146
        %6148 = vmatmul.f32.gmra.mxu0 %v5912
        %v6149 = vpop.f32.mrf.mxu0
        %v6150 = vadd.f32 %v6031, %v6149
        %6151 = vmatmul.f32.gmra.mxu0 %v5915
        %v6152 = vpop.f32.mrf.mxu0
        %v6153 = vadd.f32 %v6034, %v6152
        %6154 = vmatmul.f32.gmra.mxu0 %v5918
        %v6155 = vpop.f32.mrf.mxu0
        %v6156 = vadd.f32 %v6037, %v6155
        %6157 = vmatmul.f32.gmra.mxu0 %v5921
        %v6158 = vpop.f32.mrf.mxu0
        %v6159 = vadd.f32 %v6040, %v6158
        %6160 = vmatmul.f32.gmra.mxu0 %v5924
        %v6161 = vpop.f32.mrf.mxu0
        %v6162 = vadd.f32 %v6043, %v6161
        %6163 = vmatmul.f32.gmra.mxu0 %v5927
        %v6164 = vpop.f32.mrf.mxu0
        %v6165 = vadd.f32 %v6046, %v6164
        %6166 = vmatmul.f32.gmra.mxu0 %v5930
        %v6167 = vpop.f32.mrf.mxu0
        %v6168 = vadd.f32 %v6049, %v6167
        %6169 = vmatmul.f32.gmra.mxu0 %v5933
        %v6170 = vpop.f32.mrf.mxu0
        %v6171 = vadd.f32 %v6052, %v6170
        %6172 = vmatmul.f32.gmra.mxu0 %v5936
        %v6173 = vpop.f32.mrf.mxu0
        %v6174 = vadd.f32 %v6055, %v6173
        %6175 = vmatmul.f32.gmra.mxu0 %v5939
        %v6176 = vpop.f32.mrf.mxu0
        %v6177 = vadd.f32 %v6058, %v6176
        %6178 = vmatmul.f32.gmra.mxu0 %v5942
        %v6179 = vpop.f32.mrf.mxu0
        %v6180 = vadd.f32 %v6061, %v6179
        %6181 = vmatmul.f32.gmra.mxu0 %v5945
        %v6182 = vpop.f32.mrf.mxu0
        %v6183 = vadd.f32 %v6064, %v6182
        %6184 = vmatmul.f32.gmra.mxu0 %v5948
        %v6185 = vpop.f32.mrf.mxu0
        %v6186 = vadd.f32 %v6067, %v6185
        %6187 = vmatmul.f32.gmra.mxu0 %v5951
        %v6188 = vpop.f32.mrf.mxu0
        %v6189 = vadd.f32 %v6070, %v6188
        %6190 = vmatmul.f32.gmra.mxu0 %v5954
        %v6191 = vpop.f32.mrf.mxu0
        %v6192 = vadd.f32 %v6073, %v6191
        %6193 = vmatmul.f32.gmra.mxu0 %v5957
        %v6194 = vpop.f32.mrf.mxu0
        %v6195 = vadd.f32 %v6076, %v6194
        %6196 = vmatmul.f32.gmra.mxu0 %v5960
        %v6197 = vpop.f32.mrf.mxu0
        %v6198 = vadd.f32 %v6079, %v6197
        %6199 = vmatmul.f32.gmra.mxu0 %v5963
        %v6200 = vpop.f32.mrf.mxu0
        %v6201 = vadd.f32 %v6082, %v6200
        %6202 = vmatmul.f32.gmra.mxu0 %v5966
        %v6203 = vpop.f32.mrf.mxu0
        %v6204 = vadd.f32 %v6085, %v6203
        %6205 = vmatmul.f32.gmra.mxu0 %v5969
        %v6206 = vpop.f32.mrf.mxu0
        %v6207 = vadd.f32 %v6088, %v6206
        %6208 = vmatmul.f32.gmra.mxu0 %v5972
        %v6209 = vpop.f32.mrf.mxu0
        %v6210 = vadd.f32 %v6091, %v6209
        %6211 = vmatmul.f32.gmra.mxu0 %v5975
        %v6212 = vpop.f32.mrf.mxu0
        %v6213 = vadd.f32 %v6094, %v6212
        %6214 = vmatmul.f32.gmra.mxu0 %v5978
        %v6215 = vpop.f32.mrf.mxu0
        %v6216 = vadd.f32 %v6097, %v6215
        %6217 = vmatmul.f32.gmra.mxu0 %v5981
        %v6218 = vpop.f32.mrf.mxu0
        %v6219 = vadd.f32 %v6100, %v6218
        %6220 = vmatmul.f32.gmra.mxu0 %v5984
        %v6221 = vpop.f32.mrf.mxu0
        %v6222 = vadd.f32 %v6103, %v6221
        %6223 = vmatmul.f32.gmra.mxu0 %v5987
        %v6224 = vpop.f32.mrf.mxu0
        %v6225 = vadd.f32 %v6106, %v6224
        %6226 = vmatmul.f32.gmra.mxu0 %v5990
        %v6227 = vpop.f32.mrf.mxu0
        %v6228 = vadd.f32 %v6109, %v6227
        %6229 = vdwg.mxu0
        %v6233 = vrot.slane %v5378, 1
        %v6234 = vrot.slane %v5379, 1
        %v6235 = vsel %vm5429, %v6233, %v6234
        %v6236 = vrot.slane %v5380, 1
        %v6237 = vsel %vm5429, %v6234, %v6236
        %6238 = vrot.lane.b32.xlu0 %v6235, 32
        %v6239 = vpop.permute.xlu0 %6238
        %6240 = vrot.lane.b32.xlu0 %v6237, 32
        %v6241 = vpop.permute.xlu0 %6240
        %v6244 = vrot.slane %v5378, 2
        %v6245 = vrot.slane %v5379, 2
        %v6246 = vsel %vm5606, %v6244, %v6245
        %v6247 = vrot.slane %v5380, 2
        %v6248 = vsel %vm5606, %v6245, %v6247
        %6249 = vrot.lane.b32.xlu0 %v6246, 64
        %v6250 = vpop.permute.xlu0 %6249
        %6251 = vrot.lane.b32.xlu0 %v6248, 64
        %v6252 = vpop.permute.xlu0 %6251
        %v6255 = vsel %vm356, %v5378, %v6239
        %v6256 = vsel %vm356, %v5379, %v6241
        %v6257 = vsel %vm5305, %v6255, %v6250
        %v6258 = vsel %vm5305, %v6256, %v6252
        %s6259 = scalar_lea.vmem %s3, 192
        %v6260 = vld [vmem:[%s6259] sm:$0xff]
        %v6261 = vld [vmem:[%s6259 + $0x8] sm:$0xff]
        %v6262 = vld [vmem:[%s6259 + $0x10] sm:$0xff]
        %v6263 = vld [vmem:[%s6259 + $0x18] sm:$0xff]
        %v6264 = vld [vmem:[%s6259 + $0x20] sm:$0xff]
        %v6265 = vld [vmem:[%s6259 + $0x28] sm:$0xff]
        %v6266 = vld [vmem:[%s6259 + $0x30] sm:$0xff]
        %v6267 = vld [vmem:[%s6259 + $0x38] sm:$0xff]
        %v6268 = vld [vmem:[%s6259 + $0x40] sm:$0xff]
        %v6269 = vld [vmem:[%s6259 + $0x48] sm:$0xff]
        %v6270 = vld [vmem:[%s6259 + $0x50] sm:$0xff]
        %v6271 = vld [vmem:[%s6259 + $0x58] sm:$0xff]
        %v6273 = vsel %vm5901, %v6257, 0
        %v6276 = vsel %vm5901, %v6258, 0
        %6278 = vmatpush.msra.mxu0 0.0
        %6279 = vmatpush.msra.mxu0 0.0
        %6280 = vmatpush.msra.mxu0 0.0
        %6281 = vmatpush.msra.mxu0 0.0
        %6282 = vmatpush.msra.mxu0 %v6271
        %6283 = vmatpush.msra.mxu0 %v6270
        %6284 = vmatpush.msra.mxu0 %v6269
        %6285 = vmatpush.msra.mxu0 %v6268
        %6286 = vmatpush.msra.mxu0 %v6267
        %6287 = vmatpush.msra.mxu0 %v6266
        %6288 = vmatpush.msra.mxu0 %v6265
        %6289 = vmatpush.msra.mxu0 %v6264
        %6290 = vmatpush.msra.mxu0 %v6263
        %6291 = vmatpush.msra.mxu0 %v6262
        %6292 = vmatpush.msra.mxu0 %v6261
        %6293 = vmatpush.msra.mxu0 %v6260
        %6294 = vmatmul.f32.gmra.mxu0 %v5909
        %v6295 = vpop.f32.mrf.mxu0
        %v6296 = vadd.f32 0.0, %v6295
        %6297 = vmatmul.f32.gmra.mxu0 %v5912
        %v6298 = vpop.f32.mrf.mxu0
        %v6299 = vadd.f32 0.0, %v6298
        %6300 = vmatmul.f32.gmra.mxu0 %v5915
        %v6301 = vpop.f32.mrf.mxu0
        %v6302 = vadd.f32 0.0, %v6301
        %6303 = vmatmul.f32.gmra.mxu0 %v5918
        %v6304 = vpop.f32.mrf.mxu0
        %v6305 = vadd.f32 0.0, %v6304
        %6306 = vmatmul.f32.gmra.mxu0 %v5921
        %v6307 = vpop.f32.mrf.mxu0
        %v6308 = vadd.f32 0.0, %v6307
        %6309 = vmatmul.f32.gmra.mxu0 %v5924
        %v6310 = vpop.f32.mrf.mxu0
        %v6311 = vadd.f32 0.0, %v6310
        %6312 = vmatmul.f32.gmra.mxu0 %v5927
        %v6313 = vpop.f32.mrf.mxu0
        %v6314 = vadd.f32 0.0, %v6313
        %6315 = vmatmul.f32.gmra.mxu0 %v5930
        %v6316 = vpop.f32.mrf.mxu0
        %v6317 = vadd.f32 0.0, %v6316
        %6318 = vmatmul.f32.gmra.mxu0 %v5933
        %v6319 = vpop.f32.mrf.mxu0
        %v6320 = vadd.f32 0.0, %v6319
        %6321 = vmatmul.f32.gmra.mxu0 %v5936
        %v6322 = vpop.f32.mrf.mxu0
        %v6323 = vadd.f32 0.0, %v6322
        %6324 = vmatmul.f32.gmra.mxu0 %v5939
        %v6325 = vpop.f32.mrf.mxu0
        %v6326 = vadd.f32 0.0, %v6325
        %6327 = vmatmul.f32.gmra.mxu0 %v5942
        %v6328 = vpop.f32.mrf.mxu0
        %v6329 = vadd.f32 0.0, %v6328
        %6330 = vmatmul.f32.gmra.mxu0 %v5945
        %v6331 = vpop.f32.mrf.mxu0
        %v6332 = vadd.f32 0.0, %v6331
        %6333 = vmatmul.f32.gmra.mxu0 %v5948
        %v6334 = vpop.f32.mrf.mxu0
        %v6335 = vadd.f32 0.0, %v6334
        %6336 = vmatmul.f32.gmra.mxu0 %v5951
        %v6337 = vpop.f32.mrf.mxu0
        %v6338 = vadd.f32 0.0, %v6337
        %6339 = vmatmul.f32.gmra.mxu0 %v5954
        %v6340 = vpop.f32.mrf.mxu0
        %v6341 = vadd.f32 0.0, %v6340
        %6342 = vmatmul.f32.gmra.mxu0 %v5957
        %v6343 = vpop.f32.mrf.mxu0
        %v6344 = vadd.f32 0.0, %v6343
        %6345 = vmatmul.f32.gmra.mxu0 %v5960
        %v6346 = vpop.f32.mrf.mxu0
        %v6347 = vadd.f32 0.0, %v6346
        %6348 = vmatmul.f32.gmra.mxu0 %v5963
        %v6349 = vpop.f32.mrf.mxu0
        %v6350 = vadd.f32 0.0, %v6349
        %6351 = vmatmul.f32.gmra.mxu0 %v5966
        %v6352 = vpop.f32.mrf.mxu0
        %v6353 = vadd.f32 0.0, %v6352
        %6354 = vmatmul.f32.gmra.mxu0 %v5969
        %v6355 = vpop.f32.mrf.mxu0
        %v6356 = vadd.f32 0.0, %v6355
        %6357 = vmatmul.f32.gmra.mxu0 %v5972
        %v6358 = vpop.f32.mrf.mxu0
        %v6359 = vadd.f32 0.0, %v6358
        %6360 = vmatmul.f32.gmra.mxu0 %v5975
        %v6361 = vpop.f32.mrf.mxu0
        %v6362 = vadd.f32 0.0, %v6361
        %6363 = vmatmul.f32.gmra.mxu0 %v5978
        %v6364 = vpop.f32.mrf.mxu0
        %v6365 = vadd.f32 0.0, %v6364
        %6366 = vmatmul.f32.gmra.mxu0 %v5981
        %v6367 = vpop.f32.mrf.mxu0
        %v6368 = vadd.f32 0.0, %v6367
        %6369 = vmatmul.f32.gmra.mxu0 %v5984
        %v6370 = vpop.f32.mrf.mxu0
        %v6371 = vadd.f32 0.0, %v6370
        %6372 = vmatmul.f32.gmra.mxu0 %v5987
        %v6373 = vpop.f32.mrf.mxu0
        %v6374 = vadd.f32 0.0, %v6373
        %6375 = vmatmul.f32.gmra.mxu0 %v5990
        %v6376 = vpop.f32.mrf.mxu0
        %v6377 = vadd.f32 0.0, %v6376
        %6378 = vmatmul.f32.gmra.mxu0 %v5993
        %v6379 = vpop.f32.mrf.mxu0
        %v6380 = vadd.f32 0.0, %v6379
        %6381 = vmatmul.f32.gmra.mxu0 %v5996
        %v6382 = vpop.f32.mrf.mxu0
        %v6383 = vadd.f32 0.0, %v6382
        %6384 = vmatmul.f32.gmra.mxu0 %v6273
        %v6385 = vpop.f32.mrf.mxu0
        %v6386 = vadd.f32 0.0, %v6385
        %6387 = vmatmul.f32.gmra.mxu0 %v6276
        %v6388 = vpop.f32.mrf.mxu0
        %v6389 = vadd.f32 0.0, %v6388
        %6390 = vdwg.mxu0
        %v6391 = vadd.f32 %v6135, %v6296
        %v6392 = vadd.f32 %v6138, %v6299
        %v6393 = vadd.f32 %v6141, %v6302
        %v6394 = vadd.f32 %v6144, %v6305
        %v6395 = vadd.f32 %v6147, %v6308
        %v6396 = vadd.f32 %v6150, %v6311
        %v6397 = vadd.f32 %v6153, %v6314
        %v6398 = vadd.f32 %v6156, %v6317
        %v6399 = vadd.f32 %v6159, %v6320
        %v6400 = vadd.f32 %v6162, %v6323
        %v6401 = vadd.f32 %v6165, %v6326
        %v6402 = vadd.f32 %v6168, %v6329
        %v6403 = vadd.f32 %v6171, %v6332
        %v6404 = vadd.f32 %v6174, %v6335
        %v6405 = vadd.f32 %v6177, %v6338
        %v6406 = vadd.f32 %v6180, %v6341
        %v6407 = vadd.f32 %v6183, %v6344
        %v6408 = vadd.f32 %v6186, %v6347
        %v6409 = vadd.f32 %v6189, %v6350
        %v6410 = vadd.f32 %v6192, %v6353
        %v6411 = vadd.f32 %v6195, %v6356
        %v6412 = vadd.f32 %v6198, %v6359
        %v6413 = vadd.f32 %v6201, %v6362
        %v6414 = vadd.f32 %v6204, %v6365
        %v6415 = vadd.f32 %v6207, %v6368
        %v6416 = vadd.f32 %v6210, %v6371
        %v6417 = vadd.f32 %v6213, %v6374
        %v6418 = vadd.f32 %v6216, %v6377
        %v6419 = vadd.f32 %v6219, %v6380
        %v6420 = vadd.f32 %v6222, %v6383
        %v6421 = vadd.f32 %v6225, %v6386
        %v6422 = vadd.f32 %v6228, %v6389
        %v6423 = vld [vmem:[#allocation8] sm:$0x1]
        %v6425 = vperm.slane %v6423, 0
        %v6427 = vadd.f32 %v6391, %v6425
        %v6428 = vadd.f32 %v6392, %v6425
        %v6429 = vadd.f32 %v6393, %v6425
        %v6430 = vadd.f32 %v6394, %v6425
        %v6431 = vadd.f32 %v6395, %v6425
        %v6432 = vadd.f32 %v6396, %v6425
        %v6433 = vadd.f32 %v6397, %v6425
        %v6434 = vadd.f32 %v6398, %v6425
        %v6435 = vadd.f32 %v6399, %v6425
        %v6436 = vadd.f32 %v6400, %v6425
        %v6437 = vadd.f32 %v6401, %v6425
        %v6438 = vadd.f32 %v6402, %v6425
        %v6439 = vadd.f32 %v6403, %v6425
        %v6440 = vadd.f32 %v6404, %v6425
        %v6441 = vadd.f32 %v6405, %v6425
        %v6442 = vadd.f32 %v6406, %v6425
        %v6443 = vadd.f32 %v6407, %v6425
        %v6444 = vadd.f32 %v6408, %v6425
        %v6445 = vadd.f32 %v6409, %v6425
        %v6446 = vadd.f32 %v6410, %v6425
        %v6447 = vadd.f32 %v6411, %v6425
        %v6448 = vadd.f32 %v6412, %v6425
        %v6449 = vadd.f32 %v6413, %v6425
        %v6450 = vadd.f32 %v6414, %v6425
        %v6451 = vadd.f32 %v6415, %v6425
        %v6452 = vadd.f32 %v6416, %v6425
        %v6453 = vadd.f32 %v6417, %v6425
        %v6454 = vadd.f32 %v6418, %v6425
        %v6455 = vadd.f32 %v6419, %v6425
        %v6456 = vadd.f32 %v6420, %v6425
        %v6457 = vadd.f32 %v6421, %v6425
        %v6458 = vadd.f32 %v6422, %v6425
        %v6459 = vmax.f32 %v6427, 0.0
        %v6460 = vmax.f32 %v6428, 0.0
        %v6461 = vmax.f32 %v6429, 0.0
        %v6462 = vmax.f32 %v6430, 0.0
        %v6463 = vmax.f32 %v6431, 0.0
        %v6464 = vmax.f32 %v6432, 0.0
        %v6465 = vmax.f32 %v6433, 0.0
        %v6466 = vmax.f32 %v6434, 0.0
        %v6467 = vmax.f32 %v6435, 0.0
        %v6468 = vmax.f32 %v6436, 0.0
        %v6469 = vmax.f32 %v6437, 0.0
        %v6470 = vmax.f32 %v6438, 0.0
        %v6471 = vmax.f32 %v6439, 0.0
        %v6472 = vmax.f32 %v6440, 0.0
        %v6473 = vmax.f32 %v6441, 0.0
        %v6474 = vmax.f32 %v6442, 0.0
        %v6475 = vmax.f32 %v6443, 0.0
        %v6476 = vmax.f32 %v6444, 0.0
        %v6477 = vmax.f32 %v6445, 0.0
        %v6478 = vmax.f32 %v6446, 0.0
        %v6479 = vmax.f32 %v6447, 0.0
        %v6480 = vmax.f32 %v6448, 0.0
        %v6481 = vmax.f32 %v6449, 0.0
        %v6482 = vmax.f32 %v6450, 0.0
        %v6483 = vmax.f32 %v6451, 0.0
        %v6484 = vmax.f32 %v6452, 0.0
        %v6485 = vmax.f32 %v6453, 0.0
        %v6486 = vmax.f32 %v6454, 0.0
        %v6487 = vmax.f32 %v6455, 0.0
        %v6488 = vmax.f32 %v6456, 0.0
        %v6489 = vmax.f32 %v6457, 0.0
        %v6490 = vmax.f32 %v6458, 0.0
        %v6523 = vrot.slane %v6459, 2
        %v6524 = vrot.slane %v6459, 4
        %v6525 = vrot.slane %v6459, 6
        %v6526 = vrot.slane %v6460, 2
        %v6527 = vrot.slane %v6460, 4
        %v6528 = vrot.slane %v6460, 6
        %v6529 = vrot.slane %v6461, 2
        %v6530 = vrot.slane %v6461, 4
        %v6531 = vrot.slane %v6461, 6
        %v6532 = vrot.slane %v6462, 2
        %v6533 = vrot.slane %v6462, 4
        %v6534 = vrot.slane %v6462, 6
        %v6535 = vrot.slane %v6463, 2
        %v6536 = vrot.slane %v6463, 4
        %v6537 = vrot.slane %v6463, 6
        %v6538 = vrot.slane %v6464, 2
        %v6539 = vrot.slane %v6464, 4
        %v6540 = vrot.slane %v6464, 6
        %v6541 = vrot.slane %v6465, 2
        %v6542 = vrot.slane %v6465, 4
        %v6543 = vrot.slane %v6465, 6
        %v6544 = vrot.slane %v6466, 2
        %v6545 = vrot.slane %v6466, 4
        %v6546 = vrot.slane %v6466, 6
        %v6547 = vrot.slane %v6467, 2
        %v6548 = vrot.slane %v6467, 4
        %v6549 = vrot.slane %v6467, 6
        %v6550 = vrot.slane %v6468, 2
        %v6551 = vrot.slane %v6468, 4
        %v6552 = vrot.slane %v6468, 6
        %v6553 = vrot.slane %v6469, 2
        %v6554 = vrot.slane %v6469, 4
        %v6555 = vrot.slane %v6469, 6
        %v6556 = vrot.slane %v6470, 2
        %v6557 = vrot.slane %v6470, 4
        %v6558 = vrot.slane %v6470, 6
        %v6559 = vrot.slane %v6471, 2
        %v6560 = vrot.slane %v6471, 4
        %v6561 = vrot.slane %v6471, 6
        %v6562 = vrot.slane %v6472, 2
        %v6563 = vrot.slane %v6472, 4
        %v6564 = vrot.slane %v6472, 6
        %v6565 = vrot.slane %v6473, 2
        %v6566 = vrot.slane %v6473, 4
        %v6567 = vrot.slane %v6473, 6
        %v6568 = vrot.slane %v6474, 2
        %v6569 = vrot.slane %v6474, 4
        %v6570 = vrot.slane %v6474, 6
        %v6571 = vrot.slane %v6475, 2
        %v6572 = vrot.slane %v6475, 4
        %v6573 = vrot.slane %v6475, 6
        %v6574 = vrot.slane %v6476, 2
        %v6575 = vrot.slane %v6476, 4
        %v6576 = vrot.slane %v6476, 6
        %v6577 = vrot.slane %v6477, 2
        %v6578 = vrot.slane %v6477, 4
        %v6579 = vrot.slane %v6477, 6
        %v6580 = vrot.slane %v6478, 2
        %v6581 = vrot.slane %v6478, 4
        %v6582 = vrot.slane %v6478, 6
        %v6583 = vrot.slane %v6479, 2
        %v6584 = vrot.slane %v6479, 4
        %v6585 = vrot.slane %v6479, 6
        %v6586 = vrot.slane %v6480, 2
        %v6587 = vrot.slane %v6480, 4
        %v6588 = vrot.slane %v6480, 6
        %v6589 = vrot.slane %v6481, 2
        %v6590 = vrot.slane %v6481, 4
        %v6591 = vrot.slane %v6481, 6
        %v6592 = vrot.slane %v6482, 2
        %v6593 = vrot.slane %v6482, 4
        %v6594 = vrot.slane %v6482, 6
        %v6595 = vrot.slane %v6483, 2
        %v6596 = vrot.slane %v6483, 4
        %v6597 = vrot.slane %v6483, 6
        %v6598 = vrot.slane %v6484, 2
        %v6599 = vrot.slane %v6484, 4
        %v6600 = vrot.slane %v6484, 6
        %v6601 = vrot.slane %v6485, 2
        %v6602 = vrot.slane %v6485, 4
        %v6603 = vrot.slane %v6485, 6
        %v6604 = vrot.slane %v6486, 2
        %v6605 = vrot.slane %v6486, 4
        %v6606 = vrot.slane %v6486, 6
        %v6607 = vrot.slane %v6487, 2
        %v6608 = vrot.slane %v6487, 4
        %v6609 = vrot.slane %v6487, 6
        %v6610 = vrot.slane %v6488, 2
        %v6611 = vrot.slane %v6488, 4
        %v6612 = vrot.slane %v6488, 6
        %v6613 = vrot.slane %v6489, 2
        %v6614 = vrot.slane %v6489, 4
        %v6615 = vrot.slane %v6489, 6
        %v6616 = vrot.slane %v6490, 2
        %v6617 = vrot.slane %v6490, 4
        %v6618 = vrot.slane %v6490, 6
        %v6715 = vsel %vm5307, %v6459, -inf
        %v6716 = vsel %vm5307, %v6461, -inf
        %v6717 = vmax.f32 %v6715, %v6716
        %v6718 = vrot.slane %v6717, 4
        %v6719 = vmax.f32 %v6717, %v6718
        %v6720 = vrot.slane %v6719, 2
        %v6721 = vmax.f32 %v6719, %v6720
        %v6722 = vrot.slane %v6721, 1
        %v6723 = vmax.f32 %v6721, %v6722
        %v6724 = vsel %vm5307, %v6523, -inf
        %v6725 = vsel %vm5307, %v6529, -inf
        %v6726 = vmax.f32 %v6724, %v6725
        %v6727 = vrot.slane %v6726, 4
        %v6728 = vmax.f32 %v6726, %v6727
        %v6729 = vrot.slane %v6728, 2
        %v6730 = vmax.f32 %v6728, %v6729
        %v6731 = vrot.slane %v6730, 1
        %v6732 = vmax.f32 %v6730, %v6731
        %v6733 = vsel %vm5307, %v6524, -inf
        %v6734 = vsel %vm5307, %v6530, -inf
        %v6735 = vmax.f32 %v6733, %v6734
        %v6736 = vrot.slane %v6735, 4
        %v6737 = vmax.f32 %v6735, %v6736
        %v6738 = vrot.slane %v6737, 2
        %v6739 = vmax.f32 %v6737, %v6738
        %v6740 = vrot.slane %v6739, 1
        %v6741 = vmax.f32 %v6739, %v6740
        %v6742 = vsel %vm5307, %v6525, -inf
        %v6743 = vsel %vm5307, %v6531, -inf
        %v6744 = vmax.f32 %v6742, %v6743
        %v6745 = vrot.slane %v6744, 4
        %v6746 = vmax.f32 %v6744, %v6745
        %v6747 = vrot.slane %v6746, 2
        %v6748 = vmax.f32 %v6746, %v6747
        %v6749 = vrot.slane %v6748, 1
        %v6750 = vmax.f32 %v6748, %v6749
        %v6751 = vsel %vm5307, %v6460, -inf
        %v6752 = vsel %vm5307, %v6462, -inf
        %v6753 = vmax.f32 %v6751, %v6752
        %v6754 = vrot.slane %v6753, 4
        %v6755 = vmax.f32 %v6753, %v6754
        %v6756 = vrot.slane %v6755, 2
        %v6757 = vmax.f32 %v6755, %v6756
        %v6758 = vrot.slane %v6757, 1
        %v6759 = vmax.f32 %v6757, %v6758
        %v6760 = vsel %vm5307, %v6526, -inf
        %v6761 = vsel %vm5307, %v6532, -inf
        %v6762 = vmax.f32 %v6760, %v6761
        %v6763 = vrot.slane %v6762, 4
        %v6764 = vmax.f32 %v6762, %v6763
        %v6765 = vrot.slane %v6764, 2
        %v6766 = vmax.f32 %v6764, %v6765
        %v6767 = vrot.slane %v6766, 1
        %v6768 = vmax.f32 %v6766, %v6767
        %v6769 = vsel %vm5307, %v6527, -inf
        %v6770 = vsel %vm5307, %v6533, -inf
        %v6771 = vmax.f32 %v6769, %v6770
        %v6772 = vrot.slane %v6771, 4
        %v6773 = vmax.f32 %v6771, %v6772
        %v6774 = vrot.slane %v6773, 2
        %v6775 = vmax.f32 %v6773, %v6774
        %v6776 = vrot.slane %v6775, 1
        %v6777 = vmax.f32 %v6775, %v6776
        %v6778 = vsel %vm5307, %v6528, -inf
        %v6779 = vsel %vm5307, %v6534, -inf
        %v6780 = vmax.f32 %v6778, %v6779
        %v6781 = vrot.slane %v6780, 4
        %v6782 = vmax.f32 %v6780, %v6781
        %v6783 = vrot.slane %v6782, 2
        %v6784 = vmax.f32 %v6782, %v6783
        %v6785 = vrot.slane %v6784, 1
        %v6786 = vmax.f32 %v6784, %v6785
        %v6787 = vsel %vm5307, %v6463, -inf
        %v6788 = vsel %vm5307, %v6465, -inf
        %v6789 = vmax.f32 %v6787, %v6788
        %v6790 = vrot.slane %v6789, 4
        %v6791 = vmax.f32 %v6789, %v6790
        %v6792 = vrot.slane %v6791, 2
        %v6793 = vmax.f32 %v6791, %v6792
        %v6794 = vrot.slane %v6793, 1
        %v6795 = vmax.f32 %v6793, %v6794
        %v6796 = vsel %vm5307, %v6535, -inf
        %v6797 = vsel %vm5307, %v6541, -inf
        %v6798 = vmax.f32 %v6796, %v6797
        %v6799 = vrot.slane %v6798, 4
        %v6800 = vmax.f32 %v6798, %v6799
        %v6801 = vrot.slane %v6800, 2
        %v6802 = vmax.f32 %v6800, %v6801
        %v6803 = vrot.slane %v6802, 1
        %v6804 = vmax.f32 %v6802, %v6803
        %v6805 = vsel %vm5307, %v6536, -inf
        %v6806 = vsel %vm5307, %v6542, -inf
        %v6807 = vmax.f32 %v6805, %v6806
        %v6808 = vrot.slane %v6807, 4
        %v6809 = vmax.f32 %v6807, %v6808
        %v6810 = vrot.slane %v6809, 2
        %v6811 = vmax.f32 %v6809, %v6810
        %v6812 = vrot.slane %v6811, 1
        %v6813 = vmax.f32 %v6811, %v6812
        %v6814 = vsel %vm5307, %v6537, -inf
        %v6815 = vsel %vm5307, %v6543, -inf
        %v6816 = vmax.f32 %v6814, %v6815
        %v6817 = vrot.slane %v6816, 4
        %v6818 = vmax.f32 %v6816, %v6817
        %v6819 = vrot.slane %v6818, 2
        %v6820 = vmax.f32 %v6818, %v6819
        %v6821 = vrot.slane %v6820, 1
        %v6822 = vmax.f32 %v6820, %v6821
        %v6823 = vsel %vm5307, %v6464, -inf
        %v6824 = vsel %vm5307, %v6466, -inf
        %v6825 = vmax.f32 %v6823, %v6824
        %v6826 = vrot.slane %v6825, 4
        %v6827 = vmax.f32 %v6825, %v6826
        %v6828 = vrot.slane %v6827, 2
        %v6829 = vmax.f32 %v6827, %v6828
        %v6830 = vrot.slane %v6829, 1
        %v6831 = vmax.f32 %v6829, %v6830
        %v6832 = vsel %vm5307, %v6538, -inf
        %v6833 = vsel %vm5307, %v6544, -inf
        %v6834 = vmax.f32 %v6832, %v6833
        %v6835 = vrot.slane %v6834, 4
        %v6836 = vmax.f32 %v6834, %v6835
        %v6837 = vrot.slane %v6836, 2
        %v6838 = vmax.f32 %v6836, %v6837
        %v6839 = vrot.slane %v6838, 1
        %v6840 = vmax.f32 %v6838, %v6839
        %v6841 = vsel %vm5307, %v6539, -inf
        %v6842 = vsel %vm5307, %v6545, -inf
        %v6843 = vmax.f32 %v6841, %v6842
        %v6844 = vrot.slane %v6843, 4
        %v6845 = vmax.f32 %v6843, %v6844
        %v6846 = vrot.slane %v6845, 2
        %v6847 = vmax.f32 %v6845, %v6846
        %v6848 = vrot.slane %v6847, 1
        %v6849 = vmax.f32 %v6847, %v6848
        %v6850 = vsel %vm5307, %v6540, -inf
        %v6851 = vsel %vm5307, %v6546, -inf
        %v6852 = vmax.f32 %v6850, %v6851
        %v6853 = vrot.slane %v6852, 4
        %v6854 = vmax.f32 %v6852, %v6853
        %v6855 = vrot.slane %v6854, 2
        %v6856 = vmax.f32 %v6854, %v6855
        %v6857 = vrot.slane %v6856, 1
        %v6858 = vmax.f32 %v6856, %v6857
        %v6859 = vsel %vm5307, %v6467, -inf
        %v6860 = vsel %vm5307, %v6469, -inf
        %v6861 = vmax.f32 %v6859, %v6860
        %v6862 = vrot.slane %v6861, 4
        %v6863 = vmax.f32 %v6861, %v6862
        %v6864 = vrot.slane %v6863, 2
        %v6865 = vmax.f32 %v6863, %v6864
        %v6866 = vrot.slane %v6865, 1
        %v6867 = vmax.f32 %v6865, %v6866
        %v6868 = vsel %vm5307, %v6547, -inf
        %v6869 = vsel %vm5307, %v6553, -inf
        %v6870 = vmax.f32 %v6868, %v6869
        %v6871 = vrot.slane %v6870, 4
        %v6872 = vmax.f32 %v6870, %v6871
        %v6873 = vrot.slane %v6872, 2
        %v6874 = vmax.f32 %v6872, %v6873
        %v6875 = vrot.slane %v6874, 1
        %v6876 = vmax.f32 %v6874, %v6875
        %v6877 = vsel %vm5307, %v6548, -inf
        %v6878 = vsel %vm5307, %v6554, -inf
        %v6879 = vmax.f32 %v6877, %v6878
        %v6880 = vrot.slane %v6879, 4
        %v6881 = vmax.f32 %v6879, %v6880
        %v6882 = vrot.slane %v6881, 2
        %v6883 = vmax.f32 %v6881, %v6882
        %v6884 = vrot.slane %v6883, 1
        %v6885 = vmax.f32 %v6883, %v6884
        %v6886 = vsel %vm5307, %v6549, -inf
        %v6887 = vsel %vm5307, %v6555, -inf
        %v6888 = vmax.f32 %v6886, %v6887
        %v6889 = vrot.slane %v6888, 4
        %v6890 = vmax.f32 %v6888, %v6889
        %v6891 = vrot.slane %v6890, 2
        %v6892 = vmax.f32 %v6890, %v6891
        %v6893 = vrot.slane %v6892, 1
        %v6894 = vmax.f32 %v6892, %v6893
        %v6895 = vsel %vm5307, %v6468, -inf
        %v6896 = vsel %vm5307, %v6470, -inf
        %v6897 = vmax.f32 %v6895, %v6896
        %v6898 = vrot.slane %v6897, 4
        %v6899 = vmax.f32 %v6897, %v6898
        %v6900 = vrot.slane %v6899, 2
        %v6901 = vmax.f32 %v6899, %v6900
        %v6902 = vrot.slane %v6901, 1
        %v6903 = vmax.f32 %v6901, %v6902
        %v6904 = vsel %vm5307, %v6550, -inf
        %v6905 = vsel %vm5307, %v6556, -inf
        %v6906 = vmax.f32 %v6904, %v6905
        %v6907 = vrot.slane %v6906, 4
        %v6908 = vmax.f32 %v6906, %v6907
        %v6909 = vrot.slane %v6908, 2
        %v6910 = vmax.f32 %v6908, %v6909
        %v6911 = vrot.slane %v6910, 1
        %v6912 = vmax.f32 %v6910, %v6911
        %v6913 = vsel %vm5307, %v6551, -inf
        %v6914 = vsel %vm5307, %v6557, -inf
        %v6915 = vmax.f32 %v6913, %v6914
        %v6916 = vrot.slane %v6915, 4
        %v6917 = vmax.f32 %v6915, %v6916
        %v6918 = vrot.slane %v6917, 2
        %v6919 = vmax.f32 %v6917, %v6918
        %v6920 = vrot.slane %v6919, 1
        %v6921 = vmax.f32 %v6919, %v6920
        %v6922 = vsel %vm5307, %v6552, -inf
        %v6923 = vsel %vm5307, %v6558, -inf
        %v6924 = vmax.f32 %v6922, %v6923
        %v6925 = vrot.slane %v6924, 4
        %v6926 = vmax.f32 %v6924, %v6925
        %v6927 = vrot.slane %v6926, 2
        %v6928 = vmax.f32 %v6926, %v6927
        %v6929 = vrot.slane %v6928, 1
        %v6930 = vmax.f32 %v6928, %v6929
        %v6931 = vsel %vm5307, %v6471, -inf
        %v6932 = vsel %vm5307, %v6473, -inf
        %v6933 = vmax.f32 %v6931, %v6932
        %v6934 = vrot.slane %v6933, 4
        %v6935 = vmax.f32 %v6933, %v6934
        %v6936 = vrot.slane %v6935, 2
        %v6937 = vmax.f32 %v6935, %v6936
        %v6938 = vrot.slane %v6937, 1
        %v6939 = vmax.f32 %v6937, %v6938
        %v6940 = vsel %vm5307, %v6559, -inf
        %v6941 = vsel %vm5307, %v6565, -inf
        %v6942 = vmax.f32 %v6940, %v6941
        %v6943 = vrot.slane %v6942, 4
        %v6944 = vmax.f32 %v6942, %v6943
        %v6945 = vrot.slane %v6944, 2
        %v6946 = vmax.f32 %v6944, %v6945
        %v6947 = vrot.slane %v6946, 1
        %v6948 = vmax.f32 %v6946, %v6947
        %v6949 = vsel %vm5307, %v6560, -inf
        %v6950 = vsel %vm5307, %v6566, -inf
        %v6951 = vmax.f32 %v6949, %v6950
        %v6952 = vrot.slane %v6951, 4
        %v6953 = vmax.f32 %v6951, %v6952
        %v6954 = vrot.slane %v6953, 2
        %v6955 = vmax.f32 %v6953, %v6954
        %v6956 = vrot.slane %v6955, 1
        %v6957 = vmax.f32 %v6955, %v6956
        %v6958 = vsel %vm5307, %v6561, -inf
        %v6959 = vsel %vm5307, %v6567, -inf
        %v6960 = vmax.f32 %v6958, %v6959
        %v6961 = vrot.slane %v6960, 4
        %v6962 = vmax.f32 %v6960, %v6961
        %v6963 = vrot.slane %v6962, 2
        %v6964 = vmax.f32 %v6962, %v6963
        %v6965 = vrot.slane %v6964, 1
        %v6966 = vmax.f32 %v6964, %v6965
        %v6967 = vsel %vm5307, %v6472, -inf
        %v6968 = vsel %vm5307, %v6474, -inf
        %v6969 = vmax.f32 %v6967, %v6968
        %v6970 = vrot.slane %v6969, 4
        %v6971 = vmax.f32 %v6969, %v6970
        %v6972 = vrot.slane %v6971, 2
        %v6973 = vmax.f32 %v6971, %v6972
        %v6974 = vrot.slane %v6973, 1
        %v6975 = vmax.f32 %v6973, %v6974
        %v6976 = vsel %vm5307, %v6562, -inf
        %v6977 = vsel %vm5307, %v6568, -inf
        %v6978 = vmax.f32 %v6976, %v6977
        %v6979 = vrot.slane %v6978, 4
        %v6980 = vmax.f32 %v6978, %v6979
        %v6981 = vrot.slane %v6980, 2
        %v6982 = vmax.f32 %v6980, %v6981
        %v6983 = vrot.slane %v6982, 1
        %v6984 = vmax.f32 %v6982, %v6983
        %v6985 = vsel %vm5307, %v6563, -inf
        %v6986 = vsel %vm5307, %v6569, -inf
        %v6987 = vmax.f32 %v6985, %v6986
        %v6988 = vrot.slane %v6987, 4
        %v6989 = vmax.f32 %v6987, %v6988
        %v6990 = vrot.slane %v6989, 2
        %v6991 = vmax.f32 %v6989, %v6990
        %v6992 = vrot.slane %v6991, 1
        %v6993 = vmax.f32 %v6991, %v6992
        %v6994 = vsel %vm5307, %v6564, -inf
        %v6995 = vsel %vm5307, %v6570, -inf
        %v6996 = vmax.f32 %v6994, %v6995
        %v6997 = vrot.slane %v6996, 4
        %v6998 = vmax.f32 %v6996, %v6997
        %v6999 = vrot.slane %v6998, 2
        %v7000 = vmax.f32 %v6998, %v6999
        %v7001 = vrot.slane %v7000, 1
        %v7002 = vmax.f32 %v7000, %v7001
        %v7003 = vsel %vm5307, %v6475, -inf
        %v7004 = vsel %vm5307, %v6477, -inf
        %v7005 = vmax.f32 %v7003, %v7004
        %v7006 = vrot.slane %v7005, 4
        %v7007 = vmax.f32 %v7005, %v7006
        %v7008 = vrot.slane %v7007, 2
        %v7009 = vmax.f32 %v7007, %v7008
        %v7010 = vrot.slane %v7009, 1
        %v7011 = vmax.f32 %v7009, %v7010
        %v7012 = vsel %vm5307, %v6571, -inf
        %v7013 = vsel %vm5307, %v6577, -inf
        %v7014 = vmax.f32 %v7012, %v7013
        %v7015 = vrot.slane %v7014, 4
        %v7016 = vmax.f32 %v7014, %v7015
        %v7017 = vrot.slane %v7016, 2
        %v7018 = vmax.f32 %v7016, %v7017
        %v7019 = vrot.slane %v7018, 1
        %v7020 = vmax.f32 %v7018, %v7019
        %v7021 = vsel %vm5307, %v6572, -inf
        %v7022 = vsel %vm5307, %v6578, -inf
        %v7023 = vmax.f32 %v7021, %v7022
        %v7024 = vrot.slane %v7023, 4
        %v7025 = vmax.f32 %v7023, %v7024
        %v7026 = vrot.slane %v7025, 2
        %v7027 = vmax.f32 %v7025, %v7026
        %v7028 = vrot.slane %v7027, 1
        %v7029 = vmax.f32 %v7027, %v7028
        %v7030 = vsel %vm5307, %v6573, -inf
        %v7031 = vsel %vm5307, %v6579, -inf
        %v7032 = vmax.f32 %v7030, %v7031
        %v7033 = vrot.slane %v7032, 4
        %v7034 = vmax.f32 %v7032, %v7033
        %v7035 = vrot.slane %v7034, 2
        %v7036 = vmax.f32 %v7034, %v7035
        %v7037 = vrot.slane %v7036, 1
        %v7038 = vmax.f32 %v7036, %v7037
        %v7039 = vsel %vm5307, %v6476, -inf
        %v7040 = vsel %vm5307, %v6478, -inf
        %v7041 = vmax.f32 %v7039, %v7040
        %v7042 = vrot.slane %v7041, 4
        %v7043 = vmax.f32 %v7041, %v7042
        %v7044 = vrot.slane %v7043, 2
        %v7045 = vmax.f32 %v7043, %v7044
        %v7046 = vrot.slane %v7045, 1
        %v7047 = vmax.f32 %v7045, %v7046
        %v7048 = vsel %vm5307, %v6574, -inf
        %v7049 = vsel %vm5307, %v6580, -inf
        %v7050 = vmax.f32 %v7048, %v7049
        %v7051 = vrot.slane %v7050, 4
        %v7052 = vmax.f32 %v7050, %v7051
        %v7053 = vrot.slane %v7052, 2
        %v7054 = vmax.f32 %v7052, %v7053
        %v7055 = vrot.slane %v7054, 1
        %v7056 = vmax.f32 %v7054, %v7055
        %v7057 = vsel %vm5307, %v6575, -inf
        %v7058 = vsel %vm5307, %v6581, -inf
        %v7059 = vmax.f32 %v7057, %v7058
        %v7060 = vrot.slane %v7059, 4
        %v7061 = vmax.f32 %v7059, %v7060
        %v7062 = vrot.slane %v7061, 2
        %v7063 = vmax.f32 %v7061, %v7062
        %v7064 = vrot.slane %v7063, 1
        %v7065 = vmax.f32 %v7063, %v7064
        %v7066 = vsel %vm5307, %v6576, -inf
        %v7067 = vsel %vm5307, %v6582, -inf
        %v7068 = vmax.f32 %v7066, %v7067
        %v7069 = vrot.slane %v7068, 4
        %v7070 = vmax.f32 %v7068, %v7069
        %v7071 = vrot.slane %v7070, 2
        %v7072 = vmax.f32 %v7070, %v7071
        %v7073 = vrot.slane %v7072, 1
        %v7074 = vmax.f32 %v7072, %v7073
        %v7075 = vsel %vm5307, %v6479, -inf
        %v7076 = vsel %vm5307, %v6481, -inf
        %v7077 = vmax.f32 %v7075, %v7076
        %v7078 = vrot.slane %v7077, 4
        %v7079 = vmax.f32 %v7077, %v7078
        %v7080 = vrot.slane %v7079, 2
        %v7081 = vmax.f32 %v7079, %v7080
        %v7082 = vrot.slane %v7081, 1
        %v7083 = vmax.f32 %v7081, %v7082
        %v7084 = vsel %vm5307, %v6583, -inf
        %v7085 = vsel %vm5307, %v6589, -inf
        %v7086 = vmax.f32 %v7084, %v7085
        %v7087 = vrot.slane %v7086, 4
        %v7088 = vmax.f32 %v7086, %v7087
        %v7089 = vrot.slane %v7088, 2
        %v7090 = vmax.f32 %v7088, %v7089
        %v7091 = vrot.slane %v7090, 1
        %v7092 = vmax.f32 %v7090, %v7091
        %v7093 = vsel %vm5307, %v6584, -inf
        %v7094 = vsel %vm5307, %v6590, -inf
        %v7095 = vmax.f32 %v7093, %v7094
        %v7096 = vrot.slane %v7095, 4
        %v7097 = vmax.f32 %v7095, %v7096
        %v7098 = vrot.slane %v7097, 2
        %v7099 = vmax.f32 %v7097, %v7098
        %v7100 = vrot.slane %v7099, 1
        %v7101 = vmax.f32 %v7099, %v7100
        %v7102 = vsel %vm5307, %v6585, -inf
        %v7103 = vsel %vm5307, %v6591, -inf
        %v7104 = vmax.f32 %v7102, %v7103
        %v7105 = vrot.slane %v7104, 4
        %v7106 = vmax.f32 %v7104, %v7105
        %v7107 = vrot.slane %v7106, 2
        %v7108 = vmax.f32 %v7106, %v7107
        %v7109 = vrot.slane %v7108, 1
        %v7110 = vmax.f32 %v7108, %v7109
        %v7111 = vsel %vm5307, %v6480, -inf
        %v7112 = vsel %vm5307, %v6482, -inf
        %v7113 = vmax.f32 %v7111, %v7112
        %v7114 = vrot.slane %v7113, 4
        %v7115 = vmax.f32 %v7113, %v7114
        %v7116 = vrot.slane %v7115, 2
        %v7117 = vmax.f32 %v7115, %v7116
        %v7118 = vrot.slane %v7117, 1
        %v7119 = vmax.f32 %v7117, %v7118
        %v7120 = vsel %vm5307, %v6586, -inf
        %v7121 = vsel %vm5307, %v6592, -inf
        %v7122 = vmax.f32 %v7120, %v7121
        %v7123 = vrot.slane %v7122, 4
        %v7124 = vmax.f32 %v7122, %v7123
        %v7125 = vrot.slane %v7124, 2
        %v7126 = vmax.f32 %v7124, %v7125
        %v7127 = vrot.slane %v7126, 1
        %v7128 = vmax.f32 %v7126, %v7127
        %v7129 = vsel %vm5307, %v6587, -inf
        %v7130 = vsel %vm5307, %v6593, -inf
        %v7131 = vmax.f32 %v7129, %v7130
        %v7132 = vrot.slane %v7131, 4
        %v7133 = vmax.f32 %v7131, %v7132
        %v7134 = vrot.slane %v7133, 2
        %v7135 = vmax.f32 %v7133, %v7134
        %v7136 = vrot.slane %v7135, 1
        %v7137 = vmax.f32 %v7135, %v7136
        %v7138 = vsel %vm5307, %v6588, -inf
        %v7139 = vsel %vm5307, %v6594, -inf
        %v7140 = vmax.f32 %v7138, %v7139
        %v7141 = vrot.slane %v7140, 4
        %v7142 = vmax.f32 %v7140, %v7141
        %v7143 = vrot.slane %v7142, 2
        %v7144 = vmax.f32 %v7142, %v7143
        %v7145 = vrot.slane %v7144, 1
        %v7146 = vmax.f32 %v7144, %v7145
        %v7147 = vsel %vm5307, %v6483, -inf
        %v7148 = vsel %vm5307, %v6485, -inf
        %v7149 = vmax.f32 %v7147, %v7148
        %v7150 = vrot.slane %v7149, 4
        %v7151 = vmax.f32 %v7149, %v7150
        %v7152 = vrot.slane %v7151, 2
        %v7153 = vmax.f32 %v7151, %v7152
        %v7154 = vrot.slane %v7153, 1
        %v7155 = vmax.f32 %v7153, %v7154
        %v7156 = vsel %vm5307, %v6595, -inf
        %v7157 = vsel %vm5307, %v6601, -inf
        %v7158 = vmax.f32 %v7156, %v7157
        %v7159 = vrot.slane %v7158, 4
        %v7160 = vmax.f32 %v7158, %v7159
        %v7161 = vrot.slane %v7160, 2
        %v7162 = vmax.f32 %v7160, %v7161
        %v7163 = vrot.slane %v7162, 1
        %v7164 = vmax.f32 %v7162, %v7163
        %v7165 = vsel %vm5307, %v6596, -inf
        %v7166 = vsel %vm5307, %v6602, -inf
        %v7167 = vmax.f32 %v7165, %v7166
        %v7168 = vrot.slane %v7167, 4
        %v7169 = vmax.f32 %v7167, %v7168
        %v7170 = vrot.slane %v7169, 2
        %v7171 = vmax.f32 %v7169, %v7170
        %v7172 = vrot.slane %v7171, 1
        %v7173 = vmax.f32 %v7171, %v7172
        %v7174 = vsel %vm5307, %v6597, -inf
        %v7175 = vsel %vm5307, %v6603, -inf
        %v7176 = vmax.f32 %v7174, %v7175
        %v7177 = vrot.slane %v7176, 4
        %v7178 = vmax.f32 %v7176, %v7177
        %v7179 = vrot.slane %v7178, 2
        %v7180 = vmax.f32 %v7178, %v7179
        %v7181 = vrot.slane %v7180, 1
        %v7182 = vmax.f32 %v7180, %v7181
        %v7183 = vsel %vm5307, %v6484, -inf
        %v7184 = vsel %vm5307, %v6486, -inf
        %v7185 = vmax.f32 %v7183, %v7184
        %v7186 = vrot.slane %v7185, 4
        %v7187 = vmax.f32 %v7185, %v7186
        %v7188 = vrot.slane %v7187, 2
        %v7189 = vmax.f32 %v7187, %v7188
        %v7190 = vrot.slane %v7189, 1
        %v7191 = vmax.f32 %v7189, %v7190
        %v7192 = vsel %vm5307, %v6598, -inf
        %v7193 = vsel %vm5307, %v6604, -inf
        %v7194 = vmax.f32 %v7192, %v7193
        %v7195 = vrot.slane %v7194, 4
        %v7196 = vmax.f32 %v7194, %v7195
        %v7197 = vrot.slane %v7196, 2
        %v7198 = vmax.f32 %v7196, %v7197
        %v7199 = vrot.slane %v7198, 1
        %v7200 = vmax.f32 %v7198, %v7199
        %v7201 = vsel %vm5307, %v6599, -inf
        %v7202 = vsel %vm5307, %v6605, -inf
        %v7203 = vmax.f32 %v7201, %v7202
        %v7204 = vrot.slane %v7203, 4
        %v7205 = vmax.f32 %v7203, %v7204
        %v7206 = vrot.slane %v7205, 2
        %v7207 = vmax.f32 %v7205, %v7206
        %v7208 = vrot.slane %v7207, 1
        %v7209 = vmax.f32 %v7207, %v7208
        %v7210 = vsel %vm5307, %v6600, -inf
        %v7211 = vsel %vm5307, %v6606, -inf
        %v7212 = vmax.f32 %v7210, %v7211
        %v7213 = vrot.slane %v7212, 4
        %v7214 = vmax.f32 %v7212, %v7213
        %v7215 = vrot.slane %v7214, 2
        %v7216 = vmax.f32 %v7214, %v7215
        %v7217 = vrot.slane %v7216, 1
        %v7218 = vmax.f32 %v7216, %v7217
        %v7219 = vsel %vm5307, %v6487, -inf
        %v7220 = vsel %vm5307, %v6489, -inf
        %v7221 = vmax.f32 %v7219, %v7220
        %v7222 = vrot.slane %v7221, 4
        %v7223 = vmax.f32 %v7221, %v7222
        %v7224 = vrot.slane %v7223, 2
        %v7225 = vmax.f32 %v7223, %v7224
        %v7226 = vrot.slane %v7225, 1
        %v7227 = vmax.f32 %v7225, %v7226
        %v7228 = vsel %vm5307, %v6607, -inf
        %v7229 = vsel %vm5307, %v6613, -inf
        %v7230 = vmax.f32 %v7228, %v7229
        %v7231 = vrot.slane %v7230, 4
        %v7232 = vmax.f32 %v7230, %v7231
        %v7233 = vrot.slane %v7232, 2
        %v7234 = vmax.f32 %v7232, %v7233
        %v7235 = vrot.slane %v7234, 1
        %v7236 = vmax.f32 %v7234, %v7235
        %v7237 = vsel %vm5307, %v6608, -inf
        %v7238 = vsel %vm5307, %v6614, -inf
        %v7239 = vmax.f32 %v7237, %v7238
        %v7240 = vrot.slane %v7239, 4
        %v7241 = vmax.f32 %v7239, %v7240
        %v7242 = vrot.slane %v7241, 2
        %v7243 = vmax.f32 %v7241, %v7242
        %v7244 = vrot.slane %v7243, 1
        %v7245 = vmax.f32 %v7243, %v7244
        %v7246 = vsel %vm5307, %v6609, -inf
        %v7247 = vsel %vm5307, %v6615, -inf
        %v7248 = vmax.f32 %v7246, %v7247
        %v7249 = vrot.slane %v7248, 4
        %v7250 = vmax.f32 %v7248, %v7249
        %v7251 = vrot.slane %v7250, 2
        %v7252 = vmax.f32 %v7250, %v7251
        %v7253 = vrot.slane %v7252, 1
        %v7254 = vmax.f32 %v7252, %v7253
        %v7255 = vsel %vm5307, %v6488, -inf
        %v7256 = vsel %vm5307, %v6490, -inf
        %v7257 = vmax.f32 %v7255, %v7256
        %v7258 = vrot.slane %v7257, 4
        %v7259 = vmax.f32 %v7257, %v7258
        %v7260 = vrot.slane %v7259, 2
        %v7261 = vmax.f32 %v7259, %v7260
        %v7262 = vrot.slane %v7261, 1
        %v7263 = vmax.f32 %v7261, %v7262
        %v7264 = vsel %vm5307, %v6610, -inf
        %v7265 = vsel %vm5307, %v6616, -inf
        %v7266 = vmax.f32 %v7264, %v7265
        %v7267 = vrot.slane %v7266, 4
        %v7268 = vmax.f32 %v7266, %v7267
        %v7269 = vrot.slane %v7268, 2
        %v7270 = vmax.f32 %v7268, %v7269
        %v7271 = vrot.slane %v7270, 1
        %v7272 = vmax.f32 %v7270, %v7271
        %v7273 = vsel %vm5307, %v6611, -inf
        %v7274 = vsel %vm5307, %v6617, -inf
        %v7275 = vmax.f32 %v7273, %v7274
        %v7276 = vrot.slane %v7275, 4
        %v7277 = vmax.f32 %v7275, %v7276
        %v7278 = vrot.slane %v7277, 2
        %v7279 = vmax.f32 %v7277, %v7278
        %v7280 = vrot.slane %v7279, 1
        %v7281 = vmax.f32 %v7279, %v7280
        %v7282 = vsel %vm5307, %v6612, -inf
        %v7283 = vsel %vm5307, %v6618, -inf
        %v7284 = vmax.f32 %v7282, %v7283
        %v7285 = vrot.slane %v7284, 4
        %v7286 = vmax.f32 %v7284, %v7285
        %v7287 = vrot.slane %v7286, 2
        %v7288 = vmax.f32 %v7286, %v7287
        %v7289 = vrot.slane %v7288, 1
        %v7290 = vmax.f32 %v7288, %v7289
        %v7355 = vsel %vm1562, %v6732, %v6723
        %v7356 = vsel %vm1564, %v6741, %v7355
        %v7357 = vsel %vm1566, %v6750, %v7356
        %v7358 = vsel %vm1568, %v6759, %v7357
        %v7359 = vsel %vm1570, %v6768, %v7358
        %v7360 = vsel %vm1572, %v6777, %v7359
        %v7361 = vsel %vm1574, %v6786, %v7360
        %v7362 = vsel %vm1562, %v6804, %v6795
        %v7363 = vsel %vm1564, %v6813, %v7362
        %v7364 = vsel %vm1566, %v6822, %v7363
        %v7365 = vsel %vm1568, %v6831, %v7364
        %v7366 = vsel %vm1570, %v6840, %v7365
        %v7367 = vsel %vm1572, %v6849, %v7366
        %v7368 = vsel %vm1574, %v6858, %v7367
        %v7369 = vsel %vm1562, %v6876, %v6867
        %v7370 = vsel %vm1564, %v6885, %v7369
        %v7371 = vsel %vm1566, %v6894, %v7370
        %v7372 = vsel %vm1568, %v6903, %v7371
        %v7373 = vsel %vm1570, %v6912, %v7372
        %v7374 = vsel %vm1572, %v6921, %v7373
        %v7375 = vsel %vm1574, %v6930, %v7374
        %v7376 = vsel %vm1562, %v6948, %v6939
        %v7377 = vsel %vm1564, %v6957, %v7376
        %v7378 = vsel %vm1566, %v6966, %v7377
        %v7379 = vsel %vm1568, %v6975, %v7378
        %v7380 = vsel %vm1570, %v6984, %v7379
        %v7381 = vsel %vm1572, %v6993, %v7380
        %v7382 = vsel %vm1574, %v7002, %v7381
        %v7383 = vsel %vm1562, %v7020, %v7011
        %v7384 = vsel %vm1564, %v7029, %v7383
        %v7385 = vsel %vm1566, %v7038, %v7384
        %v7386 = vsel %vm1568, %v7047, %v7385
        %v7387 = vsel %vm1570, %v7056, %v7386
        %v7388 = vsel %vm1572, %v7065, %v7387
        %v7389 = vsel %vm1574, %v7074, %v7388
        %v7390 = vsel %vm1562, %v7092, %v7083
        %v7391 = vsel %vm1564, %v7101, %v7390
        %v7392 = vsel %vm1566, %v7110, %v7391
        %v7393 = vsel %vm1568, %v7119, %v7392
        %v7394 = vsel %vm1570, %v7128, %v7393
        %v7395 = vsel %vm1572, %v7137, %v7394
        %v7396 = vsel %vm1574, %v7146, %v7395
        %v7397 = vsel %vm1562, %v7164, %v7155
        %v7398 = vsel %vm1564, %v7173, %v7397
        %v7399 = vsel %vm1566, %v7182, %v7398
        %v7400 = vsel %vm1568, %v7191, %v7399
        %v7401 = vsel %vm1570, %v7200, %v7400
        %v7402 = vsel %vm1572, %v7209, %v7401
        %v7403 = vsel %vm1574, %v7218, %v7402
        %v7404 = vsel %vm1562, %v7236, %v7227
        %v7405 = vsel %vm1564, %v7245, %v7404
        %v7406 = vsel %vm1566, %v7254, %v7405
        %v7407 = vsel %vm1568, %v7263, %v7406
        %v7408 = vsel %vm1570, %v7272, %v7407
        %v7409 = vsel %vm1572, %v7281, %v7408
        %v7410 = vsel %vm1574, %v7290, %v7409
        %s7419 = scalar_lea.vmem [#allocation3], 16
        %7420 = vst.msk [vmem:[%s7419 + $0x1] sm:$0xff] %vm5305, %v7361
        %7421 = vst.msk [vmem:[%s7419 + $0x11] sm:$0xff] %vm5305, %v7368
        %7422 = vst.msk [vmem:[%s7419 + $0x21] sm:$0xff] %vm5305, %v7375
        %7423 = vst.msk [vmem:[%s7419 + $0x31] sm:$0xff] %vm5305, %v7382
        %7424 = vst.msk [vmem:[%s7419 + $0x41] sm:$0xff] %vm5305, %v7389
        %7425 = vst.msk [vmem:[%s7419 + $0x51] sm:$0xff] %vm5305, %v7396
        %7426 = vst.msk [vmem:[%s7419 + $0x61] sm:$0xff] %vm5305, %v7403
        %7427 = vst.msk [vmem:[%s7419 + $0x71] sm:$0xff] %vm5305, %v7410
        %v7428 = vld [vmem:[#allocation3] sm:$0xff]
        %v7429 = vld [vmem:[#allocation3 + $0x8] sm:$0x3]
        %v7430 = vld [vmem:[#allocation3 + $0x10] sm:$0xff]
        %v7431 = vld [vmem:[#allocation3 + $0x18] sm:$0x3]
        %v7432 = vld [vmem:[#allocation3 + $0x20] sm:$0xff]
        %v7433 = vld [vmem:[#allocation3 + $0x28] sm:$0x3]
        %v7434 = vld [vmem:[#allocation3 + $0x30] sm:$0xff]
        %v7435 = vld [vmem:[#allocation3 + $0x38] sm:$0x3]
        %v7436 = vld [vmem:[#allocation3 + $0x40] sm:$0xff]
        %v7437 = vld [vmem:[#allocation3 + $0x48] sm:$0x3]
        %v7438 = vld [vmem:[#allocation3 + $0x50] sm:$0xff]
        %v7439 = vld [vmem:[#allocation3 + $0x58] sm:$0x3]
        %v7440 = vld [vmem:[#allocation3 + $0x60] sm:$0xff]
        %v7441 = vld [vmem:[#allocation3 + $0x68] sm:$0x3]
        %v7442 = vld [vmem:[#allocation3 + $0x70] sm:$0xff]
        %v7443 = vld [vmem:[#allocation3 + $0x78] sm:$0x3]
        %v7444 = vld [vmem:[#allocation3 + $0x80] sm:$0xff]
        %v7445 = vld [vmem:[#allocation3 + $0x88] sm:$0x3]
        %v7446 = vld [vmem:[#allocation3 + $0x90] sm:$0xff]
        %v7447 = vld [vmem:[#allocation3 + $0x98] sm:$0x3]
        %v7464 = vrot.slane %v7428, 1
        %v7465 = vrot.slane %v7429, 1
        %v7466 = vsel %vm5429, %v7464, %v7465
        %v7467 = vrot.slane %v7430, 1
        %v7468 = vrot.slane %v7431, 1
        %v7469 = vsel %vm5429, %v7467, %v7468
        %v7470 = vrot.slane %v7432, 1
        %v7471 = vrot.slane %v7433, 1
        %v7472 = vsel %vm5429, %v7470, %v7471
        %v7473 = vrot.slane %v7434, 1
        %v7474 = vrot.slane %v7435, 1
        %v7475 = vsel %vm5429, %v7473, %v7474
        %v7476 = vrot.slane %v7436, 1
        %v7477 = vrot.slane %v7437, 1
        %v7478 = vsel %vm5429, %v7476, %v7477
        %v7479 = vrot.slane %v7438, 1
        %v7480 = vrot.slane %v7439, 1
        %v7481 = vsel %vm5429, %v7479, %v7480
        %v7482 = vrot.slane %v7440, 1
        %v7483 = vrot.slane %v7441, 1
        %v7484 = vsel %vm5429, %v7482, %v7483
        %v7485 = vrot.slane %v7442, 1
        %v7486 = vrot.slane %v7443, 1
        %v7487 = vsel %vm5429, %v7485, %v7486
        %7488 = vrot.lane.b32.xlu0 %v7466, 64
        %v7489 = vpop.permute.xlu0 %7488
        %7490 = vrot.lane.b32.xlu0 %v7469, 64
        %v7491 = vpop.permute.xlu0 %7490
        %7492 = vrot.lane.b32.xlu0 %v7472, 64
        %v7493 = vpop.permute.xlu0 %7492
        %7494 = vrot.lane.b32.xlu0 %v7475, 64
        %v7495 = vpop.permute.xlu0 %7494
        %7496 = vrot.lane.b32.xlu0 %v7478, 64
        %v7497 = vpop.permute.xlu0 %7496
        %7498 = vrot.lane.b32.xlu0 %v7481, 64
        %v7499 = vpop.permute.xlu0 %7498
        %7500 = vrot.lane.b32.xlu0 %v7484, 64
        %v7501 = vpop.permute.xlu0 %7500
        %7502 = vrot.lane.b32.xlu0 %v7487, 64
        %v7503 = vpop.permute.xlu0 %7502
        %v7512 = vrot.slane %v7428, 2
        %v7513 = vrot.slane %v7429, 2
        %v7514 = vsel %vm5606, %v7512, %v7513
        %v7515 = vrot.slane %v7430, 2
        %v7516 = vrot.slane %v7431, 2
        %v7517 = vsel %vm5606, %v7515, %v7516
        %v7518 = vrot.slane %v7432, 2
        %v7519 = vrot.slane %v7433, 2
        %v7520 = vsel %vm5606, %v7518, %v7519
        %v7521 = vrot.slane %v7434, 2
        %v7522 = vrot.slane %v7435, 2
        %v7523 = vsel %vm5606, %v7521, %v7522
        %v7524 = vrot.slane %v7436, 2
        %v7525 = vrot.slane %v7437, 2
        %v7526 = vsel %vm5606, %v7524, %v7525
        %v7527 = vrot.slane %v7438, 2
        %v7528 = vrot.slane %v7439, 2
        %v7529 = vsel %vm5606, %v7527, %v7528
        %v7530 = vrot.slane %v7440, 2
        %v7531 = vrot.slane %v7441, 2
        %v7532 = vsel %vm5606, %v7530, %v7531
        %v7533 = vrot.slane %v7442, 2
        %v7534 = vrot.slane %v7443, 2
        %v7535 = vsel %vm5606, %v7533, %v7534
        %v7536 = vsel %vm5305, %v7428, %v7489
        %v7537 = vsel %vm5305, %v7430, %v7491
        %v7538 = vsel %vm5305, %v7432, %v7493
        %v7539 = vsel %vm5305, %v7434, %v7495
        %v7540 = vsel %vm5305, %v7436, %v7497
        %v7541 = vsel %vm5305, %v7438, %v7499
        %v7542 = vsel %vm5305, %v7440, %v7501
        %v7543 = vsel %vm5305, %v7442, %v7503
        %v7544 = vld [vmem:[#allocation9] sm:$0xff]
        %v7545 = vld [vmem:[#allocation9 + $0x8] sm:$0xff]
        %v7546 = vld [vmem:[#allocation9 + $0x10] sm:$0xff]
        %v7547 = vld [vmem:[#allocation9 + $0x18] sm:$0xff]
        %v7548 = vld [vmem:[#allocation9 + $0x20] sm:$0xff]
        %v7549 = vld [vmem:[#allocation9 + $0x28] sm:$0xff]
        %v7550 = vld [vmem:[#allocation9 + $0x30] sm:$0xff]
        %v7551 = vld [vmem:[#allocation9 + $0x38] sm:$0xff]
        %v7552 = vld [vmem:[#allocation9 + $0x40] sm:$0xff]
        %v7553 = vld [vmem:[#allocation9 + $0x48] sm:$0xff]
        %v7554 = vld [vmem:[#allocation9 + $0x50] sm:$0xff]
        %v7555 = vld [vmem:[#allocation9 + $0x58] sm:$0xff]
        %v7556 = vld [vmem:[#allocation9 + $0x60] sm:$0xff]
        %v7557 = vld [vmem:[#allocation9 + $0x68] sm:$0xff]
        %v7558 = vld [vmem:[#allocation9 + $0x70] sm:$0xff]
        %v7559 = vld [vmem:[#allocation9 + $0x78] sm:$0xff]
        %v7560 = vld [vmem:[#allocation9 + $0x80] sm:$0xff]
        %v7561 = vld [vmem:[#allocation9 + $0x88] sm:$0xff]
        %v7562 = vld [vmem:[#allocation9 + $0x90] sm:$0xff]
        %v7563 = vld [vmem:[#allocation9 + $0x98] sm:$0xff]
        %v7564 = vld [vmem:[#allocation9 + $0xa0] sm:$0xff]
        %v7565 = vld [vmem:[#allocation9 + $0xa8] sm:$0xff]
        %v7566 = vld [vmem:[#allocation9 + $0xb0] sm:$0xff]
        %v7567 = vld [vmem:[#allocation9 + $0xb8] sm:$0xff]
        %v7570 = vrot.slane %v7444, 1
        %v7571 = vrot.slane %v7445, 1
        %v7572 = vsel %vm5429, %v7570, %v7571
        %7573 = vrot.lane.b32.xlu0 %v7572, 64
        %v7574 = vpop.permute.xlu0 %7573
        %v7576 = vrot.slane %v7444, 2
        %v7577 = vrot.slane %v7445, 2
        %v7578 = vsel %vm5606, %v7576, %v7577
        %v7579 = vsel %vm5305, %v7444, %v7574
        %s7580 = scalar_lea.vmem [#allocation9], 192
        %v7581 = vld [vmem:[%s7580] sm:$0xff]
        %v7582 = vld [vmem:[%s7580 + $0x8] sm:$0xff]
        %v7583 = vld [vmem:[%s7580 + $0x10] sm:$0xff]
        %v7584 = vld [vmem:[%s7580 + $0x18] sm:$0xff]
        %v7585 = vld [vmem:[%s7580 + $0x20] sm:$0xff]
        %v7586 = vld [vmem:[%s7580 + $0x28] sm:$0xff]
        %v7587 = vld [vmem:[%s7580 + $0x30] sm:$0xff]
        %v7588 = vld [vmem:[%s7580 + $0x38] sm:$0xff]
        %v7589 = vld [vmem:[%s7580 + $0x40] sm:$0xff]
        %v7590 = vld [vmem:[%s7580 + $0x48] sm:$0xff]
        %v7591 = vld [vmem:[%s7580 + $0x50] sm:$0xff]
        %v7592 = vld [vmem:[%s7580 + $0x58] sm:$0xff]
        %v7593 = vld [vmem:[%s7580 + $0x60] sm:$0xff]
        %v7594 = vld [vmem:[%s7580 + $0x68] sm:$0xff]
        %v7595 = vld [vmem:[%s7580 + $0x70] sm:$0xff]
        %v7596 = vld [vmem:[%s7580 + $0x78] sm:$0xff]
        %v7597 = vld [vmem:[%s7580 + $0x80] sm:$0xff]
        %v7598 = vld [vmem:[%s7580 + $0x88] sm:$0xff]
        %v7599 = vld [vmem:[%s7580 + $0x90] sm:$0xff]
        %v7600 = vld [vmem:[%s7580 + $0x98] sm:$0xff]
        %v7601 = vld [vmem:[%s7580 + $0xa0] sm:$0xff]
        %v7602 = vld [vmem:[%s7580 + $0xa8] sm:$0xff]
        %v7603 = vld [vmem:[%s7580 + $0xb0] sm:$0xff]
        %v7604 = vld [vmem:[%s7580 + $0xb8] sm:$0xff]
        %v7605 = vsel %vm5305, %v7517, 0
        %v7607 = vsel %vm5305, %v7520, 0
        %v7609 = vsel %vm5305, %v7523, 0
        %v7611 = vsel %vm5305, %v7526, 0
        %v7613 = vsel %vm5305, %v7529, 0
        %v7615 = vsel %vm5305, %v7532, 0
        %v7617 = vsel %vm5305, %v7535, 0
        %v7619 = vsel %vm5305, %v7578, 0
        %7621 = vmatpush.msra.mxu0 %v7596
        %7622 = vmatpush.msra.mxu0 %v7595
        %7623 = vmatpush.msra.mxu0 %v7594
        %7624 = vmatpush.msra.mxu0 %v7593
        %7625 = vmatpush.msra.mxu0 %v7592
        %7626 = vmatpush.msra.mxu0 %v7591
        %7627 = vmatpush.msra.mxu0 %v7590
        %7628 = vmatpush.msra.mxu0 %v7589
        %7629 = vmatpush.msra.mxu0 %v7588
        %7630 = vmatpush.msra.mxu0 %v7587
        %7631 = vmatpush.msra.mxu0 %v7586
        %7632 = vmatpush.msra.mxu0 %v7585
        %7633 = vmatpush.msra.mxu0 %v7584
        %7634 = vmatpush.msra.mxu0 %v7583
        %7635 = vmatpush.msra.mxu0 %v7582
        %7636 = vmatpush.msra.mxu0 %v7581
        %7637 = vmatmul.f32.gmra.mxu0 %v7537
        %v7638 = vpop.f32.mrf.mxu0
        %v7639 = vadd.f32 0.0, %v7638
        %7640 = vmatmul.f32.gmra.mxu0 %v7538
        %v7641 = vpop.f32.mrf.mxu0
        %v7642 = vadd.f32 0.0, %v7641
        %7643 = vmatmul.f32.gmra.mxu0 %v7539
        %v7644 = vpop.f32.mrf.mxu0
        %v7645 = vadd.f32 0.0, %v7644
        %7646 = vmatmul.f32.gmra.mxu0 %v7540
        %v7647 = vpop.f32.mrf.mxu0
        %v7648 = vadd.f32 0.0, %v7647
        %7649 = vmatmul.f32.gmra.mxu0 %v7541
        %v7650 = vpop.f32.mrf.mxu0
        %v7651 = vadd.f32 0.0, %v7650
        %7652 = vmatmul.f32.gmra.mxu0 %v7542
        %v7653 = vpop.f32.mrf.mxu0
        %v7654 = vadd.f32 0.0, %v7653
        %7655 = vmatmul.f32.gmra.mxu0 %v7543
        %v7656 = vpop.f32.mrf.mxu0
        %v7657 = vadd.f32 0.0, %v7656
        %7658 = vmatmul.f32.gmra.mxu0 %v7579
        %v7659 = vpop.f32.mrf.mxu0
        %v7660 = vadd.f32 0.0, %v7659
        %7661 = vdwg.mxu0
        %7662 = vmatpush.msra.mxu0 0.0
        %7663 = vmatpush.msra.mxu0 0.0
        %7664 = vmatpush.msra.mxu0 0.0
        %7665 = vmatpush.msra.mxu0 0.0
        %7666 = vmatpush.msra.mxu0 0.0
        %7667 = vmatpush.msra.mxu0 0.0
        %7668 = vmatpush.msra.mxu0 0.0
        %7669 = vmatpush.msra.mxu0 0.0
        %7670 = vmatpush.msra.mxu0 %v7604
        %7671 = vmatpush.msra.mxu0 %v7603
        %7672 = vmatpush.msra.mxu0 %v7602
        %7673 = vmatpush.msra.mxu0 %v7601
        %7674 = vmatpush.msra.mxu0 %v7600
        %7675 = vmatpush.msra.mxu0 %v7599
        %7676 = vmatpush.msra.mxu0 %v7598
        %7677 = vmatpush.msra.mxu0 %v7597
        %7678 = vmatmul.f32.gmra.mxu0 %v7605
        %v7679 = vpop.f32.mrf.mxu0
        %v7680 = vadd.f32 %v7639, %v7679
        %7681 = vmatmul.f32.gmra.mxu0 %v7607
        %v7682 = vpop.f32.mrf.mxu0
        %v7683 = vadd.f32 %v7642, %v7682
        %7684 = vmatmul.f32.gmra.mxu0 %v7609
        %v7685 = vpop.f32.mrf.mxu0
        %v7686 = vadd.f32 %v7645, %v7685
        %7687 = vmatmul.f32.gmra.mxu0 %v7611
        %v7688 = vpop.f32.mrf.mxu0
        %v7689 = vadd.f32 %v7648, %v7688
        %7690 = vmatmul.f32.gmra.mxu0 %v7613
        %v7691 = vpop.f32.mrf.mxu0
        %v7692 = vadd.f32 %v7651, %v7691
        %7693 = vmatmul.f32.gmra.mxu0 %v7615
        %v7694 = vpop.f32.mrf.mxu0
        %v7695 = vadd.f32 %v7654, %v7694
        %7696 = vmatmul.f32.gmra.mxu0 %v7617
        %v7697 = vpop.f32.mrf.mxu0
        %v7698 = vadd.f32 %v7657, %v7697
        %7699 = vmatmul.f32.gmra.mxu0 %v7619
        %v7700 = vpop.f32.mrf.mxu0
        %v7701 = vadd.f32 %v7660, %v7700
        %7702 = vdwg.mxu0
        %v7703 = vsel %vm5305, %v7514, 0
        %7705 = vmatpush.msra.mxu0 %v7559
        %7706 = vmatpush.msra.mxu0 %v7558
        %7707 = vmatpush.msra.mxu0 %v7557
        %7708 = vmatpush.msra.mxu0 %v7556
        %7709 = vmatpush.msra.mxu0 %v7555
        %7710 = vmatpush.msra.mxu0 %v7554
        %7711 = vmatpush.msra.mxu0 %v7553
        %7712 = vmatpush.msra.mxu0 %v7552
        %7713 = vmatpush.msra.mxu0 %v7551
        %7714 = vmatpush.msra.mxu0 %v7550
        %7715 = vmatpush.msra.mxu0 %v7549
        %7716 = vmatpush.msra.mxu0 %v7548
        %7717 = vmatpush.msra.mxu0 %v7547
        %7718 = vmatpush.msra.mxu0 %v7546
        %7719 = vmatpush.msra.mxu0 %v7545
        %7720 = vmatpush.msra.mxu0 %v7544
        %7721 = vmatmul.f32.gmra.mxu0 %v7536
        %v7722 = vpop.f32.mrf.mxu0
        %v7723 = vadd.f32 %v7680, %v7722
        %7724 = vmatmul.f32.gmra.mxu0 %v7537
        %v7725 = vpop.f32.mrf.mxu0
        %v7726 = vadd.f32 %v7683, %v7725
        %7727 = vmatmul.f32.gmra.mxu0 %v7538
        %v7728 = vpop.f32.mrf.mxu0
        %v7729 = vadd.f32 %v7686, %v7728
        %7730 = vmatmul.f32.gmra.mxu0 %v7539
        %v7731 = vpop.f32.mrf.mxu0
        %v7732 = vadd.f32 %v7689, %v7731
        %7733 = vmatmul.f32.gmra.mxu0 %v7540
        %v7734 = vpop.f32.mrf.mxu0
        %v7735 = vadd.f32 %v7692, %v7734
        %7736 = vmatmul.f32.gmra.mxu0 %v7541
        %v7737 = vpop.f32.mrf.mxu0
        %v7738 = vadd.f32 %v7695, %v7737
        %7739 = vmatmul.f32.gmra.mxu0 %v7542
        %v7740 = vpop.f32.mrf.mxu0
        %v7741 = vadd.f32 %v7698, %v7740
        %7742 = vmatmul.f32.gmra.mxu0 %v7543
        %v7743 = vpop.f32.mrf.mxu0
        %v7744 = vadd.f32 %v7701, %v7743
        %7745 = vdwg.mxu0
        %7746 = vmatpush.msra.mxu0 0.0
        %7747 = vmatpush.msra.mxu0 0.0
        %7748 = vmatpush.msra.mxu0 0.0
        %7749 = vmatpush.msra.mxu0 0.0
        %7750 = vmatpush.msra.mxu0 0.0
        %7751 = vmatpush.msra.mxu0 0.0
        %7752 = vmatpush.msra.mxu0 0.0
        %7753 = vmatpush.msra.mxu0 0.0
        %7754 = vmatpush.msra.mxu0 %v7567
        %7755 = vmatpush.msra.mxu0 %v7566
        %7756 = vmatpush.msra.mxu0 %v7565
        %7757 = vmatpush.msra.mxu0 %v7564
        %7758 = vmatpush.msra.mxu0 %v7563
        %7759 = vmatpush.msra.mxu0 %v7562
        %7760 = vmatpush.msra.mxu0 %v7561
        %7761 = vmatpush.msra.mxu0 %v7560
        %7762 = vmatmul.f32.gmra.mxu0 %v7703
        %v7763 = vpop.f32.mrf.mxu0
        %v7764 = vadd.f32 %v7723, %v7763
        %7765 = vmatmul.f32.gmra.mxu0 %v7605
        %v7766 = vpop.f32.mrf.mxu0
        %v7767 = vadd.f32 %v7726, %v7766
        %7768 = vmatmul.f32.gmra.mxu0 %v7607
        %v7769 = vpop.f32.mrf.mxu0
        %v7770 = vadd.f32 %v7729, %v7769
        %7771 = vmatmul.f32.gmra.mxu0 %v7609
        %v7772 = vpop.f32.mrf.mxu0
        %v7773 = vadd.f32 %v7732, %v7772
        %7774 = vmatmul.f32.gmra.mxu0 %v7611
        %v7775 = vpop.f32.mrf.mxu0
        %v7776 = vadd.f32 %v7735, %v7775
        %7777 = vmatmul.f32.gmra.mxu0 %v7613
        %v7778 = vpop.f32.mrf.mxu0
        %v7779 = vadd.f32 %v7738, %v7778
        %7780 = vmatmul.f32.gmra.mxu0 %v7615
        %v7781 = vpop.f32.mrf.mxu0
        %v7782 = vadd.f32 %v7741, %v7781
        %7783 = vmatmul.f32.gmra.mxu0 %v7617
        %v7784 = vpop.f32.mrf.mxu0
        %v7785 = vadd.f32 %v7744, %v7784
        %7786 = vdwg.mxu0
        %v7789 = vrot.slane %v7446, 1
        %v7790 = vrot.slane %v7447, 1
        %v7791 = vsel %vm5429, %v7789, %v7790
        %7792 = vrot.lane.b32.xlu0 %v7791, 64
        %v7793 = vpop.permute.xlu0 %7792
        %v7795 = vrot.slane %v7446, 2
        %v7796 = vrot.slane %v7447, 2
        %v7797 = vsel %vm5606, %v7795, %v7796
        %v7798 = vsel %vm5305, %v7446, %v7793
        %s7799 = scalar_lea.vmem [#allocation9], 384
        %v7800 = vld [vmem:[%s7799] sm:$0xff]
        %v7801 = vld [vmem:[%s7799 + $0x8] sm:$0xff]
        %v7802 = vld [vmem:[%s7799 + $0x10] sm:$0xff]
        %v7803 = vld [vmem:[%s7799 + $0x18] sm:$0xff]
        %v7804 = vld [vmem:[%s7799 + $0x20] sm:$0xff]
        %v7805 = vld [vmem:[%s7799 + $0x28] sm:$0xff]
        %v7806 = vld [vmem:[%s7799 + $0x30] sm:$0xff]
        %v7807 = vld [vmem:[%s7799 + $0x38] sm:$0xff]
        %v7808 = vld [vmem:[%s7799 + $0x40] sm:$0xff]
        %v7809 = vld [vmem:[%s7799 + $0x48] sm:$0xff]
        %v7810 = vld [vmem:[%s7799 + $0x50] sm:$0xff]
        %v7811 = vld [vmem:[%s7799 + $0x58] sm:$0xff]
        %v7812 = vld [vmem:[%s7799 + $0x60] sm:$0xff]
        %v7813 = vld [vmem:[%s7799 + $0x68] sm:$0xff]
        %v7814 = vld [vmem:[%s7799 + $0x70] sm:$0xff]
        %v7815 = vld [vmem:[%s7799 + $0x78] sm:$0xff]
        %v7816 = vld [vmem:[%s7799 + $0x80] sm:$0xff]
        %v7817 = vld [vmem:[%s7799 + $0x88] sm:$0xff]
        %v7818 = vld [vmem:[%s7799 + $0x90] sm:$0xff]
        %v7819 = vld [vmem:[%s7799 + $0x98] sm:$0xff]
        %v7820 = vld [vmem:[%s7799 + $0xa0] sm:$0xff]
        %v7821 = vld [vmem:[%s7799 + $0xa8] sm:$0xff]
        %v7822 = vld [vmem:[%s7799 + $0xb0] sm:$0xff]
        %v7823 = vld [vmem:[%s7799 + $0xb8] sm:$0xff]
        %v7824 = vsel %vm5305, %v7797, 0
        %7826 = vmatpush.msra.mxu0 %v7815
        %7827 = vmatpush.msra.mxu0 %v7814
        %7828 = vmatpush.msra.mxu0 %v7813
        %7829 = vmatpush.msra.mxu0 %v7812
        %7830 = vmatpush.msra.mxu0 %v7811
        %7831 = vmatpush.msra.mxu0 %v7810
        %7832 = vmatpush.msra.mxu0 %v7809
        %7833 = vmatpush.msra.mxu0 %v7808
        %7834 = vmatpush.msra.mxu0 %v7807
        %7835 = vmatpush.msra.mxu0 %v7806
        %7836 = vmatpush.msra.mxu0 %v7805
        %7837 = vmatpush.msra.mxu0 %v7804
        %7838 = vmatpush.msra.mxu0 %v7803
        %7839 = vmatpush.msra.mxu0 %v7802
        %7840 = vmatpush.msra.mxu0 %v7801
        %7841 = vmatpush.msra.mxu0 %v7800
        %7842 = vmatmul.f32.gmra.mxu0 %v7538
        %v7843 = vpop.f32.mrf.mxu0
        %v7844 = vadd.f32 0.0, %v7843
        %7845 = vmatmul.f32.gmra.mxu0 %v7539
        %v7846 = vpop.f32.mrf.mxu0
        %v7847 = vadd.f32 0.0, %v7846
        %7848 = vmatmul.f32.gmra.mxu0 %v7540
        %v7849 = vpop.f32.mrf.mxu0
        %v7850 = vadd.f32 0.0, %v7849
        %7851 = vmatmul.f32.gmra.mxu0 %v7541
        %v7852 = vpop.f32.mrf.mxu0
        %v7853 = vadd.f32 0.0, %v7852
        %7854 = vmatmul.f32.gmra.mxu0 %v7542
        %v7855 = vpop.f32.mrf.mxu0
        %v7856 = vadd.f32 0.0, %v7855
        %7857 = vmatmul.f32.gmra.mxu0 %v7543
        %v7858 = vpop.f32.mrf.mxu0
        %v7859 = vadd.f32 0.0, %v7858
        %7860 = vmatmul.f32.gmra.mxu0 %v7579
        %v7861 = vpop.f32.mrf.mxu0
        %v7862 = vadd.f32 0.0, %v7861
        %7863 = vmatmul.f32.gmra.mxu0 %v7798
        %v7864 = vpop.f32.mrf.mxu0
        %v7865 = vadd.f32 0.0, %v7864
        %7866 = vdwg.mxu0
        %7867 = vmatpush.msra.mxu0 0.0
        %7868 = vmatpush.msra.mxu0 0.0
        %7869 = vmatpush.msra.mxu0 0.0
        %7870 = vmatpush.msra.mxu0 0.0
        %7871 = vmatpush.msra.mxu0 0.0
        %7872 = vmatpush.msra.mxu0 0.0
        %7873 = vmatpush.msra.mxu0 0.0
        %7874 = vmatpush.msra.mxu0 0.0
        %7875 = vmatpush.msra.mxu0 %v7823
        %7876 = vmatpush.msra.mxu0 %v7822
        %7877 = vmatpush.msra.mxu0 %v7821
        %7878 = vmatpush.msra.mxu0 %v7820
        %7879 = vmatpush.msra.mxu0 %v7819
        %7880 = vmatpush.msra.mxu0 %v7818
        %7881 = vmatpush.msra.mxu0 %v7817
        %7882 = vmatpush.msra.mxu0 %v7816
        %7883 = vmatmul.f32.gmra.mxu0 %v7607
        %v7884 = vpop.f32.mrf.mxu0
        %v7885 = vadd.f32 %v7844, %v7884
        %7886 = vmatmul.f32.gmra.mxu0 %v7609
        %v7887 = vpop.f32.mrf.mxu0
        %v7888 = vadd.f32 %v7847, %v7887
        %7889 = vmatmul.f32.gmra.mxu0 %v7611
        %v7890 = vpop.f32.mrf.mxu0
        %v7891 = vadd.f32 %v7850, %v7890
        %7892 = vmatmul.f32.gmra.mxu0 %v7613
        %v7893 = vpop.f32.mrf.mxu0
        %v7894 = vadd.f32 %v7853, %v7893
        %7895 = vmatmul.f32.gmra.mxu0 %v7615
        %v7896 = vpop.f32.mrf.mxu0
        %v7897 = vadd.f32 %v7856, %v7896
        %7898 = vmatmul.f32.gmra.mxu0 %v7617
        %v7899 = vpop.f32.mrf.mxu0
        %v7900 = vadd.f32 %v7859, %v7899
        %7901 = vmatmul.f32.gmra.mxu0 %v7619
        %v7902 = vpop.f32.mrf.mxu0
        %v7903 = vadd.f32 %v7862, %v7902
        %7904 = vmatmul.f32.gmra.mxu0 %v7824
        %v7905 = vpop.f32.mrf.mxu0
        %v7906 = vadd.f32 %v7865, %v7905
        %7907 = vdwg.mxu0
        %v7908 = vadd.f32 %v7764, %v7885
        %v7909 = vadd.f32 %v7767, %v7888
        %v7910 = vadd.f32 %v7770, %v7891
        %v7911 = vadd.f32 %v7773, %v7894
        %v7912 = vadd.f32 %v7776, %v7897
        %v7913 = vadd.f32 %v7779, %v7900
        %v7914 = vadd.f32 %v7782, %v7903
        %v7915 = vadd.f32 %v7785, %v7906
        %v7916 = vld [vmem:[#allocation11] sm:$0x1]
        %v7918 = vperm.slane %v7916, 0
        %v7920 = vadd.f32 %v7908, %v7918
        %v7921 = vadd.f32 %v7909, %v7918
        %v7922 = vadd.f32 %v7910, %v7918
        %v7923 = vadd.f32 %v7911, %v7918
        %v7924 = vadd.f32 %v7912, %v7918
        %v7925 = vadd.f32 %v7913, %v7918
        %v7926 = vadd.f32 %v7914, %v7918
        %v7927 = vadd.f32 %v7915, %v7918
        %v7928 = vmax.f32 %v7920, 0.0
        %v7929 = vmax.f32 %v7921, 0.0
        %v7930 = vmax.f32 %v7922, 0.0
        %v7931 = vmax.f32 %v7923, 0.0
        %v7932 = vmax.f32 %v7924, 0.0
        %v7933 = vmax.f32 %v7925, 0.0
        %v7934 = vmax.f32 %v7926, 0.0
        %v7935 = vmax.f32 %v7927, 0.0
        %v7944 = vrot.slane %v7928, 2
        %v7945 = vrot.slane %v7928, 4
        %v7946 = vrot.slane %v7928, 6
        %v7947 = vrot.slane %v7929, 2
        %v7948 = vrot.slane %v7929, 4
        %v7949 = vrot.slane %v7929, 6
        %v7950 = vrot.slane %v7930, 2
        %v7951 = vrot.slane %v7930, 4
        %v7952 = vrot.slane %v7930, 6
        %v7953 = vrot.slane %v7931, 2
        %v7954 = vrot.slane %v7931, 4
        %v7955 = vrot.slane %v7931, 6
        %v7956 = vrot.slane %v7932, 2
        %v7957 = vrot.slane %v7932, 4
        %v7958 = vrot.slane %v7932, 6
        %v7959 = vrot.slane %v7933, 2
        %v7960 = vrot.slane %v7933, 4
        %v7961 = vrot.slane %v7933, 6
        %v7962 = vrot.slane %v7934, 2
        %v7963 = vrot.slane %v7934, 4
        %v7964 = vrot.slane %v7934, 6
        %v7965 = vrot.slane %v7935, 2
        %v7966 = vrot.slane %v7935, 4
        %v7967 = vrot.slane %v7935, 6
        %vm7992 = vcmask 1041408
        %v7993 = vsel %vm7992, %v7928, -inf
        %v7994 = vsel %vm7992, %v7929, -inf
        %v7995 = vmax.f32 %v7993, %v7994
        %v7996 = vrot.slane %v7995, 4
        %v7997 = vmax.f32 %v7995, %v7996
        %v7998 = vrot.slane %v7997, 2
        %v7999 = vmax.f32 %v7997, %v7998
        %v8000 = vrot.slane %v7999, 1
        %v8001 = vmax.f32 %v7999, %v8000
        %v8002 = vsel %vm7992, %v7944, -inf
        %v8003 = vsel %vm7992, %v7947, -inf
        %v8004 = vmax.f32 %v8002, %v8003
        %v8005 = vrot.slane %v8004, 4
        %v8006 = vmax.f32 %v8004, %v8005
        %v8007 = vrot.slane %v8006, 2
        %v8008 = vmax.f32 %v8006, %v8007
        %v8009 = vrot.slane %v8008, 1
        %v8010 = vmax.f32 %v8008, %v8009
        %v8011 = vsel %vm7992, %v7945, -inf
        %v8012 = vsel %vm7992, %v7948, -inf
        %v8013 = vmax.f32 %v8011, %v8012
        %v8014 = vrot.slane %v8013, 4
        %v8015 = vmax.f32 %v8013, %v8014
        %v8016 = vrot.slane %v8015, 2
        %v8017 = vmax.f32 %v8015, %v8016
        %v8018 = vrot.slane %v8017, 1
        %v8019 = vmax.f32 %v8017, %v8018
        %v8020 = vsel %vm7992, %v7946, -inf
        %v8021 = vsel %vm7992, %v7949, -inf
        %v8022 = vmax.f32 %v8020, %v8021
        %v8023 = vrot.slane %v8022, 4
        %v8024 = vmax.f32 %v8022, %v8023
        %v8025 = vrot.slane %v8024, 2
        %v8026 = vmax.f32 %v8024, %v8025
        %v8027 = vrot.slane %v8026, 1
        %v8028 = vmax.f32 %v8026, %v8027
        %v8029 = vsel %vm7992, %v7930, -inf
        %v8030 = vsel %vm7992, %v7931, -inf
        %v8031 = vmax.f32 %v8029, %v8030
        %v8032 = vrot.slane %v8031, 4
        %v8033 = vmax.f32 %v8031, %v8032
        %v8034 = vrot.slane %v8033, 2
        %v8035 = vmax.f32 %v8033, %v8034
        %v8036 = vrot.slane %v8035, 1
        %v8037 = vmax.f32 %v8035, %v8036
        %v8038 = vsel %vm7992, %v7950, -inf
        %v8039 = vsel %vm7992, %v7953, -inf
        %v8040 = vmax.f32 %v8038, %v8039
        %v8041 = vrot.slane %v8040, 4
        %v8042 = vmax.f32 %v8040, %v8041
        %v8043 = vrot.slane %v8042, 2
        %v8044 = vmax.f32 %v8042, %v8043
        %v8045 = vrot.slane %v8044, 1
        %v8046 = vmax.f32 %v8044, %v8045
        %v8047 = vsel %vm7992, %v7951, -inf
        %v8048 = vsel %vm7992, %v7954, -inf
        %v8049 = vmax.f32 %v8047, %v8048
        %v8050 = vrot.slane %v8049, 4
        %v8051 = vmax.f32 %v8049, %v8050
        %v8052 = vrot.slane %v8051, 2
        %v8053 = vmax.f32 %v8051, %v8052
        %v8054 = vrot.slane %v8053, 1
        %v8055 = vmax.f32 %v8053, %v8054
        %v8056 = vsel %vm7992, %v7952, -inf
        %v8057 = vsel %vm7992, %v7955, -inf
        %v8058 = vmax.f32 %v8056, %v8057
        %v8059 = vrot.slane %v8058, 4
        %v8060 = vmax.f32 %v8058, %v8059
        %v8061 = vrot.slane %v8060, 2
        %v8062 = vmax.f32 %v8060, %v8061
        %v8063 = vrot.slane %v8062, 1
        %v8064 = vmax.f32 %v8062, %v8063
        %v8065 = vsel %vm7992, %v7932, -inf
        %v8066 = vsel %vm7992, %v7933, -inf
        %v8067 = vmax.f32 %v8065, %v8066
        %v8068 = vrot.slane %v8067, 4
        %v8069 = vmax.f32 %v8067, %v8068
        %v8070 = vrot.slane %v8069, 2
        %v8071 = vmax.f32 %v8069, %v8070
        %v8072 = vrot.slane %v8071, 1
        %v8073 = vmax.f32 %v8071, %v8072
        %v8074 = vsel %vm7992, %v7956, -inf
        %v8075 = vsel %vm7992, %v7959, -inf
        %v8076 = vmax.f32 %v8074, %v8075
        %v8077 = vrot.slane %v8076, 4
        %v8078 = vmax.f32 %v8076, %v8077
        %v8079 = vrot.slane %v8078, 2
        %v8080 = vmax.f32 %v8078, %v8079
        %v8081 = vrot.slane %v8080, 1
        %v8082 = vmax.f32 %v8080, %v8081
        %v8083 = vsel %vm7992, %v7957, -inf
        %v8084 = vsel %vm7992, %v7960, -inf
        %v8085 = vmax.f32 %v8083, %v8084
        %v8086 = vrot.slane %v8085, 4
        %v8087 = vmax.f32 %v8085, %v8086
        %v8088 = vrot.slane %v8087, 2
        %v8089 = vmax.f32 %v8087, %v8088
        %v8090 = vrot.slane %v8089, 1
        %v8091 = vmax.f32 %v8089, %v8090
        %v8092 = vsel %vm7992, %v7958, -inf
        %v8093 = vsel %vm7992, %v7961, -inf
        %v8094 = vmax.f32 %v8092, %v8093
        %v8095 = vrot.slane %v8094, 4
        %v8096 = vmax.f32 %v8094, %v8095
        %v8097 = vrot.slane %v8096, 2
        %v8098 = vmax.f32 %v8096, %v8097
        %v8099 = vrot.slane %v8098, 1
        %v8100 = vmax.f32 %v8098, %v8099
        %v8101 = vsel %vm7992, %v7934, -inf
        %v8102 = vsel %vm7992, %v7935, -inf
        %v8103 = vmax.f32 %v8101, %v8102
        %v8104 = vrot.slane %v8103, 4
        %v8105 = vmax.f32 %v8103, %v8104
        %v8106 = vrot.slane %v8105, 2
        %v8107 = vmax.f32 %v8105, %v8106
        %v8108 = vrot.slane %v8107, 1
        %v8109 = vmax.f32 %v8107, %v8108
        %v8110 = vsel %vm7992, %v7962, -inf
        %v8111 = vsel %vm7992, %v7965, -inf
        %v8112 = vmax.f32 %v8110, %v8111
        %v8113 = vrot.slane %v8112, 4
        %v8114 = vmax.f32 %v8112, %v8113
        %v8115 = vrot.slane %v8114, 2
        %v8116 = vmax.f32 %v8114, %v8115
        %v8117 = vrot.slane %v8116, 1
        %v8118 = vmax.f32 %v8116, %v8117
        %v8119 = vsel %vm7992, %v7963, -inf
        %v8120 = vsel %vm7992, %v7966, -inf
        %v8121 = vmax.f32 %v8119, %v8120
        %v8122 = vrot.slane %v8121, 4
        %v8123 = vmax.f32 %v8121, %v8122
        %v8124 = vrot.slane %v8123, 2
        %v8125 = vmax.f32 %v8123, %v8124
        %v8126 = vrot.slane %v8125, 1
        %v8127 = vmax.f32 %v8125, %v8126
        %v8128 = vsel %vm7992, %v7964, -inf
        %v8129 = vsel %vm7992, %v7967, -inf
        %v8130 = vmax.f32 %v8128, %v8129
        %v8131 = vrot.slane %v8130, 4
        %v8132 = vmax.f32 %v8130, %v8131
        %v8133 = vrot.slane %v8132, 2
        %v8134 = vmax.f32 %v8132, %v8133
        %v8135 = vrot.slane %v8134, 1
        %v8136 = vmax.f32 %v8134, %v8135
        %v8153 = vsel %vm1562, %v8010, %v8001
        %v8154 = vsel %vm1564, %v8019, %v8153
        %v8155 = vsel %vm1566, %v8028, %v8154
        %v8156 = vsel %vm1562, %v8046, %v8037
        %v8157 = vsel %vm1564, %v8055, %v8156
        %v8158 = vsel %vm1566, %v8064, %v8157
        %v8159 = vsel %vm1562, %v8082, %v8073
        %v8160 = vsel %vm1564, %v8091, %v8159
        %v8161 = vsel %vm1566, %v8100, %v8160
        %v8162 = vsel %vm1562, %v8118, %v8109
        %v8163 = vsel %vm1564, %v8127, %v8162
        %v8164 = vsel %vm1566, %v8136, %v8163
        %8169 = vst [vmem:[%s355] sm:$0xf] %v8155
        %8170 = vst [vmem:[%s355 + $0x4] sm:$0xf] %v8158
        %8171 = vst [vmem:[%s355 + $0x8] sm:$0xf] %v8161
        %8172 = vst [vmem:[%s355 + $0xc] sm:$0xf] %v8164
        %p8173 = scmp.lt.s32.totalorder %s21, 1
        %s8174 = scalar_select %p8173, %s21, 1
        %s8175 = smul.addr %s8174, 4
        %s8176 = smul.addr %s8175, 4
        %s8177 = scalar_lea.vmem %s7, %s8176
        // Predicated region
        $region69: #{cnn_forward.2} parent=47 // pred_check
          %p8178 = pneg %p191
        $region70: #{cnn_forward.2} parent=47 // pred_check_branch
          %8180 = sbr.rel (%p8178) target = $region72
        $region71: #{cnn_forward.2} parent=47 // pred_region
          _
        $region72: #{cnn_forward.2} parent=47 // pred_fallthru
          _
      $region48: #{cnn_forward.2} parent=5 // pred_fallthru
        _
      %p8181 = scmp.le.s32.totalorder 2, %s16
      // Predicated region
      $region73: #{cnn_forward.2} parent=5 // pred_check
        %p8182 = pneg %p8181
      $region74: #{cnn_forward.2} parent=5 // pred_check_branch
        %8184 = sbr.rel (%p8182) target = $region76
      $region75: #{cnn_forward.2} parent=5 // pred_region
        %s8185 = ssub.s32 %s16, 2
        // Predicated region
        $region77: #{cnn_forward.2} parent=75 // pred_check
          %p8186 = pneg %p197
        $region78: #{cnn_forward.2} parent=75 // pred_check_branch
          %8188 = sbr.rel (%p8186) target = $region80
        $region79: #{cnn_forward.2} parent=75 // pred_region
          %p8189 = scmp.lt.s32.totalorder %s22, 1
          %s8190 = scalar_select %p8189, %s22, 1
          %s8191 = smul.addr %s8190, 4
          %s8192 = smul.addr %s8191, 4
          %s8193 = scalar_lea.vmem %s7, %s8192
        $region80: #{cnn_forward.2} parent=75 // pred_fallthru
          _
      $region76: #{cnn_forward.2} parent=5 // pred_fallthru
        _
    $region6: #{cnn_forward.2} parent=1 // loop_footer
      %s20 = sadd.s32 1, %s16
    $region7: #{cnn_forward.2} parent=1 // loop_footer_branch
      %15 = sbr.rel target = $region3
    $region8: #{cnn_forward.2} parent=1 // loop_exit
      _
    %8194 = vsyncpa [#allocation5], 1
    %s8195 = scalar_lea.sflag [#allocation5], 1
    %8196 = vsyncpa %s8195, 1
    %8197 = vsyncpa [#allocation7], 1
    %8198 = vsyncpa [#allocation10], 1

</llo_original>
